<compile_context>
chip_gen: v7x
topology: tpu7x:2x2x1
jax: 0.10.0
libtpu: 0.0.40
codegen_flags: <defaults>
</compile_context>

<pallas_src>
import math
import functools

import jax
import jax.numpy as jnp
from jax.experimental import pallas as pl
from jax.experimental.pallas import tpu as pltpu


def node_edge_block_kernel(
    q_ref, k_ref, v_ref, e_ref, mask_ref, expand_ref,
    wem_ref, bem_ref, wea_ref, bea_ref, weo_ref, beo_ref, wxo_ref, bxo_ref,
    newx_ref, newe_ref,
    m_sc, l_sc, acc_sc,
    *, g, approx_recip,
):
    kc = pl.program_id(1)
    TI, NK, Dg = e_ref.shape          # query tile, packed key rows, packed lanes
    D = Dg // g

    @pl.when(kc == 0)
    def _init():
        m_sc[...] = jnp.full(m_sc.shape, -jnp.inf, jnp.float32)
        l_sc[...] = jnp.zeros(l_sc.shape, jnp.float32)
        acc_sc[...] = jnp.zeros(acc_sc.shape, jnp.float32)

    # ---- block-diagonal (lane-packed) e_mul / e_add projections, f32 accum --
    e2d = e_ref[...].reshape(TI * NK, Dg)
    E1 = (jnp.dot(e2d, wem_ref[...], preferred_element_type=jnp.float32)
          + bem_ref[...]).reshape(TI, NK, Dg)           # == e_mul(e) + 1 (bias fold)
    E2 = (jnp.dot(e2d, wea_ref[...], preferred_element_type=jnp.float32)
          + bea_ref[...]).reshape(TI, NK, Dg)           # == e_add(e)

    # ---- lane-expanded float mask (1 keep / 0 drop) via a tiny MXU matmul ---
    mfull = jnp.dot(mask_ref[...].reshape(TI * NK, g), expand_ref[...],
                    preferred_element_type=jnp.float32).reshape(TI, NK, Dg)

    # ---- Y = (q*k)/sqrt(df) * (e_mul(e)+1) + e_add(e); scale folded into q --
    Y = (q_ref[...][:, None, :] * k_ref[...][None, :, :]) * E1 + E2
    Ykeep = Y * mfull                                   # Y where kept, 0 where masked
    mneg = mfull - 1.0                                  # 0 where kept, -1 where masked

    # ---- newE branch first (independent of the softmax accumulators) --------
    Ye = Ykeep + mneg * 2.0                             # -2 fill on masked entries
    newE = jnp.dot(Ye.reshape(TI * NK, Dg).astype(weo_ref.dtype), weo_ref[...],
                   preferred_element_type=jnp.float32) + beo_ref[...]
    newe_ref[...] = newE.reshape(TI, NK, Dg).astype(newe_ref.dtype)

    # ---- online softmax over this key chunk (per lane-group accumulators) ---
    Ym = Ykeep + mneg * 9.0e9                           # -9e9 fill on masked entries
    m_prev = m_sc[...]
    m_new = jnp.maximum(m_prev, jnp.max(Ym, axis=1))    # (TI, Dg)
    alpha = jnp.exp(m_prev - m_new)
    P = jnp.exp(Ym - m_new[:, None, :])                 # (TI, NK, Dg)
    l_sc[...] = alpha * l_sc[...] + jnp.sum(P, axis=1)
    acc_sc[...] = alpha * acc_sc[...] + jnp.sum(P * v_ref[...][None, :, :], axis=1)
    m_sc[...] = m_new

    # ---- finalize: combine the g lane groups, normalize, x_out matmul -------
    @pl.when(kc == pl.num_programs(1) - 1)
    def _finalize():
        m = m_sc[...]
        l = l_sc[...]
        acc = acc_sc[...]
        # Cross-group combine on small (TI, Dg) arrays via static lane slices.
        M = m[:, 0:D]
        for s in range(1, g):
            M = jnp.maximum(M, m[:, s * D:(s + 1) * D])
        S = jnp.zeros((TI, D), jnp.float32)
        WV = jnp.zeros((TI, D), jnp.float32)
        for s in range(g):
            scale = jnp.exp(m[:, s * D:(s + 1) * D] - M)
            S = S + l[:, s * D:(s + 1) * D] * scale
            WV = WV + acc[:, s * D:(s + 1) * D] * scale
        inv_S = pl.reciprocal(S, approx=True) if approx_recip else 1.0 / S
        newX = jnp.dot(WV * inv_S, wxo_ref[...],
                       preferred_element_type=jnp.float32) + bxo_ref[...]
        newx_ref[...] = newX.astype(newx_ref.dtype)


def _default_vmem_limit():
    """Generation-aware scoped-VMEM limit: physical capacity minus headroom."""
    try:
        cap = int(pltpu.get_tpu_info().vmem_capacity_bytes)
    except Exception:
        cap = 64 * 1024 * 1024           # conservative: fits every generation
    return max(32 * 1024 * 1024, cap - 16 * 1024 * 1024)


def _auto_tiles(N, Np, Dg, e_bytes, vmem_limit, num_cores=2):
    """Pick (tile_i, nk_tile).

    tile_i: largest multiple of 8 dividing N that still leaves >= 4 grid steps
    per TensorCore on the parallel axis (so neighbouring e-in / newE-out DMAs
    hide behind compute).  nk_tile: largest multiple of 8 dividing Np whose
    double-buffered e-in + newE-out slabs stay within ~1/8 of the VMEM budget,
    leaving room for the (tile_i, nk_tile, Dg) f32 intermediates and compiler
    scratch.
    """
    tile_i = 8
    for cand in range(8, min(N, 256) + 1, 8):
        if N % cand == 0 and N // cand >= 4 * num_cores:
            tile_i = cand
    if Np % 8 != 0:
        return tile_i, Np
    budget = vmem_limit // 8
    nk = 8
    for cand in range(8, Np + 1, 8):
        if Np % cand != 0:
            continue
        slab = 2 * 2 * tile_i * cand * Dg * e_bytes   # e-in + newE-out, 2 buffers each
        if slab <= budget:
            nk = cand
    return tile_i, nk


def node_edge_block(x, e, mask, params, *, n_head, tile_i=None, nk_tile=None,
                    edge_dtype=jnp.bfloat16, approx_recip=True,
                    vmem_limit_bytes=None):
    N, D = x.shape
    assert D % n_head == 0
    assert N % 8 == 0, "N must be a multiple of 8 (sublane tiling)"
    df = D // n_head
    f32 = jnp.float32

    # Lane-packing factor: pack g key rows per 128-lane row when D < 128.
    if D < 128 and 128 % D == 0 and N % (128 // D) == 0 and (N // (128 // D)) % 8 == 0:
        g = 128 // D
    else:
        g = 1
    Dg = g * D
    Np = N // g

    vmem_limit = vmem_limit_bytes if vmem_limit_bytes is not None else _default_vmem_limit()
    e_bytes = jnp.dtype(edge_dtype).itemsize
    auto_ti, auto_nk = _auto_tiles(N, Np, Dg, e_bytes, vmem_limit)
    if tile_i is None:
        tile_i = auto_ti
    if nk_tile is None:
        nk_tile = auto_nk
    assert N % tile_i == 0 and tile_i % 8 == 0
    assert Np % nk_tile == 0 and (nk_tile % 8 == 0 or nk_tile == Np)

    x = x.astype(f32)

    # Fused QKV projection once, outside the kernel; fold 1/sqrt(df) into Q,
    # then move q/k/v into the packed lane layout.
    w_qkv = jnp.concatenate([params["wq"], params["wk"], params["wv"]], axis=1)
    b_qkv = jnp.concatenate([params["bq"], params["bk"], params["bv"]], axis=1)
    qkv = jnp.dot(x, w_qkv, preferred_element_type=f32) + b_qkv
    q = qkv[:, :D] * jnp.float32(1.0 / math.sqrt(df))
    k = qkv[:, D:2 * D]
    v = qkv[:, 2 * D:]
    q_t = jnp.tile(q, (1, g))                      # (N, Dg)  lane-tiled, pre-scaled
    k_p = k.reshape(Np, Dg)                        # (Np, Dg) g keys per lane row
    v_p = v.reshape(Np, Dg)

    # Block-diagonal packed edge weights; "+1" folded into the e_mul bias.
    eye_g = jnp.eye(g, dtype=f32)
    w_em = jnp.kron(eye_g, params["wem"]).astype(edge_dtype)
    w_ea = jnp.kron(eye_g, params["wea"]).astype(edge_dtype)
    w_eo = jnp.kron(eye_g, params["weo"]).astype(edge_dtype)
    b_em1 = jnp.tile(params["bem"] + 1.0, (1, g)).astype(f32)
    b_ea = jnp.tile(params["bea"], (1, g)).astype(f32)
    b_eo = jnp.tile(params["beo"], (1, g)).astype(f32)
    wxo = params["wxo"].astype(f32)
    bxo = params["bxo"].astype(f32)

    # Packed edge tensor / compact mask / constant lane-expansion matrix.
    e_p = e.reshape(N, Np, Dg).astype(edge_dtype)
    mask_p = mask.astype(f32).reshape(N, Np, g)
    expand = jnp.kron(eye_g, jnp.ones((1, D), f32))     # (g, Dg)

    kernel = functools.partial(node_edge_block_kernel, g=g,
                               approx_recip=approx_recip)

    const = lambda i, kc: (0, 0)
    in_specs = [
        pl.BlockSpec((tile_i, Dg), lambda i, kc: (i, 0)),              # q (scaled, tiled)
        pl.BlockSpec((nk_tile, Dg), lambda i, kc: (kc, 0)),            # k chunk
        pl.BlockSpec((nk_tile, Dg), lambda i, kc: (kc, 0)),            # v chunk
        pl.BlockSpec((tile_i, nk_tile, Dg), lambda i, kc: (i, kc, 0)),  # e chunk
        pl.BlockSpec((tile_i, nk_tile, g), lambda i, kc: (i, kc, 0)),   # mask chunk
        pl.BlockSpec((g, Dg), const),                                  # mask expander
        pl.BlockSpec((Dg, Dg), const),                                 # e_mul W (bd)
        pl.BlockSpec((1, Dg), const),                                  # e_mul b (+1)
        pl.BlockSpec((Dg, Dg), const),                                 # e_add W (bd)
        pl.BlockSpec((1, Dg), const),                                  # e_add b
        pl.BlockSpec((Dg, Dg), const),                                 # e_out W (bd)
        pl.BlockSpec((1, Dg), const),                                  # e_out b
        pl.BlockSpec((D, D), const),                                   # x_out W
        pl.BlockSpec((1, D), const),                                   # x_out b
    ]
    out_specs = (
        pl.BlockSpec((tile_i, D), lambda i, kc: (i, 0)),               # newX
        pl.BlockSpec((tile_i, nk_tile, Dg), lambda i, kc: (i, kc, 0)),  # newE (packed)
    )
    out_shape = (
        jax.ShapeDtypeStruct((N, D), f32),
        jax.ShapeDtypeStruct((N, Np, Dg), edge_dtype),
    )
    scratch_shapes = [
        pltpu.VMEM((tile_i, Dg), f32),   # running max (per lane group)
        pltpu.VMEM((tile_i, Dg), f32),   # running softmax denominator
        pltpu.VMEM((tile_i, Dg), f32),   # running weighted V
    ]

    newX, newE_p = pl.pallas_call(
        kernel,
        out_shape=out_shape,
        grid=(N // tile_i, Np // nk_tile),
        in_specs=in_specs,
        out_specs=out_specs,
        scratch_shapes=scratch_shapes,
        compiler_params=pltpu.CompilerParams(
            dimension_semantics=("parallel", "arbitrary"),
            vmem_limit_bytes=int(vmem_limit)),
    )(q_t, k_p, v_p, e_p, mask_p, expand,
      w_em, b_em1, w_ea, b_ea, w_eo, b_eo, wxo, bxo)

    return newX, newE_p.reshape(N, N, D)


def reference(x, e, mask, params, *, n_head):
    """Pure-JAX transcription of the PyTorch forward for verification."""
    N, D = x.shape
    df = D // n_head
    Q = x @ params["wq"] + params["bq"][0]
    K = x @ params["wk"] + params["bk"][0]
    V = x @ params["wv"] + params["bv"][0]
    E1 = e @ params["wem"] + params["bem"][0]
    E2 = e @ params["wea"] + params["bea"][0]
    Y = (Q[:, None, :] * K[None, :, :]) / math.sqrt(df)
    Y = Y * (E1 + 1.0) + E2
    masked = (mask == 0)[:, :, None]
    Ym = jnp.where(masked, -9.0e9, Y)
    attn = jax.nn.softmax(Ym, axis=1)
    weighted_V = jnp.sum(attn * V[None, :, :], axis=1)
    newX = weighted_V @ params["wxo"] + params["bxo"][0]
    Ye = jnp.where(masked, -2.0, Y)
    newE = Ye @ params["weo"] + params["beo"][0]
    return newX, newE


def init_params(key, dim):
    """Deterministic linear weights, (in, out) layout; biases as (1, out)."""
    names = ["q", "k", "v", "em", "ea", "xo", "eo"]
    params = {}
    bound = 1.0 / math.sqrt(dim)
    keys = jax.random.split(key, 2 * len(names))
    for idx, name in enumerate(names):
        params["w" + name] = jax.random.uniform(
            keys[2 * idx], (dim, dim), jnp.float32, -bound, bound)
        params["b" + name] = jax.random.uniform(
            keys[2 * idx + 1], (1, dim), jnp.float32, -bound, bound)
    return params


if __name__ == "__main__":
    N = 128         # nodes: 4 graphs of 32 under one "batchlization" mask
    D = 32          # hiddim  -> lane-packing factor g = 4
    H = 4           # num_head -> df = 8

    key = jax.random.PRNGKey(0)
    kx, ke, kp = jax.random.split(key, 3)

    x = jax.random.normal(kx, (N, D), jnp.float32)
    e = jax.random.normal(ke, (N, N, D), jnp.float32)

    # Block-diagonal batchlization mask: node i attends to node j only if
    # they belong to the same graph (graph size 32).
    graph_id = jnp.arange(N) // 32
    mask = (graph_id[:, None] == graph_id[None, :]).astype(jnp.int32)

    params = init_params(kp, D)
    refX, refE = reference(x, e, mask, params, n_head=H)

    # 1) Exact-semantics f32 configuration (multi-chunk online softmax path):
    #    tight check against the reference.
    X32, E32 = node_edge_block(x, e, mask, params, n_head=H,
                               tile_i=32, nk_tile=16,
                               edge_dtype=jnp.float32, approx_recip=False)
    X32 = jax.block_until_ready(X32)
    E32 = jax.block_until_ready(E32)
    assert jnp.allclose(X32, refX, atol=2e-4, rtol=2e-4), "f32 newX mismatch"
    assert jnp.allclose(E32, refE, atol=2e-4, rtol=2e-4), "f32 newE mismatch"

    # 2) Default performance configuration: auto tile sizes, bf16 edge I/O +
    #    bf16 edge-matmul operands (f32 accumulation), approximate EUP
    #    reciprocal.  Tolerances reflect bf16 rounding of e / newE / weights.
    Xb, Eb = node_edge_block(x, e, mask, params, n_head=H)
    Xb = jax.block_until_ready(Xb)
    Eb = jax.block_until_ready(Eb)
    assert jnp.allclose(Xb, refX, atol=1e-1, rtol=5e-2), "bf16 newX mismatch"
    assert jnp.allclose(Eb.astype(jnp.float32), refE,
                        atol=1e-1, rtol=5e-2), "bf16 newE mismatch"

    print("KERNEL_OK")
</pallas_src>

<mosaic_0001>
module attributes {stable_mosaic.version = 11 : i64} {
  func.func @node_edge_block_kernel(%arg0: i32, %arg1: i32, %arg2: memref<32x128xf32, #tpu.memory_space<vmem>>, %arg3: memref<16x128xf32, #tpu.memory_space<vmem>>, %arg4: memref<16x128xf32, #tpu.memory_space<vmem>>, %arg5: memref<32x16x128xf32, #tpu.memory_space<vmem>>, %arg6: memref<32x16x4xf32, #tpu.memory_space<vmem>>, %arg7: memref<4x128xf32, #tpu.memory_space<vmem>>, %arg8: memref<128x128xf32, #tpu.memory_space<vmem>>, %arg9: memref<1x128xf32, #tpu.memory_space<vmem>>, %arg10: memref<128x128xf32, #tpu.memory_space<vmem>>, %arg11: memref<1x128xf32, #tpu.memory_space<vmem>>, %arg12: memref<128x128xf32, #tpu.memory_space<vmem>>, %arg13: memref<1x128xf32, #tpu.memory_space<vmem>>, %arg14: memref<32x32xf32, #tpu.memory_space<vmem>>, %arg15: memref<1x32xf32, #tpu.memory_space<vmem>>, %arg16: memref<32x32xf32, #tpu.memory_space<vmem>>, %arg17: memref<32x16x128xf32, #tpu.memory_space<vmem>>, %arg18: memref<32x128xf32, #tpu.memory_space<vmem>>, %arg19: memref<32x128xf32, #tpu.memory_space<vmem>>, %arg20: memref<32x128xf32, #tpu.memory_space<vmem>>) attributes {dimension_semantics = [#tpu.dimension_semantics<parallel>, #tpu.dimension_semantics<arbitrary>], iteration_bounds = array<i64: 4, 2>, scalar_prefetch = 0 : i64, scratch_operands = 3 : i64, tpu.core_type = #tpu.core_type<tc>, window_params = [{transform_indices = @transform_0, window_bounds = array<i64: 32, 128>}, {transform_indices = @transform_1, window_bounds = array<i64: 16, 128>}, {transform_indices = @transform_2, window_bounds = array<i64: 16, 128>}, {transform_indices = @transform_3, window_bounds = array<i64: 32, 16, 128>}, {transform_indices = @transform_4, window_bounds = array<i64: 32, 16, 4>}, {pipeline_mode = #tpu.pipeline_mode<synchronous>, transform_indices = @transform_5, window_bounds = array<i64: 4, 128>}, {pipeline_mode = #tpu.pipeline_mode<synchronous>, transform_indices = @transform_6, window_bounds = array<i64: 128, 128>}, {pipeline_mode = #tpu.pipeline_mode<synchronous>, transform_indices = @transform_7, window_bounds = array<i64: 1, 128>}, {pipeline_mode = #tpu.pipeline_mode<synchronous>, transform_indices = @transform_8, window_bounds = array<i64: 128, 128>}, {pipeline_mode = #tpu.pipeline_mode<synchronous>, transform_indices = @transform_9, window_bounds = array<i64: 1, 128>}, {pipeline_mode = #tpu.pipeline_mode<synchronous>, transform_indices = @transform_10, window_bounds = array<i64: 128, 128>}, {pipeline_mode = #tpu.pipeline_mode<synchronous>, transform_indices = @transform_11, window_bounds = array<i64: 1, 128>}, {pipeline_mode = #tpu.pipeline_mode<synchronous>, transform_indices = @transform_12, window_bounds = array<i64: 32, 32>}, {pipeline_mode = #tpu.pipeline_mode<synchronous>, transform_indices = @transform_13, window_bounds = array<i64: 1, 32>}, {transform_indices = @transform_14, window_bounds = array<i64: 32, 32>}, {transform_indices = @transform_15, window_bounds = array<i64: 32, 16, 128>}]} {
    %c0_i32 = arith.constant 0 : i32
    %0 = arith.cmpi eq, %arg1, %c0_i32 : i32
    %1 = arith.extui %0 : i1 to i32
    %c0_i32_0 = arith.constant 0 : i32
    %2 = arith.cmpi ne, %1, %c0_i32_0 : i32
    scf.if %2 {
      %cst_51 = arith.constant 0xFF800000 : f32
      %75 = vector.broadcast %cst_51 : f32 to vector<32x128xf32>
      %c0_52 = arith.constant 0 : index
      %c0_53 = arith.constant 0 : index
      %76 = vector.load %arg18[%c0_52, %c0_53] : memref<32x128xf32, #tpu.memory_space<vmem>>, vector<32x128xf32>
      tpu.vector_store %arg18[%c0_52, %c0_53], %75 {strides = array<i32>} : memref<32x128xf32, #tpu.memory_space<vmem>>, vector<32x128xf32>,
      %cst_54 = arith.constant 0.000000e+00 : f32
      %77 = vector.broadcast %cst_54 : f32 to vector<32x128xf32>
      %c0_55 = arith.constant 0 : index
      %c0_56 = arith.constant 0 : index
      %78 = vector.load %arg19[%c0_55, %c0_56] : memref<32x128xf32, #tpu.memory_space<vmem>>, vector<32x128xf32>
      tpu.vector_store %arg19[%c0_55, %c0_56], %77 {strides = array<i32>} : memref<32x128xf32, #tpu.memory_space<vmem>>, vector<32x128xf32>,
      %cst_57 = arith.constant 0.000000e+00 : f32
      %79 = vector.broadcast %cst_57 : f32 to vector<32x128xf32>
      %c0_58 = arith.constant 0 : index
      %c0_59 = arith.constant 0 : index
      %80 = vector.load %arg20[%c0_58, %c0_59] : memref<32x128xf32, #tpu.memory_space<vmem>>, vector<32x128xf32>
      tpu.vector_store %arg20[%c0_58, %c0_59], %79 {strides = array<i32>} : memref<32x128xf32, #tpu.memory_space<vmem>>, vector<32x128xf32>,
    } else {
    }
    %c0 = arith.constant 0 : index
    %c0_1 = arith.constant 0 : index
    %c0_2 = arith.constant 0 : index
    %3 = vector.load %arg5[%c0, %c0_1, %c0_2] : memref<32x16x128xf32, #tpu.memory_space<vmem>>, vector<32x16x128xf32>
    %4 = vector.shape_cast %3 : vector<32x16x128xf32> to vector<512x128xf32>
    %c0_3 = arith.constant 0 : index
    %c0_4 = arith.constant 0 : index
    %5 = vector.load %arg8[%c0_3, %c0_4] : memref<128x128xf32, #tpu.memory_space<vmem>>, vector<128x128xf32>
    %cst = arith.constant dense<0.000000e+00> : vector<512x128xf32>
    %6 = tpu.matmul %4, %5, %cst {dimension_numbers = #tpu.dot_dimension_numbers<[1], [0], [0], [1], [0, 0, 1, 1], [], []>} : vector<512x128xf32>, vector<128x128xf32>, vector<512x128xf32> -> vector<512x128xf32>
    %c0_5 = arith.constant 0 : index
    %c0_6 = arith.constant 0 : index
    %7 = vector.load %arg9[%c0_5, %c0_6] : memref<1x128xf32, #tpu.memory_space<vmem>>, vector<1x128xf32>
    %8 = vector.broadcast %7 : vector<1x128xf32> to vector<512x128xf32>
    %9 = arith.addf %6, %8 : vector<512x128xf32>
    %10 = vector.shape_cast %9 : vector<512x128xf32> to vector<32x16x128xf32>
    %c0_7 = arith.constant 0 : index
    %c0_8 = arith.constant 0 : index
    %11 = vector.load %arg10[%c0_7, %c0_8] : memref<128x128xf32, #tpu.memory_space<vmem>>, vector<128x128xf32>
    %cst_9 = arith.constant dense<0.000000e+00> : vector<512x128xf32>
    %12 = tpu.matmul %4, %11, %cst_9 {dimension_numbers = #tpu.dot_dimension_numbers<[1], [0], [0], [1], [0, 0, 1, 1], [], []>} : vector<512x128xf32>, vector<128x128xf32>, vector<512x128xf32> -> vector<512x128xf32>
    %c0_10 = arith.constant 0 : index
    %c0_11 = arith.constant 0 : index
    %13 = vector.load %arg11[%c0_10, %c0_11] : memref<1x128xf32, #tpu.memory_space<vmem>>, vector<1x128xf32>
    %14 = vector.broadcast %13 : vector<1x128xf32> to vector<512x128xf32>
    %15 = arith.addf %12, %14 : vector<512x128xf32>
    %16 = vector.shape_cast %15 : vector<512x128xf32> to vector<32x16x128xf32>
    %c0_12 = arith.constant 0 : index
    %c0_13 = arith.constant 0 : index
    %c0_14 = arith.constant 0 : index
    %17 = vector.load %arg6[%c0_12, %c0_13, %c0_14] : memref<32x16x4xf32, #tpu.memory_space<vmem>>, vector<32x16x4xf32>
    %18 = vector.shape_cast %17 : vector<32x16x4xf32> to vector<512x4xf32>
    %c0_15 = arith.constant 0 : index
    %c0_16 = arith.constant 0 : index
    %19 = vector.load %arg7[%c0_15, %c0_16] : memref<4x128xf32, #tpu.memory_space<vmem>>, vector<4x128xf32>
    %cst_17 = arith.constant dense<0.000000e+00> : vector<512x128xf32>
    %20 = tpu.matmul %18, %19, %cst_17 {dimension_numbers = #tpu.dot_dimension_numbers<[1], [0], [0], [1], [0, 0, 1, 1], [], []>} : vector<512x4xf32>, vector<4x128xf32>, vector<512x128xf32> -> vector<512x128xf32>
    %21 = vector.shape_cast %20 : vector<512x128xf32> to vector<32x16x128xf32>
    %c0_18 = arith.constant 0 : index
    %c0_19 = arith.constant 0 : index
    %22 = vector.load %arg2[%c0_18, %c0_19] : memref<32x128xf32, #tpu.memory_space<vmem>>, vector<32x128xf32>
    %23 = vector.shape_cast %22 : vector<32x128xf32> to vector<32x1x128xf32>
    %c0_20 = arith.constant 0 : index
    %c0_21 = arith.constant 0 : index
    %24 = vector.load %arg3[%c0_20, %c0_21] : memref<16x128xf32, #tpu.memory_space<vmem>>, vector<16x128xf32>
    %25 = vector.shape_cast %24 : vector<16x128xf32> to vector<1x16x128xf32>
    %26 = vector.broadcast %23 : vector<32x1x128xf32> to vector<32x16x128xf32>
    %27 = vector.broadcast %25 : vector<1x16x128xf32> to vector<32x16x128xf32>
    %28 = arith.mulf %26, %27 : vector<32x16x128xf32>
    %29 = arith.mulf %28, %10 : vector<32x16x128xf32>
    %30 = arith.addf %29, %16 : vector<32x16x128xf32>
    %31 = arith.mulf %30, %21 : vector<32x16x128xf32>
    %cst_22 = arith.constant 1.000000e+00 : f32
    %32 = vector.broadcast %cst_22 : f32 to vector<32x16x128xf32>
    %33 = arith.subf %21, %32 : vector<32x16x128xf32>
    %cst_23 = arith.constant 2.000000e+00 : f32
    %34 = vector.broadcast %cst_23 : f32 to vector<32x16x128xf32>
    %35 = arith.mulf %33, %34 : vector<32x16x128xf32>
    %36 = arith.addf %31, %35 : vector<32x16x128xf32>
    %37 = vector.shape_cast %36 : vector<32x16x128xf32> to vector<512x128xf32>
    %c0_24 = arith.constant 0 : index
    %c0_25 = arith.constant 0 : index
    %38 = vector.load %arg12[%c0_24, %c0_25] : memref<128x128xf32, #tpu.memory_space<vmem>>, vector<128x128xf32>
    %cst_26 = arith.constant dense<0.000000e+00> : vector<512x128xf32>
    %39 = tpu.matmul %37, %38, %cst_26 {dimension_numbers = #tpu.dot_dimension_numbers<[1], [0], [0], [1], [0, 0, 1, 1], [], []>} : vector<512x128xf32>, vector<128x128xf32>, vector<512x128xf32> -> vector<512x128xf32>
    %c0_27 = arith.constant 0 : index
    %c0_28 = arith.constant 0 : index
    %40 = vector.load %arg13[%c0_27, %c0_28] : memref<1x128xf32, #tpu.memory_space<vmem>>, vector<1x128xf32>
    %41 = vector.broadcast %40 : vector<1x128xf32> to vector<512x128xf32>
    %42 = arith.addf %39, %41 : vector<512x128xf32>
    %43 = vector.shape_cast %42 : vector<512x128xf32> to vector<32x16x128xf32>
    %c0_29 = arith.constant 0 : index
    %c0_30 = arith.constant 0 : index
    %c0_31 = arith.constant 0 : index
    %44 = vector.load %arg17[%c0_29, %c0_30, %c0_31] : memref<32x16x128xf32, #tpu.memory_space<vmem>>, vector<32x16x128xf32>
    tpu.vector_store %arg17[%c0_29, %c0_30, %c0_31], %43 {strides = array<i32>} : memref<32x16x128xf32, #tpu.memory_space<vmem>>, vector<32x16x128xf32>,
    %cst_32 = arith.constant 8.99999948E+9 : f32
    %45 = vector.broadcast %cst_32 : f32 to vector<32x16x128xf32>
    %46 = arith.mulf %33, %45 : vector<32x16x128xf32>
    %47 = arith.addf %31, %46 : vector<32x16x128xf32>
    %c0_33 = arith.constant 0 : index
    %c0_34 = arith.constant 0 : index
    %48 = vector.load %arg18[%c0_33, %c0_34] : memref<32x128xf32, #tpu.memory_space<vmem>>, vector<32x128xf32>
    %cst_35 = arith.constant dense<0xFF800000> : vector<32x128xf32>
    %49 = vector.multi_reduction <maximumf>, %47, %cst_35 [1] : vector<32x16x128xf32> to vector<32x128xf32>
    %50 = arith.maximumf %48, %49 : vector<32x128xf32>
    %51 = arith.subf %48, %50 : vector<32x128xf32>
    %52 = math.exp %51 : vector<32x128xf32>
    %53 = vector.shape_cast %50 : vector<32x128xf32> to vector<32x1x128xf32>
    %54 = vector.broadcast %53 : vector<32x1x128xf32> to vector<32x16x128xf32>
    %55 = arith.subf %47, %54 : vector<32x16x128xf32>
    %56 = math.exp %55 : vector<32x16x128xf32>
    %c0_36 = arith.constant 0 : index
    %c0_37 = arith.constant 0 : index
    %57 = vector.load %arg19[%c0_36, %c0_37] : memref<32x128xf32, #tpu.memory_space<vmem>>, vector<32x128xf32>
    %58 = arith.mulf %52, %57 : vector<32x128xf32>
    %cst_38 = arith.constant dense<0.000000e+00> : vector<32x128xf32>
    %59 = vector.multi_reduction <add>, %56, %cst_38 [1] : vector<32x16x128xf32> to vector<32x128xf32>
    %60 = arith.addf %58, %59 : vector<32x128xf32>
    %c0_39 = arith.constant 0 : index
    %c0_40 = arith.constant 0 : index
    %61 = vector.load %arg19[%c0_39, %c0_40] : memref<32x128xf32, #tpu.memory_space<vmem>>, vector<32x128xf32>
    tpu.vector_store %arg19[%c0_39, %c0_40], %60 {strides = array<i32>} : memref<32x128xf32, #tpu.memory_space<vmem>>, vector<32x128xf32>,
    %c0_41 = arith.constant 0 : index
    %c0_42 = arith.constant 0 : index
    %62 = vector.load %arg20[%c0_41, %c0_42] : memref<32x128xf32, #tpu.memory_space<vmem>>, vector<32x128xf32>
    %63 = arith.mulf %52, %62 : vector<32x128xf32>
    %c0_43 = arith.constant 0 : index
    %c0_44 = arith.constant 0 : index
    %64 = vector.load %arg4[%c0_43, %c0_44] : memref<16x128xf32, #tpu.memory_space<vmem>>, vector<16x128xf32>
    %65 = vector.shape_cast %64 : vector<16x128xf32> to vector<1x16x128xf32>
    %66 = vector.broadcast %65 : vector<1x16x128xf32> to vector<32x16x128xf32>
    %67 = arith.mulf %56, %66 : vector<32x16x128xf32>
    %cst_45 = arith.constant dense<0.000000e+00> : vector<32x128xf32>
    %68 = vector.multi_reduction <add>, %67, %cst_45 [1] : vector<32x16x128xf32> to vector<32x128xf32>
    %69 = arith.addf %63, %68 : vector<32x128xf32>
    %c0_46 = arith.constant 0 : index
    %c0_47 = arith.constant 0 : index
    %70 = vector.load %arg20[%c0_46, %c0_47] : memref<32x128xf32, #tpu.memory_space<vmem>>, vector<32x128xf32>
    tpu.vector_store %arg20[%c0_46, %c0_47], %69 {strides = array<i32>} : memref<32x128xf32, #tpu.memory_space<vmem>>, vector<32x128xf32>,
    %c0_48 = arith.constant 0 : index
    %c0_49 = arith.constant 0 : index
    %71 = vector.load %arg18[%c0_48, %c0_49] : memref<32x128xf32, #tpu.memory_space<vmem>>, vector<32x128xf32>
    tpu.vector_store %arg18[%c0_48, %c0_49], %50 {strides = array<i32>} : memref<32x128xf32, #tpu.memory_space<vmem>>, vector<32x128xf32>,
    %c1_i32 = arith.constant 1 : i32
    %72 = arith.cmpi eq, %arg1, %c1_i32 : i32
    %73 = arith.extui %72 : i1 to i32
    %c0_i32_50 = arith.constant 0 : i32
    %74 = arith.cmpi ne, %73, %c0_i32_50 : i32
    scf.if %74 {
      %c0_51 = arith.constant 0 : index
      %c0_52 = arith.constant 0 : index
      %75 = vector.load %arg18[%c0_51, %c0_52] : memref<32x128xf32, #tpu.memory_space<vmem>>, vector<32x128xf32>
      %c0_53 = arith.constant 0 : index
      %c0_54 = arith.constant 0 : index
      %76 = vector.load %arg19[%c0_53, %c0_54] : memref<32x128xf32, #tpu.memory_space<vmem>>, vector<32x128xf32>
      %c0_55 = arith.constant 0 : index
      %c0_56 = arith.constant 0 : index
      %77 = vector.load %arg20[%c0_55, %c0_56] : memref<32x128xf32, #tpu.memory_space<vmem>>, vector<32x128xf32>
      %78 = vector.extract_strided_slice %75 {offsets = [0, 0], sizes = [32, 32], strides = [1, 1]} : vector<32x128xf32> to vector<32x32xf32>
      %79 = vector.extract_strided_slice %75 {offsets = [0, 32], sizes = [32, 32], strides = [1, 1]} : vector<32x128xf32> to vector<32x32xf32>
      %80 = arith.maximumf %78, %79 : vector<32x32xf32>
      %81 = vector.extract_strided_slice %75 {offsets = [0, 64], sizes = [32, 32], strides = [1, 1]} : vector<32x128xf32> to vector<32x32xf32>
      %82 = arith.maximumf %80, %81 : vector<32x32xf32>
      %83 = vector.extract_strided_slice %75 {offsets = [0, 96], sizes = [32, 32], strides = [1, 1]} : vector<32x128xf32> to vector<32x32xf32>
      %84 = arith.maximumf %82, %83 : vector<32x32xf32>
      %cst_57 = arith.constant 0.000000e+00 : f32
      %85 = vector.broadcast %cst_57 : f32 to vector<32x32xf32>
      %cst_58 = arith.constant 0.000000e+00 : f32
      %86 = vector.broadcast %cst_58 : f32 to vector<32x32xf32>
      %87 = vector.extract_strided_slice %75 {offsets = [0, 0], sizes = [32, 32], strides = [1, 1]} : vector<32x128xf32> to vector<32x32xf32>
      %88 = arith.subf %87, %84 : vector<32x32xf32>
      %89 = math.exp %88 : vector<32x32xf32>
      %90 = vector.extract_strided_slice %76 {offsets = [0, 0], sizes = [32, 32], strides = [1, 1]} : vector<32x128xf32> to vector<32x32xf32>
      %91 = arith.mulf %90, %89 : vector<32x32xf32>
      %92 = arith.addf %85, %91 : vector<32x32xf32>
      %93 = vector.extract_strided_slice %77 {offsets = [0, 0], sizes = [32, 32], strides = [1, 1]} : vector<32x128xf32> to vector<32x32xf32>
      %94 = arith.mulf %93, %89 : vector<32x32xf32>
      %95 = arith.addf %86, %94 : vector<32x32xf32>
      %96 = vector.extract_strided_slice %75 {offsets = [0, 32], sizes = [32, 32], strides = [1, 1]} : vector<32x128xf32> to vector<32x32xf32>
      %97 = arith.subf %96, %84 : vector<32x32xf32>
      %98 = math.exp %97 : vector<32x32xf32>
      %99 = vector.extract_strided_slice %76 {offsets = [0, 32], sizes = [32, 32], strides = [1, 1]} : vector<32x128xf32> to vector<32x32xf32>
      %100 = arith.mulf %99, %98 : vector<32x32xf32>
      %101 = arith.addf %92, %100 : vector<32x32xf32>
      %102 = vector.extract_strided_slice %77 {offsets = [0, 32], sizes = [32, 32], strides = [1, 1]} : vector<32x128xf32> to vector<32x32xf32>
      %103 = arith.mulf %102, %98 : vector<32x32xf32>
      %104 = arith.addf %95, %103 : vector<32x32xf32>
      %105 = vector.extract_strided_slice %75 {offsets = [0, 64], sizes = [32, 32], strides = [1, 1]} : vector<32x128xf32> to vector<32x32xf32>
      %106 = arith.subf %105, %84 : vector<32x32xf32>
      %107 = math.exp %106 : vector<32x32xf32>
      %108 = vector.extract_strided_slice %76 {offsets = [0, 64], sizes = [32, 32], strides = [1, 1]} : vector<32x128xf32> to vector<32x32xf32>
      %109 = arith.mulf %108, %107 : vector<32x32xf32>
      %110 = arith.addf %101, %109 : vector<32x32xf32>
      %111 = vector.extract_strided_slice %77 {offsets = [0, 64], sizes = [32, 32], strides = [1, 1]} : vector<32x128xf32> to vector<32x32xf32>
      %112 = arith.mulf %111, %107 : vector<32x32xf32>
      %113 = arith.addf %104, %112 : vector<32x32xf32>
      %114 = vector.extract_strided_slice %75 {offsets = [0, 96], sizes = [32, 32], strides = [1, 1]} : vector<32x128xf32> to vector<32x32xf32>
      %115 = arith.subf %114, %84 : vector<32x32xf32>
      %116 = math.exp %115 : vector<32x32xf32>
      %117 = vector.extract_strided_slice %76 {offsets = [0, 96], sizes = [32, 32], strides = [1, 1]} : vector<32x128xf32> to vector<32x32xf32>
      %118 = arith.mulf %117, %116 : vector<32x32xf32>
      %119 = arith.addf %110, %118 : vector<32x32xf32>
      %120 = vector.extract_strided_slice %77 {offsets = [0, 96], sizes = [32, 32], strides = [1, 1]} : vector<32x128xf32> to vector<32x32xf32>
      %121 = arith.mulf %120, %116 : vector<32x32xf32>
      %122 = arith.addf %113, %121 : vector<32x32xf32>
      %cst_59 = arith.constant 1.000000e+00 : f32
      %123 = vector.broadcast %cst_59 : f32 to vector<32x32xf32>
      %124 = arith.divf %123, %119 : vector<32x32xf32>
      %125 = arith.mulf %122, %124 : vector<32x32xf32>
      %c0_60 = arith.constant 0 : index
      %c0_61 = arith.constant 0 : index
      %126 = vector.load %arg14[%c0_60, %c0_61] : memref<32x32xf32, #tpu.memory_space<vmem>>, vector<32x32xf32>
      %cst_62 = arith.constant dense<0.000000e+00> : vector<32x32xf32>
      %127 = tpu.matmul %125, %126, %cst_62 {dimension_numbers = #tpu.dot_dimension_numbers<[1], [0], [0], [1], [0, 0, 1, 1], [], []>} : vector<32x32xf32>, vector<32x32xf32>, vector<32x32xf32> -> vector<32x32xf32>
      %c0_63 = arith.constant 0 : index
      %c0_64 = arith.constant 0 : index
      %128 = vector.load %arg15[%c0_63, %c0_64] : memref<1x32xf32, #tpu.memory_space<vmem>>, vector<1x32xf32>
      %129 = vector.broadcast %128 : vector<1x32xf32> to vector<32x32xf32>
      %130 = arith.addf %127, %129 : vector<32x32xf32>
      %c0_65 = arith.constant 0 : index
      %c0_66 = arith.constant 0 : index
      %131 = vector.load %arg16[%c0_65, %c0_66] : memref<32x32xf32, #tpu.memory_space<vmem>>, vector<32x32xf32>
      tpu.vector_store %arg16[%c0_65, %c0_66], %130 {strides = array<i32>} : memref<32x32xf32, #tpu.memory_space<vmem>>, vector<32x32xf32>,
    } else {
    }
    return
  }
  func.func @transform_0(%arg0: i32, %arg1: i32) -> (i32, i32) {
    %c0_i32 = arith.constant 0 : i32
    %c0_i32_0 = arith.constant 0 : i32
    return %arg0, %c0_i32 : i32, i32
  }
  func.func @transform_1(%arg0: i32, %arg1: i32) -> (i32, i32) {
    %c0_i32 = arith.constant 0 : i32
    %c0_i32_0 = arith.constant 0 : i32
    return %arg1, %c0_i32 : i32, i32
  }
  func.func @transform_2(%arg0: i32, %arg1: i32) -> (i32, i32) {
    %c0_i32 = arith.constant 0 : i32
    %c0_i32_0 = arith.constant 0 : i32
    return %arg1, %c0_i32 : i32, i32
  }
  func.func @transform_3(%arg0: i32, %arg1: i32) -> (i32, i32, i32) {
    %c0_i32 = arith.constant 0 : i32
    %c0_i32_0 = arith.constant 0 : i32
    return %arg0, %arg1, %c0_i32 : i32, i32, i32
  }
  func.func @transform_4(%arg0: i32, %arg1: i32) -> (i32, i32, i32) {
    %c0_i32 = arith.constant 0 : i32
    %c0_i32_0 = arith.constant 0 : i32
    return %arg0, %arg1, %c0_i32 : i32, i32, i32
  }
  func.func @transform_5(%arg0: i32, %arg1: i32) -> (i32, i32) {
    %c0_i32 = arith.constant 0 : i32
    %c0_i32_0 = arith.constant 0 : i32
    %c0_i32_1 = arith.constant 0 : i32
    return %c0_i32, %c0_i32_0 : i32, i32
  }
  func.func @transform_6(%arg0: i32, %arg1: i32) -> (i32, i32) {
    %c0_i32 = arith.constant 0 : i32
    %c0_i32_0 = arith.constant 0 : i32
    %c0_i32_1 = arith.constant 0 : i32
    return %c0_i32, %c0_i32_0 : i32, i32
  }
  func.func @transform_7(%arg0: i32, %arg1: i32) -> (i32, i32) {
    %c0_i32 = arith.constant 0 : i32
    %c0_i32_0 = arith.constant 0 : i32
    %c0_i32_1 = arith.constant 0 : i32
    return %c0_i32, %c0_i32_0 : i32, i32
  }
  func.func @transform_8(%arg0: i32, %arg1: i32) -> (i32, i32) {
    %c0_i32 = arith.constant 0 : i32
    %c0_i32_0 = arith.constant 0 : i32
    %c0_i32_1 = arith.constant 0 : i32
    return %c0_i32, %c0_i32_0 : i32, i32
  }
  func.func @transform_9(%arg0: i32, %arg1: i32) -> (i32, i32) {
    %c0_i32 = arith.constant 0 : i32
    %c0_i32_0 = arith.constant 0 : i32
    %c0_i32_1 = arith.constant 0 : i32
    return %c0_i32, %c0_i32_0 : i32, i32
  }
  func.func @transform_10(%arg0: i32, %arg1: i32) -> (i32, i32) {
    %c0_i32 = arith.constant 0 : i32
    %c0_i32_0 = arith.constant 0 : i32
    %c0_i32_1 = arith.constant 0 : i32
    return %c0_i32, %c0_i32_0 : i32, i32
  }
  func.func @transform_11(%arg0: i32, %arg1: i32) -> (i32, i32) {
    %c0_i32 = arith.constant 0 : i32
    %c0_i32_0 = arith.constant 0 : i32
    %c0_i32_1 = arith.constant 0 : i32
    return %c0_i32, %c0_i32_0 : i32, i32
  }
  func.func @transform_12(%arg0: i32, %arg1: i32) -> (i32, i32) {
    %c0_i32 = arith.constant 0 : i32
    %c0_i32_0 = arith.constant 0 : i32
    %c0_i32_1 = arith.constant 0 : i32
    return %c0_i32, %c0_i32_0 : i32, i32
  }
  func.func @transform_13(%arg0: i32, %arg1: i32) -> (i32, i32) {
    %c0_i32 = arith.constant 0 : i32
    %c0_i32_0 = arith.constant 0 : i32
    %c0_i32_1 = arith.constant 0 : i32
    return %c0_i32, %c0_i32_0 : i32, i32
  }
  func.func @transform_14(%arg0: i32, %arg1: i32) -> (i32, i32) {
    %c0_i32 = arith.constant 0 : i32
    %c0_i32_0 = arith.constant 0 : i32
    return %arg0, %c0_i32 : i32, i32
  }
  func.func @transform_15(%arg0: i32, %arg1: i32) -> (i32, i32, i32) {
    %c0_i32 = arith.constant 0 : i32
    %c0_i32_0 = arith.constant 0 : i32
    return %arg0, %arg1, %c0_i32 : i32, i32, i32
  }
}

</mosaic_0001>

<llo_original>
// kernel: tpu_custom_call.1
$region0: #{tpu_custom_call.1}
  #allocation0 [shape = 'u32[]', space=smem, size = 0x4, offset = 0x4, fixed_abs, tag = 'smem constant byte address 0x4 - core index']
  #allocation1 [shape = 'u32[144,128]{1,0:T(1,128)}', space=vmem, size = 0x12000, scoped, tag = 'internal scratch']
  #allocation2 [shape = 'f32[32,128]{1,0:T(8,128)}', space=vmem, size = 0x4000, scoped, tag = 'scratch operand']
  #allocation3 [shape = 'f32[32,128]{1,0:T(8,128)}', space=vmem, size = 0x4000, scoped, tag = 'scratch operand']
  #allocation4 [shape = 'f32[32,128]{1,0:T(8,128)}', space=vmem, size = 0x4000, scoped, tag = 'scratch operand']
  #allocation17 [shape = 's32[]', space=sflag, size = 0x4, offset = 0, fixed_abs, tag = 'sflag constant byte address 0x0 - dummy sync flag']
  %s0 = inlined_call_operand.vmem [shape: f32[128,128], index: 0, kind: input, shape index: {}]
  %s1 = inlined_call_operand.hbm [shape: f32[32,128], index: 1, kind: input, shape index: {}]
  %s2 = inlined_call_operand.hbm [shape: f32[32,128], index: 2, kind: input, shape index: {}]
  %s3 = inlined_call_operand.vmem [shape: f32[128,32,128], index: 3, kind: input, shape index: {}]
  %s4 = inlined_call_operand.vmem [shape: f32[128,32,4], index: 4, kind: input, shape index: {}]
  %s5 = inlined_call_operand.vmem [shape: f32[4,128], index: 5, kind: input, shape index: {}]
  %s6 = inlined_call_operand.hbm [shape: f32[128,128], index: 6, kind: input, shape index: {}]
  %s7 = inlined_call_operand.vmem [shape: f32[1,128], index: 7, kind: input, shape index: {}]
  %s8 = inlined_call_operand.hbm [shape: f32[128,128], index: 8, kind: input, shape index: {}]
  %s9 = inlined_call_operand.vmem [shape: f32[1,128], index: 9, kind: input, shape index: {}]
  %s10 = inlined_call_operand.hbm [shape: f32[128,128], index: 10, kind: input, shape index: {}]
  %s11 = inlined_call_operand.vmem [shape: f32[1,128], index: 11, kind: input, shape index: {}]
  %s12 = inlined_call_operand.vmem [shape: f32[32,32], index: 12, kind: input, shape index: {}]
  %s13 = inlined_call_operand.vmem [shape: f32[1,32], index: 13, kind: input, shape index: {}]
  %s14 = inlined_call_operand.vmem [shape: f32[128,32], index: 14, kind: output, shape index: {0}]
  %s15 = inlined_call_operand.hbm [shape: f32[128,32,128], index: 15, kind: output, shape index: {1}]
  %16 = xla_tuple %s14, %s15
  %s17 = sld [smem:[#allocation0]]
  $region201: #{tpu_custom_call.1} parent=0
    _
  %s19 = ssub.s32 1, %s17
  %s20 = scalar_select 0, %s19, %s17
  $region1: #{tpu_custom_call.1} parent=0
    #allocation5 [shape = 'u8[16384]{0}', space=vmem, size = 0x4000, scoped, tag = 'input window, operand 1']
    #allocation6 [shape = 's32[2]{0}', space=sflag, size = 0x8, scoped, tag = 'scoped memory for tpu_custom_call.1']
    #allocation7 [shape = 's32[2]{0}', space=sflag, size = 0x8, scoped, tag = 'scoped memory for tpu_custom_call.1']
    #allocation8 [shape = 'u8[16384]{0}', space=vmem, size = 0x4000, scoped, tag = 'input window, operand 2']
    #allocation9 [shape = 's32[2]{0}', space=sflag, size = 0x8, scoped, tag = 'scoped memory for tpu_custom_call.1']
    #allocation10 [shape = 'u8[524288]{0}', space=vmem, size = 0x80000, scoped, tag = 'input window, operand 3']
    #allocation11 [shape = 'u8[524288]{0}', space=vmem, size = 0x80000, scoped, tag = 'input window, operand 4']
    #allocation12 [shape = 'u8[65536]{0}', space=vmem, size = 0x10000, scoped, tag = 'input window, operand 6, single buffered']
    #allocation13 [shape = 'u8[65536]{0}', space=vmem, size = 0x10000, scoped, tag = 'input window, operand 8, single buffered']
    #allocation14 [shape = 's32[1]{0}', space=sflag, size = 0x4, scoped, tag = 'scoped memory for tpu_custom_call.1']
    #allocation15 [shape = 'u8[65536]{0}', space=vmem, size = 0x10000, scoped, tag = 'input window, operand 10, single buffered']
    #allocation16 [shape = 'u8[524288]{0}', space=vmem, size = 0x80000, scoped, tag = 'output window, operand 1']
    %21 = vsyncpa [#allocation6], 0
    %s22 = scalar_lea.sflag [#allocation6], 1
    %23 = vsyncpa %s22, 0
    %24 = vsyncpa [#allocation9], 0
    %s25 = scalar_lea.sflag [#allocation9], 1
    %26 = vsyncpa %s25, 0
    %27 = vsyncpa [#allocation14], 0
    %28 = vsyncpa [#allocation7], 0
    %s29 = scalar_lea.sflag [#allocation7], 1
    %30 = vsyncpa %s29, 0
    loop: start=0, step=1, limit=10
    $region2: #{tpu_custom_call.1} parent=1 // loop_pre_header
      _
    $region3: #{tpu_custom_call.1} parent=1 // loop_header
      %s32 = sphi 0, %s36
      %p33 = scmp.ge.s32.totalorder %s32, 10
      %s39 = sphi 0, %s51
      %s40 = sphi 0, %s47
      %s41 = sphi 0, %s39
      %s42 = sphi 0, %s40
      %s43 = sphi 0, %s41
      %s44 = sphi 0, %s42
      %s54 = sphi 0, %s56
      %s57 = sphi 0, %s54
      %s58 = sphi 0, %s57
      %s74 = sphi 0, %s58
      %s80 = sphi 0, %s82
      %s83 = sphi 0, %s80
      %s84 = sphi 0, %s83
      %s100 = sphi 0, %s84
      %s106 = sphi 0, %s108
      %s109 = sphi 0, %s106
      %s110 = sphi 0, %s109
      %s126 = sphi 0, %s110
      %s134 = sphi 0, %s136
      %s137 = sphi 0, %s134
      %s138 = sphi 0, %s137
      %s154 = sphi 0, %s138
      %s162 = sphi 0, %s164
      %s165 = sphi 0, %s162
      %s166 = sphi 0, %s165
      %s182 = sphi 0, %s166
      %s186 = sphi 0, %s186
      %s188 = sphi 0, %s186
      %s189 = sphi 0, %s188
      %s203 = sphi 0, %s189
      %s207 = sphi 0, %s207
      %s209 = sphi 0, %s207
      %s210 = sphi 0, %s209
      %s224 = sphi 0, %s210
      %s228 = sphi 0, %s228
      %s230 = sphi 0, %s228
      %s231 = sphi 0, %s230
      %s245 = sphi 0, %s231
      %s249 = sphi 0, %s249
      %s251 = sphi 0, %s249
      %s252 = sphi 0, %s251
      %s266 = sphi 0, %s252
      %s270 = sphi 0, %s270
      %s272 = sphi 0, %s270
      %s273 = sphi 0, %s272
      %s287 = sphi 0, %s273
      %s291 = sphi 0, %s291
      %s293 = sphi 0, %s291
      %s294 = sphi 0, %s293
      %s308 = sphi 0, %s294
      %s312 = sphi 0, %s312
      %s314 = sphi 0, %s312
      %s315 = sphi 0, %s314
      %s329 = sphi 0, %s315
      %s333 = sphi 0, %s333
      %s335 = sphi 0, %s333
      %s336 = sphi 0, %s335
      %s350 = sphi 0, %s336
      %s354 = sphi 0, %s354
      %s356 = sphi 0, %s354
      %s357 = sphi 0, %s356
      %s371 = sphi 0, %s357
      %s377 = sphi 0, %s379
      %s380 = sphi 0, %s377
      %s381 = sphi 0, %s380
      %s397 = sphi 0, %s381
      %s405 = sphi 0, %s407
      %s408 = sphi 0, %s405
      %s409 = sphi 0, %s408
      %s425 = sphi 0, %s409
    $region4: #{tpu_custom_call.1} parent=1 // loop_header_branch
      %35 = sbr.rel (%p33) target = $region8
    $region5: #{tpu_custom_call.1} parent=1 // loop_body
      %s37 = ssub.s32 %s32, 1
      %s38 = ssub.s32 %s32, 2
      %s45 = sadd.s32 1, %s40
      %p46 = scmp.ge.s32.totalorder %s45, 2
      %s47 = scalar_select %p46, 0, %s45
      %s48 = sadd.s32 1, %s39
      %s49 = scalar_select %p46, %s48, %s39
      %p50 = scmp.ge.s32.totalorder %s49, 4
      %s51 = scalar_select %p50, 0, %s49
      %s52 = ssub.s32 %s39, %s51
      %p53 = scmp.eq.s32.totalorder %s52, 0
      %s55 = sadd.s32 %s54, 1
      %s56 = scalar_select %p53, %s54, %s55
      %p59 = pneg %p53
      %p60 = scmp.eq.s32.totalorder %s32, 7
      %p61 = por %p59, %p60
      %p62 = scmp.ne.s32.totalorder %s54, %s57
      %p63 = scmp.eq.s32.totalorder %s32, 0
      %p64 = por %p62, %p63
      %p65 = scmp.ne.s32.totalorder %s54, %s57
      %p66 = scmp.eq.s32.totalorder %s37, 7
      %p67 = por %p65, %p66
      %p68 = scmp.ne.s32.totalorder %s57, %s58
      %p69 = scmp.eq.s32.totalorder %s37, 0
      %p70 = por %p68, %p69
      %p71 = scmp.ne.s32.totalorder %s57, %s58
      %p72 = scmp.eq.s32.totalorder %s38, 7
      %p73 = por %p71, %p72
      %p75 = scmp.ne.s32.totalorder %s58, %s74
      %p76 = scmp.eq.s32.totalorder %s38, 0
      %p77 = por %p75, %p76
      %s78 = ssub.s32 %s40, %s47
      %p79 = scmp.eq.s32.totalorder %s78, 0
      %s81 = sadd.s32 %s80, 1
      %s82 = scalar_select %p79, %s80, %s81
      %p85 = pneg %p79
      %p86 = scmp.eq.s32.totalorder %s32, 7
      %p87 = por %p85, %p86
      %p88 = scmp.ne.s32.totalorder %s80, %s83
      %p89 = scmp.eq.s32.totalorder %s32, 0
      %p90 = por %p88, %p89
      %p91 = scmp.ne.s32.totalorder %s80, %s83
      %p92 = scmp.eq.s32.totalorder %s37, 7
      %p93 = por %p91, %p92
      %p94 = scmp.ne.s32.totalorder %s83, %s84
      %p95 = scmp.eq.s32.totalorder %s37, 0
      %p96 = por %p94, %p95
      %p97 = scmp.ne.s32.totalorder %s83, %s84
      %p98 = scmp.eq.s32.totalorder %s38, 7
      %p99 = por %p97, %p98
      %p101 = scmp.ne.s32.totalorder %s84, %s100
      %p102 = scmp.eq.s32.totalorder %s38, 0
      %p103 = por %p101, %p102
      %s104 = ssub.s32 %s40, %s47
      %p105 = scmp.eq.s32.totalorder %s104, 0
      %s107 = sadd.s32 %s106, 1
      %s108 = scalar_select %p105, %s106, %s107
      %p111 = pneg %p105
      %p112 = scmp.eq.s32.totalorder %s32, 7
      %p113 = por %p111, %p112
      %p114 = scmp.ne.s32.totalorder %s106, %s109
      %p115 = scmp.eq.s32.totalorder %s32, 0
      %p116 = por %p114, %p115
      %p117 = scmp.ne.s32.totalorder %s106, %s109
      %p118 = scmp.eq.s32.totalorder %s37, 7
      %p119 = por %p117, %p118
      %p120 = scmp.ne.s32.totalorder %s109, %s110
      %p121 = scmp.eq.s32.totalorder %s37, 0
      %p122 = por %p120, %p121
      %p123 = scmp.ne.s32.totalorder %s109, %s110
      %p124 = scmp.eq.s32.totalorder %s38, 7
      %p125 = por %p123, %p124
      %p127 = scmp.ne.s32.totalorder %s110, %s126
      %p128 = scmp.eq.s32.totalorder %s38, 0
      %p129 = por %p127, %p128
      %s130 = ssub.s32 %s39, %s51
      %s131 = ssub.s32 %s40, %s47
      %s132 = sor.u32 %s130, %s131
      %p133 = scmp.eq.s32.totalorder %s132, 0
      %s135 = sadd.s32 %s134, 1
      %s136 = scalar_select %p133, %s134, %s135
      %p139 = pneg %p133
      %p140 = scmp.eq.s32.totalorder %s32, 7
      %p141 = por %p139, %p140
      %p142 = scmp.ne.s32.totalorder %s134, %s137
      %p143 = scmp.eq.s32.totalorder %s32, 0
      %p144 = por %p142, %p143
      %p145 = scmp.ne.s32.totalorder %s134, %s137
      %p146 = scmp.eq.s32.totalorder %s37, 7
      %p147 = por %p145, %p146
      %p148 = scmp.ne.s32.totalorder %s137, %s138
      %p149 = scmp.eq.s32.totalorder %s37, 0
      %p150 = por %p148, %p149
      %p151 = scmp.ne.s32.totalorder %s137, %s138
      %p152 = scmp.eq.s32.totalorder %s38, 7
      %p153 = por %p151, %p152
      %p155 = scmp.ne.s32.totalorder %s138, %s154
      %p156 = scmp.eq.s32.totalorder %s38, 0
      %p157 = por %p155, %p156
      %s158 = ssub.s32 %s39, %s51
      %s159 = ssub.s32 %s40, %s47
      %s160 = sor.u32 %s158, %s159
      %p161 = scmp.eq.s32.totalorder %s160, 0
      %s163 = sadd.s32 %s162, 1
      %s164 = scalar_select %p161, %s162, %s163
      %p167 = pneg %p161
      %p168 = scmp.eq.s32.totalorder %s32, 7
      %p169 = por %p167, %p168
      %p170 = scmp.ne.s32.totalorder %s162, %s165
      %p171 = scmp.eq.s32.totalorder %s32, 0
      %p172 = por %p170, %p171
      %p173 = scmp.ne.s32.totalorder %s162, %s165
      %p174 = scmp.eq.s32.totalorder %s37, 7
      %p175 = por %p173, %p174
      %p176 = scmp.ne.s32.totalorder %s165, %s166
      %p177 = scmp.eq.s32.totalorder %s37, 0
      %p178 = por %p176, %p177
      %p179 = scmp.ne.s32.totalorder %s165, %s166
      %p180 = scmp.eq.s32.totalorder %s38, 7
      %p181 = por %p179, %p180
      %p183 = scmp.ne.s32.totalorder %s166, %s182
      %p184 = scmp.eq.s32.totalorder %s38, 0
      %p185 = por %p183, %p184
      %s187 = sadd.s32 %s186, 1
      %p190 = scmp.eq.s32.totalorder %s32, 7
      %p191 = scmp.ne.s32.totalorder %s186, %s188
      %p192 = scmp.eq.s32.totalorder %s32, 0
      %p193 = por %p191, %p192
      %p194 = scmp.ne.s32.totalorder %s186, %s188
      %p195 = scmp.eq.s32.totalorder %s37, 7
      %p196 = por %p194, %p195
      %p197 = scmp.ne.s32.totalorder %s188, %s189
      %p198 = scmp.eq.s32.totalorder %s37, 0
      %p199 = por %p197, %p198
      %p200 = scmp.ne.s32.totalorder %s188, %s189
      %p201 = scmp.eq.s32.totalorder %s38, 7
      %p202 = por %p200, %p201
      %p204 = scmp.ne.s32.totalorder %s189, %s203
      %p205 = scmp.eq.s32.totalorder %s38, 0
      %p206 = por %p204, %p205
      %s208 = sadd.s32 %s207, 1
      %p211 = scmp.eq.s32.totalorder %s32, 7
      %p212 = scmp.ne.s32.totalorder %s207, %s209
      %p213 = scmp.eq.s32.totalorder %s32, 0
      %p214 = por %p212, %p213
      %p215 = scmp.ne.s32.totalorder %s207, %s209
      %p216 = scmp.eq.s32.totalorder %s37, 7
      %p217 = por %p215, %p216
      %p218 = scmp.ne.s32.totalorder %s209, %s210
      %p219 = scmp.eq.s32.totalorder %s37, 0
      %p220 = por %p218, %p219
      %p221 = scmp.ne.s32.totalorder %s209, %s210
      %p222 = scmp.eq.s32.totalorder %s38, 7
      %p223 = por %p221, %p222
      %p225 = scmp.ne.s32.totalorder %s210, %s224
      %p226 = scmp.eq.s32.totalorder %s38, 0
      %p227 = por %p225, %p226
      %s229 = sadd.s32 %s228, 1
      %p232 = scmp.eq.s32.totalorder %s32, 7
      %p233 = scmp.ne.s32.totalorder %s228, %s230
      %p234 = scmp.eq.s32.totalorder %s32, 0
      %p235 = por %p233, %p234
      %p236 = scmp.ne.s32.totalorder %s228, %s230
      %p237 = scmp.eq.s32.totalorder %s37, 7
      %p238 = por %p236, %p237
      %p239 = scmp.ne.s32.totalorder %s230, %s231
      %p240 = scmp.eq.s32.totalorder %s37, 0
      %p241 = por %p239, %p240
      %p242 = scmp.ne.s32.totalorder %s230, %s231
      %p243 = scmp.eq.s32.totalorder %s38, 7
      %p244 = por %p242, %p243
      %p246 = scmp.ne.s32.totalorder %s231, %s245
      %p247 = scmp.eq.s32.totalorder %s38, 0
      %p248 = por %p246, %p247
      %s250 = sadd.s32 %s249, 1
      %p253 = scmp.eq.s32.totalorder %s32, 7
      %p254 = scmp.ne.s32.totalorder %s249, %s251
      %p255 = scmp.eq.s32.totalorder %s32, 0
      %p256 = por %p254, %p255
      %p257 = scmp.ne.s32.totalorder %s249, %s251
      %p258 = scmp.eq.s32.totalorder %s37, 7
      %p259 = por %p257, %p258
      %p260 = scmp.ne.s32.totalorder %s251, %s252
      %p261 = scmp.eq.s32.totalorder %s37, 0
      %p262 = por %p260, %p261
      %p263 = scmp.ne.s32.totalorder %s251, %s252
      %p264 = scmp.eq.s32.totalorder %s38, 7
      %p265 = por %p263, %p264
      %p267 = scmp.ne.s32.totalorder %s252, %s266
      %p268 = scmp.eq.s32.totalorder %s38, 0
      %p269 = por %p267, %p268
      %s271 = sadd.s32 %s270, 1
      %p274 = scmp.eq.s32.totalorder %s32, 7
      %p275 = scmp.ne.s32.totalorder %s270, %s272
      %p276 = scmp.eq.s32.totalorder %s32, 0
      %p277 = por %p275, %p276
      %p278 = scmp.ne.s32.totalorder %s270, %s272
      %p279 = scmp.eq.s32.totalorder %s37, 7
      %p280 = por %p278, %p279
      %p281 = scmp.ne.s32.totalorder %s272, %s273
      %p282 = scmp.eq.s32.totalorder %s37, 0
      %p283 = por %p281, %p282
      %p284 = scmp.ne.s32.totalorder %s272, %s273
      %p285 = scmp.eq.s32.totalorder %s38, 7
      %p286 = por %p284, %p285
      %p288 = scmp.ne.s32.totalorder %s273, %s287
      %p289 = scmp.eq.s32.totalorder %s38, 0
      %p290 = por %p288, %p289
      %s292 = sadd.s32 %s291, 1
      %p295 = scmp.eq.s32.totalorder %s32, 7
      %p296 = scmp.ne.s32.totalorder %s291, %s293
      %p297 = scmp.eq.s32.totalorder %s32, 0
      %p298 = por %p296, %p297
      %p299 = scmp.ne.s32.totalorder %s291, %s293
      %p300 = scmp.eq.s32.totalorder %s37, 7
      %p301 = por %p299, %p300
      %p302 = scmp.ne.s32.totalorder %s293, %s294
      %p303 = scmp.eq.s32.totalorder %s37, 0
      %p304 = por %p302, %p303
      %p305 = scmp.ne.s32.totalorder %s293, %s294
      %p306 = scmp.eq.s32.totalorder %s38, 7
      %p307 = por %p305, %p306
      %p309 = scmp.ne.s32.totalorder %s294, %s308
      %p310 = scmp.eq.s32.totalorder %s38, 0
      %p311 = por %p309, %p310
      %s313 = sadd.s32 %s312, 1
      %p316 = scmp.eq.s32.totalorder %s32, 7
      %p317 = scmp.ne.s32.totalorder %s312, %s314
      %p318 = scmp.eq.s32.totalorder %s32, 0
      %p319 = por %p317, %p318
      %p320 = scmp.ne.s32.totalorder %s312, %s314
      %p321 = scmp.eq.s32.totalorder %s37, 7
      %p322 = por %p320, %p321
      %p323 = scmp.ne.s32.totalorder %s314, %s315
      %p324 = scmp.eq.s32.totalorder %s37, 0
      %p325 = por %p323, %p324
      %p326 = scmp.ne.s32.totalorder %s314, %s315
      %p327 = scmp.eq.s32.totalorder %s38, 7
      %p328 = por %p326, %p327
      %p330 = scmp.ne.s32.totalorder %s315, %s329
      %p331 = scmp.eq.s32.totalorder %s38, 0
      %p332 = por %p330, %p331
      %s334 = sadd.s32 %s333, 1
      %p337 = scmp.eq.s32.totalorder %s32, 7
      %p338 = scmp.ne.s32.totalorder %s333, %s335
      %p339 = scmp.eq.s32.totalorder %s32, 0
      %p340 = por %p338, %p339
      %p341 = scmp.ne.s32.totalorder %s333, %s335
      %p342 = scmp.eq.s32.totalorder %s37, 7
      %p343 = por %p341, %p342
      %p344 = scmp.ne.s32.totalorder %s335, %s336
      %p345 = scmp.eq.s32.totalorder %s37, 0
      %p346 = por %p344, %p345
      %p347 = scmp.ne.s32.totalorder %s335, %s336
      %p348 = scmp.eq.s32.totalorder %s38, 7
      %p349 = por %p347, %p348
      %p351 = scmp.ne.s32.totalorder %s336, %s350
      %p352 = scmp.eq.s32.totalorder %s38, 0
      %p353 = por %p351, %p352
      %s355 = sadd.s32 %s354, 1
      %p358 = scmp.eq.s32.totalorder %s32, 7
      %p359 = scmp.ne.s32.totalorder %s354, %s356
      %p360 = scmp.eq.s32.totalorder %s32, 0
      %p361 = por %p359, %p360
      %p362 = scmp.ne.s32.totalorder %s354, %s356
      %p363 = scmp.eq.s32.totalorder %s37, 7
      %p364 = por %p362, %p363
      %p365 = scmp.ne.s32.totalorder %s356, %s357
      %p366 = scmp.eq.s32.totalorder %s37, 0
      %p367 = por %p365, %p366
      %p368 = scmp.ne.s32.totalorder %s356, %s357
      %p369 = scmp.eq.s32.totalorder %s38, 7
      %p370 = por %p368, %p369
      %p372 = scmp.ne.s32.totalorder %s357, %s371
      %p373 = scmp.eq.s32.totalorder %s38, 0
      %p374 = por %p372, %p373
      %s375 = ssub.s32 %s39, %s51
      %p376 = scmp.eq.s32.totalorder %s375, 0
      %s378 = sadd.s32 %s377, 1
      %s379 = scalar_select %p376, %s377, %s378
      %p382 = pneg %p376
      %p383 = scmp.eq.s32.totalorder %s32, 7
      %p384 = por %p382, %p383
      %p385 = scmp.ne.s32.totalorder %s377, %s380
      %p386 = scmp.eq.s32.totalorder %s32, 0
      %p387 = por %p385, %p386
      %p388 = scmp.ne.s32.totalorder %s377, %s380
      %p389 = scmp.eq.s32.totalorder %s37, 7
      %p390 = por %p388, %p389
      %p391 = scmp.ne.s32.totalorder %s380, %s381
      %p392 = scmp.eq.s32.totalorder %s37, 0
      %p393 = por %p391, %p392
      %p394 = scmp.ne.s32.totalorder %s380, %s381
      %p395 = scmp.eq.s32.totalorder %s38, 7
      %p396 = por %p394, %p395
      %p398 = scmp.ne.s32.totalorder %s381, %s397
      %p399 = scmp.eq.s32.totalorder %s38, 0
      %p400 = por %p398, %p399
      %s401 = ssub.s32 %s39, %s51
      %s402 = ssub.s32 %s40, %s47
      %s403 = sor.u32 %s401, %s402
      %p404 = scmp.eq.s32.totalorder %s403, 0
      %s406 = sadd.s32 %s405, 1
      %s407 = scalar_select %p404, %s405, %s406
      %p410 = pneg %p404
      %p411 = scmp.eq.s32.totalorder %s32, 7
      %p412 = por %p410, %p411
      %p413 = scmp.ne.s32.totalorder %s405, %s408
      %p414 = scmp.eq.s32.totalorder %s32, 0
      %p415 = por %p413, %p414
      %p416 = scmp.ne.s32.totalorder %s405, %s408
      %p417 = scmp.eq.s32.totalorder %s37, 7
      %p418 = por %p416, %p417
      %p419 = scmp.ne.s32.totalorder %s408, %s409
      %p420 = scmp.eq.s32.totalorder %s37, 0
      %p421 = por %p419, %p420
      %p422 = scmp.ne.s32.totalorder %s408, %s409
      %p423 = scmp.eq.s32.totalorder %s38, 7
      %p424 = por %p422, %p423
      %p426 = scmp.ne.s32.totalorder %s409, %s425
      %p427 = scmp.eq.s32.totalorder %s38, 0
      %p428 = por %p426, %p427
      %p429 = scmp.le.s32.totalorder 1, %s32
      %p430 = scmp.lt.s32.totalorder %s32, 9
      %p431 = pnand %p429, %p430
      %p432 = pneg %p431
      // Predicated region
      $region9: #{tpu_custom_call.1} parent=5 // pred_check
        _
      $region10: #{tpu_custom_call.1} parent=5 // pred_check_branch
        %434 = sbr.rel (%p431) target = $region12
      $region11: #{tpu_custom_call.1} parent=5 // pred_region
        %s435 = ssub.s32 %s32, 1
        // Predicated region
        $region13: #{tpu_custom_call.1} parent=11 // pred_check
          %p436 = pneg %p199
        $region14: #{tpu_custom_call.1} parent=11 // pred_check_branch
          %438 = sbr.rel (%p436) target = $region16
        $region15: #{tpu_custom_call.1} parent=11 // pred_region
          _
        $region16: #{tpu_custom_call.1} parent=11 // pred_fallthru
          _
        // Predicated region
        $region17: #{tpu_custom_call.1} parent=11 // pred_check
          %p439 = pneg %p220
        $region18: #{tpu_custom_call.1} parent=11 // pred_check_branch
          %441 = sbr.rel (%p439) target = $region20
        $region19: #{tpu_custom_call.1} parent=11 // pred_region
          %s443 = ssub.s32 2048, 2048
          %444 = vsyncadd [#allocation9], %s443
          %s445 = sshll.u32 [#allocation12], 4
          %s446 = int_to_ptr.vmem [resolvable:$true] %s445
          %451 = dma.hbm_to_vmem [thread:$0]  %s6, 2048, %s446, [#allocation9], 128, 128, 8
        $region20: #{tpu_custom_call.1} parent=11 // pred_fallthru
          _
        // Predicated region
        $region21: #{tpu_custom_call.1} parent=11 // pred_check
          %p452 = pneg %p241
        $region22: #{tpu_custom_call.1} parent=11 // pred_check_branch
          %454 = sbr.rel (%p452) target = $region24
        $region23: #{tpu_custom_call.1} parent=11 // pred_region
          _
        $region24: #{tpu_custom_call.1} parent=11 // pred_fallthru
          _
        // Predicated region
        $region25: #{tpu_custom_call.1} parent=11 // pred_check
          %p455 = pneg %p262
        $region26: #{tpu_custom_call.1} parent=11 // pred_check_branch
          %457 = sbr.rel (%p455) target = $region28
        $region27: #{tpu_custom_call.1} parent=11 // pred_region
          %s459 = ssub.s32 2048, 2048
          %460 = vsyncadd [#allocation14], %s459
          %s461 = sshll.u32 [#allocation13], 4
          %s462 = int_to_ptr.vmem [resolvable:$true] %s461
          %467 = dma.hbm_to_vmem [thread:$0]  %s8, 2048, %s462, [#allocation14], 128, 128, 8
        $region28: #{tpu_custom_call.1} parent=11 // pred_fallthru
          _
        // Predicated region
        $region29: #{tpu_custom_call.1} parent=11 // pred_check
          %p468 = pneg %p283
        $region30: #{tpu_custom_call.1} parent=11 // pred_check_branch
          %470 = sbr.rel (%p468) target = $region32
        $region31: #{tpu_custom_call.1} parent=11 // pred_region
          _
        $region32: #{tpu_custom_call.1} parent=11 // pred_fallthru
          _
        // Predicated region
        $region33: #{tpu_custom_call.1} parent=11 // pred_check
          %p471 = pneg %p304
        $region34: #{tpu_custom_call.1} parent=11 // pred_check_branch
          %473 = sbr.rel (%p471) target = $region36
        $region35: #{tpu_custom_call.1} parent=11 // pred_region
          %s475 = ssub.s32 2048, 2048
          %476 = vsyncadd [#allocation14], %s475
          %s477 = sshll.u32 [#allocation15], 4
          %s478 = int_to_ptr.vmem [resolvable:$true] %s477
          %483 = dma.hbm_to_vmem [thread:$0]  %s10, 2048, %s478, [#allocation14], 128, 128, 8
        $region36: #{tpu_custom_call.1} parent=11 // pred_fallthru
          _
        // Predicated region
        $region37: #{tpu_custom_call.1} parent=11 // pred_check
          %p484 = pneg %p325
        $region38: #{tpu_custom_call.1} parent=11 // pred_check_branch
          %486 = sbr.rel (%p484) target = $region40
        $region39: #{tpu_custom_call.1} parent=11 // pred_region
          _
        $region40: #{tpu_custom_call.1} parent=11 // pred_fallthru
          _
        // Predicated region
        $region41: #{tpu_custom_call.1} parent=11 // pred_check
          %p487 = pneg %p346
        $region42: #{tpu_custom_call.1} parent=11 // pred_check_branch
          %489 = sbr.rel (%p487) target = $region44
        $region43: #{tpu_custom_call.1} parent=11 // pred_region
          _
        $region44: #{tpu_custom_call.1} parent=11 // pred_fallthru
          _
        // Predicated region
        $region45: #{tpu_custom_call.1} parent=11 // pred_check
          %p490 = pneg %p367
        $region46: #{tpu_custom_call.1} parent=11 // pred_check_branch
          %492 = sbr.rel (%p490) target = $region48
        $region47: #{tpu_custom_call.1} parent=11 // pred_region
          _
        $region48: #{tpu_custom_call.1} parent=11 // pred_fallthru
          _
      $region12: #{tpu_custom_call.1} parent=5 // pred_fallthru
        _
      %p493 = scmp.lt.s32.totalorder %s32, 8
      // Predicated region
      $region49: #{tpu_custom_call.1} parent=5 // pred_check
        %p494 = pneg %p493
      $region50: #{tpu_custom_call.1} parent=5 // pred_check_branch
        %496 = sbr.rel (%p494) target = $region52
      $region51: #{tpu_custom_call.1} parent=5 // pred_region
        // Predicated region
        $region53: #{tpu_custom_call.1} parent=51 // pred_check
          %p497 = pneg %p64
        $region54: #{tpu_custom_call.1} parent=51 // pred_check_branch
          %499 = sbr.rel (%p497) target = $region56
        $region55: #{tpu_custom_call.1} parent=51 // pred_region
          %s500 = smul.u32 4, %s39
          %p501 = scmp.lt.s32.totalorder %s500, 15
          %s502 = scalar_select %p501, %s500, 15
          %s503 = smul.addr %s502, 8
          %s504 = scalar_lea.vmem %s0, %s503
          %s505 = smul.u32 4, %s39
        $region56: #{tpu_custom_call.1} parent=51 // pred_fallthru
          _
        // Predicated region
        $region57: #{tpu_custom_call.1} parent=51 // pred_check
          %p506 = pneg %p90
        $region58: #{tpu_custom_call.1} parent=51 // pred_check_branch
          %508 = sbr.rel (%p506) target = $region60
        $region59: #{tpu_custom_call.1} parent=51 // pred_region
          %s509 = sand.u32 %s80, 1
          %s510 = scalar_lea.sflag [#allocation6], %s509
          %s511 = sand.u32 %s80, 1
          %s512 = smul.addr %s511, 16
          %s513 = scalar_lea.vmem [#allocation5], %s512
          %s514 = smul.u32 2, %s40
          %s516 = ssub.s32 256, 256
          %517 = vsyncadd %s510, %s516
          %s518 = smul.addr %s514, 128
          %s519 = scalar_lea.hbm %s1, %s518
          %s520 = sshll.u32 %s513, 4
          %s521 = int_to_ptr.vmem [resolvable:$true] %s520
          %526 = dma.hbm_to_vmem [thread:$0]  %s519, 256, %s521, %s510, 128, 128, 8
        $region60: #{tpu_custom_call.1} parent=51 // pred_fallthru
          _
        // Predicated region
        $region61: #{tpu_custom_call.1} parent=51 // pred_check
          %p527 = pneg %p116
        $region62: #{tpu_custom_call.1} parent=51 // pred_check_branch
          %529 = sbr.rel (%p527) target = $region64
        $region63: #{tpu_custom_call.1} parent=51 // pred_region
          %s530 = sand.u32 %s32, 1
          %s531 = scalar_lea.sflag [#allocation9], %s530
          %s532 = sand.u32 %s106, 1
          %s533 = smul.addr %s532, 16
          %s534 = scalar_lea.vmem [#allocation8], %s533
          %s535 = smul.u32 2, %s40
          %s537 = ssub.s32 256, 256
          %538 = vsyncadd %s531, %s537
          %s539 = smul.addr %s535, 128
          %s540 = scalar_lea.hbm %s2, %s539
          %s541 = sshll.u32 %s534, 4
          %s542 = int_to_ptr.vmem [resolvable:$true] %s541
          %547 = dma.hbm_to_vmem [thread:$0]  %s540, 256, %s542, %s531, 128, 128, 8
        $region64: #{tpu_custom_call.1} parent=51 // pred_fallthru
          _
        // Predicated region
        $region65: #{tpu_custom_call.1} parent=51 // pred_check
          %p548 = pneg %p144
        $region66: #{tpu_custom_call.1} parent=51 // pred_check_branch
          %550 = sbr.rel (%p548) target = $region68
        $region67: #{tpu_custom_call.1} parent=51 // pred_region
          %s551 = sand.u32 %s134, 1
          %s552 = sand.u32 %s134, 1
          %s553 = smul.addr %s552, 512
          %s554 = scalar_lea.vmem [#allocation10], %s553
          %s555 = smul.u32 32, %s39
          %s556 = smul.u32 2, %s40
          %s557 = smul.addr %s555, 4
          %s558 = sadd.s32 %s556, %s557
          %s559 = smul.addr %s558, 8
          %s560 = scalar_lea.vmem %s3, %s559
          // Predicated region
          $region69: #{tpu_custom_call.1} parent=67 // pred_check
            _
          $region70: #{tpu_custom_call.1} parent=67 // pred_check_branch
            %562 = sbr.rel (0) target = $region72
          $region71: #{tpu_custom_call.1} parent=67 // pred_region
            // Predicated region
            $region73: #{tpu_custom_call.1} parent=71 // pred_check
              _
            $region74: #{tpu_custom_call.1} parent=71 // pred_check_branch
              %564 = sbr.rel (0) target = $region76
            $region75: #{tpu_custom_call.1} parent=71 // pred_region
              // Predicated region
              $region88: #{tpu_custom_call.1} parent=75 // pred_check
                _
              $region89: #{tpu_custom_call.1} parent=75 // pred_check_branch
                %705 = sbr.rel (0) target = $region91
              $region90: #{tpu_custom_call.1} parent=75 // pred_region
                loop: start=0, step=1, limit=1
                $region92: #{tpu_custom_call.1} parent=90 // loop_pre_header
                  _
                $region93: #{tpu_custom_call.1} parent=90 // loop_header
                  %s707 = sphi 0, %s711
                  %p708 = scmp.ge.s32.totalorder %s707, 1
                  %s712 = sphi %s560, %s560
                  %s713 = sphi %s554, %s554
                $region94: #{tpu_custom_call.1} parent=90 // loop_header_branch
                  %710 = sbr.rel (%p708) target = $region98
                $region95: #{tpu_custom_call.1} parent=90 // loop_body
                  %v714 = vld [vmem:[%s712] sm:$0xff]
                  %715 = vst [vmem:[%s713] sm:$0xff] %v714
                  %v716 = vld [vmem:[%s712 + $0x8] sm:$0xff]
                  %717 = vst [vmem:[%s713 + $0x8] sm:$0xff] %v716
                  %v718 = vld [vmem:[%s712 + $0x20] sm:$0xff]
                  %719 = vst [vmem:[%s713 + $0x10] sm:$0xff] %v718
                  %v720 = vld [vmem:[%s712 + $0x28] sm:$0xff]
                  %721 = vst [vmem:[%s713 + $0x18] sm:$0xff] %v720
                  %v722 = vld [vmem:[%s712 + $0x40] sm:$0xff]
                  %723 = vst [vmem:[%s713 + $0x20] sm:$0xff] %v722
                  %v724 = vld [vmem:[%s712 + $0x48] sm:$0xff]
                  %725 = vst [vmem:[%s713 + $0x28] sm:$0xff] %v724
                  %v726 = vld [vmem:[%s712 + $0x60] sm:$0xff]
                  %727 = vst [vmem:[%s713 + $0x30] sm:$0xff] %v726
                  %v728 = vld [vmem:[%s712 + $0x68] sm:$0xff]
                  %729 = vst [vmem:[%s713 + $0x38] sm:$0xff] %v728
                  %v730 = vld [vmem:[%s712 + $0x80] sm:$0xff]
                  %731 = vst [vmem:[%s713 + $0x40] sm:$0xff] %v730
                  %v732 = vld [vmem:[%s712 + $0x88] sm:$0xff]
                  %733 = vst [vmem:[%s713 + $0x48] sm:$0xff] %v732
                  %v734 = vld [vmem:[%s712 + $0xa0] sm:$0xff]
                  %735 = vst [vmem:[%s713 + $0x50] sm:$0xff] %v734
                  %v736 = vld [vmem:[%s712 + $0xa8] sm:$0xff]
                  %737 = vst [vmem:[%s713 + $0x58] sm:$0xff] %v736
                  %v738 = vld [vmem:[%s712 + $0xc0] sm:$0xff]
                  %739 = vst [vmem:[%s713 + $0x60] sm:$0xff] %v738
                  %v740 = vld [vmem:[%s712 + $0xc8] sm:$0xff]
                  %741 = vst [vmem:[%s713 + $0x68] sm:$0xff] %v740
                  %v742 = vld [vmem:[%s712 + $0xe0] sm:$0xff]
                  %743 = vst [vmem:[%s713 + $0x70] sm:$0xff] %v742
                  %v744 = vld [vmem:[%s712 + $0xe8] sm:$0xff]
                  %745 = vst [vmem:[%s713 + $0x78] sm:$0xff] %v744
                  %v746 = vld [vmem:[%s712 + $0x100] sm:$0xff]
                  %747 = vst [vmem:[%s713 + $0x80] sm:$0xff] %v746
                  %v748 = vld [vmem:[%s712 + $0x108] sm:$0xff]
                  %749 = vst [vmem:[%s713 + $0x88] sm:$0xff] %v748
                  %v750 = vld [vmem:[%s712 + $0x120] sm:$0xff]
                  %751 = vst [vmem:[%s713 + $0x90] sm:$0xff] %v750
                  %v752 = vld [vmem:[%s712 + $0x128] sm:$0xff]
                  %753 = vst [vmem:[%s713 + $0x98] sm:$0xff] %v752
                  %v754 = vld [vmem:[%s712 + $0x140] sm:$0xff]
                  %755 = vst [vmem:[%s713 + $0xa0] sm:$0xff] %v754
                  %v756 = vld [vmem:[%s712 + $0x148] sm:$0xff]
                  %757 = vst [vmem:[%s713 + $0xa8] sm:$0xff] %v756
                  %v758 = vld [vmem:[%s712 + $0x160] sm:$0xff]
                  %759 = vst [vmem:[%s713 + $0xb0] sm:$0xff] %v758
                  %v760 = vld [vmem:[%s712 + $0x168] sm:$0xff]
                  %761 = vst [vmem:[%s713 + $0xb8] sm:$0xff] %v760
                  %v762 = vld [vmem:[%s712 + $0x180] sm:$0xff]
                  %763 = vst [vmem:[%s713 + $0xc0] sm:$0xff] %v762
                  %v764 = vld [vmem:[%s712 + $0x188] sm:$0xff]
                  %765 = vst [vmem:[%s713 + $0xc8] sm:$0xff] %v764
                  %v766 = vld [vmem:[%s712 + $0x1a0] sm:$0xff]
                  %767 = vst [vmem:[%s713 + $0xd0] sm:$0xff] %v766
                  %v768 = vld [vmem:[%s712 + $0x1a8] sm:$0xff]
                  %769 = vst [vmem:[%s713 + $0xd8] sm:$0xff] %v768
                  %v770 = vld [vmem:[%s712 + $0x1c0] sm:$0xff]
                  %771 = vst [vmem:[%s713 + $0xe0] sm:$0xff] %v770
                  %v772 = vld [vmem:[%s712 + $0x1c8] sm:$0xff]
                  %773 = vst [vmem:[%s713 + $0xe8] sm:$0xff] %v772
                  %v774 = vld [vmem:[%s712 + $0x1e0] sm:$0xff]
                  %775 = vst [vmem:[%s713 + $0xf0] sm:$0xff] %v774
                  %v776 = vld [vmem:[%s712 + $0x1e8] sm:$0xff]
                  %777 = vst [vmem:[%s713 + $0xf8] sm:$0xff] %v776
                  %v778 = vld [vmem:[%s712 + $0x200] sm:$0xff]
                  %779 = vst [vmem:[%s713 + $0x100] sm:$0xff] %v778
                  %v780 = vld [vmem:[%s712 + $0x208] sm:$0xff]
                  %781 = vst [vmem:[%s713 + $0x108] sm:$0xff] %v780
                  %v782 = vld [vmem:[%s712 + $0x220] sm:$0xff]
                  %783 = vst [vmem:[%s713 + $0x110] sm:$0xff] %v782
                  %v784 = vld [vmem:[%s712 + $0x228] sm:$0xff]
                  %785 = vst [vmem:[%s713 + $0x118] sm:$0xff] %v784
                  %v786 = vld [vmem:[%s712 + $0x240] sm:$0xff]
                  %787 = vst [vmem:[%s713 + $0x120] sm:$0xff] %v786
                  %v788 = vld [vmem:[%s712 + $0x248] sm:$0xff]
                  %789 = vst [vmem:[%s713 + $0x128] sm:$0xff] %v788
                  %v790 = vld [vmem:[%s712 + $0x260] sm:$0xff]
                  %791 = vst [vmem:[%s713 + $0x130] sm:$0xff] %v790
                  %v792 = vld [vmem:[%s712 + $0x268] sm:$0xff]
                  %793 = vst [vmem:[%s713 + $0x138] sm:$0xff] %v792
                  %v794 = vld [vmem:[%s712 + $0x280] sm:$0xff]
                  %795 = vst [vmem:[%s713 + $0x140] sm:$0xff] %v794
                  %v796 = vld [vmem:[%s712 + $0x288] sm:$0xff]
                  %797 = vst [vmem:[%s713 + $0x148] sm:$0xff] %v796
                  %v798 = vld [vmem:[%s712 + $0x2a0] sm:$0xff]
                  %799 = vst [vmem:[%s713 + $0x150] sm:$0xff] %v798
                  %v800 = vld [vmem:[%s712 + $0x2a8] sm:$0xff]
                  %801 = vst [vmem:[%s713 + $0x158] sm:$0xff] %v800
                  %v802 = vld [vmem:[%s712 + $0x2c0] sm:$0xff]
                  %803 = vst [vmem:[%s713 + $0x160] sm:$0xff] %v802
                  %v804 = vld [vmem:[%s712 + $0x2c8] sm:$0xff]
                  %805 = vst [vmem:[%s713 + $0x168] sm:$0xff] %v804
                  %v806 = vld [vmem:[%s712 + $0x2e0] sm:$0xff]
                  %807 = vst [vmem:[%s713 + $0x170] sm:$0xff] %v806
                  %v808 = vld [vmem:[%s712 + $0x2e8] sm:$0xff]
                  %809 = vst [vmem:[%s713 + $0x178] sm:$0xff] %v808
                  %v810 = vld [vmem:[%s712 + $0x300] sm:$0xff]
                  %811 = vst [vmem:[%s713 + $0x180] sm:$0xff] %v810
                  %v812 = vld [vmem:[%s712 + $0x308] sm:$0xff]
                  %813 = vst [vmem:[%s713 + $0x188] sm:$0xff] %v812
                  %v814 = vld [vmem:[%s712 + $0x320] sm:$0xff]
                  %815 = vst [vmem:[%s713 + $0x190] sm:$0xff] %v814
                  %v816 = vld [vmem:[%s712 + $0x328] sm:$0xff]
                  %817 = vst [vmem:[%s713 + $0x198] sm:$0xff] %v816
                  %v818 = vld [vmem:[%s712 + $0x340] sm:$0xff]
                  %819 = vst [vmem:[%s713 + $0x1a0] sm:$0xff] %v818
                  %v820 = vld [vmem:[%s712 + $0x348] sm:$0xff]
                  %821 = vst [vmem:[%s713 + $0x1a8] sm:$0xff] %v820
                  %v822 = vld [vmem:[%s712 + $0x360] sm:$0xff]
                  %823 = vst [vmem:[%s713 + $0x1b0] sm:$0xff] %v822
                  %v824 = vld [vmem:[%s712 + $0x368] sm:$0xff]
                  %825 = vst [vmem:[%s713 + $0x1b8] sm:$0xff] %v824
                  %v826 = vld [vmem:[%s712 + $0x380] sm:$0xff]
                  %827 = vst [vmem:[%s713 + $0x1c0] sm:$0xff] %v826
                  %v828 = vld [vmem:[%s712 + $0x388] sm:$0xff]
                  %829 = vst [vmem:[%s713 + $0x1c8] sm:$0xff] %v828
                  %v830 = vld [vmem:[%s712 + $0x3a0] sm:$0xff]
                  %831 = vst [vmem:[%s713 + $0x1d0] sm:$0xff] %v830
                  %v832 = vld [vmem:[%s712 + $0x3a8] sm:$0xff]
                  %833 = vst [vmem:[%s713 + $0x1d8] sm:$0xff] %v832
                  %v834 = vld [vmem:[%s712 + $0x3c0] sm:$0xff]
                  %835 = vst [vmem:[%s713 + $0x1e0] sm:$0xff] %v834
                  %v836 = vld [vmem:[%s712 + $0x3c8] sm:$0xff]
                  %837 = vst [vmem:[%s713 + $0x1e8] sm:$0xff] %v836
                  %v838 = vld [vmem:[%s712 + $0x3e0] sm:$0xff]
                  %839 = vst [vmem:[%s713 + $0x1f0] sm:$0xff] %v838
                  %v840 = vld [vmem:[%s712 + $0x3e8] sm:$0xff]
                  %841 = vst [vmem:[%s713 + $0x1f8] sm:$0xff] %v840
                $region96: #{tpu_custom_call.1} parent=90 // loop_footer
                  %s711 = sadd.s32 1, %s707
                $region97: #{tpu_custom_call.1} parent=90 // loop_footer_branch
                  %706 = sbr.rel target = $region93
                $region98: #{tpu_custom_call.1} parent=90 // loop_exit
                  _
              $region91: #{tpu_custom_call.1} parent=75 // pred_fallthru
                _
              // Predicated region
              $region99: #{tpu_custom_call.1} parent=75 // pred_check
                _
              $region100: #{tpu_custom_call.1} parent=75 // pred_check_branch
                %843 = sbr.rel target = $region102
              $region101: #{tpu_custom_call.1} parent=75 // pred_region
                _
              $region102: #{tpu_custom_call.1} parent=75 // pred_fallthru
                _
            $region76: #{tpu_custom_call.1} parent=71 // pred_fallthru
              _
            // Predicated region
            $region77: #{tpu_custom_call.1} parent=71 // pred_check
              _
            $region78: #{tpu_custom_call.1} parent=71 // pred_check_branch
              %566 = sbr.rel target = $region80
            $region79: #{tpu_custom_call.1} parent=71 // pred_region
              loop: start=0, step=1, limit=1
              $region81: #{tpu_custom_call.1} parent=79 // loop_pre_header
                _
              $region82: #{tpu_custom_call.1} parent=79 // loop_header
                %s569 = sphi 0, %s573
                %p570 = scmp.ge.s32.totalorder %s569, 1
                %s574 = sphi %s560, %s560
                %s575 = sphi %s554, %s554
              $region83: #{tpu_custom_call.1} parent=79 // loop_header_branch
                %572 = sbr.rel (%p570) target = $region87
              $region84: #{tpu_custom_call.1} parent=79 // loop_body
                %v576 = vld [vmem:[%s574] sm:$0xff]
                %577 = vst [vmem:[%s575] sm:$0xff] %v576
                %v578 = vld [vmem:[%s574 + $0x8] sm:$0xff]
                %579 = vst [vmem:[%s575 + $0x8] sm:$0xff] %v578
                %v580 = vld [vmem:[%s574 + $0x20] sm:$0xff]
                %581 = vst [vmem:[%s575 + $0x10] sm:$0xff] %v580
                %v582 = vld [vmem:[%s574 + $0x28] sm:$0xff]
                %583 = vst [vmem:[%s575 + $0x18] sm:$0xff] %v582
                %v584 = vld [vmem:[%s574 + $0x40] sm:$0xff]
                %585 = vst [vmem:[%s575 + $0x20] sm:$0xff] %v584
                %v586 = vld [vmem:[%s574 + $0x48] sm:$0xff]
                %587 = vst [vmem:[%s575 + $0x28] sm:$0xff] %v586
                %v588 = vld [vmem:[%s574 + $0x60] sm:$0xff]
                %589 = vst [vmem:[%s575 + $0x30] sm:$0xff] %v588
                %v590 = vld [vmem:[%s574 + $0x68] sm:$0xff]
                %591 = vst [vmem:[%s575 + $0x38] sm:$0xff] %v590
                %v592 = vld [vmem:[%s574 + $0x80] sm:$0xff]
                %593 = vst [vmem:[%s575 + $0x40] sm:$0xff] %v592
                %v594 = vld [vmem:[%s574 + $0x88] sm:$0xff]
                %595 = vst [vmem:[%s575 + $0x48] sm:$0xff] %v594
                %v596 = vld [vmem:[%s574 + $0xa0] sm:$0xff]
                %597 = vst [vmem:[%s575 + $0x50] sm:$0xff] %v596
                %v598 = vld [vmem:[%s574 + $0xa8] sm:$0xff]
                %599 = vst [vmem:[%s575 + $0x58] sm:$0xff] %v598
                %v600 = vld [vmem:[%s574 + $0xc0] sm:$0xff]
                %601 = vst [vmem:[%s575 + $0x60] sm:$0xff] %v600
                %v602 = vld [vmem:[%s574 + $0xc8] sm:$0xff]
                %603 = vst [vmem:[%s575 + $0x68] sm:$0xff] %v602
                %v604 = vld [vmem:[%s574 + $0xe0] sm:$0xff]
                %605 = vst [vmem:[%s575 + $0x70] sm:$0xff] %v604
                %v606 = vld [vmem:[%s574 + $0xe8] sm:$0xff]
                %607 = vst [vmem:[%s575 + $0x78] sm:$0xff] %v606
                %v608 = vld [vmem:[%s574 + $0x100] sm:$0xff]
                %609 = vst [vmem:[%s575 + $0x80] sm:$0xff] %v608
                %v610 = vld [vmem:[%s574 + $0x108] sm:$0xff]
                %611 = vst [vmem:[%s575 + $0x88] sm:$0xff] %v610
                %v612 = vld [vmem:[%s574 + $0x120] sm:$0xff]
                %613 = vst [vmem:[%s575 + $0x90] sm:$0xff] %v612
                %v614 = vld [vmem:[%s574 + $0x128] sm:$0xff]
                %615 = vst [vmem:[%s575 + $0x98] sm:$0xff] %v614
                %v616 = vld [vmem:[%s574 + $0x140] sm:$0xff]
                %617 = vst [vmem:[%s575 + $0xa0] sm:$0xff] %v616
                %v618 = vld [vmem:[%s574 + $0x148] sm:$0xff]
                %619 = vst [vmem:[%s575 + $0xa8] sm:$0xff] %v618
                %v620 = vld [vmem:[%s574 + $0x160] sm:$0xff]
                %621 = vst [vmem:[%s575 + $0xb0] sm:$0xff] %v620
                %v622 = vld [vmem:[%s574 + $0x168] sm:$0xff]
                %623 = vst [vmem:[%s575 + $0xb8] sm:$0xff] %v622
                %v624 = vld [vmem:[%s574 + $0x180] sm:$0xff]
                %625 = vst [vmem:[%s575 + $0xc0] sm:$0xff] %v624
                %v626 = vld [vmem:[%s574 + $0x188] sm:$0xff]
                %627 = vst [vmem:[%s575 + $0xc8] sm:$0xff] %v626
                %v628 = vld [vmem:[%s574 + $0x1a0] sm:$0xff]
                %629 = vst [vmem:[%s575 + $0xd0] sm:$0xff] %v628
                %v630 = vld [vmem:[%s574 + $0x1a8] sm:$0xff]
                %631 = vst [vmem:[%s575 + $0xd8] sm:$0xff] %v630
                %v632 = vld [vmem:[%s574 + $0x1c0] sm:$0xff]
                %633 = vst [vmem:[%s575 + $0xe0] sm:$0xff] %v632
                %v634 = vld [vmem:[%s574 + $0x1c8] sm:$0xff]
                %635 = vst [vmem:[%s575 + $0xe8] sm:$0xff] %v634
                %v636 = vld [vmem:[%s574 + $0x1e0] sm:$0xff]
                %637 = vst [vmem:[%s575 + $0xf0] sm:$0xff] %v636
                %v638 = vld [vmem:[%s574 + $0x1e8] sm:$0xff]
                %639 = vst [vmem:[%s575 + $0xf8] sm:$0xff] %v638
                %v640 = vld [vmem:[%s574 + $0x200] sm:$0xff]
                %641 = vst [vmem:[%s575 + $0x100] sm:$0xff] %v640
                %v642 = vld [vmem:[%s574 + $0x208] sm:$0xff]
                %643 = vst [vmem:[%s575 + $0x108] sm:$0xff] %v642
                %v644 = vld [vmem:[%s574 + $0x220] sm:$0xff]
                %645 = vst [vmem:[%s575 + $0x110] sm:$0xff] %v644
                %v646 = vld [vmem:[%s574 + $0x228] sm:$0xff]
                %647 = vst [vmem:[%s575 + $0x118] sm:$0xff] %v646
                %v648 = vld [vmem:[%s574 + $0x240] sm:$0xff]
                %649 = vst [vmem:[%s575 + $0x120] sm:$0xff] %v648
                %v650 = vld [vmem:[%s574 + $0x248] sm:$0xff]
                %651 = vst [vmem:[%s575 + $0x128] sm:$0xff] %v650
                %v652 = vld [vmem:[%s574 + $0x260] sm:$0xff]
                %653 = vst [vmem:[%s575 + $0x130] sm:$0xff] %v652
                %v654 = vld [vmem:[%s574 + $0x268] sm:$0xff]
                %655 = vst [vmem:[%s575 + $0x138] sm:$0xff] %v654
                %v656 = vld [vmem:[%s574 + $0x280] sm:$0xff]
                %657 = vst [vmem:[%s575 + $0x140] sm:$0xff] %v656
                %v658 = vld [vmem:[%s574 + $0x288] sm:$0xff]
                %659 = vst [vmem:[%s575 + $0x148] sm:$0xff] %v658
                %v660 = vld [vmem:[%s574 + $0x2a0] sm:$0xff]
                %661 = vst [vmem:[%s575 + $0x150] sm:$0xff] %v660
                %v662 = vld [vmem:[%s574 + $0x2a8] sm:$0xff]
                %663 = vst [vmem:[%s575 + $0x158] sm:$0xff] %v662
                %v664 = vld [vmem:[%s574 + $0x2c0] sm:$0xff]
                %665 = vst [vmem:[%s575 + $0x160] sm:$0xff] %v664
                %v666 = vld [vmem:[%s574 + $0x2c8] sm:$0xff]
                %667 = vst [vmem:[%s575 + $0x168] sm:$0xff] %v666
                %v668 = vld [vmem:[%s574 + $0x2e0] sm:$0xff]
                %669 = vst [vmem:[%s575 + $0x170] sm:$0xff] %v668
                %v670 = vld [vmem:[%s574 + $0x2e8] sm:$0xff]
                %671 = vst [vmem:[%s575 + $0x178] sm:$0xff] %v670
                %v672 = vld [vmem:[%s574 + $0x300] sm:$0xff]
                %673 = vst [vmem:[%s575 + $0x180] sm:$0xff] %v672
                %v674 = vld [vmem:[%s574 + $0x308] sm:$0xff]
                %675 = vst [vmem:[%s575 + $0x188] sm:$0xff] %v674
                %v676 = vld [vmem:[%s574 + $0x320] sm:$0xff]
                %677 = vst [vmem:[%s575 + $0x190] sm:$0xff] %v676
                %v678 = vld [vmem:[%s574 + $0x328] sm:$0xff]
                %679 = vst [vmem:[%s575 + $0x198] sm:$0xff] %v678
                %v680 = vld [vmem:[%s574 + $0x340] sm:$0xff]
                %681 = vst [vmem:[%s575 + $0x1a0] sm:$0xff] %v680
                %v682 = vld [vmem:[%s574 + $0x348] sm:$0xff]
                %683 = vst [vmem:[%s575 + $0x1a8] sm:$0xff] %v682
                %v684 = vld [vmem:[%s574 + $0x360] sm:$0xff]
                %685 = vst [vmem:[%s575 + $0x1b0] sm:$0xff] %v684
                %v686 = vld [vmem:[%s574 + $0x368] sm:$0xff]
                %687 = vst [vmem:[%s575 + $0x1b8] sm:$0xff] %v686
                %v688 = vld [vmem:[%s574 + $0x380] sm:$0xff]
                %689 = vst [vmem:[%s575 + $0x1c0] sm:$0xff] %v688
                %v690 = vld [vmem:[%s574 + $0x388] sm:$0xff]
                %691 = vst [vmem:[%s575 + $0x1c8] sm:$0xff] %v690
                %v692 = vld [vmem:[%s574 + $0x3a0] sm:$0xff]
                %693 = vst [vmem:[%s575 + $0x1d0] sm:$0xff] %v692
                %v694 = vld [vmem:[%s574 + $0x3a8] sm:$0xff]
                %695 = vst [vmem:[%s575 + $0x1d8] sm:$0xff] %v694
                %v696 = vld [vmem:[%s574 + $0x3c0] sm:$0xff]
                %697 = vst [vmem:[%s575 + $0x1e0] sm:$0xff] %v696
                %v698 = vld [vmem:[%s574 + $0x3c8] sm:$0xff]
                %699 = vst [vmem:[%s575 + $0x1e8] sm:$0xff] %v698
                %v700 = vld [vmem:[%s574 + $0x3e0] sm:$0xff]
                %701 = vst [vmem:[%s575 + $0x1f0] sm:$0xff] %v700
                %v702 = vld [vmem:[%s574 + $0x3e8] sm:$0xff]
                %703 = vst [vmem:[%s575 + $0x1f8] sm:$0xff] %v702
              $region85: #{tpu_custom_call.1} parent=79 // loop_footer
                %s573 = sadd.s32 1, %s569
              $region86: #{tpu_custom_call.1} parent=79 // loop_footer_branch
                %568 = sbr.rel target = $region82
              $region87: #{tpu_custom_call.1} parent=79 // loop_exit
                _
            $region80: #{tpu_custom_call.1} parent=71 // pred_fallthru
              _
          $region72: #{tpu_custom_call.1} parent=67 // pred_fallthru
            _
          %844 = vnop
        $region68: #{tpu_custom_call.1} parent=51 // pred_fallthru
          _
        // Predicated region
        $region103: #{tpu_custom_call.1} parent=51 // pred_check
          %p845 = pneg %p172
        $region104: #{tpu_custom_call.1} parent=51 // pred_check_branch
          %847 = sbr.rel (%p845) target = $region106
        $region105: #{tpu_custom_call.1} parent=51 // pred_region
          %s848 = sand.u32 %s162, 1
          %s849 = sand.u32 %s162, 1
          %s850 = smul.addr %s849, 512
          %s851 = scalar_lea.vmem [#allocation11], %s850
          %s852 = smul.u32 32, %s39
          %s853 = smul.u32 2, %s40
          %s854 = smul.addr %s852, 4
          %s855 = sadd.s32 %s853, %s854
          %s856 = smul.addr %s855, 8
          %s857 = scalar_lea.vmem %s4, %s856
          // Predicated region
          $region107: #{tpu_custom_call.1} parent=105 // pred_check
            _
          $region108: #{tpu_custom_call.1} parent=105 // pred_check_branch
            %859 = sbr.rel (0) target = $region110
          $region109: #{tpu_custom_call.1} parent=105 // pred_region
            // Predicated region
            $region111: #{tpu_custom_call.1} parent=109 // pred_check
              _
            $region112: #{tpu_custom_call.1} parent=109 // pred_check_branch
              %861 = sbr.rel (0) target = $region114
            $region113: #{tpu_custom_call.1} parent=109 // pred_region
              // Predicated region
              $region126: #{tpu_custom_call.1} parent=113 // pred_check
                _
              $region127: #{tpu_custom_call.1} parent=113 // pred_check_branch
                %1002 = sbr.rel (0) target = $region129
              $region128: #{tpu_custom_call.1} parent=113 // pred_region
                loop: start=0, step=1, limit=1
                $region130: #{tpu_custom_call.1} parent=128 // loop_pre_header
                  _
                $region131: #{tpu_custom_call.1} parent=128 // loop_header
                  %s1004 = sphi 0, %s1008
                  %p1005 = scmp.ge.s32.totalorder %s1004, 1
                  %s1009 = sphi %s857, %s857
                  %s1010 = sphi %s851, %s851
                $region132: #{tpu_custom_call.1} parent=128 // loop_header_branch
                  %1007 = sbr.rel (%p1005) target = $region136
                $region133: #{tpu_custom_call.1} parent=128 // loop_body
                  %v1011 = vld [vmem:[%s1009] sm:$0xff]
                  %1012 = vst [vmem:[%s1010] sm:$0xff] %v1011
                  %v1013 = vld [vmem:[%s1009 + $0x8] sm:$0xff]
                  %1014 = vst [vmem:[%s1010 + $0x8] sm:$0xff] %v1013
                  %v1015 = vld [vmem:[%s1009 + $0x20] sm:$0xff]
                  %1016 = vst [vmem:[%s1010 + $0x10] sm:$0xff] %v1015
                  %v1017 = vld [vmem:[%s1009 + $0x28] sm:$0xff]
                  %1018 = vst [vmem:[%s1010 + $0x18] sm:$0xff] %v1017
                  %v1019 = vld [vmem:[%s1009 + $0x40] sm:$0xff]
                  %1020 = vst [vmem:[%s1010 + $0x20] sm:$0xff] %v1019
                  %v1021 = vld [vmem:[%s1009 + $0x48] sm:$0xff]
                  %1022 = vst [vmem:[%s1010 + $0x28] sm:$0xff] %v1021
                  %v1023 = vld [vmem:[%s1009 + $0x60] sm:$0xff]
                  %1024 = vst [vmem:[%s1010 + $0x30] sm:$0xff] %v1023
                  %v1025 = vld [vmem:[%s1009 + $0x68] sm:$0xff]
                  %1026 = vst [vmem:[%s1010 + $0x38] sm:$0xff] %v1025
                  %v1027 = vld [vmem:[%s1009 + $0x80] sm:$0xff]
                  %1028 = vst [vmem:[%s1010 + $0x40] sm:$0xff] %v1027
                  %v1029 = vld [vmem:[%s1009 + $0x88] sm:$0xff]
                  %1030 = vst [vmem:[%s1010 + $0x48] sm:$0xff] %v1029
                  %v1031 = vld [vmem:[%s1009 + $0xa0] sm:$0xff]
                  %1032 = vst [vmem:[%s1010 + $0x50] sm:$0xff] %v1031
                  %v1033 = vld [vmem:[%s1009 + $0xa8] sm:$0xff]
                  %1034 = vst [vmem:[%s1010 + $0x58] sm:$0xff] %v1033
                  %v1035 = vld [vmem:[%s1009 + $0xc0] sm:$0xff]
                  %1036 = vst [vmem:[%s1010 + $0x60] sm:$0xff] %v1035
                  %v1037 = vld [vmem:[%s1009 + $0xc8] sm:$0xff]
                  %1038 = vst [vmem:[%s1010 + $0x68] sm:$0xff] %v1037
                  %v1039 = vld [vmem:[%s1009 + $0xe0] sm:$0xff]
                  %1040 = vst [vmem:[%s1010 + $0x70] sm:$0xff] %v1039
                  %v1041 = vld [vmem:[%s1009 + $0xe8] sm:$0xff]
                  %1042 = vst [vmem:[%s1010 + $0x78] sm:$0xff] %v1041
                  %v1043 = vld [vmem:[%s1009 + $0x100] sm:$0xff]
                  %1044 = vst [vmem:[%s1010 + $0x80] sm:$0xff] %v1043
                  %v1045 = vld [vmem:[%s1009 + $0x108] sm:$0xff]
                  %1046 = vst [vmem:[%s1010 + $0x88] sm:$0xff] %v1045
                  %v1047 = vld [vmem:[%s1009 + $0x120] sm:$0xff]
                  %1048 = vst [vmem:[%s1010 + $0x90] sm:$0xff] %v1047
                  %v1049 = vld [vmem:[%s1009 + $0x128] sm:$0xff]
                  %1050 = vst [vmem:[%s1010 + $0x98] sm:$0xff] %v1049
                  %v1051 = vld [vmem:[%s1009 + $0x140] sm:$0xff]
                  %1052 = vst [vmem:[%s1010 + $0xa0] sm:$0xff] %v1051
                  %v1053 = vld [vmem:[%s1009 + $0x148] sm:$0xff]
                  %1054 = vst [vmem:[%s1010 + $0xa8] sm:$0xff] %v1053
                  %v1055 = vld [vmem:[%s1009 + $0x160] sm:$0xff]
                  %1056 = vst [vmem:[%s1010 + $0xb0] sm:$0xff] %v1055
                  %v1057 = vld [vmem:[%s1009 + $0x168] sm:$0xff]
                  %1058 = vst [vmem:[%s1010 + $0xb8] sm:$0xff] %v1057
                  %v1059 = vld [vmem:[%s1009 + $0x180] sm:$0xff]
                  %1060 = vst [vmem:[%s1010 + $0xc0] sm:$0xff] %v1059
                  %v1061 = vld [vmem:[%s1009 + $0x188] sm:$0xff]
                  %1062 = vst [vmem:[%s1010 + $0xc8] sm:$0xff] %v1061
                  %v1063 = vld [vmem:[%s1009 + $0x1a0] sm:$0xff]
                  %1064 = vst [vmem:[%s1010 + $0xd0] sm:$0xff] %v1063
                  %v1065 = vld [vmem:[%s1009 + $0x1a8] sm:$0xff]
                  %1066 = vst [vmem:[%s1010 + $0xd8] sm:$0xff] %v1065
                  %v1067 = vld [vmem:[%s1009 + $0x1c0] sm:$0xff]
                  %1068 = vst [vmem:[%s1010 + $0xe0] sm:$0xff] %v1067
                  %v1069 = vld [vmem:[%s1009 + $0x1c8] sm:$0xff]
                  %1070 = vst [vmem:[%s1010 + $0xe8] sm:$0xff] %v1069
                  %v1071 = vld [vmem:[%s1009 + $0x1e0] sm:$0xff]
                  %1072 = vst [vmem:[%s1010 + $0xf0] sm:$0xff] %v1071
                  %v1073 = vld [vmem:[%s1009 + $0x1e8] sm:$0xff]
                  %1074 = vst [vmem:[%s1010 + $0xf8] sm:$0xff] %v1073
                  %v1075 = vld [vmem:[%s1009 + $0x200] sm:$0xff]
                  %1076 = vst [vmem:[%s1010 + $0x100] sm:$0xff] %v1075
                  %v1077 = vld [vmem:[%s1009 + $0x208] sm:$0xff]
                  %1078 = vst [vmem:[%s1010 + $0x108] sm:$0xff] %v1077
                  %v1079 = vld [vmem:[%s1009 + $0x220] sm:$0xff]
                  %1080 = vst [vmem:[%s1010 + $0x110] sm:$0xff] %v1079
                  %v1081 = vld [vmem:[%s1009 + $0x228] sm:$0xff]
                  %1082 = vst [vmem:[%s1010 + $0x118] sm:$0xff] %v1081
                  %v1083 = vld [vmem:[%s1009 + $0x240] sm:$0xff]
                  %1084 = vst [vmem:[%s1010 + $0x120] sm:$0xff] %v1083
                  %v1085 = vld [vmem:[%s1009 + $0x248] sm:$0xff]
                  %1086 = vst [vmem:[%s1010 + $0x128] sm:$0xff] %v1085
                  %v1087 = vld [vmem:[%s1009 + $0x260] sm:$0xff]
                  %1088 = vst [vmem:[%s1010 + $0x130] sm:$0xff] %v1087
                  %v1089 = vld [vmem:[%s1009 + $0x268] sm:$0xff]
                  %1090 = vst [vmem:[%s1010 + $0x138] sm:$0xff] %v1089
                  %v1091 = vld [vmem:[%s1009 + $0x280] sm:$0xff]
                  %1092 = vst [vmem:[%s1010 + $0x140] sm:$0xff] %v1091
                  %v1093 = vld [vmem:[%s1009 + $0x288] sm:$0xff]
                  %1094 = vst [vmem:[%s1010 + $0x148] sm:$0xff] %v1093
                  %v1095 = vld [vmem:[%s1009 + $0x2a0] sm:$0xff]
                  %1096 = vst [vmem:[%s1010 + $0x150] sm:$0xff] %v1095
                  %v1097 = vld [vmem:[%s1009 + $0x2a8] sm:$0xff]
                  %1098 = vst [vmem:[%s1010 + $0x158] sm:$0xff] %v1097
                  %v1099 = vld [vmem:[%s1009 + $0x2c0] sm:$0xff]
                  %1100 = vst [vmem:[%s1010 + $0x160] sm:$0xff] %v1099
                  %v1101 = vld [vmem:[%s1009 + $0x2c8] sm:$0xff]
                  %1102 = vst [vmem:[%s1010 + $0x168] sm:$0xff] %v1101
                  %v1103 = vld [vmem:[%s1009 + $0x2e0] sm:$0xff]
                  %1104 = vst [vmem:[%s1010 + $0x170] sm:$0xff] %v1103
                  %v1105 = vld [vmem:[%s1009 + $0x2e8] sm:$0xff]
                  %1106 = vst [vmem:[%s1010 + $0x178] sm:$0xff] %v1105
                  %v1107 = vld [vmem:[%s1009 + $0x300] sm:$0xff]
                  %1108 = vst [vmem:[%s1010 + $0x180] sm:$0xff] %v1107
                  %v1109 = vld [vmem:[%s1009 + $0x308] sm:$0xff]
                  %1110 = vst [vmem:[%s1010 + $0x188] sm:$0xff] %v1109
                  %v1111 = vld [vmem:[%s1009 + $0x320] sm:$0xff]
                  %1112 = vst [vmem:[%s1010 + $0x190] sm:$0xff] %v1111
                  %v1113 = vld [vmem:[%s1009 + $0x328] sm:$0xff]
                  %1114 = vst [vmem:[%s1010 + $0x198] sm:$0xff] %v1113
                  %v1115 = vld [vmem:[%s1009 + $0x340] sm:$0xff]
                  %1116 = vst [vmem:[%s1010 + $0x1a0] sm:$0xff] %v1115
                  %v1117 = vld [vmem:[%s1009 + $0x348] sm:$0xff]
                  %1118 = vst [vmem:[%s1010 + $0x1a8] sm:$0xff] %v1117
                  %v1119 = vld [vmem:[%s1009 + $0x360] sm:$0xff]
                  %1120 = vst [vmem:[%s1010 + $0x1b0] sm:$0xff] %v1119
                  %v1121 = vld [vmem:[%s1009 + $0x368] sm:$0xff]
                  %1122 = vst [vmem:[%s1010 + $0x1b8] sm:$0xff] %v1121
                  %v1123 = vld [vmem:[%s1009 + $0x380] sm:$0xff]
                  %1124 = vst [vmem:[%s1010 + $0x1c0] sm:$0xff] %v1123
                  %v1125 = vld [vmem:[%s1009 + $0x388] sm:$0xff]
                  %1126 = vst [vmem:[%s1010 + $0x1c8] sm:$0xff] %v1125
                  %v1127 = vld [vmem:[%s1009 + $0x3a0] sm:$0xff]
                  %1128 = vst [vmem:[%s1010 + $0x1d0] sm:$0xff] %v1127
                  %v1129 = vld [vmem:[%s1009 + $0x3a8] sm:$0xff]
                  %1130 = vst [vmem:[%s1010 + $0x1d8] sm:$0xff] %v1129
                  %v1131 = vld [vmem:[%s1009 + $0x3c0] sm:$0xff]
                  %1132 = vst [vmem:[%s1010 + $0x1e0] sm:$0xff] %v1131
                  %v1133 = vld [vmem:[%s1009 + $0x3c8] sm:$0xff]
                  %1134 = vst [vmem:[%s1010 + $0x1e8] sm:$0xff] %v1133
                  %v1135 = vld [vmem:[%s1009 + $0x3e0] sm:$0xff]
                  %1136 = vst [vmem:[%s1010 + $0x1f0] sm:$0xff] %v1135
                  %v1137 = vld [vmem:[%s1009 + $0x3e8] sm:$0xff]
                  %1138 = vst [vmem:[%s1010 + $0x1f8] sm:$0xff] %v1137
                $region134: #{tpu_custom_call.1} parent=128 // loop_footer
                  %s1008 = sadd.s32 1, %s1004
                $region135: #{tpu_custom_call.1} parent=128 // loop_footer_branch
                  %1003 = sbr.rel target = $region131
                $region136: #{tpu_custom_call.1} parent=128 // loop_exit
                  _
              $region129: #{tpu_custom_call.1} parent=113 // pred_fallthru
                _
              // Predicated region
              $region137: #{tpu_custom_call.1} parent=113 // pred_check
                _
              $region138: #{tpu_custom_call.1} parent=113 // pred_check_branch
                %1140 = sbr.rel target = $region140
              $region139: #{tpu_custom_call.1} parent=113 // pred_region
                _
              $region140: #{tpu_custom_call.1} parent=113 // pred_fallthru
                _
            $region114: #{tpu_custom_call.1} parent=109 // pred_fallthru
              _
            // Predicated region
            $region115: #{tpu_custom_call.1} parent=109 // pred_check
              _
            $region116: #{tpu_custom_call.1} parent=109 // pred_check_branch
              %863 = sbr.rel target = $region118
            $region117: #{tpu_custom_call.1} parent=109 // pred_region
              loop: start=0, step=1, limit=1
              $region119: #{tpu_custom_call.1} parent=117 // loop_pre_header
                _
              $region120: #{tpu_custom_call.1} parent=117 // loop_header
                %s866 = sphi 0, %s870
                %p867 = scmp.ge.s32.totalorder %s866, 1
                %s871 = sphi %s857, %s857
                %s872 = sphi %s851, %s851
              $region121: #{tpu_custom_call.1} parent=117 // loop_header_branch
                %869 = sbr.rel (%p867) target = $region125
              $region122: #{tpu_custom_call.1} parent=117 // loop_body
                %v873 = vld [vmem:[%s871] sm:$0xff]
                %874 = vst [vmem:[%s872] sm:$0xff] %v873
                %v875 = vld [vmem:[%s871 + $0x8] sm:$0xff]
                %876 = vst [vmem:[%s872 + $0x8] sm:$0xff] %v875
                %v877 = vld [vmem:[%s871 + $0x20] sm:$0xff]
                %878 = vst [vmem:[%s872 + $0x10] sm:$0xff] %v877
                %v879 = vld [vmem:[%s871 + $0x28] sm:$0xff]
                %880 = vst [vmem:[%s872 + $0x18] sm:$0xff] %v879
                %v881 = vld [vmem:[%s871 + $0x40] sm:$0xff]
                %882 = vst [vmem:[%s872 + $0x20] sm:$0xff] %v881
                %v883 = vld [vmem:[%s871 + $0x48] sm:$0xff]
                %884 = vst [vmem:[%s872 + $0x28] sm:$0xff] %v883
                %v885 = vld [vmem:[%s871 + $0x60] sm:$0xff]
                %886 = vst [vmem:[%s872 + $0x30] sm:$0xff] %v885
                %v887 = vld [vmem:[%s871 + $0x68] sm:$0xff]
                %888 = vst [vmem:[%s872 + $0x38] sm:$0xff] %v887
                %v889 = vld [vmem:[%s871 + $0x80] sm:$0xff]
                %890 = vst [vmem:[%s872 + $0x40] sm:$0xff] %v889
                %v891 = vld [vmem:[%s871 + $0x88] sm:$0xff]
                %892 = vst [vmem:[%s872 + $0x48] sm:$0xff] %v891
                %v893 = vld [vmem:[%s871 + $0xa0] sm:$0xff]
                %894 = vst [vmem:[%s872 + $0x50] sm:$0xff] %v893
                %v895 = vld [vmem:[%s871 + $0xa8] sm:$0xff]
                %896 = vst [vmem:[%s872 + $0x58] sm:$0xff] %v895
                %v897 = vld [vmem:[%s871 + $0xc0] sm:$0xff]
                %898 = vst [vmem:[%s872 + $0x60] sm:$0xff] %v897
                %v899 = vld [vmem:[%s871 + $0xc8] sm:$0xff]
                %900 = vst [vmem:[%s872 + $0x68] sm:$0xff] %v899
                %v901 = vld [vmem:[%s871 + $0xe0] sm:$0xff]
                %902 = vst [vmem:[%s872 + $0x70] sm:$0xff] %v901
                %v903 = vld [vmem:[%s871 + $0xe8] sm:$0xff]
                %904 = vst [vmem:[%s872 + $0x78] sm:$0xff] %v903
                %v905 = vld [vmem:[%s871 + $0x100] sm:$0xff]
                %906 = vst [vmem:[%s872 + $0x80] sm:$0xff] %v905
                %v907 = vld [vmem:[%s871 + $0x108] sm:$0xff]
                %908 = vst [vmem:[%s872 + $0x88] sm:$0xff] %v907
                %v909 = vld [vmem:[%s871 + $0x120] sm:$0xff]
                %910 = vst [vmem:[%s872 + $0x90] sm:$0xff] %v909
                %v911 = vld [vmem:[%s871 + $0x128] sm:$0xff]
                %912 = vst [vmem:[%s872 + $0x98] sm:$0xff] %v911
                %v913 = vld [vmem:[%s871 + $0x140] sm:$0xff]
                %914 = vst [vmem:[%s872 + $0xa0] sm:$0xff] %v913
                %v915 = vld [vmem:[%s871 + $0x148] sm:$0xff]
                %916 = vst [vmem:[%s872 + $0xa8] sm:$0xff] %v915
                %v917 = vld [vmem:[%s871 + $0x160] sm:$0xff]
                %918 = vst [vmem:[%s872 + $0xb0] sm:$0xff] %v917
                %v919 = vld [vmem:[%s871 + $0x168] sm:$0xff]
                %920 = vst [vmem:[%s872 + $0xb8] sm:$0xff] %v919
                %v921 = vld [vmem:[%s871 + $0x180] sm:$0xff]
                %922 = vst [vmem:[%s872 + $0xc0] sm:$0xff] %v921
                %v923 = vld [vmem:[%s871 + $0x188] sm:$0xff]
                %924 = vst [vmem:[%s872 + $0xc8] sm:$0xff] %v923
                %v925 = vld [vmem:[%s871 + $0x1a0] sm:$0xff]
                %926 = vst [vmem:[%s872 + $0xd0] sm:$0xff] %v925
                %v927 = vld [vmem:[%s871 + $0x1a8] sm:$0xff]
                %928 = vst [vmem:[%s872 + $0xd8] sm:$0xff] %v927
                %v929 = vld [vmem:[%s871 + $0x1c0] sm:$0xff]
                %930 = vst [vmem:[%s872 + $0xe0] sm:$0xff] %v929
                %v931 = vld [vmem:[%s871 + $0x1c8] sm:$0xff]
                %932 = vst [vmem:[%s872 + $0xe8] sm:$0xff] %v931
                %v933 = vld [vmem:[%s871 + $0x1e0] sm:$0xff]
                %934 = vst [vmem:[%s872 + $0xf0] sm:$0xff] %v933
                %v935 = vld [vmem:[%s871 + $0x1e8] sm:$0xff]
                %936 = vst [vmem:[%s872 + $0xf8] sm:$0xff] %v935
                %v937 = vld [vmem:[%s871 + $0x200] sm:$0xff]
                %938 = vst [vmem:[%s872 + $0x100] sm:$0xff] %v937
                %v939 = vld [vmem:[%s871 + $0x208] sm:$0xff]
                %940 = vst [vmem:[%s872 + $0x108] sm:$0xff] %v939
                %v941 = vld [vmem:[%s871 + $0x220] sm:$0xff]
                %942 = vst [vmem:[%s872 + $0x110] sm:$0xff] %v941
                %v943 = vld [vmem:[%s871 + $0x228] sm:$0xff]
                %944 = vst [vmem:[%s872 + $0x118] sm:$0xff] %v943
                %v945 = vld [vmem:[%s871 + $0x240] sm:$0xff]
                %946 = vst [vmem:[%s872 + $0x120] sm:$0xff] %v945
                %v947 = vld [vmem:[%s871 + $0x248] sm:$0xff]
                %948 = vst [vmem:[%s872 + $0x128] sm:$0xff] %v947
                %v949 = vld [vmem:[%s871 + $0x260] sm:$0xff]
                %950 = vst [vmem:[%s872 + $0x130] sm:$0xff] %v949
                %v951 = vld [vmem:[%s871 + $0x268] sm:$0xff]
                %952 = vst [vmem:[%s872 + $0x138] sm:$0xff] %v951
                %v953 = vld [vmem:[%s871 + $0x280] sm:$0xff]
                %954 = vst [vmem:[%s872 + $0x140] sm:$0xff] %v953
                %v955 = vld [vmem:[%s871 + $0x288] sm:$0xff]
                %956 = vst [vmem:[%s872 + $0x148] sm:$0xff] %v955
                %v957 = vld [vmem:[%s871 + $0x2a0] sm:$0xff]
                %958 = vst [vmem:[%s872 + $0x150] sm:$0xff] %v957
                %v959 = vld [vmem:[%s871 + $0x2a8] sm:$0xff]
                %960 = vst [vmem:[%s872 + $0x158] sm:$0xff] %v959
                %v961 = vld [vmem:[%s871 + $0x2c0] sm:$0xff]
                %962 = vst [vmem:[%s872 + $0x160] sm:$0xff] %v961
                %v963 = vld [vmem:[%s871 + $0x2c8] sm:$0xff]
                %964 = vst [vmem:[%s872 + $0x168] sm:$0xff] %v963
                %v965 = vld [vmem:[%s871 + $0x2e0] sm:$0xff]
                %966 = vst [vmem:[%s872 + $0x170] sm:$0xff] %v965
                %v967 = vld [vmem:[%s871 + $0x2e8] sm:$0xff]
                %968 = vst [vmem:[%s872 + $0x178] sm:$0xff] %v967
                %v969 = vld [vmem:[%s871 + $0x300] sm:$0xff]
                %970 = vst [vmem:[%s872 + $0x180] sm:$0xff] %v969
                %v971 = vld [vmem:[%s871 + $0x308] sm:$0xff]
                %972 = vst [vmem:[%s872 + $0x188] sm:$0xff] %v971
                %v973 = vld [vmem:[%s871 + $0x320] sm:$0xff]
                %974 = vst [vmem:[%s872 + $0x190] sm:$0xff] %v973
                %v975 = vld [vmem:[%s871 + $0x328] sm:$0xff]
                %976 = vst [vmem:[%s872 + $0x198] sm:$0xff] %v975
                %v977 = vld [vmem:[%s871 + $0x340] sm:$0xff]
                %978 = vst [vmem:[%s872 + $0x1a0] sm:$0xff] %v977
                %v979 = vld [vmem:[%s871 + $0x348] sm:$0xff]
                %980 = vst [vmem:[%s872 + $0x1a8] sm:$0xff] %v979
                %v981 = vld [vmem:[%s871 + $0x360] sm:$0xff]
                %982 = vst [vmem:[%s872 + $0x1b0] sm:$0xff] %v981
                %v983 = vld [vmem:[%s871 + $0x368] sm:$0xff]
                %984 = vst [vmem:[%s872 + $0x1b8] sm:$0xff] %v983
                %v985 = vld [vmem:[%s871 + $0x380] sm:$0xff]
                %986 = vst [vmem:[%s872 + $0x1c0] sm:$0xff] %v985
                %v987 = vld [vmem:[%s871 + $0x388] sm:$0xff]
                %988 = vst [vmem:[%s872 + $0x1c8] sm:$0xff] %v987
                %v989 = vld [vmem:[%s871 + $0x3a0] sm:$0xff]
                %990 = vst [vmem:[%s872 + $0x1d0] sm:$0xff] %v989
                %v991 = vld [vmem:[%s871 + $0x3a8] sm:$0xff]
                %992 = vst [vmem:[%s872 + $0x1d8] sm:$0xff] %v991
                %v993 = vld [vmem:[%s871 + $0x3c0] sm:$0xff]
                %994 = vst [vmem:[%s872 + $0x1e0] sm:$0xff] %v993
                %v995 = vld [vmem:[%s871 + $0x3c8] sm:$0xff]
                %996 = vst [vmem:[%s872 + $0x1e8] sm:$0xff] %v995
                %v997 = vld [vmem:[%s871 + $0x3e0] sm:$0xff]
                %998 = vst [vmem:[%s872 + $0x1f0] sm:$0xff] %v997
                %v999 = vld [vmem:[%s871 + $0x3e8] sm:$0xff]
                %1000 = vst [vmem:[%s872 + $0x1f8] sm:$0xff] %v999
              $region123: #{tpu_custom_call.1} parent=117 // loop_footer
                %s870 = sadd.s32 1, %s866
              $region124: #{tpu_custom_call.1} parent=117 // loop_footer_branch
                %865 = sbr.rel target = $region120
              $region125: #{tpu_custom_call.1} parent=117 // loop_exit
                _
            $region118: #{tpu_custom_call.1} parent=109 // pred_fallthru
              _
          $region110: #{tpu_custom_call.1} parent=105 // pred_fallthru
            _
          %1141 = vnop
        $region106: #{tpu_custom_call.1} parent=51 // pred_fallthru
          _
      $region52: #{tpu_custom_call.1} parent=5 // pred_fallthru
        _
      %p1142 = scmp.le.s32.totalorder 1, %s32
      %p1143 = scmp.lt.s32.totalorder %s32, 9
      %p1144 = pnand %p1142, %p1143
      %p1145 = pneg %p1144
      // Predicated region
      $region141: #{tpu_custom_call.1} parent=5 // pred_check
        _
      $region142: #{tpu_custom_call.1} parent=5 // pred_check_branch
        %1147 = sbr.rel (%p1144) target = $region144
      $region143: #{tpu_custom_call.1} parent=5 // pred_region
        %s1148 = ssub.s32 %s32, 1
        %s1149 = sand.u32 %s83, 1
        %s1150 = scalar_lea.sflag [#allocation6], %s1149
        %s1151 = sand.u32 %s83, 1
        %s1152 = smul.addr %s1151, 16
        %s1153 = scalar_lea.vmem [#allocation5], %s1152
        // Predicated region
        $region145: #{tpu_custom_call.1} parent=143 // pred_check
          %p1154 = pneg %p96
        $region146: #{tpu_custom_call.1} parent=143 // pred_check_branch
          %1156 = sbr.rel (%p1154) target = $region148
        $region147: #{tpu_custom_call.1} parent=143 // pred_region
          %1157 = dma.done %s1150, 256
        $region148: #{tpu_custom_call.1} parent=143 // pred_fallthru
          _
        %s1158 = sand.u32 %s37, 1
        %s1159 = scalar_lea.sflag [#allocation9], %s1158
        %s1160 = sand.u32 %s109, 1
        %s1161 = smul.addr %s1160, 16
        %s1162 = scalar_lea.vmem [#allocation8], %s1161
        // Predicated region
        $region149: #{tpu_custom_call.1} parent=143 // pred_check
          %p1163 = pneg %p122
        $region150: #{tpu_custom_call.1} parent=143 // pred_check_branch
          %1165 = sbr.rel (%p1163) target = $region152
        $region151: #{tpu_custom_call.1} parent=143 // pred_region
          %1166 = dma.done %s1159, 256
        $region152: #{tpu_custom_call.1} parent=143 // pred_fallthru
          _
        %s1167 = sand.u32 %s137, 1
        %s1168 = sand.u32 %s137, 1
        %s1169 = smul.addr %s1168, 512
        %s1170 = scalar_lea.vmem [#allocation10], %s1169
        // Predicated region
        $region153: #{tpu_custom_call.1} parent=143 // pred_check
          %p1171 = pneg %p150
        $region154: #{tpu_custom_call.1} parent=143 // pred_check_branch
          %1173 = sbr.rel (%p1171) target = $region156
        $region155: #{tpu_custom_call.1} parent=143 // pred_region
          _
        $region156: #{tpu_custom_call.1} parent=143 // pred_fallthru
          _
        %s1174 = sand.u32 %s165, 1
        %s1175 = sand.u32 %s165, 1
        %s1176 = smul.addr %s1175, 512
        %s1177 = scalar_lea.vmem [#allocation11], %s1176
        // Predicated region
        $region157: #{tpu_custom_call.1} parent=143 // pred_check
          %p1178 = pneg %p178
        $region158: #{tpu_custom_call.1} parent=143 // pred_check_branch
          %1180 = sbr.rel (%p1178) target = $region160
        $region159: #{tpu_custom_call.1} parent=143 // pred_region
          _
        $region160: #{tpu_custom_call.1} parent=143 // pred_fallthru
          _
        // Predicated region
        $region161: #{tpu_custom_call.1} parent=143 // pred_check
          %p1181 = pneg %p220
        $region162: #{tpu_custom_call.1} parent=143 // pred_check_branch
          %1183 = sbr.rel (%p1181) target = $region164
        $region163: #{tpu_custom_call.1} parent=143 // pred_region
          %1184 = dma.done [#allocation9], 2048
        $region164: #{tpu_custom_call.1} parent=143 // pred_fallthru
          _
        // Predicated region
        $region165: #{tpu_custom_call.1} parent=143 // pred_check
          %p1185 = pneg %p262
        $region166: #{tpu_custom_call.1} parent=143 // pred_check_branch
          %1187 = sbr.rel (%p1185) target = $region168
        $region167: #{tpu_custom_call.1} parent=143 // pred_region
          %1188 = dma.done [#allocation14], 2048
        $region168: #{tpu_custom_call.1} parent=143 // pred_fallthru
          _
        // Predicated region
        $region169: #{tpu_custom_call.1} parent=143 // pred_check
          %p1189 = pneg %p304
        $region170: #{tpu_custom_call.1} parent=143 // pred_check_branch
          %1191 = sbr.rel (%p1189) target = $region172
        $region171: #{tpu_custom_call.1} parent=143 // pred_region
          %1192 = dma.done [#allocation14], 2048
        $region172: #{tpu_custom_call.1} parent=143 // pred_fallthru
          _
        %s1193 = smul.u32 4, %s41
        %p1194 = scmp.lt.s32.totalorder %s1193, 15
        %s1195 = scalar_select %p1194, %s1193, 15
        %s1196 = smul.addr %s1195, 8
        %s1197 = scalar_lea.vmem %s0, %s1196
        %p1198 = pneg %p70
        %p1199 = pneg %p67
        %s1200 = sand.u32 %s83, 1
        %s1201 = scalar_lea.sflag [#allocation6], %s1200
        %s1202 = sand.u32 %s83, 1
        %s1203 = smul.addr %s1202, 16
        %s1204 = scalar_lea.vmem [#allocation5], %s1203
        %p1205 = pneg %p96
        %p1206 = pneg %p93
        %s1207 = sand.u32 %s37, 1
        %s1208 = scalar_lea.sflag [#allocation9], %s1207
        %s1209 = sand.u32 %s109, 1
        %s1210 = smul.addr %s1209, 16
        %s1211 = scalar_lea.vmem [#allocation8], %s1210
        %p1212 = pneg %p122
        %p1213 = pneg %p119
        %s1214 = sand.u32 %s137, 1
        %s1215 = sand.u32 %s137, 1
        %s1216 = smul.addr %s1215, 512
        %s1217 = scalar_lea.vmem [#allocation10], %s1216
        %p1218 = pneg %p150
        %p1219 = pneg %p147
        %s1220 = sand.u32 %s165, 1
        %s1221 = sand.u32 %s165, 1
        %s1222 = smul.addr %s1221, 512
        %s1223 = scalar_lea.vmem [#allocation11], %s1222
        %p1224 = pneg %p178
        %p1225 = pneg %p175
        %p1226 = pneg %p199
        %p1227 = pneg %p196
        %p1228 = pneg %p220
        %p1229 = pneg %p217
        %p1230 = pneg %p241
        %p1231 = pneg %p238
        %p1232 = pneg %p262
        %p1233 = pneg %p259
        %p1234 = pneg %p283
        %p1235 = pneg %p280
        %p1236 = pneg %p304
        %p1237 = pneg %p301
        %p1238 = pneg %p325
        %p1239 = pneg %p322
        %p1240 = pneg %p346
        %p1241 = pneg %p343
        %p1242 = pneg %p367
        %p1243 = pneg %p364
        %p1244 = pneg %p393
        %p1245 = pneg %p390
        %s1246 = smul.u32 4, %s41
        %p1247 = scmp.lt.s32.totalorder %s1246, 15
        %s1248 = scalar_select %p1247, %s1246, 15
        %s1249 = smul.addr %s1248, 8
        %s1250 = scalar_lea.vmem %s14, %s1249
        %p1251 = pneg %p421
        %p1252 = pneg %p418
        %s1253 = sand.u32 %s408, 1
        %s1254 = scalar_lea.sflag [#allocation7], %s1253
        %s1255 = sand.u32 %s408, 1
        %s1256 = smul.addr %s1255, 512
        %s1257 = scalar_lea.vmem [#allocation16], %s1256
        %s1258 = smul.u32 4, %s41
        %p1259 = scmp.lt.s32.totalorder %s1258, 15
        %s1260 = scalar_select %p1259, %s1258, 15
        %s1261 = smul.addr %s1260, 8
        %s1262 = scalar_lea.vmem %s0, %s1261
        %s1263 = smul.u32 4, %s41
        %s1264 = smul.u32 2, %s42
        %s1265 = smul.u32 2, %s42
        %s1266 = smul.u32 32, %s41
        %s1267 = smul.u32 2, %s42
        %s1268 = smul.u32 32, %s41
        %s1269 = smul.u32 2, %s42
        %s1270 = smul.u32 4, %s41
        %p1271 = scmp.lt.s32.totalorder %s1270, 15
        %s1272 = scalar_select %p1271, %s1270, 15
        %s1273 = smul.addr %s1272, 8
        %s1274 = scalar_lea.vmem %s14, %s1273
        %s1275 = smul.u32 4, %s41
        %s1276 = smul.u32 32, %s41
        %s1277 = smul.u32 2, %s42
        %p1278 = scmp.eq.s32.totalorder %s42, 0
        // Predicated region
        $region173: #{tpu_custom_call.1} parent=143 // pred_check
          %p1279 = pneg %p1278
        $region174: #{tpu_custom_call.1} parent=143 // pred_check_branch
          %1281 = sbr.rel (%p1279) target = $region176
        $region175: #{tpu_custom_call.1} parent=143 // pred_region
          %1282 = vst [vmem:[#allocation2] sm:$0xff] -inf
          %1283 = vst [vmem:[#allocation2 + $0x8] sm:$0xff] -inf
          %1284 = vst [vmem:[#allocation2 + $0x10] sm:$0xff] -inf
          %1285 = vst [vmem:[#allocation2 + $0x18] sm:$0xff] -inf
          %1286 = vst [vmem:[#allocation3] sm:$0xff] 0.0
          %1287 = vst [vmem:[#allocation3 + $0x8] sm:$0xff] 0.0
          %1288 = vst [vmem:[#allocation3 + $0x10] sm:$0xff] 0.0
          %1289 = vst [vmem:[#allocation3 + $0x18] sm:$0xff] 0.0
          %1290 = vst [vmem:[#allocation4] sm:$0xff] 0.0
          %1291 = vst [vmem:[#allocation4 + $0x8] sm:$0xff] 0.0
          %1292 = vst [vmem:[#allocation4 + $0x10] sm:$0xff] 0.0
          %1293 = vst [vmem:[#allocation4 + $0x18] sm:$0xff] 0.0
        $region176: #{tpu_custom_call.1} parent=143 // pred_fallthru
          _
        %v1294 = vld [vmem:[%s1170] sm:$0xff]
        %v1295 = vld [vmem:[%s1170 + $0x8] sm:$0xff]
        %v1296 = vld [vmem:[%s1170 + $0x10] sm:$0xff]
        %v1297 = vld [vmem:[%s1170 + $0x18] sm:$0xff]
        %v1298 = vld [vmem:[%s1170 + $0x20] sm:$0xff]
        %v1299 = vld [vmem:[%s1170 + $0x28] sm:$0xff]
        %v1300 = vld [vmem:[%s1170 + $0x30] sm:$0xff]
        %v1301 = vld [vmem:[%s1170 + $0x38] sm:$0xff]
        %v1302 = vld [vmem:[%s1170 + $0x40] sm:$0xff]
        %v1303 = vld [vmem:[%s1170 + $0x48] sm:$0xff]
        %v1304 = vld [vmem:[%s1170 + $0x50] sm:$0xff]
        %v1305 = vld [vmem:[%s1170 + $0x58] sm:$0xff]
        %v1306 = vld [vmem:[%s1170 + $0x60] sm:$0xff]
        %v1307 = vld [vmem:[%s1170 + $0x68] sm:$0xff]
        %v1308 = vld [vmem:[%s1170 + $0x70] sm:$0xff]
        %v1309 = vld [vmem:[%s1170 + $0x78] sm:$0xff]
        %v1310 = vld [vmem:[%s1170 + $0x80] sm:$0xff]
        %v1311 = vld [vmem:[%s1170 + $0x88] sm:$0xff]
        %v1312 = vld [vmem:[%s1170 + $0x90] sm:$0xff]
        %v1313 = vld [vmem:[%s1170 + $0x98] sm:$0xff]
        %v1314 = vld [vmem:[%s1170 + $0xa0] sm:$0xff]
        %v1315 = vld [vmem:[%s1170 + $0xa8] sm:$0xff]
        %v1316 = vld [vmem:[%s1170 + $0xb0] sm:$0xff]
        %v1317 = vld [vmem:[%s1170 + $0xb8] sm:$0xff]
        %v1318 = vld [vmem:[%s1170 + $0xc0] sm:$0xff]
        %v1319 = vld [vmem:[%s1170 + $0xc8] sm:$0xff]
        %v1320 = vld [vmem:[%s1170 + $0xd0] sm:$0xff]
        %v1321 = vld [vmem:[%s1170 + $0xd8] sm:$0xff]
        %v1322 = vld [vmem:[%s1170 + $0xe0] sm:$0xff]
        %v1323 = vld [vmem:[%s1170 + $0xe8] sm:$0xff]
        %v1324 = vld [vmem:[%s1170 + $0xf0] sm:$0xff]
        %v1325 = vld [vmem:[%s1170 + $0xf8] sm:$0xff]
        %v1326 = vld [vmem:[%s1170 + $0x100] sm:$0xff]
        %v1327 = vld [vmem:[%s1170 + $0x108] sm:$0xff]
        %v1328 = vld [vmem:[%s1170 + $0x110] sm:$0xff]
        %v1329 = vld [vmem:[%s1170 + $0x118] sm:$0xff]
        %v1330 = vld [vmem:[%s1170 + $0x120] sm:$0xff]
        %v1331 = vld [vmem:[%s1170 + $0x128] sm:$0xff]
        %v1332 = vld [vmem:[%s1170 + $0x130] sm:$0xff]
        %v1333 = vld [vmem:[%s1170 + $0x138] sm:$0xff]
        %v1334 = vld [vmem:[%s1170 + $0x140] sm:$0xff]
        %v1335 = vld [vmem:[%s1170 + $0x148] sm:$0xff]
        %v1336 = vld [vmem:[%s1170 + $0x150] sm:$0xff]
        %v1337 = vld [vmem:[%s1170 + $0x158] sm:$0xff]
        %v1338 = vld [vmem:[%s1170 + $0x160] sm:$0xff]
        %v1339 = vld [vmem:[%s1170 + $0x168] sm:$0xff]
        %v1340 = vld [vmem:[%s1170 + $0x170] sm:$0xff]
        %v1341 = vld [vmem:[%s1170 + $0x178] sm:$0xff]
        %v1342 = vld [vmem:[%s1170 + $0x180] sm:$0xff]
        %v1343 = vld [vmem:[%s1170 + $0x188] sm:$0xff]
        %v1344 = vld [vmem:[%s1170 + $0x190] sm:$0xff]
        %v1345 = vld [vmem:[%s1170 + $0x198] sm:$0xff]
        %v1346 = vld [vmem:[%s1170 + $0x1a0] sm:$0xff]
        %v1347 = vld [vmem:[%s1170 + $0x1a8] sm:$0xff]
        %v1348 = vld [vmem:[%s1170 + $0x1b0] sm:$0xff]
        %v1349 = vld [vmem:[%s1170 + $0x1b8] sm:$0xff]
        %v1350 = vld [vmem:[%s1170 + $0x1c0] sm:$0xff]
        %v1351 = vld [vmem:[%s1170 + $0x1c8] sm:$0xff]
        %v1352 = vld [vmem:[%s1170 + $0x1d0] sm:$0xff]
        %v1353 = vld [vmem:[%s1170 + $0x1d8] sm:$0xff]
        %v1354 = vld [vmem:[%s1170 + $0x1e0] sm:$0xff]
        %v1355 = vld [vmem:[%s1170 + $0x1e8] sm:$0xff]
        %v1356 = vld [vmem:[%s1170 + $0x1f0] sm:$0xff]
        %v1357 = vld [vmem:[%s1170 + $0x1f8] sm:$0xff]
        %v1358 = vld [vmem:[#allocation12] sm:$0xff]
        %v1359 = vld [vmem:[#allocation12 + $0x8] sm:$0xff]
        %v1360 = vld [vmem:[#allocation12 + $0x10] sm:$0xff]
        %v1361 = vld [vmem:[#allocation12 + $0x18] sm:$0xff]
        %v1362 = vld [vmem:[#allocation12 + $0x20] sm:$0xff]
        %v1363 = vld [vmem:[#allocation12 + $0x28] sm:$0xff]
        %v1364 = vld [vmem:[#allocation12 + $0x30] sm:$0xff]
        %v1365 = vld [vmem:[#allocation12 + $0x38] sm:$0xff]
        %v1366 = vld [vmem:[#allocation12 + $0x40] sm:$0xff]
        %v1367 = vld [vmem:[#allocation12 + $0x48] sm:$0xff]
        %v1368 = vld [vmem:[#allocation12 + $0x50] sm:$0xff]
        %v1369 = vld [vmem:[#allocation12 + $0x58] sm:$0xff]
        %v1370 = vld [vmem:[#allocation12 + $0x60] sm:$0xff]
        %v1371 = vld [vmem:[#allocation12 + $0x68] sm:$0xff]
        %v1372 = vld [vmem:[#allocation12 + $0x70] sm:$0xff]
        %v1373 = vld [vmem:[#allocation12 + $0x78] sm:$0xff]
        %v1374 = vld [vmem:[%s7] sm:$0x1]
        %v1376 = vlaneseq
        %v1377 = vshrl.u32 %v1376, 7
        %v1378 = vsub.s32 0, %v1377
        %v1379 = vrot.slane %v1374, %v1378
        %1381 = vmatprep.subr.mxu0 0.0
        %1382 = vmatpush1.msra.mxu0 %v1358
        %1383 = vmatprep.subr.mxu0 0.0
        %1384 = vmatpush1.msra.mxu0 %v1359
        %1385 = vmatprep.subr.mxu0 0.0
        %1386 = vmatpush1.msra.mxu0 %v1360
        %1387 = vmatprep.subr.mxu0 0.0
        %1388 = vmatpush1.msra.mxu0 %v1361
        %1389 = vmatprep.subr.mxu0 0.0
        %1390 = vmatpush1.msra.mxu0 %v1362
        %1391 = vmatprep.subr.mxu0 0.0
        %1392 = vmatpush1.msra.mxu0 %v1363
        %1393 = vmatprep.subr.mxu0 0.0
        %1394 = vmatpush1.msra.mxu0 %v1364
        %1395 = vmatprep.subr.mxu0 0.0
        %1396 = vmatpush1.msra.mxu0 %v1365
        %1397 = vmatprep.subr.mxu0 0.0
        %1398 = vmatpush1.msra.mxu0 %v1366
        %1399 = vmatprep.subr.mxu0 0.0
        %1400 = vmatpush1.msra.mxu0 %v1367
        %1401 = vmatprep.subr.mxu0 0.0
        %1402 = vmatpush1.msra.mxu0 %v1368
        %1403 = vmatprep.subr.mxu0 0.0
        %1404 = vmatpush1.msra.mxu0 %v1369
        %1405 = vmatprep.subr.mxu0 0.0
        %1406 = vmatpush1.msra.mxu0 %v1370
        %1407 = vmatprep.subr.mxu0 0.0
        %1408 = vmatpush1.msra.mxu0 %v1371
        %1409 = vmatprep.subr.mxu0 0.0
        %1410 = vmatpush1.msra.mxu0 %v1372
        %1411 = vmatprep.subr.mxu0 0.0
        %1412 = vmatpush1.msra.mxu0 %v1373
        %1413 = vmatprep.subr.mxu0 0.0
        %1414 = vmatpush1.msra.mxu0 0.0
        %1415 = vmatprep.subr.mxu0 0.0
        %1416 = vmatpush1.msra.mxu0 0.0
        %1417 = vmatprep.subr.mxu0 0.0
        %1418 = vmatpush1.msra.mxu0 0.0
        %1419 = vmatprep.subr.mxu0 0.0
        %1420 = vmatpush1.msra.mxu0 0.0
        %1421 = vmatprep.subr.mxu0 0.0
        %1422 = vmatpush1.msra.mxu0 0.0
        %1423 = vmatprep.subr.mxu0 0.0
        %1424 = vmatpush1.msra.mxu0 0.0
        %1425 = vmatprep.subr.mxu0 0.0
        %1426 = vmatpush1.msra.mxu0 0.0
        %1427 = vmatprep.subr.mxu0 0.0
        %1428 = vmatpush1.msra.mxu0 0.0
        %1429 = vmatprep.subr.mxu0 0.0
        %1430 = vmatpush1.msra.mxu0 0.0
        %1431 = vmatprep.subr.mxu0 0.0
        %1432 = vmatpush1.msra.mxu0 0.0
        %1433 = vmatprep.subr.mxu0 0.0
        %1434 = vmatpush1.msra.mxu0 0.0
        %1435 = vmatprep.subr.mxu0 0.0
        %1436 = vmatpush1.msra.mxu0 0.0
        %1437 = vmatprep.subr.mxu0 0.0
        %1438 = vmatpush1.msra.mxu0 0.0
        %1439 = vmatprep.subr.mxu0 0.0
        %1440 = vmatpush1.msra.mxu0 0.0
        %1441 = vmatprep.subr.mxu0 0.0
        %1442 = vmatpush1.msra.mxu0 0.0
        %1443 = vmatprep.subr.mxu0 0.0
        %1444 = vmatpush1.msra.mxu0 0.0
        %1445 = vmatprep.mubr.f32.mxu0 0.0
        %1446 = vmatmul.mubr.f32.gmra.mrb[0].mxu0 %v1294
        %v1447 = vpop.f32.mrb[0].mxu0
        %v1448 = vadd.f32 %v1379, %v1447
        %v1449 = vpop.f32.mrb[0].mxu0
        %1450 = vmatprep.mubr.f32.mxu0 0.0
        %1451 = vmatmul.mubr.f32.gmra.mrb[0].mxu0 %v1295
        %v1452 = vpop.f32.mrb[0].mxu0
        %v1453 = vadd.f32 %v1379, %v1452
        %v1454 = vpop.f32.mrb[0].mxu0
        %1455 = vmatprep.mubr.f32.mxu0 0.0
        %1456 = vmatmul.mubr.f32.gmra.mrb[0].mxu0 %v1296
        %v1457 = vpop.f32.mrb[0].mxu0
        %v1458 = vadd.f32 %v1379, %v1457
        %v1459 = vpop.f32.mrb[0].mxu0
        %1460 = vmatprep.mubr.f32.mxu0 0.0
        %1461 = vmatmul.mubr.f32.gmra.mrb[0].mxu0 %v1297
        %v1462 = vpop.f32.mrb[0].mxu0
        %v1463 = vadd.f32 %v1379, %v1462
        %v1464 = vpop.f32.mrb[0].mxu0
        %1465 = vmatprep.mubr.f32.mxu0 0.0
        %1466 = vmatmul.mubr.f32.gmra.mrb[0].mxu0 %v1298
        %v1467 = vpop.f32.mrb[0].mxu0
        %v1468 = vadd.f32 %v1379, %v1467
        %v1469 = vpop.f32.mrb[0].mxu0
        %1470 = vmatprep.mubr.f32.mxu0 0.0
        %1471 = vmatmul.mubr.f32.gmra.mrb[0].mxu0 %v1299
        %v1472 = vpop.f32.mrb[0].mxu0
        %v1473 = vadd.f32 %v1379, %v1472
        %v1474 = vpop.f32.mrb[0].mxu0
        %1475 = vmatprep.mubr.f32.mxu0 0.0
        %1476 = vmatmul.mubr.f32.gmra.mrb[0].mxu0 %v1300
        %v1477 = vpop.f32.mrb[0].mxu0
        %v1478 = vadd.f32 %v1379, %v1477
        %v1479 = vpop.f32.mrb[0].mxu0
        %1480 = vmatprep.mubr.f32.mxu0 0.0
        %1481 = vmatmul.mubr.f32.gmra.mrb[0].mxu0 %v1301
        %v1482 = vpop.f32.mrb[0].mxu0
        %v1483 = vadd.f32 %v1379, %v1482
        %v1484 = vpop.f32.mrb[0].mxu0
        %1485 = vmatprep.mubr.f32.mxu0 0.0
        %1486 = vmatmul.mubr.f32.gmra.mrb[0].mxu0 %v1302
        %v1487 = vpop.f32.mrb[0].mxu0
        %v1488 = vadd.f32 %v1379, %v1487
        %v1489 = vpop.f32.mrb[0].mxu0
        %1490 = vmatprep.mubr.f32.mxu0 0.0
        %1491 = vmatmul.mubr.f32.gmra.mrb[0].mxu0 %v1303
        %v1492 = vpop.f32.mrb[0].mxu0
        %v1493 = vadd.f32 %v1379, %v1492
        %v1494 = vpop.f32.mrb[0].mxu0
        %1495 = vmatprep.mubr.f32.mxu0 0.0
        %1496 = vmatmul.mubr.f32.gmra.mrb[0].mxu0 %v1304
        %v1497 = vpop.f32.mrb[0].mxu0
        %v1498 = vadd.f32 %v1379, %v1497
        %v1499 = vpop.f32.mrb[0].mxu0
        %1500 = vmatprep.mubr.f32.mxu0 0.0
        %1501 = vmatmul.mubr.f32.gmra.mrb[0].mxu0 %v1305
        %v1502 = vpop.f32.mrb[0].mxu0
        %v1503 = vadd.f32 %v1379, %v1502
        %v1504 = vpop.f32.mrb[0].mxu0
        %1505 = vmatprep.mubr.f32.mxu0 0.0
        %1506 = vmatmul.mubr.f32.gmra.mrb[0].mxu0 %v1306
        %v1507 = vpop.f32.mrb[0].mxu0
        %v1508 = vadd.f32 %v1379, %v1507
        %v1509 = vpop.f32.mrb[0].mxu0
        %1510 = vmatprep.mubr.f32.mxu0 0.0
        %1511 = vmatmul.mubr.f32.gmra.mrb[0].mxu0 %v1307
        %v1512 = vpop.f32.mrb[0].mxu0
        %v1513 = vadd.f32 %v1379, %v1512
        %v1514 = vpop.f32.mrb[0].mxu0
        %1515 = vmatprep.mubr.f32.mxu0 0.0
        %1516 = vmatmul.mubr.f32.gmra.mrb[0].mxu0 %v1308
        %v1517 = vpop.f32.mrb[0].mxu0
        %v1518 = vadd.f32 %v1379, %v1517
        %v1519 = vpop.f32.mrb[0].mxu0
        %1520 = vmatprep.mubr.f32.mxu0 0.0
        %1521 = vmatmul.mubr.f32.gmra.mrb[0].mxu0 %v1309
        %v1522 = vpop.f32.mrb[0].mxu0
        %v1523 = vadd.f32 %v1379, %v1522
        %v1524 = vpop.f32.mrb[0].mxu0
        %1525 = vmatprep.mubr.f32.mxu0 0.0
        %1526 = vmatmul.mubr.f32.gmra.mrb[0].mxu0 %v1310
        %v1527 = vpop.f32.mrb[0].mxu0
        %v1528 = vadd.f32 %v1379, %v1527
        %v1529 = vpop.f32.mrb[0].mxu0
        %1530 = vmatprep.mubr.f32.mxu0 0.0
        %1531 = vmatmul.mubr.f32.gmra.mrb[0].mxu0 %v1311
        %v1532 = vpop.f32.mrb[0].mxu0
        %v1533 = vadd.f32 %v1379, %v1532
        %v1534 = vpop.f32.mrb[0].mxu0
        %1535 = vmatprep.mubr.f32.mxu0 0.0
        %1536 = vmatmul.mubr.f32.gmra.mrb[0].mxu0 %v1312
        %v1537 = vpop.f32.mrb[0].mxu0
        %v1538 = vadd.f32 %v1379, %v1537
        %v1539 = vpop.f32.mrb[0].mxu0
        %1540 = vmatprep.mubr.f32.mxu0 0.0
        %1541 = vmatmul.mubr.f32.gmra.mrb[0].mxu0 %v1313
        %v1542 = vpop.f32.mrb[0].mxu0
        %v1543 = vadd.f32 %v1379, %v1542
        %v1544 = vpop.f32.mrb[0].mxu0
        %1545 = vmatprep.mubr.f32.mxu0 0.0
        %1546 = vmatmul.mubr.f32.gmra.mrb[0].mxu0 %v1314
        %v1547 = vpop.f32.mrb[0].mxu0
        %v1548 = vadd.f32 %v1379, %v1547
        %v1549 = vpop.f32.mrb[0].mxu0
        %1550 = vmatprep.mubr.f32.mxu0 0.0
        %1551 = vmatmul.mubr.f32.gmra.mrb[0].mxu0 %v1315
        %v1552 = vpop.f32.mrb[0].mxu0
        %v1553 = vadd.f32 %v1379, %v1552
        %v1554 = vpop.f32.mrb[0].mxu0
        %1555 = vmatprep.mubr.f32.mxu0 0.0
        %1556 = vmatmul.mubr.f32.gmra.mrb[0].mxu0 %v1316
        %v1557 = vpop.f32.mrb[0].mxu0
        %v1558 = vadd.f32 %v1379, %v1557
        %v1559 = vpop.f32.mrb[0].mxu0
        %1560 = vmatprep.mubr.f32.mxu0 0.0
        %1561 = vmatmul.mubr.f32.gmra.mrb[0].mxu0 %v1317
        %v1562 = vpop.f32.mrb[0].mxu0
        %v1563 = vadd.f32 %v1379, %v1562
        %v1564 = vpop.f32.mrb[0].mxu0
        %1565 = vmatprep.mubr.f32.mxu0 0.0
        %1566 = vmatmul.mubr.f32.gmra.mrb[0].mxu0 %v1318
        %v1567 = vpop.f32.mrb[0].mxu0
        %v1568 = vadd.f32 %v1379, %v1567
        %v1569 = vpop.f32.mrb[0].mxu0
        %1570 = vmatprep.mubr.f32.mxu0 0.0
        %1571 = vmatmul.mubr.f32.gmra.mrb[0].mxu0 %v1319
        %v1572 = vpop.f32.mrb[0].mxu0
        %v1573 = vadd.f32 %v1379, %v1572
        %v1574 = vpop.f32.mrb[0].mxu0
        %1575 = vmatprep.mubr.f32.mxu0 0.0
        %1576 = vmatmul.mubr.f32.gmra.mrb[0].mxu0 %v1320
        %v1577 = vpop.f32.mrb[0].mxu0
        %v1578 = vadd.f32 %v1379, %v1577
        %v1579 = vpop.f32.mrb[0].mxu0
        %1580 = vmatprep.mubr.f32.mxu0 0.0
        %1581 = vmatmul.mubr.f32.gmra.mrb[0].mxu0 %v1321
        %v1582 = vpop.f32.mrb[0].mxu0
        %v1583 = vadd.f32 %v1379, %v1582
        %v1584 = vpop.f32.mrb[0].mxu0
        %1585 = vmatprep.mubr.f32.mxu0 0.0
        %1586 = vmatmul.mubr.f32.gmra.mrb[0].mxu0 %v1322
        %v1587 = vpop.f32.mrb[0].mxu0
        %v1588 = vadd.f32 %v1379, %v1587
        %v1589 = vpop.f32.mrb[0].mxu0
        %1590 = vmatprep.mubr.f32.mxu0 0.0
        %1591 = vmatmul.mubr.f32.gmra.mrb[0].mxu0 %v1323
        %v1592 = vpop.f32.mrb[0].mxu0
        %v1593 = vadd.f32 %v1379, %v1592
        %v1594 = vpop.f32.mrb[0].mxu0
        %1595 = vmatprep.mubr.f32.mxu0 0.0
        %1596 = vmatmul.mubr.f32.gmra.mrb[0].mxu0 %v1324
        %v1597 = vpop.f32.mrb[0].mxu0
        %v1598 = vadd.f32 %v1379, %v1597
        %v1599 = vpop.f32.mrb[0].mxu0
        %1600 = vmatprep.mubr.f32.mxu0 0.0
        %1601 = vmatmul.mubr.f32.gmra.mrb[0].mxu0 %v1325
        %v1602 = vpop.f32.mrb[0].mxu0
        %v1603 = vadd.f32 %v1379, %v1602
        %v1604 = vpop.f32.mrb[0].mxu0
        %1605 = vmatprep.mubr.f32.mxu0 0.0
        %1606 = vmatmul.mubr.f32.gmra.mrb[0].mxu0 %v1326
        %v1607 = vpop.f32.mrb[0].mxu0
        %v1608 = vadd.f32 %v1379, %v1607
        %v1609 = vpop.f32.mrb[0].mxu0
        %1610 = vmatprep.mubr.f32.mxu0 0.0
        %1611 = vmatmul.mubr.f32.gmra.mrb[0].mxu0 %v1327
        %v1612 = vpop.f32.mrb[0].mxu0
        %v1613 = vadd.f32 %v1379, %v1612
        %v1614 = vpop.f32.mrb[0].mxu0
        %1615 = vmatprep.mubr.f32.mxu0 0.0
        %1616 = vmatmul.mubr.f32.gmra.mrb[0].mxu0 %v1328
        %v1617 = vpop.f32.mrb[0].mxu0
        %v1618 = vadd.f32 %v1379, %v1617
        %v1619 = vpop.f32.mrb[0].mxu0
        %1620 = vmatprep.mubr.f32.mxu0 0.0
        %1621 = vmatmul.mubr.f32.gmra.mrb[0].mxu0 %v1329
        %v1622 = vpop.f32.mrb[0].mxu0
        %v1623 = vadd.f32 %v1379, %v1622
        %v1624 = vpop.f32.mrb[0].mxu0
        %1625 = vmatprep.mubr.f32.mxu0 0.0
        %1626 = vmatmul.mubr.f32.gmra.mrb[0].mxu0 %v1330
        %v1627 = vpop.f32.mrb[0].mxu0
        %v1628 = vadd.f32 %v1379, %v1627
        %v1629 = vpop.f32.mrb[0].mxu0
        %1630 = vmatprep.mubr.f32.mxu0 0.0
        %1631 = vmatmul.mubr.f32.gmra.mrb[0].mxu0 %v1331
        %v1632 = vpop.f32.mrb[0].mxu0
        %v1633 = vadd.f32 %v1379, %v1632
        %v1634 = vpop.f32.mrb[0].mxu0
        %1635 = vmatprep.mubr.f32.mxu0 0.0
        %1636 = vmatmul.mubr.f32.gmra.mrb[0].mxu0 %v1332
        %v1637 = vpop.f32.mrb[0].mxu0
        %v1638 = vadd.f32 %v1379, %v1637
        %v1639 = vpop.f32.mrb[0].mxu0
        %1640 = vmatprep.mubr.f32.mxu0 0.0
        %1641 = vmatmul.mubr.f32.gmra.mrb[0].mxu0 %v1333
        %v1642 = vpop.f32.mrb[0].mxu0
        %v1643 = vadd.f32 %v1379, %v1642
        %v1644 = vpop.f32.mrb[0].mxu0
        %1645 = vmatprep.mubr.f32.mxu0 0.0
        %1646 = vmatmul.mubr.f32.gmra.mrb[0].mxu0 %v1334
        %v1647 = vpop.f32.mrb[0].mxu0
        %v1648 = vadd.f32 %v1379, %v1647
        %v1649 = vpop.f32.mrb[0].mxu0
        %1650 = vmatprep.mubr.f32.mxu0 0.0
        %1651 = vmatmul.mubr.f32.gmra.mrb[0].mxu0 %v1335
        %v1652 = vpop.f32.mrb[0].mxu0
        %v1653 = vadd.f32 %v1379, %v1652
        %v1654 = vpop.f32.mrb[0].mxu0
        %1655 = vmatprep.mubr.f32.mxu0 0.0
        %1656 = vmatmul.mubr.f32.gmra.mrb[0].mxu0 %v1336
        %v1657 = vpop.f32.mrb[0].mxu0
        %v1658 = vadd.f32 %v1379, %v1657
        %v1659 = vpop.f32.mrb[0].mxu0
        %1660 = vmatprep.mubr.f32.mxu0 0.0
        %1661 = vmatmul.mubr.f32.gmra.mrb[0].mxu0 %v1337
        %v1662 = vpop.f32.mrb[0].mxu0
        %v1663 = vadd.f32 %v1379, %v1662
        %v1664 = vpop.f32.mrb[0].mxu0
        %1665 = vmatprep.mubr.f32.mxu0 0.0
        %1666 = vmatmul.mubr.f32.gmra.mrb[0].mxu0 %v1338
        %v1667 = vpop.f32.mrb[0].mxu0
        %v1668 = vadd.f32 %v1379, %v1667
        %v1669 = vpop.f32.mrb[0].mxu0
        %1670 = vmatprep.mubr.f32.mxu0 0.0
        %1671 = vmatmul.mubr.f32.gmra.mrb[0].mxu0 %v1339
        %v1672 = vpop.f32.mrb[0].mxu0
        %v1673 = vadd.f32 %v1379, %v1672
        %v1674 = vpop.f32.mrb[0].mxu0
        %1675 = vmatprep.mubr.f32.mxu0 0.0
        %1676 = vmatmul.mubr.f32.gmra.mrb[0].mxu0 %v1340
        %v1677 = vpop.f32.mrb[0].mxu0
        %v1678 = vadd.f32 %v1379, %v1677
        %v1679 = vpop.f32.mrb[0].mxu0
        %1680 = vmatprep.mubr.f32.mxu0 0.0
        %1681 = vmatmul.mubr.f32.gmra.mrb[0].mxu0 %v1341
        %v1682 = vpop.f32.mrb[0].mxu0
        %v1683 = vadd.f32 %v1379, %v1682
        %v1684 = vpop.f32.mrb[0].mxu0
        %1685 = vmatprep.mubr.f32.mxu0 0.0
        %1686 = vmatmul.mubr.f32.gmra.mrb[0].mxu0 %v1342
        %v1687 = vpop.f32.mrb[0].mxu0
        %v1688 = vadd.f32 %v1379, %v1687
        %v1689 = vpop.f32.mrb[0].mxu0
        %1690 = vmatprep.mubr.f32.mxu0 0.0
        %1691 = vmatmul.mubr.f32.gmra.mrb[0].mxu0 %v1343
        %v1692 = vpop.f32.mrb[0].mxu0
        %v1693 = vadd.f32 %v1379, %v1692
        %v1694 = vpop.f32.mrb[0].mxu0
        %1695 = vmatprep.mubr.f32.mxu0 0.0
        %1696 = vmatmul.mubr.f32.gmra.mrb[0].mxu0 %v1344
        %v1697 = vpop.f32.mrb[0].mxu0
        %v1698 = vadd.f32 %v1379, %v1697
        %v1699 = vpop.f32.mrb[0].mxu0
        %1700 = vmatprep.mubr.f32.mxu0 0.0
        %1701 = vmatmul.mubr.f32.gmra.mrb[0].mxu0 %v1345
        %v1702 = vpop.f32.mrb[0].mxu0
        %v1703 = vadd.f32 %v1379, %v1702
        %v1704 = vpop.f32.mrb[0].mxu0
        %1705 = vmatprep.mubr.f32.mxu0 0.0
        %1706 = vmatmul.mubr.f32.gmra.mrb[0].mxu0 %v1346
        %v1707 = vpop.f32.mrb[0].mxu0
        %v1708 = vadd.f32 %v1379, %v1707
        %v1709 = vpop.f32.mrb[0].mxu0
        %1710 = vmatprep.mubr.f32.mxu0 0.0
        %1711 = vmatmul.mubr.f32.gmra.mrb[0].mxu0 %v1347
        %v1712 = vpop.f32.mrb[0].mxu0
        %v1713 = vadd.f32 %v1379, %v1712
        %v1714 = vpop.f32.mrb[0].mxu0
        %1715 = vmatprep.mubr.f32.mxu0 0.0
        %1716 = vmatmul.mubr.f32.gmra.mrb[0].mxu0 %v1348
        %v1717 = vpop.f32.mrb[0].mxu0
        %v1718 = vadd.f32 %v1379, %v1717
        %v1719 = vpop.f32.mrb[0].mxu0
        %1720 = vmatprep.mubr.f32.mxu0 0.0
        %1721 = vmatmul.mubr.f32.gmra.mrb[0].mxu0 %v1349
        %v1722 = vpop.f32.mrb[0].mxu0
        %v1723 = vadd.f32 %v1379, %v1722
        %v1724 = vpop.f32.mrb[0].mxu0
        %1725 = vmatprep.mubr.f32.mxu0 0.0
        %1726 = vmatmul.mubr.f32.gmra.mrb[0].mxu0 %v1350
        %v1727 = vpop.f32.mrb[0].mxu0
        %v1728 = vadd.f32 %v1379, %v1727
        %v1729 = vpop.f32.mrb[0].mxu0
        %1730 = vmatprep.mubr.f32.mxu0 0.0
        %1731 = vmatmul.mubr.f32.gmra.mrb[0].mxu0 %v1351
        %v1732 = vpop.f32.mrb[0].mxu0
        %v1733 = vadd.f32 %v1379, %v1732
        %v1734 = vpop.f32.mrb[0].mxu0
        %1735 = vmatprep.mubr.f32.mxu0 0.0
        %1736 = vmatmul.mubr.f32.gmra.mrb[0].mxu0 %v1352
        %v1737 = vpop.f32.mrb[0].mxu0
        %v1738 = vadd.f32 %v1379, %v1737
        %v1739 = vpop.f32.mrb[0].mxu0
        %1740 = vmatprep.mubr.f32.mxu0 0.0
        %1741 = vmatmul.mubr.f32.gmra.mrb[0].mxu0 %v1353
        %v1742 = vpop.f32.mrb[0].mxu0
        %v1743 = vadd.f32 %v1379, %v1742
        %v1744 = vpop.f32.mrb[0].mxu0
        %1745 = vmatprep.mubr.f32.mxu0 0.0
        %1746 = vmatmul.mubr.f32.gmra.mrb[0].mxu0 %v1354
        %v1747 = vpop.f32.mrb[0].mxu0
        %v1748 = vadd.f32 %v1379, %v1747
        %v1749 = vpop.f32.mrb[0].mxu0
        %1750 = vmatprep.mubr.f32.mxu0 0.0
        %1751 = vmatmul.mubr.f32.gmra.mrb[0].mxu0 %v1355
        %v1752 = vpop.f32.mrb[0].mxu0
        %v1753 = vadd.f32 %v1379, %v1752
        %v1754 = vpop.f32.mrb[0].mxu0
        %1755 = vmatprep.mubr.f32.mxu0 0.0
        %1756 = vmatmul.mubr.f32.gmra.mrb[0].mxu0 %v1356
        %v1757 = vpop.f32.mrb[0].mxu0
        %v1758 = vadd.f32 %v1379, %v1757
        %v1759 = vpop.f32.mrb[0].mxu0
        %1760 = vmatprep.mubr.f32.mxu0 0.0
        %1761 = vmatmul.mubr.f32.gmra.mrb[0].mxu0 %v1357
        %v1762 = vpop.f32.mrb[0].mxu0
        %v1763 = vadd.f32 %v1379, %v1762
        %v1764 = vpop.f32.mrb[0].mxu0
        %1765 = vdwg.mxu0
        %v1766 = vld [vmem:[#allocation13] sm:$0xff]
        %v1767 = vld [vmem:[#allocation13 + $0x8] sm:$0xff]
        %v1768 = vld [vmem:[#allocation13 + $0x10] sm:$0xff]
        %v1769 = vld [vmem:[#allocation13 + $0x18] sm:$0xff]
        %v1770 = vld [vmem:[#allocation13 + $0x20] sm:$0xff]
        %v1771 = vld [vmem:[#allocation13 + $0x28] sm:$0xff]
        %v1772 = vld [vmem:[#allocation13 + $0x30] sm:$0xff]
        %v1773 = vld [vmem:[#allocation13 + $0x38] sm:$0xff]
        %v1774 = vld [vmem:[#allocation13 + $0x40] sm:$0xff]
        %v1775 = vld [vmem:[#allocation13 + $0x48] sm:$0xff]
        %v1776 = vld [vmem:[#allocation13 + $0x50] sm:$0xff]
        %v1777 = vld [vmem:[#allocation13 + $0x58] sm:$0xff]
        %v1778 = vld [vmem:[#allocation13 + $0x60] sm:$0xff]
        %v1779 = vld [vmem:[#allocation13 + $0x68] sm:$0xff]
        %v1780 = vld [vmem:[#allocation13 + $0x70] sm:$0xff]
        %v1781 = vld [vmem:[#allocation13 + $0x78] sm:$0xff]
        %v1782 = vld [vmem:[%s9] sm:$0x1]
        %v1784 = vlaneseq
        %v1785 = vshrl.u32 %v1784, 7
        %v1786 = vsub.s32 0, %v1785
        %v1787 = vrot.slane %v1782, %v1786
        %1789 = vmatprep.subr.mxu0 0.0
        %1790 = vmatpush1.msra.mxu0 %v1766
        %1791 = vmatprep.subr.mxu0 0.0
        %1792 = vmatpush1.msra.mxu0 %v1767
        %1793 = vmatprep.subr.mxu0 0.0
        %1794 = vmatpush1.msra.mxu0 %v1768
        %1795 = vmatprep.subr.mxu0 0.0
        %1796 = vmatpush1.msra.mxu0 %v1769
        %1797 = vmatprep.subr.mxu0 0.0
        %1798 = vmatpush1.msra.mxu0 %v1770
        %1799 = vmatprep.subr.mxu0 0.0
        %1800 = vmatpush1.msra.mxu0 %v1771
        %1801 = vmatprep.subr.mxu0 0.0
        %1802 = vmatpush1.msra.mxu0 %v1772
        %1803 = vmatprep.subr.mxu0 0.0
        %1804 = vmatpush1.msra.mxu0 %v1773
        %1805 = vmatprep.subr.mxu0 0.0
        %1806 = vmatpush1.msra.mxu0 %v1774
        %1807 = vmatprep.subr.mxu0 0.0
        %1808 = vmatpush1.msra.mxu0 %v1775
        %1809 = vmatprep.subr.mxu0 0.0
        %1810 = vmatpush1.msra.mxu0 %v1776
        %1811 = vmatprep.subr.mxu0 0.0
        %1812 = vmatpush1.msra.mxu0 %v1777
        %1813 = vmatprep.subr.mxu0 0.0
        %1814 = vmatpush1.msra.mxu0 %v1778
        %1815 = vmatprep.subr.mxu0 0.0
        %1816 = vmatpush1.msra.mxu0 %v1779
        %1817 = vmatprep.subr.mxu0 0.0
        %1818 = vmatpush1.msra.mxu0 %v1780
        %1819 = vmatprep.subr.mxu0 0.0
        %1820 = vmatpush1.msra.mxu0 %v1781
        %1821 = vmatprep.subr.mxu0 0.0
        %1822 = vmatpush1.msra.mxu0 0.0
        %1823 = vmatprep.subr.mxu0 0.0
        %1824 = vmatpush1.msra.mxu0 0.0
        %1825 = vmatprep.subr.mxu0 0.0
        %1826 = vmatpush1.msra.mxu0 0.0
        %1827 = vmatprep.subr.mxu0 0.0
        %1828 = vmatpush1.msra.mxu0 0.0
        %1829 = vmatprep.subr.mxu0 0.0
        %1830 = vmatpush1.msra.mxu0 0.0
        %1831 = vmatprep.subr.mxu0 0.0
        %1832 = vmatpush1.msra.mxu0 0.0
        %1833 = vmatprep.subr.mxu0 0.0
        %1834 = vmatpush1.msra.mxu0 0.0
        %1835 = vmatprep.subr.mxu0 0.0
        %1836 = vmatpush1.msra.mxu0 0.0
        %1837 = vmatprep.subr.mxu0 0.0
        %1838 = vmatpush1.msra.mxu0 0.0
        %1839 = vmatprep.subr.mxu0 0.0
        %1840 = vmatpush1.msra.mxu0 0.0
        %1841 = vmatprep.subr.mxu0 0.0
        %1842 = vmatpush1.msra.mxu0 0.0
        %1843 = vmatprep.subr.mxu0 0.0
        %1844 = vmatpush1.msra.mxu0 0.0
        %1845 = vmatprep.subr.mxu0 0.0
        %1846 = vmatpush1.msra.mxu0 0.0
        %1847 = vmatprep.subr.mxu0 0.0
        %1848 = vmatpush1.msra.mxu0 0.0
        %1849 = vmatprep.subr.mxu0 0.0
        %1850 = vmatpush1.msra.mxu0 0.0
        %1851 = vmatprep.subr.mxu0 0.0
        %1852 = vmatpush1.msra.mxu0 0.0
        %1853 = vmatprep.mubr.f32.mxu0 0.0
        %1854 = vmatmul.mubr.f32.gmra.mrb[0].mxu0 %v1294
        %v1855 = vpop.f32.mrb[0].mxu0
        %v1856 = vadd.f32 %v1787, %v1855
        %v1857 = vpop.f32.mrb[0].mxu0
        %1858 = vmatprep.mubr.f32.mxu0 0.0
        %1859 = vmatmul.mubr.f32.gmra.mrb[0].mxu0 %v1295
        %v1860 = vpop.f32.mrb[0].mxu0
        %v1861 = vadd.f32 %v1787, %v1860
        %v1862 = vpop.f32.mrb[0].mxu0
        %1863 = vmatprep.mubr.f32.mxu0 0.0
        %1864 = vmatmul.mubr.f32.gmra.mrb[0].mxu0 %v1296
        %v1865 = vpop.f32.mrb[0].mxu0
        %v1866 = vadd.f32 %v1787, %v1865
        %v1867 = vpop.f32.mrb[0].mxu0
        %1868 = vmatprep.mubr.f32.mxu0 0.0
        %1869 = vmatmul.mubr.f32.gmra.mrb[0].mxu0 %v1297
        %v1870 = vpop.f32.mrb[0].mxu0
        %v1871 = vadd.f32 %v1787, %v1870
        %v1872 = vpop.f32.mrb[0].mxu0
        %1873 = vmatprep.mubr.f32.mxu0 0.0
        %1874 = vmatmul.mubr.f32.gmra.mrb[0].mxu0 %v1298
        %v1875 = vpop.f32.mrb[0].mxu0
        %v1876 = vadd.f32 %v1787, %v1875
        %v1877 = vpop.f32.mrb[0].mxu0
        %1878 = vmatprep.mubr.f32.mxu0 0.0
        %1879 = vmatmul.mubr.f32.gmra.mrb[0].mxu0 %v1299
        %v1880 = vpop.f32.mrb[0].mxu0
        %v1881 = vadd.f32 %v1787, %v1880
        %v1882 = vpop.f32.mrb[0].mxu0
        %1883 = vmatprep.mubr.f32.mxu0 0.0
        %1884 = vmatmul.mubr.f32.gmra.mrb[0].mxu0 %v1300
        %v1885 = vpop.f32.mrb[0].mxu0
        %v1886 = vadd.f32 %v1787, %v1885
        %v1887 = vpop.f32.mrb[0].mxu0
        %1888 = vmatprep.mubr.f32.mxu0 0.0
        %1889 = vmatmul.mubr.f32.gmra.mrb[0].mxu0 %v1301
        %v1890 = vpop.f32.mrb[0].mxu0
        %v1891 = vadd.f32 %v1787, %v1890
        %v1892 = vpop.f32.mrb[0].mxu0
        %1893 = vmatprep.mubr.f32.mxu0 0.0
        %1894 = vmatmul.mubr.f32.gmra.mrb[0].mxu0 %v1302
        %v1895 = vpop.f32.mrb[0].mxu0
        %v1896 = vadd.f32 %v1787, %v1895
        %v1897 = vpop.f32.mrb[0].mxu0
        %1898 = vmatprep.mubr.f32.mxu0 0.0
        %1899 = vmatmul.mubr.f32.gmra.mrb[0].mxu0 %v1303
        %v1900 = vpop.f32.mrb[0].mxu0
        %v1901 = vadd.f32 %v1787, %v1900
        %v1902 = vpop.f32.mrb[0].mxu0
        %1903 = vmatprep.mubr.f32.mxu0 0.0
        %1904 = vmatmul.mubr.f32.gmra.mrb[0].mxu0 %v1304
        %v1905 = vpop.f32.mrb[0].mxu0
        %v1906 = vadd.f32 %v1787, %v1905
        %v1907 = vpop.f32.mrb[0].mxu0
        %1908 = vmatprep.mubr.f32.mxu0 0.0
        %1909 = vmatmul.mubr.f32.gmra.mrb[0].mxu0 %v1305
        %v1910 = vpop.f32.mrb[0].mxu0
        %v1911 = vadd.f32 %v1787, %v1910
        %v1912 = vpop.f32.mrb[0].mxu0
        %1913 = vmatprep.mubr.f32.mxu0 0.0
        %1914 = vmatmul.mubr.f32.gmra.mrb[0].mxu0 %v1306
        %v1915 = vpop.f32.mrb[0].mxu0
        %v1916 = vadd.f32 %v1787, %v1915
        %v1917 = vpop.f32.mrb[0].mxu0
        %1918 = vmatprep.mubr.f32.mxu0 0.0
        %1919 = vmatmul.mubr.f32.gmra.mrb[0].mxu0 %v1307
        %v1920 = vpop.f32.mrb[0].mxu0
        %v1921 = vadd.f32 %v1787, %v1920
        %v1922 = vpop.f32.mrb[0].mxu0
        %1923 = vmatprep.mubr.f32.mxu0 0.0
        %1924 = vmatmul.mubr.f32.gmra.mrb[0].mxu0 %v1308
        %v1925 = vpop.f32.mrb[0].mxu0
        %v1926 = vadd.f32 %v1787, %v1925
        %v1927 = vpop.f32.mrb[0].mxu0
        %1928 = vmatprep.mubr.f32.mxu0 0.0
        %1929 = vmatmul.mubr.f32.gmra.mrb[0].mxu0 %v1309
        %v1930 = vpop.f32.mrb[0].mxu0
        %v1931 = vadd.f32 %v1787, %v1930
        %v1932 = vpop.f32.mrb[0].mxu0
        %1933 = vmatprep.mubr.f32.mxu0 0.0
        %1934 = vmatmul.mubr.f32.gmra.mrb[0].mxu0 %v1310
        %v1935 = vpop.f32.mrb[0].mxu0
        %v1936 = vadd.f32 %v1787, %v1935
        %v1937 = vpop.f32.mrb[0].mxu0
        %1938 = vmatprep.mubr.f32.mxu0 0.0
        %1939 = vmatmul.mubr.f32.gmra.mrb[0].mxu0 %v1311
        %v1940 = vpop.f32.mrb[0].mxu0
        %v1941 = vadd.f32 %v1787, %v1940
        %v1942 = vpop.f32.mrb[0].mxu0
        %1943 = vmatprep.mubr.f32.mxu0 0.0
        %1944 = vmatmul.mubr.f32.gmra.mrb[0].mxu0 %v1312
        %v1945 = vpop.f32.mrb[0].mxu0
        %v1946 = vadd.f32 %v1787, %v1945
        %v1947 = vpop.f32.mrb[0].mxu0
        %1948 = vmatprep.mubr.f32.mxu0 0.0
        %1949 = vmatmul.mubr.f32.gmra.mrb[0].mxu0 %v1313
        %v1950 = vpop.f32.mrb[0].mxu0
        %v1951 = vadd.f32 %v1787, %v1950
        %v1952 = vpop.f32.mrb[0].mxu0
        %1953 = vmatprep.mubr.f32.mxu0 0.0
        %1954 = vmatmul.mubr.f32.gmra.mrb[0].mxu0 %v1314
        %v1955 = vpop.f32.mrb[0].mxu0
        %v1956 = vadd.f32 %v1787, %v1955
        %v1957 = vpop.f32.mrb[0].mxu0
        %1958 = vmatprep.mubr.f32.mxu0 0.0
        %1959 = vmatmul.mubr.f32.gmra.mrb[0].mxu0 %v1315
        %v1960 = vpop.f32.mrb[0].mxu0
        %v1961 = vadd.f32 %v1787, %v1960
        %v1962 = vpop.f32.mrb[0].mxu0
        %1963 = vmatprep.mubr.f32.mxu0 0.0
        %1964 = vmatmul.mubr.f32.gmra.mrb[0].mxu0 %v1316
        %v1965 = vpop.f32.mrb[0].mxu0
        %v1966 = vadd.f32 %v1787, %v1965
        %v1967 = vpop.f32.mrb[0].mxu0
        %1968 = vmatprep.mubr.f32.mxu0 0.0
        %1969 = vmatmul.mubr.f32.gmra.mrb[0].mxu0 %v1317
        %v1970 = vpop.f32.mrb[0].mxu0
        %v1971 = vadd.f32 %v1787, %v1970
        %v1972 = vpop.f32.mrb[0].mxu0
        %1973 = vmatprep.mubr.f32.mxu0 0.0
        %1974 = vmatmul.mubr.f32.gmra.mrb[0].mxu0 %v1318
        %v1975 = vpop.f32.mrb[0].mxu0
        %v1976 = vadd.f32 %v1787, %v1975
        %v1977 = vpop.f32.mrb[0].mxu0
        %1978 = vmatprep.mubr.f32.mxu0 0.0
        %1979 = vmatmul.mubr.f32.gmra.mrb[0].mxu0 %v1319
        %v1980 = vpop.f32.mrb[0].mxu0
        %v1981 = vadd.f32 %v1787, %v1980
        %v1982 = vpop.f32.mrb[0].mxu0
        %1983 = vmatprep.mubr.f32.mxu0 0.0
        %1984 = vmatmul.mubr.f32.gmra.mrb[0].mxu0 %v1320
        %v1985 = vpop.f32.mrb[0].mxu0
        %v1986 = vadd.f32 %v1787, %v1985
        %v1987 = vpop.f32.mrb[0].mxu0
        %1988 = vmatprep.mubr.f32.mxu0 0.0
        %1989 = vmatmul.mubr.f32.gmra.mrb[0].mxu0 %v1321
        %v1990 = vpop.f32.mrb[0].mxu0
        %v1991 = vadd.f32 %v1787, %v1990
        %v1992 = vpop.f32.mrb[0].mxu0
        %1993 = vmatprep.mubr.f32.mxu0 0.0
        %1994 = vmatmul.mubr.f32.gmra.mrb[0].mxu0 %v1322
        %v1995 = vpop.f32.mrb[0].mxu0
        %v1996 = vadd.f32 %v1787, %v1995
        %v1997 = vpop.f32.mrb[0].mxu0
        %1998 = vmatprep.mubr.f32.mxu0 0.0
        %1999 = vmatmul.mubr.f32.gmra.mrb[0].mxu0 %v1323
        %v2000 = vpop.f32.mrb[0].mxu0
        %v2001 = vadd.f32 %v1787, %v2000
        %v2002 = vpop.f32.mrb[0].mxu0
        %2003 = vmatprep.mubr.f32.mxu0 0.0
        %2004 = vmatmul.mubr.f32.gmra.mrb[0].mxu0 %v1324
        %v2005 = vpop.f32.mrb[0].mxu0
        %v2006 = vadd.f32 %v1787, %v2005
        %v2007 = vpop.f32.mrb[0].mxu0
        %2008 = vmatprep.mubr.f32.mxu0 0.0
        %2009 = vmatmul.mubr.f32.gmra.mrb[0].mxu0 %v1325
        %v2010 = vpop.f32.mrb[0].mxu0
        %v2011 = vadd.f32 %v1787, %v2010
        %v2012 = vpop.f32.mrb[0].mxu0
        %2013 = vmatprep.mubr.f32.mxu0 0.0
        %2014 = vmatmul.mubr.f32.gmra.mrb[0].mxu0 %v1326
        %v2015 = vpop.f32.mrb[0].mxu0
        %v2016 = vadd.f32 %v1787, %v2015
        %v2017 = vpop.f32.mrb[0].mxu0
        %2018 = vmatprep.mubr.f32.mxu0 0.0
        %2019 = vmatmul.mubr.f32.gmra.mrb[0].mxu0 %v1327
        %v2020 = vpop.f32.mrb[0].mxu0
        %v2021 = vadd.f32 %v1787, %v2020
        %v2022 = vpop.f32.mrb[0].mxu0
        %2023 = vmatprep.mubr.f32.mxu0 0.0
        %2024 = vmatmul.mubr.f32.gmra.mrb[0].mxu0 %v1328
        %v2025 = vpop.f32.mrb[0].mxu0
        %v2026 = vadd.f32 %v1787, %v2025
        %v2027 = vpop.f32.mrb[0].mxu0
        %2028 = vmatprep.mubr.f32.mxu0 0.0
        %2029 = vmatmul.mubr.f32.gmra.mrb[0].mxu0 %v1329
        %v2030 = vpop.f32.mrb[0].mxu0
        %v2031 = vadd.f32 %v1787, %v2030
        %v2032 = vpop.f32.mrb[0].mxu0
        %2033 = vmatprep.mubr.f32.mxu0 0.0
        %2034 = vmatmul.mubr.f32.gmra.mrb[0].mxu0 %v1330
        %v2035 = vpop.f32.mrb[0].mxu0
        %v2036 = vadd.f32 %v1787, %v2035
        %v2037 = vpop.f32.mrb[0].mxu0
        %2038 = vmatprep.mubr.f32.mxu0 0.0
        %2039 = vmatmul.mubr.f32.gmra.mrb[0].mxu0 %v1331
        %v2040 = vpop.f32.mrb[0].mxu0
        %v2041 = vadd.f32 %v1787, %v2040
        %v2042 = vpop.f32.mrb[0].mxu0
        %2043 = vmatprep.mubr.f32.mxu0 0.0
        %2044 = vmatmul.mubr.f32.gmra.mrb[0].mxu0 %v1332
        %v2045 = vpop.f32.mrb[0].mxu0
        %v2046 = vadd.f32 %v1787, %v2045
        %v2047 = vpop.f32.mrb[0].mxu0
        %2048 = vmatprep.mubr.f32.mxu0 0.0
        %2049 = vmatmul.mubr.f32.gmra.mrb[0].mxu0 %v1333
        %v2050 = vpop.f32.mrb[0].mxu0
        %v2051 = vadd.f32 %v1787, %v2050
        %v2052 = vpop.f32.mrb[0].mxu0
        %2053 = vmatprep.mubr.f32.mxu0 0.0
        %2054 = vmatmul.mubr.f32.gmra.mrb[0].mxu0 %v1334
        %v2055 = vpop.f32.mrb[0].mxu0
        %v2056 = vadd.f32 %v1787, %v2055
        %v2057 = vpop.f32.mrb[0].mxu0
        %2058 = vmatprep.mubr.f32.mxu0 0.0
        %2059 = vmatmul.mubr.f32.gmra.mrb[0].mxu0 %v1335
        %v2060 = vpop.f32.mrb[0].mxu0
        %v2061 = vadd.f32 %v1787, %v2060
        %v2062 = vpop.f32.mrb[0].mxu0
        %2063 = vmatprep.mubr.f32.mxu0 0.0
        %2064 = vmatmul.mubr.f32.gmra.mrb[0].mxu0 %v1336
        %v2065 = vpop.f32.mrb[0].mxu0
        %v2066 = vadd.f32 %v1787, %v2065
        %v2067 = vpop.f32.mrb[0].mxu0
        %2068 = vmatprep.mubr.f32.mxu0 0.0
        %2069 = vmatmul.mubr.f32.gmra.mrb[0].mxu0 %v1337
        %v2070 = vpop.f32.mrb[0].mxu0
        %v2071 = vadd.f32 %v1787, %v2070
        %v2072 = vpop.f32.mrb[0].mxu0
        %2073 = vmatprep.mubr.f32.mxu0 0.0
        %2074 = vmatmul.mubr.f32.gmra.mrb[0].mxu0 %v1338
        %v2075 = vpop.f32.mrb[0].mxu0
        %v2076 = vadd.f32 %v1787, %v2075
        %v2077 = vpop.f32.mrb[0].mxu0
        %2078 = vmatprep.mubr.f32.mxu0 0.0
        %2079 = vmatmul.mubr.f32.gmra.mrb[0].mxu0 %v1339
        %v2080 = vpop.f32.mrb[0].mxu0
        %v2081 = vadd.f32 %v1787, %v2080
        %v2082 = vpop.f32.mrb[0].mxu0
        %2083 = vmatprep.mubr.f32.mxu0 0.0
        %2084 = vmatmul.mubr.f32.gmra.mrb[0].mxu0 %v1340
        %v2085 = vpop.f32.mrb[0].mxu0
        %v2086 = vadd.f32 %v1787, %v2085
        %v2087 = vpop.f32.mrb[0].mxu0
        %2088 = vmatprep.mubr.f32.mxu0 0.0
        %2089 = vmatmul.mubr.f32.gmra.mrb[0].mxu0 %v1341
        %v2090 = vpop.f32.mrb[0].mxu0
        %v2091 = vadd.f32 %v1787, %v2090
        %v2092 = vpop.f32.mrb[0].mxu0
        %2093 = vmatprep.mubr.f32.mxu0 0.0
        %2094 = vmatmul.mubr.f32.gmra.mrb[0].mxu0 %v1342
        %v2095 = vpop.f32.mrb[0].mxu0
        %v2096 = vadd.f32 %v1787, %v2095
        %v2097 = vpop.f32.mrb[0].mxu0
        %2098 = vmatprep.mubr.f32.mxu0 0.0
        %2099 = vmatmul.mubr.f32.gmra.mrb[0].mxu0 %v1343
        %v2100 = vpop.f32.mrb[0].mxu0
        %v2101 = vadd.f32 %v1787, %v2100
        %v2102 = vpop.f32.mrb[0].mxu0
        %2103 = vmatprep.mubr.f32.mxu0 0.0
        %2104 = vmatmul.mubr.f32.gmra.mrb[0].mxu0 %v1344
        %v2105 = vpop.f32.mrb[0].mxu0
        %v2106 = vadd.f32 %v1787, %v2105
        %v2107 = vpop.f32.mrb[0].mxu0
        %2108 = vmatprep.mubr.f32.mxu0 0.0
        %2109 = vmatmul.mubr.f32.gmra.mrb[0].mxu0 %v1345
        %v2110 = vpop.f32.mrb[0].mxu0
        %v2111 = vadd.f32 %v1787, %v2110
        %v2112 = vpop.f32.mrb[0].mxu0
        %2113 = vmatprep.mubr.f32.mxu0 0.0
        %2114 = vmatmul.mubr.f32.gmra.mrb[0].mxu0 %v1346
        %v2115 = vpop.f32.mrb[0].mxu0
        %v2116 = vadd.f32 %v1787, %v2115
        %v2117 = vpop.f32.mrb[0].mxu0
        %2118 = vmatprep.mubr.f32.mxu0 0.0
        %2119 = vmatmul.mubr.f32.gmra.mrb[0].mxu0 %v1347
        %v2120 = vpop.f32.mrb[0].mxu0
        %v2121 = vadd.f32 %v1787, %v2120
        %v2122 = vpop.f32.mrb[0].mxu0
        %2123 = vmatprep.mubr.f32.mxu0 0.0
        %2124 = vmatmul.mubr.f32.gmra.mrb[0].mxu0 %v1348
        %v2125 = vpop.f32.mrb[0].mxu0
        %v2126 = vadd.f32 %v1787, %v2125
        %v2127 = vpop.f32.mrb[0].mxu0
        %2128 = vmatprep.mubr.f32.mxu0 0.0
        %2129 = vmatmul.mubr.f32.gmra.mrb[0].mxu0 %v1349
        %v2130 = vpop.f32.mrb[0].mxu0
        %v2131 = vadd.f32 %v1787, %v2130
        %v2132 = vpop.f32.mrb[0].mxu0
        %2133 = vmatprep.mubr.f32.mxu0 0.0
        %2134 = vmatmul.mubr.f32.gmra.mrb[0].mxu0 %v1350
        %v2135 = vpop.f32.mrb[0].mxu0
        %v2136 = vadd.f32 %v1787, %v2135
        %v2137 = vpop.f32.mrb[0].mxu0
        %2138 = vmatprep.mubr.f32.mxu0 0.0
        %2139 = vmatmul.mubr.f32.gmra.mrb[0].mxu0 %v1351
        %v2140 = vpop.f32.mrb[0].mxu0
        %v2141 = vadd.f32 %v1787, %v2140
        %v2142 = vpop.f32.mrb[0].mxu0
        %2143 = vmatprep.mubr.f32.mxu0 0.0
        %2144 = vmatmul.mubr.f32.gmra.mrb[0].mxu0 %v1352
        %v2145 = vpop.f32.mrb[0].mxu0
        %v2146 = vadd.f32 %v1787, %v2145
        %v2147 = vpop.f32.mrb[0].mxu0
        %2148 = vmatprep.mubr.f32.mxu0 0.0
        %2149 = vmatmul.mubr.f32.gmra.mrb[0].mxu0 %v1353
        %v2150 = vpop.f32.mrb[0].mxu0
        %v2151 = vadd.f32 %v1787, %v2150
        %v2152 = vpop.f32.mrb[0].mxu0
        %2153 = vmatprep.mubr.f32.mxu0 0.0
        %2154 = vmatmul.mubr.f32.gmra.mrb[0].mxu0 %v1354
        %v2155 = vpop.f32.mrb[0].mxu0
        %v2156 = vadd.f32 %v1787, %v2155
        %v2157 = vpop.f32.mrb[0].mxu0
        %2158 = vmatprep.mubr.f32.mxu0 0.0
        %2159 = vmatmul.mubr.f32.gmra.mrb[0].mxu0 %v1355
        %v2160 = vpop.f32.mrb[0].mxu0
        %v2161 = vadd.f32 %v1787, %v2160
        %v2162 = vpop.f32.mrb[0].mxu0
        %2163 = vmatprep.mubr.f32.mxu0 0.0
        %2164 = vmatmul.mubr.f32.gmra.mrb[0].mxu0 %v1356
        %v2165 = vpop.f32.mrb[0].mxu0
        %v2166 = vadd.f32 %v1787, %v2165
        %v2167 = vpop.f32.mrb[0].mxu0
        %2168 = vmatprep.mubr.f32.mxu0 0.0
        %2169 = vmatmul.mubr.f32.gmra.mrb[0].mxu0 %v1357
        %v2170 = vpop.f32.mrb[0].mxu0
        %v2171 = vadd.f32 %v1787, %v2170
        %v2172 = vpop.f32.mrb[0].mxu0
        %2173 = vdwg.mxu0
        %v2174 = vld [vmem:[%s1177] sm:$0xff]
        %v2175 = vld [vmem:[%s1177 + $0x8] sm:$0xff]
        %v2176 = vld [vmem:[%s1177 + $0x10] sm:$0xff]
        %v2177 = vld [vmem:[%s1177 + $0x18] sm:$0xff]
        %v2178 = vld [vmem:[%s1177 + $0x20] sm:$0xff]
        %v2179 = vld [vmem:[%s1177 + $0x28] sm:$0xff]
        %v2180 = vld [vmem:[%s1177 + $0x30] sm:$0xff]
        %v2181 = vld [vmem:[%s1177 + $0x38] sm:$0xff]
        %v2182 = vld [vmem:[%s1177 + $0x40] sm:$0xff]
        %v2183 = vld [vmem:[%s1177 + $0x48] sm:$0xff]
        %v2184 = vld [vmem:[%s1177 + $0x50] sm:$0xff]
        %v2185 = vld [vmem:[%s1177 + $0x58] sm:$0xff]
        %v2186 = vld [vmem:[%s1177 + $0x60] sm:$0xff]
        %v2187 = vld [vmem:[%s1177 + $0x68] sm:$0xff]
        %v2188 = vld [vmem:[%s1177 + $0x70] sm:$0xff]
        %v2189 = vld [vmem:[%s1177 + $0x78] sm:$0xff]
        %v2190 = vld [vmem:[%s1177 + $0x80] sm:$0xff]
        %v2191 = vld [vmem:[%s1177 + $0x88] sm:$0xff]
        %v2192 = vld [vmem:[%s1177 + $0x90] sm:$0xff]
        %v2193 = vld [vmem:[%s1177 + $0x98] sm:$0xff]
        %v2194 = vld [vmem:[%s1177 + $0xa0] sm:$0xff]
        %v2195 = vld [vmem:[%s1177 + $0xa8] sm:$0xff]
        %v2196 = vld [vmem:[%s1177 + $0xb0] sm:$0xff]
        %v2197 = vld [vmem:[%s1177 + $0xb8] sm:$0xff]
        %v2198 = vld [vmem:[%s1177 + $0xc0] sm:$0xff]
        %v2199 = vld [vmem:[%s1177 + $0xc8] sm:$0xff]
        %v2200 = vld [vmem:[%s1177 + $0xd0] sm:$0xff]
        %v2201 = vld [vmem:[%s1177 + $0xd8] sm:$0xff]
        %v2202 = vld [vmem:[%s1177 + $0xe0] sm:$0xff]
        %v2203 = vld [vmem:[%s1177 + $0xe8] sm:$0xff]
        %v2204 = vld [vmem:[%s1177 + $0xf0] sm:$0xff]
        %v2205 = vld [vmem:[%s1177 + $0xf8] sm:$0xff]
        %v2206 = vld [vmem:[%s1177 + $0x100] sm:$0xff]
        %v2207 = vld [vmem:[%s1177 + $0x108] sm:$0xff]
        %v2208 = vld [vmem:[%s1177 + $0x110] sm:$0xff]
        %v2209 = vld [vmem:[%s1177 + $0x118] sm:$0xff]
        %v2210 = vld [vmem:[%s1177 + $0x120] sm:$0xff]
        %v2211 = vld [vmem:[%s1177 + $0x128] sm:$0xff]
        %v2212 = vld [vmem:[%s1177 + $0x130] sm:$0xff]
        %v2213 = vld [vmem:[%s1177 + $0x138] sm:$0xff]
        %v2214 = vld [vmem:[%s1177 + $0x140] sm:$0xff]
        %v2215 = vld [vmem:[%s1177 + $0x148] sm:$0xff]
        %v2216 = vld [vmem:[%s1177 + $0x150] sm:$0xff]
        %v2217 = vld [vmem:[%s1177 + $0x158] sm:$0xff]
        %v2218 = vld [vmem:[%s1177 + $0x160] sm:$0xff]
        %v2219 = vld [vmem:[%s1177 + $0x168] sm:$0xff]
        %v2220 = vld [vmem:[%s1177 + $0x170] sm:$0xff]
        %v2221 = vld [vmem:[%s1177 + $0x178] sm:$0xff]
        %v2222 = vld [vmem:[%s1177 + $0x180] sm:$0xff]
        %v2223 = vld [vmem:[%s1177 + $0x188] sm:$0xff]
        %v2224 = vld [vmem:[%s1177 + $0x190] sm:$0xff]
        %v2225 = vld [vmem:[%s1177 + $0x198] sm:$0xff]
        %v2226 = vld [vmem:[%s1177 + $0x1a0] sm:$0xff]
        %v2227 = vld [vmem:[%s1177 + $0x1a8] sm:$0xff]
        %v2228 = vld [vmem:[%s1177 + $0x1b0] sm:$0xff]
        %v2229 = vld [vmem:[%s1177 + $0x1b8] sm:$0xff]
        %v2230 = vld [vmem:[%s1177 + $0x1c0] sm:$0xff]
        %v2231 = vld [vmem:[%s1177 + $0x1c8] sm:$0xff]
        %v2232 = vld [vmem:[%s1177 + $0x1d0] sm:$0xff]
        %v2233 = vld [vmem:[%s1177 + $0x1d8] sm:$0xff]
        %v2234 = vld [vmem:[%s1177 + $0x1e0] sm:$0xff]
        %v2235 = vld [vmem:[%s1177 + $0x1e8] sm:$0xff]
        %v2236 = vld [vmem:[%s1177 + $0x1f0] sm:$0xff]
        %v2237 = vld [vmem:[%s1177 + $0x1f8] sm:$0xff]
        %v2238 = vld [vmem:[%s5] sm:$0xf]
        %vm2239 = vcmask 31744
        %v2241 = vsel %vm2239, %v2174, 0
        %v2244 = vsel %vm2239, %v2175, 0
        %v2247 = vsel %vm2239, %v2176, 0
        %v2250 = vsel %vm2239, %v2177, 0
        %v2253 = vsel %vm2239, %v2178, 0
        %v2256 = vsel %vm2239, %v2179, 0
        %v2259 = vsel %vm2239, %v2180, 0
        %v2262 = vsel %vm2239, %v2181, 0
        %v2265 = vsel %vm2239, %v2182, 0
        %v2268 = vsel %vm2239, %v2183, 0
        %v2271 = vsel %vm2239, %v2184, 0
        %v2274 = vsel %vm2239, %v2185, 0
        %v2277 = vsel %vm2239, %v2186, 0
        %v2280 = vsel %vm2239, %v2187, 0
        %v2283 = vsel %vm2239, %v2188, 0
        %v2286 = vsel %vm2239, %v2189, 0
        %v2289 = vsel %vm2239, %v2190, 0
        %v2292 = vsel %vm2239, %v2191, 0
        %v2295 = vsel %vm2239, %v2192, 0
        %v2298 = vsel %vm2239, %v2193, 0
        %v2301 = vsel %vm2239, %v2194, 0
        %v2304 = vsel %vm2239, %v2195, 0
        %v2307 = vsel %vm2239, %v2196, 0
        %v2310 = vsel %vm2239, %v2197, 0
        %v2313 = vsel %vm2239, %v2198, 0
        %v2316 = vsel %vm2239, %v2199, 0
        %v2319 = vsel %vm2239, %v2200, 0
        %v2322 = vsel %vm2239, %v2201, 0
        %v2325 = vsel %vm2239, %v2202, 0
        %v2328 = vsel %vm2239, %v2203, 0
        %v2331 = vsel %vm2239, %v2204, 0
        %v2334 = vsel %vm2239, %v2205, 0
        %v2337 = vsel %vm2239, %v2206, 0
        %v2340 = vsel %vm2239, %v2207, 0
        %v2343 = vsel %vm2239, %v2208, 0
        %v2346 = vsel %vm2239, %v2209, 0
        %v2349 = vsel %vm2239, %v2210, 0
        %v2352 = vsel %vm2239, %v2211, 0
        %v2355 = vsel %vm2239, %v2212, 0
        %v2358 = vsel %vm2239, %v2213, 0
        %v2361 = vsel %vm2239, %v2214, 0
        %v2364 = vsel %vm2239, %v2215, 0
        %v2367 = vsel %vm2239, %v2216, 0
        %v2370 = vsel %vm2239, %v2217, 0
        %v2373 = vsel %vm2239, %v2218, 0
        %v2376 = vsel %vm2239, %v2219, 0
        %v2379 = vsel %vm2239, %v2220, 0
        %v2382 = vsel %vm2239, %v2221, 0
        %v2385 = vsel %vm2239, %v2222, 0
        %v2388 = vsel %vm2239, %v2223, 0
        %v2391 = vsel %vm2239, %v2224, 0
        %v2394 = vsel %vm2239, %v2225, 0
        %v2397 = vsel %vm2239, %v2226, 0
        %v2400 = vsel %vm2239, %v2227, 0
        %v2403 = vsel %vm2239, %v2228, 0
        %v2406 = vsel %vm2239, %v2229, 0
        %v2409 = vsel %vm2239, %v2230, 0
        %v2412 = vsel %vm2239, %v2231, 0
        %v2415 = vsel %vm2239, %v2232, 0
        %v2418 = vsel %vm2239, %v2233, 0
        %v2421 = vsel %vm2239, %v2234, 0
        %v2424 = vsel %vm2239, %v2235, 0
        %v2427 = vsel %vm2239, %v2236, 0
        %v2430 = vsel %vm2239, %v2237, 0
        %vm2432 = vcmask 1043456
        %v2434 = vsel %vm2432, %v2238, 0
        %2436 = vmatprep.subr.mxu0 0.0
        %2437 = vmatpush1.msra.mxu0 %v2434
        %2438 = vmatprep.subr.mxu0 0.0
        %2439 = vmatpush1.msra.mxu0 0.0
        %2440 = vmatprep.subr.mxu0 0.0
        %2441 = vmatpush1.msra.mxu0 0.0
        %2442 = vmatprep.subr.mxu0 0.0
        %2443 = vmatpush1.msra.mxu0 0.0
        %2444 = vmatprep.subr.mxu0 0.0
        %2445 = vmatpush1.msra.mxu0 0.0
        %2446 = vmatprep.subr.mxu0 0.0
        %2447 = vmatpush1.msra.mxu0 0.0
        %2448 = vmatprep.subr.mxu0 0.0
        %2449 = vmatpush1.msra.mxu0 0.0
        %2450 = vmatprep.subr.mxu0 0.0
        %2451 = vmatpush1.msra.mxu0 0.0
        %2452 = vmatprep.subr.mxu0 0.0
        %2453 = vmatpush1.msra.mxu0 0.0
        %2454 = vmatprep.subr.mxu0 0.0
        %2455 = vmatpush1.msra.mxu0 0.0
        %2456 = vmatprep.subr.mxu0 0.0
        %2457 = vmatpush1.msra.mxu0 0.0
        %2458 = vmatprep.subr.mxu0 0.0
        %2459 = vmatpush1.msra.mxu0 0.0
        %2460 = vmatprep.subr.mxu0 0.0
        %2461 = vmatpush1.msra.mxu0 0.0
        %2462 = vmatprep.subr.mxu0 0.0
        %2463 = vmatpush1.msra.mxu0 0.0
        %2464 = vmatprep.subr.mxu0 0.0
        %2465 = vmatpush1.msra.mxu0 0.0
        %2466 = vmatprep.subr.mxu0 0.0
        %2467 = vmatpush1.msra.mxu0 0.0
        %2468 = vmatprep.subr.mxu0 0.0
        %2469 = vmatpush1.msra.mxu0 0.0
        %2470 = vmatprep.subr.mxu0 0.0
        %2471 = vmatpush1.msra.mxu0 0.0
        %2472 = vmatprep.subr.mxu0 0.0
        %2473 = vmatpush1.msra.mxu0 0.0
        %2474 = vmatprep.subr.mxu0 0.0
        %2475 = vmatpush1.msra.mxu0 0.0
        %2476 = vmatprep.subr.mxu0 0.0
        %2477 = vmatpush1.msra.mxu0 0.0
        %2478 = vmatprep.subr.mxu0 0.0
        %2479 = vmatpush1.msra.mxu0 0.0
        %2480 = vmatprep.subr.mxu0 0.0
        %2481 = vmatpush1.msra.mxu0 0.0
        %2482 = vmatprep.subr.mxu0 0.0
        %2483 = vmatpush1.msra.mxu0 0.0
        %2484 = vmatprep.subr.mxu0 0.0
        %2485 = vmatpush1.msra.mxu0 0.0
        %2486 = vmatprep.subr.mxu0 0.0
        %2487 = vmatpush1.msra.mxu0 0.0
        %2488 = vmatprep.subr.mxu0 0.0
        %2489 = vmatpush1.msra.mxu0 0.0
        %2490 = vmatprep.subr.mxu0 0.0
        %2491 = vmatpush1.msra.mxu0 0.0
        %2492 = vmatprep.subr.mxu0 0.0
        %2493 = vmatpush1.msra.mxu0 0.0
        %2494 = vmatprep.subr.mxu0 0.0
        %2495 = vmatpush1.msra.mxu0 0.0
        %2496 = vmatprep.subr.mxu0 0.0
        %2497 = vmatpush1.msra.mxu0 0.0
        %2498 = vmatprep.subr.mxu0 0.0
        %2499 = vmatpush1.msra.mxu0 0.0
        %2500 = vmatprep.mubr.f32.mxu0 0.0
        %2501 = vmatmul.mubr.f32.gmra.mrb[0].mxu0 %v2241
        %v2502 = vpop.f32.mrb[0].mxu0
        %v2503 = vadd.f32 0.0, %v2502
        %v2504 = vpop.f32.mrb[0].mxu0
        %2505 = vmatprep.mubr.f32.mxu0 0.0
        %2506 = vmatmul.mubr.f32.gmra.mrb[0].mxu0 %v2244
        %v2507 = vpop.f32.mrb[0].mxu0
        %v2508 = vadd.f32 0.0, %v2507
        %v2509 = vpop.f32.mrb[0].mxu0
        %2510 = vmatprep.mubr.f32.mxu0 0.0
        %2511 = vmatmul.mubr.f32.gmra.mrb[0].mxu0 %v2247
        %v2512 = vpop.f32.mrb[0].mxu0
        %v2513 = vadd.f32 0.0, %v2512
        %v2514 = vpop.f32.mrb[0].mxu0
        %2515 = vmatprep.mubr.f32.mxu0 0.0
        %2516 = vmatmul.mubr.f32.gmra.mrb[0].mxu0 %v2250
        %v2517 = vpop.f32.mrb[0].mxu0
        %v2518 = vadd.f32 0.0, %v2517
        %v2519 = vpop.f32.mrb[0].mxu0
        %2520 = vmatprep.mubr.f32.mxu0 0.0
        %2521 = vmatmul.mubr.f32.gmra.mrb[0].mxu0 %v2253
        %v2522 = vpop.f32.mrb[0].mxu0
        %v2523 = vadd.f32 0.0, %v2522
        %v2524 = vpop.f32.mrb[0].mxu0
        %2525 = vmatprep.mubr.f32.mxu0 0.0
        %2526 = vmatmul.mubr.f32.gmra.mrb[0].mxu0 %v2256
        %v2527 = vpop.f32.mrb[0].mxu0
        %v2528 = vadd.f32 0.0, %v2527
        %v2529 = vpop.f32.mrb[0].mxu0
        %2530 = vmatprep.mubr.f32.mxu0 0.0
        %2531 = vmatmul.mubr.f32.gmra.mrb[0].mxu0 %v2259
        %v2532 = vpop.f32.mrb[0].mxu0
        %v2533 = vadd.f32 0.0, %v2532
        %v2534 = vpop.f32.mrb[0].mxu0
        %2535 = vmatprep.mubr.f32.mxu0 0.0
        %2536 = vmatmul.mubr.f32.gmra.mrb[0].mxu0 %v2262
        %v2537 = vpop.f32.mrb[0].mxu0
        %v2538 = vadd.f32 0.0, %v2537
        %v2539 = vpop.f32.mrb[0].mxu0
        %2540 = vmatprep.mubr.f32.mxu0 0.0
        %2541 = vmatmul.mubr.f32.gmra.mrb[0].mxu0 %v2265
        %v2542 = vpop.f32.mrb[0].mxu0
        %v2543 = vadd.f32 0.0, %v2542
        %v2544 = vpop.f32.mrb[0].mxu0
        %2545 = vmatprep.mubr.f32.mxu0 0.0
        %2546 = vmatmul.mubr.f32.gmra.mrb[0].mxu0 %v2268
        %v2547 = vpop.f32.mrb[0].mxu0
        %v2548 = vadd.f32 0.0, %v2547
        %v2549 = vpop.f32.mrb[0].mxu0
        %2550 = vmatprep.mubr.f32.mxu0 0.0
        %2551 = vmatmul.mubr.f32.gmra.mrb[0].mxu0 %v2271
        %v2552 = vpop.f32.mrb[0].mxu0
        %v2553 = vadd.f32 0.0, %v2552
        %v2554 = vpop.f32.mrb[0].mxu0
        %2555 = vmatprep.mubr.f32.mxu0 0.0
        %2556 = vmatmul.mubr.f32.gmra.mrb[0].mxu0 %v2274
        %v2557 = vpop.f32.mrb[0].mxu0
        %v2558 = vadd.f32 0.0, %v2557
        %v2559 = vpop.f32.mrb[0].mxu0
        %2560 = vmatprep.mubr.f32.mxu0 0.0
        %2561 = vmatmul.mubr.f32.gmra.mrb[0].mxu0 %v2277
        %v2562 = vpop.f32.mrb[0].mxu0
        %v2563 = vadd.f32 0.0, %v2562
        %v2564 = vpop.f32.mrb[0].mxu0
        %2565 = vmatprep.mubr.f32.mxu0 0.0
        %2566 = vmatmul.mubr.f32.gmra.mrb[0].mxu0 %v2280
        %v2567 = vpop.f32.mrb[0].mxu0
        %v2568 = vadd.f32 0.0, %v2567
        %v2569 = vpop.f32.mrb[0].mxu0
        %2570 = vmatprep.mubr.f32.mxu0 0.0
        %2571 = vmatmul.mubr.f32.gmra.mrb[0].mxu0 %v2283
        %v2572 = vpop.f32.mrb[0].mxu0
        %v2573 = vadd.f32 0.0, %v2572
        %v2574 = vpop.f32.mrb[0].mxu0
        %2575 = vmatprep.mubr.f32.mxu0 0.0
        %2576 = vmatmul.mubr.f32.gmra.mrb[0].mxu0 %v2286
        %v2577 = vpop.f32.mrb[0].mxu0
        %v2578 = vadd.f32 0.0, %v2577
        %v2579 = vpop.f32.mrb[0].mxu0
        %2580 = vmatprep.mubr.f32.mxu0 0.0
        %2581 = vmatmul.mubr.f32.gmra.mrb[0].mxu0 %v2289
        %v2582 = vpop.f32.mrb[0].mxu0
        %v2583 = vadd.f32 0.0, %v2582
        %v2584 = vpop.f32.mrb[0].mxu0
        %2585 = vmatprep.mubr.f32.mxu0 0.0
        %2586 = vmatmul.mubr.f32.gmra.mrb[0].mxu0 %v2292
        %v2587 = vpop.f32.mrb[0].mxu0
        %v2588 = vadd.f32 0.0, %v2587
        %v2589 = vpop.f32.mrb[0].mxu0
        %2590 = vmatprep.mubr.f32.mxu0 0.0
        %2591 = vmatmul.mubr.f32.gmra.mrb[0].mxu0 %v2295
        %v2592 = vpop.f32.mrb[0].mxu0
        %v2593 = vadd.f32 0.0, %v2592
        %v2594 = vpop.f32.mrb[0].mxu0
        %2595 = vmatprep.mubr.f32.mxu0 0.0
        %2596 = vmatmul.mubr.f32.gmra.mrb[0].mxu0 %v2298
        %v2597 = vpop.f32.mrb[0].mxu0
        %v2598 = vadd.f32 0.0, %v2597
        %v2599 = vpop.f32.mrb[0].mxu0
        %2600 = vmatprep.mubr.f32.mxu0 0.0
        %2601 = vmatmul.mubr.f32.gmra.mrb[0].mxu0 %v2301
        %v2602 = vpop.f32.mrb[0].mxu0
        %v2603 = vadd.f32 0.0, %v2602
        %v2604 = vpop.f32.mrb[0].mxu0
        %2605 = vmatprep.mubr.f32.mxu0 0.0
        %2606 = vmatmul.mubr.f32.gmra.mrb[0].mxu0 %v2304
        %v2607 = vpop.f32.mrb[0].mxu0
        %v2608 = vadd.f32 0.0, %v2607
        %v2609 = vpop.f32.mrb[0].mxu0
        %2610 = vmatprep.mubr.f32.mxu0 0.0
        %2611 = vmatmul.mubr.f32.gmra.mrb[0].mxu0 %v2307
        %v2612 = vpop.f32.mrb[0].mxu0
        %v2613 = vadd.f32 0.0, %v2612
        %v2614 = vpop.f32.mrb[0].mxu0
        %2615 = vmatprep.mubr.f32.mxu0 0.0
        %2616 = vmatmul.mubr.f32.gmra.mrb[0].mxu0 %v2310
        %v2617 = vpop.f32.mrb[0].mxu0
        %v2618 = vadd.f32 0.0, %v2617
        %v2619 = vpop.f32.mrb[0].mxu0
        %2620 = vmatprep.mubr.f32.mxu0 0.0
        %2621 = vmatmul.mubr.f32.gmra.mrb[0].mxu0 %v2313
        %v2622 = vpop.f32.mrb[0].mxu0
        %v2623 = vadd.f32 0.0, %v2622
        %v2624 = vpop.f32.mrb[0].mxu0
        %2625 = vmatprep.mubr.f32.mxu0 0.0
        %2626 = vmatmul.mubr.f32.gmra.mrb[0].mxu0 %v2316
        %v2627 = vpop.f32.mrb[0].mxu0
        %v2628 = vadd.f32 0.0, %v2627
        %v2629 = vpop.f32.mrb[0].mxu0
        %2630 = vmatprep.mubr.f32.mxu0 0.0
        %2631 = vmatmul.mubr.f32.gmra.mrb[0].mxu0 %v2319
        %v2632 = vpop.f32.mrb[0].mxu0
        %v2633 = vadd.f32 0.0, %v2632
        %v2634 = vpop.f32.mrb[0].mxu0
        %2635 = vmatprep.mubr.f32.mxu0 0.0
        %2636 = vmatmul.mubr.f32.gmra.mrb[0].mxu0 %v2322
        %v2637 = vpop.f32.mrb[0].mxu0
        %v2638 = vadd.f32 0.0, %v2637
        %v2639 = vpop.f32.mrb[0].mxu0
        %2640 = vmatprep.mubr.f32.mxu0 0.0
        %2641 = vmatmul.mubr.f32.gmra.mrb[0].mxu0 %v2325
        %v2642 = vpop.f32.mrb[0].mxu0
        %v2643 = vadd.f32 0.0, %v2642
        %v2644 = vpop.f32.mrb[0].mxu0
        %2645 = vmatprep.mubr.f32.mxu0 0.0
        %2646 = vmatmul.mubr.f32.gmra.mrb[0].mxu0 %v2328
        %v2647 = vpop.f32.mrb[0].mxu0
        %v2648 = vadd.f32 0.0, %v2647
        %v2649 = vpop.f32.mrb[0].mxu0
        %2650 = vmatprep.mubr.f32.mxu0 0.0
        %2651 = vmatmul.mubr.f32.gmra.mrb[0].mxu0 %v2331
        %v2652 = vpop.f32.mrb[0].mxu0
        %v2653 = vadd.f32 0.0, %v2652
        %v2654 = vpop.f32.mrb[0].mxu0
        %2655 = vmatprep.mubr.f32.mxu0 0.0
        %2656 = vmatmul.mubr.f32.gmra.mrb[0].mxu0 %v2334
        %v2657 = vpop.f32.mrb[0].mxu0
        %v2658 = vadd.f32 0.0, %v2657
        %v2659 = vpop.f32.mrb[0].mxu0
        %2660 = vmatprep.mubr.f32.mxu0 0.0
        %2661 = vmatmul.mubr.f32.gmra.mrb[0].mxu0 %v2337
        %v2662 = vpop.f32.mrb[0].mxu0
        %v2663 = vadd.f32 0.0, %v2662
        %v2664 = vpop.f32.mrb[0].mxu0
        %2665 = vmatprep.mubr.f32.mxu0 0.0
        %2666 = vmatmul.mubr.f32.gmra.mrb[0].mxu0 %v2340
        %v2667 = vpop.f32.mrb[0].mxu0
        %v2668 = vadd.f32 0.0, %v2667
        %v2669 = vpop.f32.mrb[0].mxu0
        %2670 = vmatprep.mubr.f32.mxu0 0.0
        %2671 = vmatmul.mubr.f32.gmra.mrb[0].mxu0 %v2343
        %v2672 = vpop.f32.mrb[0].mxu0
        %v2673 = vadd.f32 0.0, %v2672
        %v2674 = vpop.f32.mrb[0].mxu0
        %2675 = vmatprep.mubr.f32.mxu0 0.0
        %2676 = vmatmul.mubr.f32.gmra.mrb[0].mxu0 %v2346
        %v2677 = vpop.f32.mrb[0].mxu0
        %v2678 = vadd.f32 0.0, %v2677
        %v2679 = vpop.f32.mrb[0].mxu0
        %2680 = vmatprep.mubr.f32.mxu0 0.0
        %2681 = vmatmul.mubr.f32.gmra.mrb[0].mxu0 %v2349
        %v2682 = vpop.f32.mrb[0].mxu0
        %v2683 = vadd.f32 0.0, %v2682
        %v2684 = vpop.f32.mrb[0].mxu0
        %2685 = vmatprep.mubr.f32.mxu0 0.0
        %2686 = vmatmul.mubr.f32.gmra.mrb[0].mxu0 %v2352
        %v2687 = vpop.f32.mrb[0].mxu0
        %v2688 = vadd.f32 0.0, %v2687
        %v2689 = vpop.f32.mrb[0].mxu0
        %2690 = vmatprep.mubr.f32.mxu0 0.0
        %2691 = vmatmul.mubr.f32.gmra.mrb[0].mxu0 %v2355
        %v2692 = vpop.f32.mrb[0].mxu0
        %v2693 = vadd.f32 0.0, %v2692
        %v2694 = vpop.f32.mrb[0].mxu0
        %2695 = vmatprep.mubr.f32.mxu0 0.0
        %2696 = vmatmul.mubr.f32.gmra.mrb[0].mxu0 %v2358
        %v2697 = vpop.f32.mrb[0].mxu0
        %v2698 = vadd.f32 0.0, %v2697
        %v2699 = vpop.f32.mrb[0].mxu0
        %2700 = vmatprep.mubr.f32.mxu0 0.0
        %2701 = vmatmul.mubr.f32.gmra.mrb[0].mxu0 %v2361
        %v2702 = vpop.f32.mrb[0].mxu0
        %v2703 = vadd.f32 0.0, %v2702
        %v2704 = vpop.f32.mrb[0].mxu0
        %2705 = vmatprep.mubr.f32.mxu0 0.0
        %2706 = vmatmul.mubr.f32.gmra.mrb[0].mxu0 %v2364
        %v2707 = vpop.f32.mrb[0].mxu0
        %v2708 = vadd.f32 0.0, %v2707
        %v2709 = vpop.f32.mrb[0].mxu0
        %2710 = vmatprep.mubr.f32.mxu0 0.0
        %2711 = vmatmul.mubr.f32.gmra.mrb[0].mxu0 %v2367
        %v2712 = vpop.f32.mrb[0].mxu0
        %v2713 = vadd.f32 0.0, %v2712
        %v2714 = vpop.f32.mrb[0].mxu0
        %2715 = vmatprep.mubr.f32.mxu0 0.0
        %2716 = vmatmul.mubr.f32.gmra.mrb[0].mxu0 %v2370
        %v2717 = vpop.f32.mrb[0].mxu0
        %v2718 = vadd.f32 0.0, %v2717
        %v2719 = vpop.f32.mrb[0].mxu0
        %2720 = vmatprep.mubr.f32.mxu0 0.0
        %2721 = vmatmul.mubr.f32.gmra.mrb[0].mxu0 %v2373
        %v2722 = vpop.f32.mrb[0].mxu0
        %v2723 = vadd.f32 0.0, %v2722
        %v2724 = vpop.f32.mrb[0].mxu0
        %2725 = vmatprep.mubr.f32.mxu0 0.0
        %2726 = vmatmul.mubr.f32.gmra.mrb[0].mxu0 %v2376
        %v2727 = vpop.f32.mrb[0].mxu0
        %v2728 = vadd.f32 0.0, %v2727
        %v2729 = vpop.f32.mrb[0].mxu0
        %2730 = vmatprep.mubr.f32.mxu0 0.0
        %2731 = vmatmul.mubr.f32.gmra.mrb[0].mxu0 %v2379
        %v2732 = vpop.f32.mrb[0].mxu0
        %v2733 = vadd.f32 0.0, %v2732
        %v2734 = vpop.f32.mrb[0].mxu0
        %2735 = vmatprep.mubr.f32.mxu0 0.0
        %2736 = vmatmul.mubr.f32.gmra.mrb[0].mxu0 %v2382
        %v2737 = vpop.f32.mrb[0].mxu0
        %v2738 = vadd.f32 0.0, %v2737
        %v2739 = vpop.f32.mrb[0].mxu0
        %2740 = vmatprep.mubr.f32.mxu0 0.0
        %2741 = vmatmul.mubr.f32.gmra.mrb[0].mxu0 %v2385
        %v2742 = vpop.f32.mrb[0].mxu0
        %v2743 = vadd.f32 0.0, %v2742
        %v2744 = vpop.f32.mrb[0].mxu0
        %2745 = vmatprep.mubr.f32.mxu0 0.0
        %2746 = vmatmul.mubr.f32.gmra.mrb[0].mxu0 %v2388
        %v2747 = vpop.f32.mrb[0].mxu0
        %v2748 = vadd.f32 0.0, %v2747
        %v2749 = vpop.f32.mrb[0].mxu0
        %2750 = vmatprep.mubr.f32.mxu0 0.0
        %2751 = vmatmul.mubr.f32.gmra.mrb[0].mxu0 %v2391
        %v2752 = vpop.f32.mrb[0].mxu0
        %v2753 = vadd.f32 0.0, %v2752
        %v2754 = vpop.f32.mrb[0].mxu0
        %2755 = vmatprep.mubr.f32.mxu0 0.0
        %2756 = vmatmul.mubr.f32.gmra.mrb[0].mxu0 %v2394
        %v2757 = vpop.f32.mrb[0].mxu0
        %v2758 = vadd.f32 0.0, %v2757
        %v2759 = vpop.f32.mrb[0].mxu0
        %2760 = vmatprep.mubr.f32.mxu0 0.0
        %2761 = vmatmul.mubr.f32.gmra.mrb[0].mxu0 %v2397
        %v2762 = vpop.f32.mrb[0].mxu0
        %v2763 = vadd.f32 0.0, %v2762
        %v2764 = vpop.f32.mrb[0].mxu0
        %2765 = vmatprep.mubr.f32.mxu0 0.0
        %2766 = vmatmul.mubr.f32.gmra.mrb[0].mxu0 %v2400
        %v2767 = vpop.f32.mrb[0].mxu0
        %v2768 = vadd.f32 0.0, %v2767
        %v2769 = vpop.f32.mrb[0].mxu0
        %2770 = vmatprep.mubr.f32.mxu0 0.0
        %2771 = vmatmul.mubr.f32.gmra.mrb[0].mxu0 %v2403
        %v2772 = vpop.f32.mrb[0].mxu0
        %v2773 = vadd.f32 0.0, %v2772
        %v2774 = vpop.f32.mrb[0].mxu0
        %2775 = vmatprep.mubr.f32.mxu0 0.0
        %2776 = vmatmul.mubr.f32.gmra.mrb[0].mxu0 %v2406
        %v2777 = vpop.f32.mrb[0].mxu0
        %v2778 = vadd.f32 0.0, %v2777
        %v2779 = vpop.f32.mrb[0].mxu0
        %2780 = vmatprep.mubr.f32.mxu0 0.0
        %2781 = vmatmul.mubr.f32.gmra.mrb[0].mxu0 %v2409
        %v2782 = vpop.f32.mrb[0].mxu0
        %v2783 = vadd.f32 0.0, %v2782
        %v2784 = vpop.f32.mrb[0].mxu0
        %2785 = vmatprep.mubr.f32.mxu0 0.0
        %2786 = vmatmul.mubr.f32.gmra.mrb[0].mxu0 %v2412
        %v2787 = vpop.f32.mrb[0].mxu0
        %v2788 = vadd.f32 0.0, %v2787
        %v2789 = vpop.f32.mrb[0].mxu0
        %2790 = vmatprep.mubr.f32.mxu0 0.0
        %2791 = vmatmul.mubr.f32.gmra.mrb[0].mxu0 %v2415
        %v2792 = vpop.f32.mrb[0].mxu0
        %v2793 = vadd.f32 0.0, %v2792
        %v2794 = vpop.f32.mrb[0].mxu0
        %2795 = vmatprep.mubr.f32.mxu0 0.0
        %2796 = vmatmul.mubr.f32.gmra.mrb[0].mxu0 %v2418
        %v2797 = vpop.f32.mrb[0].mxu0
        %v2798 = vadd.f32 0.0, %v2797
        %v2799 = vpop.f32.mrb[0].mxu0
        %2800 = vmatprep.mubr.f32.mxu0 0.0
        %2801 = vmatmul.mubr.f32.gmra.mrb[0].mxu0 %v2421
        %v2802 = vpop.f32.mrb[0].mxu0
        %v2803 = vadd.f32 0.0, %v2802
        %v2804 = vpop.f32.mrb[0].mxu0
        %2805 = vmatprep.mubr.f32.mxu0 0.0
        %2806 = vmatmul.mubr.f32.gmra.mrb[0].mxu0 %v2424
        %v2807 = vpop.f32.mrb[0].mxu0
        %v2808 = vadd.f32 0.0, %v2807
        %v2809 = vpop.f32.mrb[0].mxu0
        %2810 = vmatprep.mubr.f32.mxu0 0.0
        %2811 = vmatmul.mubr.f32.gmra.mrb[0].mxu0 %v2427
        %v2812 = vpop.f32.mrb[0].mxu0
        %v2813 = vadd.f32 0.0, %v2812
        %v2814 = vpop.f32.mrb[0].mxu0
        %2815 = vmatprep.mubr.f32.mxu0 0.0
        %2816 = vmatmul.mubr.f32.gmra.mrb[0].mxu0 %v2430
        %v2817 = vpop.f32.mrb[0].mxu0
        %v2818 = vadd.f32 0.0, %v2817
        %v2819 = vpop.f32.mrb[0].mxu0
        %2820 = vdwg.mxu0
        %v2821 = vld [vmem:[%s1262] sm:$0xff]
        %v2822 = vld [vmem:[%s1262 + $0x8] sm:$0xff]
        %v2823 = vld [vmem:[%s1262 + $0x10] sm:$0xff]
        %v2824 = vld [vmem:[%s1262 + $0x18] sm:$0xff]
        %v2829 = vcombine.high %v2821, %v2821
        %v2831 = vunpack.c.l.s4 1966171168
        %v2832 = vunpack.c.0.s8 %v2831
        %v2833 = vlaneseq
        %v2834 = vshrl.u32 %v2833, 7
        %v2835 = vsub.s32 %v2832, %v2834
        %v2836 = vrot.slane %v2821, %v2835
        %v2838 = vunpack.c.l.s4 1966171168
        %v2839 = vunpack.c.0.s8 %v2838
        %v2840 = vlaneseq
        %v2841 = vshrl.u32 %v2840, 7
        %v2842 = vsub.s32 %v2839, %v2841
        %v2843 = vrot.slane %v2829, %v2842
        %v2844 = vcombine.high %v2836, %v2836
        %v2845 = vcombine.high %v2843, %v2843
        %v2847 = vunpack.c.l.s4 1966171168
        %v2848 = vunpack.c.0.s8 %v2847
        %v2849 = vlaneseq
        %v2850 = vshrl.u32 %v2849, 7
        %v2851 = vsub.s32 %v2848, %v2850
        %v2852 = vrot.slane %v2836, %v2851
        %v2854 = vunpack.c.l.s4 1966171168
        %v2855 = vunpack.c.0.s8 %v2854
        %v2856 = vlaneseq
        %v2857 = vshrl.u32 %v2856, 7
        %v2858 = vsub.s32 %v2855, %v2857
        %v2859 = vrot.slane %v2843, %v2858
        %v2861 = vunpack.c.l.s4 1966171168
        %v2862 = vunpack.c.0.s8 %v2861
        %v2863 = vlaneseq
        %v2864 = vshrl.u32 %v2863, 7
        %v2865 = vsub.s32 %v2862, %v2864
        %v2866 = vrot.slane %v2844, %v2865
        %v2868 = vunpack.c.l.s4 1966171168
        %v2869 = vunpack.c.0.s8 %v2868
        %v2870 = vlaneseq
        %v2871 = vshrl.u32 %v2870, 7
        %v2872 = vsub.s32 %v2869, %v2871
        %v2873 = vrot.slane %v2845, %v2872
        %v2874 = vcombine.high %v2852, %v2852
        %v2875 = vcombine.high %v2859, %v2859
        %v2876 = vcombine.high %v2866, %v2866
        %v2877 = vcombine.high %v2873, %v2873
        %v2878 = vcombine.high %v2822, %v2822
        %v2880 = vunpack.c.l.s4 1966171168
        %v2881 = vunpack.c.0.s8 %v2880
        %v2882 = vlaneseq
        %v2883 = vshrl.u32 %v2882, 7
        %v2884 = vsub.s32 %v2881, %v2883
        %v2885 = vrot.slane %v2822, %v2884
        %v2887 = vunpack.c.l.s4 1966171168
        %v2888 = vunpack.c.0.s8 %v2887
        %v2889 = vlaneseq
        %v2890 = vshrl.u32 %v2889, 7
        %v2891 = vsub.s32 %v2888, %v2890
        %v2892 = vrot.slane %v2878, %v2891
        %v2893 = vcombine.high %v2885, %v2885
        %v2894 = vcombine.high %v2892, %v2892
        %v2896 = vunpack.c.l.s4 1966171168
        %v2897 = vunpack.c.0.s8 %v2896
        %v2898 = vlaneseq
        %v2899 = vshrl.u32 %v2898, 7
        %v2900 = vsub.s32 %v2897, %v2899
        %v2901 = vrot.slane %v2885, %v2900
        %v2903 = vunpack.c.l.s4 1966171168
        %v2904 = vunpack.c.0.s8 %v2903
        %v2905 = vlaneseq
        %v2906 = vshrl.u32 %v2905, 7
        %v2907 = vsub.s32 %v2904, %v2906
        %v2908 = vrot.slane %v2892, %v2907
        %v2910 = vunpack.c.l.s4 1966171168
        %v2911 = vunpack.c.0.s8 %v2910
        %v2912 = vlaneseq
        %v2913 = vshrl.u32 %v2912, 7
        %v2914 = vsub.s32 %v2911, %v2913
        %v2915 = vrot.slane %v2893, %v2914
        %v2917 = vunpack.c.l.s4 1966171168
        %v2918 = vunpack.c.0.s8 %v2917
        %v2919 = vlaneseq
        %v2920 = vshrl.u32 %v2919, 7
        %v2921 = vsub.s32 %v2918, %v2920
        %v2922 = vrot.slane %v2894, %v2921
        %v2923 = vcombine.high %v2901, %v2901
        %v2924 = vcombine.high %v2908, %v2908
        %v2925 = vcombine.high %v2915, %v2915
        %v2926 = vcombine.high %v2922, %v2922
        %v2927 = vcombine.high %v2823, %v2823
        %v2929 = vunpack.c.l.s4 1966171168
        %v2930 = vunpack.c.0.s8 %v2929
        %v2931 = vlaneseq
        %v2932 = vshrl.u32 %v2931, 7
        %v2933 = vsub.s32 %v2930, %v2932
        %v2934 = vrot.slane %v2823, %v2933
        %v2936 = vunpack.c.l.s4 1966171168
        %v2937 = vunpack.c.0.s8 %v2936
        %v2938 = vlaneseq
        %v2939 = vshrl.u32 %v2938, 7
        %v2940 = vsub.s32 %v2937, %v2939
        %v2941 = vrot.slane %v2927, %v2940
        %v2942 = vcombine.high %v2934, %v2934
        %v2943 = vcombine.high %v2941, %v2941
        %v2945 = vunpack.c.l.s4 1966171168
        %v2946 = vunpack.c.0.s8 %v2945
        %v2947 = vlaneseq
        %v2948 = vshrl.u32 %v2947, 7
        %v2949 = vsub.s32 %v2946, %v2948
        %v2950 = vrot.slane %v2934, %v2949
        %v2952 = vunpack.c.l.s4 1966171168
        %v2953 = vunpack.c.0.s8 %v2952
        %v2954 = vlaneseq
        %v2955 = vshrl.u32 %v2954, 7
        %v2956 = vsub.s32 %v2953, %v2955
        %v2957 = vrot.slane %v2941, %v2956
        %v2959 = vunpack.c.l.s4 1966171168
        %v2960 = vunpack.c.0.s8 %v2959
        %v2961 = vlaneseq
        %v2962 = vshrl.u32 %v2961, 7
        %v2963 = vsub.s32 %v2960, %v2962
        %v2964 = vrot.slane %v2942, %v2963
        %v2966 = vunpack.c.l.s4 1966171168
        %v2967 = vunpack.c.0.s8 %v2966
        %v2968 = vlaneseq
        %v2969 = vshrl.u32 %v2968, 7
        %v2970 = vsub.s32 %v2967, %v2969
        %v2971 = vrot.slane %v2943, %v2970
        %v2972 = vcombine.high %v2950, %v2950
        %v2973 = vcombine.high %v2957, %v2957
        %v2974 = vcombine.high %v2964, %v2964
        %v2975 = vcombine.high %v2971, %v2971
        %v2976 = vcombine.high %v2824, %v2824
        %v2978 = vunpack.c.l.s4 1966171168
        %v2979 = vunpack.c.0.s8 %v2978
        %v2980 = vlaneseq
        %v2981 = vshrl.u32 %v2980, 7
        %v2982 = vsub.s32 %v2979, %v2981
        %v2983 = vrot.slane %v2824, %v2982
        %v2985 = vunpack.c.l.s4 1966171168
        %v2986 = vunpack.c.0.s8 %v2985
        %v2987 = vlaneseq
        %v2988 = vshrl.u32 %v2987, 7
        %v2989 = vsub.s32 %v2986, %v2988
        %v2990 = vrot.slane %v2976, %v2989
        %v2991 = vcombine.high %v2983, %v2983
        %v2992 = vcombine.high %v2990, %v2990
        %v2994 = vunpack.c.l.s4 1966171168
        %v2995 = vunpack.c.0.s8 %v2994
        %v2996 = vlaneseq
        %v2997 = vshrl.u32 %v2996, 7
        %v2998 = vsub.s32 %v2995, %v2997
        %v2999 = vrot.slane %v2983, %v2998
        %v3001 = vunpack.c.l.s4 1966171168
        %v3002 = vunpack.c.0.s8 %v3001
        %v3003 = vlaneseq
        %v3004 = vshrl.u32 %v3003, 7
        %v3005 = vsub.s32 %v3002, %v3004
        %v3006 = vrot.slane %v2990, %v3005
        %v3008 = vunpack.c.l.s4 1966171168
        %v3009 = vunpack.c.0.s8 %v3008
        %v3010 = vlaneseq
        %v3011 = vshrl.u32 %v3010, 7
        %v3012 = vsub.s32 %v3009, %v3011
        %v3013 = vrot.slane %v2991, %v3012
        %v3015 = vunpack.c.l.s4 1966171168
        %v3016 = vunpack.c.0.s8 %v3015
        %v3017 = vlaneseq
        %v3018 = vshrl.u32 %v3017, 7
        %v3019 = vsub.s32 %v3016, %v3018
        %v3020 = vrot.slane %v2992, %v3019
        %v3021 = vcombine.high %v2999, %v2999
        %v3022 = vcombine.high %v3006, %v3006
        %v3023 = vcombine.high %v3013, %v3013
        %v3024 = vcombine.high %v3020, %v3020
        %v3025 = vld [vmem:[%s1153] sm:$0xff]
        %v3026 = vld [vmem:[%s1153 + $0x8] sm:$0xff]
        %v3027 = vlaneseq
        %v3028 = vshrl.u32 %v3027, 7
        %v3029 = vsub.s32 0, %v3028
        %v3030 = vrot.slane %v2852, %v3029
        %v3031 = vlaneseq
        %v3032 = vshrl.u32 %v3031, 7
        %v3033 = vsub.s32 0, %v3032
        %v3034 = vrot.slane %v2866, %v3033
        %v3035 = vlaneseq
        %v3036 = vshrl.u32 %v3035, 7
        %v3037 = vsub.s32 0, %v3036
        %v3038 = vrot.slane %v2874, %v3037
        %v3039 = vlaneseq
        %v3040 = vshrl.u32 %v3039, 7
        %v3041 = vsub.s32 0, %v3040
        %v3042 = vrot.slane %v2876, %v3041
        %v3043 = vlaneseq
        %v3044 = vshrl.u32 %v3043, 7
        %v3045 = vsub.s32 0, %v3044
        %v3046 = vrot.slane %v2859, %v3045
        %v3047 = vlaneseq
        %v3048 = vshrl.u32 %v3047, 7
        %v3049 = vsub.s32 0, %v3048
        %v3050 = vrot.slane %v2873, %v3049
        %v3051 = vlaneseq
        %v3052 = vshrl.u32 %v3051, 7
        %v3053 = vsub.s32 0, %v3052
        %v3054 = vrot.slane %v2875, %v3053
        %v3055 = vlaneseq
        %v3056 = vshrl.u32 %v3055, 7
        %v3057 = vsub.s32 0, %v3056
        %v3058 = vrot.slane %v2877, %v3057
        %v3059 = vlaneseq
        %v3060 = vshrl.u32 %v3059, 7
        %v3061 = vsub.s32 0, %v3060
        %v3062 = vrot.slane %v2901, %v3061
        %v3063 = vlaneseq
        %v3064 = vshrl.u32 %v3063, 7
        %v3065 = vsub.s32 0, %v3064
        %v3066 = vrot.slane %v2915, %v3065
        %v3067 = vlaneseq
        %v3068 = vshrl.u32 %v3067, 7
        %v3069 = vsub.s32 0, %v3068
        %v3070 = vrot.slane %v2923, %v3069
        %v3071 = vlaneseq
        %v3072 = vshrl.u32 %v3071, 7
        %v3073 = vsub.s32 0, %v3072
        %v3074 = vrot.slane %v2925, %v3073
        %v3075 = vlaneseq
        %v3076 = vshrl.u32 %v3075, 7
        %v3077 = vsub.s32 0, %v3076
        %v3078 = vrot.slane %v2908, %v3077
        %v3079 = vlaneseq
        %v3080 = vshrl.u32 %v3079, 7
        %v3081 = vsub.s32 0, %v3080
        %v3082 = vrot.slane %v2922, %v3081
        %v3083 = vlaneseq
        %v3084 = vshrl.u32 %v3083, 7
        %v3085 = vsub.s32 0, %v3084
        %v3086 = vrot.slane %v2924, %v3085
        %v3087 = vlaneseq
        %v3088 = vshrl.u32 %v3087, 7
        %v3089 = vsub.s32 0, %v3088
        %v3090 = vrot.slane %v2926, %v3089
        %v3091 = vlaneseq
        %v3092 = vshrl.u32 %v3091, 7
        %v3093 = vsub.s32 0, %v3092
        %v3094 = vrot.slane %v2950, %v3093
        %v3095 = vlaneseq
        %v3096 = vshrl.u32 %v3095, 7
        %v3097 = vsub.s32 0, %v3096
        %v3098 = vrot.slane %v2964, %v3097
        %v3099 = vlaneseq
        %v3100 = vshrl.u32 %v3099, 7
        %v3101 = vsub.s32 0, %v3100
        %v3102 = vrot.slane %v2972, %v3101
        %v3103 = vlaneseq
        %v3104 = vshrl.u32 %v3103, 7
        %v3105 = vsub.s32 0, %v3104
        %v3106 = vrot.slane %v2974, %v3105
        %v3107 = vlaneseq
        %v3108 = vshrl.u32 %v3107, 7
        %v3109 = vsub.s32 0, %v3108
        %v3110 = vrot.slane %v2957, %v3109
        %v3111 = vlaneseq
        %v3112 = vshrl.u32 %v3111, 7
        %v3113 = vsub.s32 0, %v3112
        %v3114 = vrot.slane %v2971, %v3113
        %v3115 = vlaneseq
        %v3116 = vshrl.u32 %v3115, 7
        %v3117 = vsub.s32 0, %v3116
        %v3118 = vrot.slane %v2973, %v3117
        %v3119 = vlaneseq
        %v3120 = vshrl.u32 %v3119, 7
        %v3121 = vsub.s32 0, %v3120
        %v3122 = vrot.slane %v2975, %v3121
        %v3123 = vlaneseq
        %v3124 = vshrl.u32 %v3123, 7
        %v3125 = vsub.s32 0, %v3124
        %v3126 = vrot.slane %v2999, %v3125
        %v3127 = vlaneseq
        %v3128 = vshrl.u32 %v3127, 7
        %v3129 = vsub.s32 0, %v3128
        %v3130 = vrot.slane %v3013, %v3129
        %v3131 = vlaneseq
        %v3132 = vshrl.u32 %v3131, 7
        %v3133 = vsub.s32 0, %v3132
        %v3134 = vrot.slane %v3021, %v3133
        %v3135 = vlaneseq
        %v3136 = vshrl.u32 %v3135, 7
        %v3137 = vsub.s32 0, %v3136
        %v3138 = vrot.slane %v3023, %v3137
        %v3139 = vlaneseq
        %v3140 = vshrl.u32 %v3139, 7
        %v3141 = vsub.s32 0, %v3140
        %v3142 = vrot.slane %v3006, %v3141
        %v3143 = vlaneseq
        %v3144 = vshrl.u32 %v3143, 7
        %v3145 = vsub.s32 0, %v3144
        %v3146 = vrot.slane %v3020, %v3145
        %v3147 = vlaneseq
        %v3148 = vshrl.u32 %v3147, 7
        %v3149 = vsub.s32 0, %v3148
        %v3150 = vrot.slane %v3022, %v3149
        %v3151 = vlaneseq
        %v3152 = vshrl.u32 %v3151, 7
        %v3153 = vsub.s32 0, %v3152
        %v3154 = vrot.slane %v3024, %v3153
        %v3187 = vmul.f32 %v3030, %v3025
        %v3188 = vmul.f32 %v3030, %v3026
        %v3189 = vmul.f32 %v3034, %v3025
        %v3190 = vmul.f32 %v3034, %v3026
        %v3191 = vmul.f32 %v3038, %v3025
        %v3192 = vmul.f32 %v3038, %v3026
        %v3193 = vmul.f32 %v3042, %v3025
        %v3194 = vmul.f32 %v3042, %v3026
        %v3195 = vmul.f32 %v3046, %v3025
        %v3196 = vmul.f32 %v3046, %v3026
        %v3197 = vmul.f32 %v3050, %v3025
        %v3198 = vmul.f32 %v3050, %v3026
        %v3199 = vmul.f32 %v3054, %v3025
        %v3200 = vmul.f32 %v3054, %v3026
        %v3201 = vmul.f32 %v3058, %v3025
        %v3202 = vmul.f32 %v3058, %v3026
        %v3203 = vmul.f32 %v3062, %v3025
        %v3204 = vmul.f32 %v3062, %v3026
        %v3205 = vmul.f32 %v3066, %v3025
        %v3206 = vmul.f32 %v3066, %v3026
        %v3207 = vmul.f32 %v3070, %v3025
        %v3208 = vmul.f32 %v3070, %v3026
        %v3209 = vmul.f32 %v3074, %v3025
        %v3210 = vmul.f32 %v3074, %v3026
        %v3211 = vmul.f32 %v3078, %v3025
        %v3212 = vmul.f32 %v3078, %v3026
        %v3213 = vmul.f32 %v3082, %v3025
        %v3214 = vmul.f32 %v3082, %v3026
        %v3215 = vmul.f32 %v3086, %v3025
        %v3216 = vmul.f32 %v3086, %v3026
        %v3217 = vmul.f32 %v3090, %v3025
        %v3218 = vmul.f32 %v3090, %v3026
        %v3219 = vmul.f32 %v3094, %v3025
        %v3220 = vmul.f32 %v3094, %v3026
        %v3221 = vmul.f32 %v3098, %v3025
        %v3222 = vmul.f32 %v3098, %v3026
        %v3223 = vmul.f32 %v3102, %v3025
        %v3224 = vmul.f32 %v3102, %v3026
        %v3225 = vmul.f32 %v3106, %v3025
        %v3226 = vmul.f32 %v3106, %v3026
        %v3227 = vmul.f32 %v3110, %v3025
        %v3228 = vmul.f32 %v3110, %v3026
        %v3229 = vmul.f32 %v3114, %v3025
        %v3230 = vmul.f32 %v3114, %v3026
        %v3231 = vmul.f32 %v3118, %v3025
        %v3232 = vmul.f32 %v3118, %v3026
        %v3233 = vmul.f32 %v3122, %v3025
        %v3234 = vmul.f32 %v3122, %v3026
        %v3235 = vmul.f32 %v3126, %v3025
        %v3236 = vmul.f32 %v3126, %v3026
        %v3237 = vmul.f32 %v3130, %v3025
        %v3238 = vmul.f32 %v3130, %v3026
        %v3239 = vmul.f32 %v3134, %v3025
        %v3240 = vmul.f32 %v3134, %v3026
        %v3241 = vmul.f32 %v3138, %v3025
        %v3242 = vmul.f32 %v3138, %v3026
        %v3243 = vmul.f32 %v3142, %v3025
        %v3244 = vmul.f32 %v3142, %v3026
        %v3245 = vmul.f32 %v3146, %v3025
        %v3246 = vmul.f32 %v3146, %v3026
        %v3247 = vmul.f32 %v3150, %v3025
        %v3248 = vmul.f32 %v3150, %v3026
        %v3249 = vmul.f32 %v3154, %v3025
        %v3250 = vmul.f32 %v3154, %v3026
        %v3251 = vmul.f32 %v3187, %v1448
        %v3252 = vmul.f32 %v3188, %v1453
        %v3253 = vmul.f32 %v3189, %v1458
        %v3254 = vmul.f32 %v3190, %v1463
        %v3255 = vmul.f32 %v3191, %v1468
        %v3256 = vmul.f32 %v3192, %v1473
        %v3257 = vmul.f32 %v3193, %v1478
        %v3258 = vmul.f32 %v3194, %v1483
        %v3259 = vmul.f32 %v3195, %v1488
        %v3260 = vmul.f32 %v3196, %v1493
        %v3261 = vmul.f32 %v3197, %v1498
        %v3262 = vmul.f32 %v3198, %v1503
        %v3263 = vmul.f32 %v3199, %v1508
        %v3264 = vmul.f32 %v3200, %v1513
        %v3265 = vmul.f32 %v3201, %v1518
        %v3266 = vmul.f32 %v3202, %v1523
        %v3267 = vmul.f32 %v3203, %v1528
        %v3268 = vmul.f32 %v3204, %v1533
        %v3269 = vmul.f32 %v3205, %v1538
        %v3270 = vmul.f32 %v3206, %v1543
        %v3271 = vmul.f32 %v3207, %v1548
        %v3272 = vmul.f32 %v3208, %v1553
        %v3273 = vmul.f32 %v3209, %v1558
        %v3274 = vmul.f32 %v3210, %v1563
        %v3275 = vmul.f32 %v3211, %v1568
        %v3276 = vmul.f32 %v3212, %v1573
        %v3277 = vmul.f32 %v3213, %v1578
        %v3278 = vmul.f32 %v3214, %v1583
        %v3279 = vmul.f32 %v3215, %v1588
        %v3280 = vmul.f32 %v3216, %v1593
        %v3281 = vmul.f32 %v3217, %v1598
        %v3282 = vmul.f32 %v3218, %v1603
        %v3283 = vmul.f32 %v3219, %v1608
        %v3284 = vmul.f32 %v3220, %v1613
        %v3285 = vmul.f32 %v3221, %v1618
        %v3286 = vmul.f32 %v3222, %v1623
        %v3287 = vmul.f32 %v3223, %v1628
        %v3288 = vmul.f32 %v3224, %v1633
        %v3289 = vmul.f32 %v3225, %v1638
        %v3290 = vmul.f32 %v3226, %v1643
        %v3291 = vmul.f32 %v3227, %v1648
        %v3292 = vmul.f32 %v3228, %v1653
        %v3293 = vmul.f32 %v3229, %v1658
        %v3294 = vmul.f32 %v3230, %v1663
        %v3295 = vmul.f32 %v3231, %v1668
        %v3296 = vmul.f32 %v3232, %v1673
        %v3297 = vmul.f32 %v3233, %v1678
        %v3298 = vmul.f32 %v3234, %v1683
        %v3299 = vmul.f32 %v3235, %v1688
        %v3300 = vmul.f32 %v3236, %v1693
        %v3301 = vmul.f32 %v3237, %v1698
        %v3302 = vmul.f32 %v3238, %v1703
        %v3303 = vmul.f32 %v3239, %v1708
        %v3304 = vmul.f32 %v3240, %v1713
        %v3305 = vmul.f32 %v3241, %v1718
        %v3306 = vmul.f32 %v3242, %v1723
        %v3307 = vmul.f32 %v3243, %v1728
        %v3308 = vmul.f32 %v3244, %v1733
        %v3309 = vmul.f32 %v3245, %v1738
        %v3310 = vmul.f32 %v3246, %v1743
        %v3311 = vmul.f32 %v3247, %v1748
        %v3312 = vmul.f32 %v3248, %v1753
        %v3313 = vmul.f32 %v3249, %v1758
        %v3314 = vmul.f32 %v3250, %v1763
        %v3315 = vadd.f32 %v3251, %v1856
        %v3316 = vadd.f32 %v3252, %v1861
        %v3317 = vadd.f32 %v3253, %v1866
        %v3318 = vadd.f32 %v3254, %v1871
        %v3319 = vadd.f32 %v3255, %v1876
        %v3320 = vadd.f32 %v3256, %v1881
        %v3321 = vadd.f32 %v3257, %v1886
        %v3322 = vadd.f32 %v3258, %v1891
        %v3323 = vadd.f32 %v3259, %v1896
        %v3324 = vadd.f32 %v3260, %v1901
        %v3325 = vadd.f32 %v3261, %v1906
        %v3326 = vadd.f32 %v3262, %v1911
        %v3327 = vadd.f32 %v3263, %v1916
        %v3328 = vadd.f32 %v3264, %v1921
        %v3329 = vadd.f32 %v3265, %v1926
        %v3330 = vadd.f32 %v3266, %v1931
        %v3331 = vadd.f32 %v3267, %v1936
        %v3332 = vadd.f32 %v3268, %v1941
        %v3333 = vadd.f32 %v3269, %v1946
        %v3334 = vadd.f32 %v3270, %v1951
        %v3335 = vadd.f32 %v3271, %v1956
        %v3336 = vadd.f32 %v3272, %v1961
        %v3337 = vadd.f32 %v3273, %v1966
        %v3338 = vadd.f32 %v3274, %v1971
        %v3339 = vadd.f32 %v3275, %v1976
        %v3340 = vadd.f32 %v3276, %v1981
        %v3341 = vadd.f32 %v3277, %v1986
        %v3342 = vadd.f32 %v3278, %v1991
        %v3343 = vadd.f32 %v3279, %v1996
        %v3344 = vadd.f32 %v3280, %v2001
        %v3345 = vadd.f32 %v3281, %v2006
        %v3346 = vadd.f32 %v3282, %v2011
        %v3347 = vadd.f32 %v3283, %v2016
        %v3348 = vadd.f32 %v3284, %v2021
        %v3349 = vadd.f32 %v3285, %v2026
        %v3350 = vadd.f32 %v3286, %v2031
        %v3351 = vadd.f32 %v3287, %v2036
        %v3352 = vadd.f32 %v3288, %v2041
        %v3353 = vadd.f32 %v3289, %v2046
        %v3354 = vadd.f32 %v3290, %v2051
        %v3355 = vadd.f32 %v3291, %v2056
        %v3356 = vadd.f32 %v3292, %v2061
        %v3357 = vadd.f32 %v3293, %v2066
        %v3358 = vadd.f32 %v3294, %v2071
        %v3359 = vadd.f32 %v3295, %v2076
        %v3360 = vadd.f32 %v3296, %v2081
        %v3361 = vadd.f32 %v3297, %v2086
        %v3362 = vadd.f32 %v3298, %v2091
        %v3363 = vadd.f32 %v3299, %v2096
        %v3364 = vadd.f32 %v3300, %v2101
        %v3365 = vadd.f32 %v3301, %v2106
        %v3366 = vadd.f32 %v3302, %v2111
        %v3367 = vadd.f32 %v3303, %v2116
        %v3368 = vadd.f32 %v3304, %v2121
        %v3369 = vadd.f32 %v3305, %v2126
        %v3370 = vadd.f32 %v3306, %v2131
        %v3371 = vadd.f32 %v3307, %v2136
        %v3372 = vadd.f32 %v3308, %v2141
        %v3373 = vadd.f32 %v3309, %v2146
        %v3374 = vadd.f32 %v3310, %v2151
        %v3375 = vadd.f32 %v3311, %v2156
        %v3376 = vadd.f32 %v3312, %v2161
        %v3377 = vadd.f32 %v3313, %v2166
        %v3378 = vadd.f32 %v3314, %v2171
        %v3379 = vmul.f32 %v3315, %v2503
        %v3380 = vmul.f32 %v3316, %v2508
        %v3381 = vmul.f32 %v3317, %v2513
        %v3382 = vmul.f32 %v3318, %v2518
        %v3383 = vmul.f32 %v3319, %v2523
        %v3384 = vmul.f32 %v3320, %v2528
        %v3385 = vmul.f32 %v3321, %v2533
        %v3386 = vmul.f32 %v3322, %v2538
        %v3387 = vmul.f32 %v3323, %v2543
        %v3388 = vmul.f32 %v3324, %v2548
        %v3389 = vmul.f32 %v3325, %v2553
        %v3390 = vmul.f32 %v3326, %v2558
        %v3391 = vmul.f32 %v3327, %v2563
        %v3392 = vmul.f32 %v3328, %v2568
        %v3393 = vmul.f32 %v3329, %v2573
        %v3394 = vmul.f32 %v3330, %v2578
        %v3395 = vmul.f32 %v3331, %v2583
        %v3396 = vmul.f32 %v3332, %v2588
        %v3397 = vmul.f32 %v3333, %v2593
        %v3398 = vmul.f32 %v3334, %v2598
        %v3399 = vmul.f32 %v3335, %v2603
        %v3400 = vmul.f32 %v3336, %v2608
        %v3401 = vmul.f32 %v3337, %v2613
        %v3402 = vmul.f32 %v3338, %v2618
        %v3403 = vmul.f32 %v3339, %v2623
        %v3404 = vmul.f32 %v3340, %v2628
        %v3405 = vmul.f32 %v3341, %v2633
        %v3406 = vmul.f32 %v3342, %v2638
        %v3407 = vmul.f32 %v3343, %v2643
        %v3408 = vmul.f32 %v3344, %v2648
        %v3409 = vmul.f32 %v3345, %v2653
        %v3410 = vmul.f32 %v3346, %v2658
        %v3411 = vmul.f32 %v3347, %v2663
        %v3412 = vmul.f32 %v3348, %v2668
        %v3413 = vmul.f32 %v3349, %v2673
        %v3414 = vmul.f32 %v3350, %v2678
        %v3415 = vmul.f32 %v3351, %v2683
        %v3416 = vmul.f32 %v3352, %v2688
        %v3417 = vmul.f32 %v3353, %v2693
        %v3418 = vmul.f32 %v3354, %v2698
        %v3419 = vmul.f32 %v3355, %v2703
        %v3420 = vmul.f32 %v3356, %v2708
        %v3421 = vmul.f32 %v3357, %v2713
        %v3422 = vmul.f32 %v3358, %v2718
        %v3423 = vmul.f32 %v3359, %v2723
        %v3424 = vmul.f32 %v3360, %v2728
        %v3425 = vmul.f32 %v3361, %v2733
        %v3426 = vmul.f32 %v3362, %v2738
        %v3427 = vmul.f32 %v3363, %v2743
        %v3428 = vmul.f32 %v3364, %v2748
        %v3429 = vmul.f32 %v3365, %v2753
        %v3430 = vmul.f32 %v3366, %v2758
        %v3431 = vmul.f32 %v3367, %v2763
        %v3432 = vmul.f32 %v3368, %v2768
        %v3433 = vmul.f32 %v3369, %v2773
        %v3434 = vmul.f32 %v3370, %v2778
        %v3435 = vmul.f32 %v3371, %v2783
        %v3436 = vmul.f32 %v3372, %v2788
        %v3437 = vmul.f32 %v3373, %v2793
        %v3438 = vmul.f32 %v3374, %v2798
        %v3439 = vmul.f32 %v3375, %v2803
        %v3440 = vmul.f32 %v3376, %v2808
        %v3441 = vmul.f32 %v3377, %v2813
        %v3442 = vmul.f32 %v3378, %v2818
        %v3443 = vsub.f32 %v2503, 1.0
        %v3444 = vsub.f32 %v2508, 1.0
        %v3445 = vsub.f32 %v2513, 1.0
        %v3446 = vsub.f32 %v2518, 1.0
        %v3447 = vsub.f32 %v2523, 1.0
        %v3448 = vsub.f32 %v2528, 1.0
        %v3449 = vsub.f32 %v2533, 1.0
        %v3450 = vsub.f32 %v2538, 1.0
        %v3451 = vsub.f32 %v2543, 1.0
        %v3452 = vsub.f32 %v2548, 1.0
        %v3453 = vsub.f32 %v2553, 1.0
        %v3454 = vsub.f32 %v2558, 1.0
        %v3455 = vsub.f32 %v2563, 1.0
        %v3456 = vsub.f32 %v2568, 1.0
        %v3457 = vsub.f32 %v2573, 1.0
        %v3458 = vsub.f32 %v2578, 1.0
        %v3459 = vsub.f32 %v2583, 1.0
        %v3460 = vsub.f32 %v2588, 1.0
        %v3461 = vsub.f32 %v2593, 1.0
        %v3462 = vsub.f32 %v2598, 1.0
        %v3463 = vsub.f32 %v2603, 1.0
        %v3464 = vsub.f32 %v2608, 1.0
        %v3465 = vsub.f32 %v2613, 1.0
        %v3466 = vsub.f32 %v2618, 1.0
        %v3467 = vsub.f32 %v2623, 1.0
        %v3468 = vsub.f32 %v2628, 1.0
        %v3469 = vsub.f32 %v2633, 1.0
        %v3470 = vsub.f32 %v2638, 1.0
        %v3471 = vsub.f32 %v2643, 1.0
        %v3472 = vsub.f32 %v2648, 1.0
        %v3473 = vsub.f32 %v2653, 1.0
        %v3474 = vsub.f32 %v2658, 1.0
        %v3475 = vsub.f32 %v2663, 1.0
        %v3476 = vsub.f32 %v2668, 1.0
        %v3477 = vsub.f32 %v2673, 1.0
        %v3478 = vsub.f32 %v2678, 1.0
        %v3479 = vsub.f32 %v2683, 1.0
        %v3480 = vsub.f32 %v2688, 1.0
        %v3481 = vsub.f32 %v2693, 1.0
        %v3482 = vsub.f32 %v2698, 1.0
        %v3483 = vsub.f32 %v2703, 1.0
        %v3484 = vsub.f32 %v2708, 1.0
        %v3485 = vsub.f32 %v2713, 1.0
        %v3486 = vsub.f32 %v2718, 1.0
        %v3487 = vsub.f32 %v2723, 1.0
        %v3488 = vsub.f32 %v2728, 1.0
        %v3489 = vsub.f32 %v2733, 1.0
        %v3490 = vsub.f32 %v2738, 1.0
        %v3491 = vsub.f32 %v2743, 1.0
        %v3492 = vsub.f32 %v2748, 1.0
        %v3493 = vsub.f32 %v2753, 1.0
        %v3494 = vsub.f32 %v2758, 1.0
        %v3495 = vsub.f32 %v2763, 1.0
        %v3496 = vsub.f32 %v2768, 1.0
        %v3497 = vsub.f32 %v2773, 1.0
        %v3498 = vsub.f32 %v2778, 1.0
        %v3499 = vsub.f32 %v2783, 1.0
        %v3500 = vsub.f32 %v2788, 1.0
        %v3501 = vsub.f32 %v2793, 1.0
        %v3502 = vsub.f32 %v2798, 1.0
        %v3503 = vsub.f32 %v2803, 1.0
        %v3504 = vsub.f32 %v2808, 1.0
        %v3505 = vsub.f32 %v2813, 1.0
        %v3506 = vsub.f32 %v2818, 1.0
        %v3507 = vmul.f32 %v3443, 2.0
        %v3508 = vmul.f32 %v3444, 2.0
        %v3509 = vmul.f32 %v3445, 2.0
        %v3510 = vmul.f32 %v3446, 2.0
        %v3511 = vmul.f32 %v3447, 2.0
        %v3512 = vmul.f32 %v3448, 2.0
        %v3513 = vmul.f32 %v3449, 2.0
        %v3514 = vmul.f32 %v3450, 2.0
        %v3515 = vmul.f32 %v3451, 2.0
        %v3516 = vmul.f32 %v3452, 2.0
        %v3517 = vmul.f32 %v3453, 2.0
        %v3518 = vmul.f32 %v3454, 2.0
        %v3519 = vmul.f32 %v3455, 2.0
        %v3520 = vmul.f32 %v3456, 2.0
        %v3521 = vmul.f32 %v3457, 2.0
        %v3522 = vmul.f32 %v3458, 2.0
        %v3523 = vmul.f32 %v3459, 2.0
        %v3524 = vmul.f32 %v3460, 2.0
        %v3525 = vmul.f32 %v3461, 2.0
        %v3526 = vmul.f32 %v3462, 2.0
        %v3527 = vmul.f32 %v3463, 2.0
        %v3528 = vmul.f32 %v3464, 2.0
        %v3529 = vmul.f32 %v3465, 2.0
        %v3530 = vmul.f32 %v3466, 2.0
        %v3531 = vmul.f32 %v3467, 2.0
        %v3532 = vmul.f32 %v3468, 2.0
        %v3533 = vmul.f32 %v3469, 2.0
        %v3534 = vmul.f32 %v3470, 2.0
        %v3535 = vmul.f32 %v3471, 2.0
        %v3536 = vmul.f32 %v3472, 2.0
        %v3537 = vmul.f32 %v3473, 2.0
        %v3538 = vmul.f32 %v3474, 2.0
        %v3539 = vmul.f32 %v3475, 2.0
        %v3540 = vmul.f32 %v3476, 2.0
        %v3541 = vmul.f32 %v3477, 2.0
        %v3542 = vmul.f32 %v3478, 2.0
        %v3543 = vmul.f32 %v3479, 2.0
        %v3544 = vmul.f32 %v3480, 2.0
        %v3545 = vmul.f32 %v3481, 2.0
        %v3546 = vmul.f32 %v3482, 2.0
        %v3547 = vmul.f32 %v3483, 2.0
        %v3548 = vmul.f32 %v3484, 2.0
        %v3549 = vmul.f32 %v3485, 2.0
        %v3550 = vmul.f32 %v3486, 2.0
        %v3551 = vmul.f32 %v3487, 2.0
        %v3552 = vmul.f32 %v3488, 2.0
        %v3553 = vmul.f32 %v3489, 2.0
        %v3554 = vmul.f32 %v3490, 2.0
        %v3555 = vmul.f32 %v3491, 2.0
        %v3556 = vmul.f32 %v3492, 2.0
        %v3557 = vmul.f32 %v3493, 2.0
        %v3558 = vmul.f32 %v3494, 2.0
        %v3559 = vmul.f32 %v3495, 2.0
        %v3560 = vmul.f32 %v3496, 2.0
        %v3561 = vmul.f32 %v3497, 2.0
        %v3562 = vmul.f32 %v3498, 2.0
        %v3563 = vmul.f32 %v3499, 2.0
        %v3564 = vmul.f32 %v3500, 2.0
        %v3565 = vmul.f32 %v3501, 2.0
        %v3566 = vmul.f32 %v3502, 2.0
        %v3567 = vmul.f32 %v3503, 2.0
        %v3568 = vmul.f32 %v3504, 2.0
        %v3569 = vmul.f32 %v3505, 2.0
        %v3570 = vmul.f32 %v3506, 2.0
        %v3571 = vadd.f32 %v3379, %v3507
        %v3572 = vadd.f32 %v3380, %v3508
        %v3573 = vadd.f32 %v3381, %v3509
        %v3574 = vadd.f32 %v3382, %v3510
        %v3575 = vadd.f32 %v3383, %v3511
        %v3576 = vadd.f32 %v3384, %v3512
        %v3577 = vadd.f32 %v3385, %v3513
        %v3578 = vadd.f32 %v3386, %v3514
        %v3579 = vadd.f32 %v3387, %v3515
        %v3580 = vadd.f32 %v3388, %v3516
        %v3581 = vadd.f32 %v3389, %v3517
        %v3582 = vadd.f32 %v3390, %v3518
        %v3583 = vadd.f32 %v3391, %v3519
        %v3584 = vadd.f32 %v3392, %v3520
        %v3585 = vadd.f32 %v3393, %v3521
        %v3586 = vadd.f32 %v3394, %v3522
        %v3587 = vadd.f32 %v3395, %v3523
        %v3588 = vadd.f32 %v3396, %v3524
        %v3589 = vadd.f32 %v3397, %v3525
        %v3590 = vadd.f32 %v3398, %v3526
        %v3591 = vadd.f32 %v3399, %v3527
        %v3592 = vadd.f32 %v3400, %v3528
        %v3593 = vadd.f32 %v3401, %v3529
        %v3594 = vadd.f32 %v3402, %v3530
        %v3595 = vadd.f32 %v3403, %v3531
        %v3596 = vadd.f32 %v3404, %v3532
        %v3597 = vadd.f32 %v3405, %v3533
        %v3598 = vadd.f32 %v3406, %v3534
        %v3599 = vadd.f32 %v3407, %v3535
        %v3600 = vadd.f32 %v3408, %v3536
        %v3601 = vadd.f32 %v3409, %v3537
        %v3602 = vadd.f32 %v3410, %v3538
        %v3603 = vadd.f32 %v3411, %v3539
        %v3604 = vadd.f32 %v3412, %v3540
        %v3605 = vadd.f32 %v3413, %v3541
        %v3606 = vadd.f32 %v3414, %v3542
        %v3607 = vadd.f32 %v3415, %v3543
        %v3608 = vadd.f32 %v3416, %v3544
        %v3609 = vadd.f32 %v3417, %v3545
        %v3610 = vadd.f32 %v3418, %v3546
        %v3611 = vadd.f32 %v3419, %v3547
        %v3612 = vadd.f32 %v3420, %v3548
        %v3613 = vadd.f32 %v3421, %v3549
        %v3614 = vadd.f32 %v3422, %v3550
        %v3615 = vadd.f32 %v3423, %v3551
        %v3616 = vadd.f32 %v3424, %v3552
        %v3617 = vadd.f32 %v3425, %v3553
        %v3618 = vadd.f32 %v3426, %v3554
        %v3619 = vadd.f32 %v3427, %v3555
        %v3620 = vadd.f32 %v3428, %v3556
        %v3621 = vadd.f32 %v3429, %v3557
        %v3622 = vadd.f32 %v3430, %v3558
        %v3623 = vadd.f32 %v3431, %v3559
        %v3624 = vadd.f32 %v3432, %v3560
        %v3625 = vadd.f32 %v3433, %v3561
        %v3626 = vadd.f32 %v3434, %v3562
        %v3627 = vadd.f32 %v3435, %v3563
        %v3628 = vadd.f32 %v3436, %v3564
        %v3629 = vadd.f32 %v3437, %v3565
        %v3630 = vadd.f32 %v3438, %v3566
        %v3631 = vadd.f32 %v3439, %v3567
        %v3632 = vadd.f32 %v3440, %v3568
        %v3633 = vadd.f32 %v3441, %v3569
        %v3634 = vadd.f32 %v3442, %v3570
        %v3635 = vld [vmem:[#allocation15] sm:$0xff]
        %v3636 = vld [vmem:[#allocation15 + $0x8] sm:$0xff]
        %v3637 = vld [vmem:[#allocation15 + $0x10] sm:$0xff]
        %v3638 = vld [vmem:[#allocation15 + $0x18] sm:$0xff]
        %v3639 = vld [vmem:[#allocation15 + $0x20] sm:$0xff]
        %v3640 = vld [vmem:[#allocation15 + $0x28] sm:$0xff]
        %v3641 = vld [vmem:[#allocation15 + $0x30] sm:$0xff]
        %v3642 = vld [vmem:[#allocation15 + $0x38] sm:$0xff]
        %v3643 = vld [vmem:[#allocation15 + $0x40] sm:$0xff]
        %v3644 = vld [vmem:[#allocation15 + $0x48] sm:$0xff]
        %v3645 = vld [vmem:[#allocation15 + $0x50] sm:$0xff]
        %v3646 = vld [vmem:[#allocation15 + $0x58] sm:$0xff]
        %v3647 = vld [vmem:[#allocation15 + $0x60] sm:$0xff]
        %v3648 = vld [vmem:[#allocation15 + $0x68] sm:$0xff]
        %v3649 = vld [vmem:[#allocation15 + $0x70] sm:$0xff]
        %v3650 = vld [vmem:[#allocation15 + $0x78] sm:$0xff]
        %v3651 = vld [vmem:[%s11] sm:$0x1]
        %v3653 = vlaneseq
        %v3654 = vshrl.u32 %v3653, 7
        %v3655 = vsub.s32 0, %v3654
        %v3656 = vrot.slane %v3651, %v3655
        %3658 = vmatprep.subr.mxu0 0.0
        %3659 = vmatpush1.msra.mxu0 %v3635
        %3660 = vmatprep.subr.mxu0 0.0
        %3661 = vmatpush1.msra.mxu0 %v3636
        %3662 = vmatprep.subr.mxu0 0.0
        %3663 = vmatpush1.msra.mxu0 %v3637
        %3664 = vmatprep.subr.mxu0 0.0
        %3665 = vmatpush1.msra.mxu0 %v3638
        %3666 = vmatprep.subr.mxu0 0.0
        %3667 = vmatpush1.msra.mxu0 %v3639
        %3668 = vmatprep.subr.mxu0 0.0
        %3669 = vmatpush1.msra.mxu0 %v3640
        %3670 = vmatprep.subr.mxu0 0.0
        %3671 = vmatpush1.msra.mxu0 %v3641
        %3672 = vmatprep.subr.mxu0 0.0
        %3673 = vmatpush1.msra.mxu0 %v3642
        %3674 = vmatprep.subr.mxu0 0.0
        %3675 = vmatpush1.msra.mxu0 %v3643
        %3676 = vmatprep.subr.mxu0 0.0
        %3677 = vmatpush1.msra.mxu0 %v3644
        %3678 = vmatprep.subr.mxu0 0.0
        %3679 = vmatpush1.msra.mxu0 %v3645
        %3680 = vmatprep.subr.mxu0 0.0
        %3681 = vmatpush1.msra.mxu0 %v3646
        %3682 = vmatprep.subr.mxu0 0.0
        %3683 = vmatpush1.msra.mxu0 %v3647
        %3684 = vmatprep.subr.mxu0 0.0
        %3685 = vmatpush1.msra.mxu0 %v3648
        %3686 = vmatprep.subr.mxu0 0.0
        %3687 = vmatpush1.msra.mxu0 %v3649
        %3688 = vmatprep.subr.mxu0 0.0
        %3689 = vmatpush1.msra.mxu0 %v3650
        %3690 = vmatprep.subr.mxu0 0.0
        %3691 = vmatpush1.msra.mxu0 0.0
        %3692 = vmatprep.subr.mxu0 0.0
        %3693 = vmatpush1.msra.mxu0 0.0
        %3694 = vmatprep.subr.mxu0 0.0
        %3695 = vmatpush1.msra.mxu0 0.0
        %3696 = vmatprep.subr.mxu0 0.0
        %3697 = vmatpush1.msra.mxu0 0.0
        %3698 = vmatprep.subr.mxu0 0.0
        %3699 = vmatpush1.msra.mxu0 0.0
        %3700 = vmatprep.subr.mxu0 0.0
        %3701 = vmatpush1.msra.mxu0 0.0
        %3702 = vmatprep.subr.mxu0 0.0
        %3703 = vmatpush1.msra.mxu0 0.0
        %3704 = vmatprep.subr.mxu0 0.0
        %3705 = vmatpush1.msra.mxu0 0.0
        %3706 = vmatprep.subr.mxu0 0.0
        %3707 = vmatpush1.msra.mxu0 0.0
        %3708 = vmatprep.subr.mxu0 0.0
        %3709 = vmatpush1.msra.mxu0 0.0
        %3710 = vmatprep.subr.mxu0 0.0
        %3711 = vmatpush1.msra.mxu0 0.0
        %3712 = vmatprep.subr.mxu0 0.0
        %3713 = vmatpush1.msra.mxu0 0.0
        %3714 = vmatprep.subr.mxu0 0.0
        %3715 = vmatpush1.msra.mxu0 0.0
        %3716 = vmatprep.subr.mxu0 0.0
        %3717 = vmatpush1.msra.mxu0 0.0
        %3718 = vmatprep.subr.mxu0 0.0
        %3719 = vmatpush1.msra.mxu0 0.0
        %3720 = vmatprep.subr.mxu0 0.0
        %3721 = vmatpush1.msra.mxu0 0.0
        %3722 = vmatprep.mubr.f32.mxu0 0.0
        %3723 = vmatmul.mubr.f32.gmra.mrb[0].mxu0 %v3571
        %v3724 = vpop.f32.mrb[0].mxu0
        %v3725 = vadd.f32 %v3656, %v3724
        %v3726 = vpop.f32.mrb[0].mxu0
        %3727 = vmatprep.mubr.f32.mxu0 0.0
        %3728 = vmatmul.mubr.f32.gmra.mrb[0].mxu0 %v3572
        %v3729 = vpop.f32.mrb[0].mxu0
        %v3730 = vadd.f32 %v3656, %v3729
        %v3731 = vpop.f32.mrb[0].mxu0
        %3732 = vmatprep.mubr.f32.mxu0 0.0
        %3733 = vmatmul.mubr.f32.gmra.mrb[0].mxu0 %v3573
        %v3734 = vpop.f32.mrb[0].mxu0
        %v3735 = vadd.f32 %v3656, %v3734
        %v3736 = vpop.f32.mrb[0].mxu0
        %3737 = vmatprep.mubr.f32.mxu0 0.0
        %3738 = vmatmul.mubr.f32.gmra.mrb[0].mxu0 %v3574
        %v3739 = vpop.f32.mrb[0].mxu0
        %v3740 = vadd.f32 %v3656, %v3739
        %v3741 = vpop.f32.mrb[0].mxu0
        %3742 = vmatprep.mubr.f32.mxu0 0.0
        %3743 = vmatmul.mubr.f32.gmra.mrb[0].mxu0 %v3575
        %v3744 = vpop.f32.mrb[0].mxu0
        %v3745 = vadd.f32 %v3656, %v3744
        %v3746 = vpop.f32.mrb[0].mxu0
        %3747 = vmatprep.mubr.f32.mxu0 0.0
        %3748 = vmatmul.mubr.f32.gmra.mrb[0].mxu0 %v3576
        %v3749 = vpop.f32.mrb[0].mxu0
        %v3750 = vadd.f32 %v3656, %v3749
        %v3751 = vpop.f32.mrb[0].mxu0
        %3752 = vmatprep.mubr.f32.mxu0 0.0
        %3753 = vmatmul.mubr.f32.gmra.mrb[0].mxu0 %v3577
        %v3754 = vpop.f32.mrb[0].mxu0
        %v3755 = vadd.f32 %v3656, %v3754
        %v3756 = vpop.f32.mrb[0].mxu0
        %3757 = vmatprep.mubr.f32.mxu0 0.0
        %3758 = vmatmul.mubr.f32.gmra.mrb[0].mxu0 %v3578
        %v3759 = vpop.f32.mrb[0].mxu0
        %v3760 = vadd.f32 %v3656, %v3759
        %v3761 = vpop.f32.mrb[0].mxu0
        %3762 = vmatprep.mubr.f32.mxu0 0.0
        %3763 = vmatmul.mubr.f32.gmra.mrb[0].mxu0 %v3579
        %v3764 = vpop.f32.mrb[0].mxu0
        %v3765 = vadd.f32 %v3656, %v3764
        %v3766 = vpop.f32.mrb[0].mxu0
        %3767 = vmatprep.mubr.f32.mxu0 0.0
        %3768 = vmatmul.mubr.f32.gmra.mrb[0].mxu0 %v3580
        %v3769 = vpop.f32.mrb[0].mxu0
        %v3770 = vadd.f32 %v3656, %v3769
        %v3771 = vpop.f32.mrb[0].mxu0
        %3772 = vmatprep.mubr.f32.mxu0 0.0
        %3773 = vmatmul.mubr.f32.gmra.mrb[0].mxu0 %v3581
        %v3774 = vpop.f32.mrb[0].mxu0
        %v3775 = vadd.f32 %v3656, %v3774
        %v3776 = vpop.f32.mrb[0].mxu0
        %3777 = vmatprep.mubr.f32.mxu0 0.0
        %3778 = vmatmul.mubr.f32.gmra.mrb[0].mxu0 %v3582
        %v3779 = vpop.f32.mrb[0].mxu0
        %v3780 = vadd.f32 %v3656, %v3779
        %v3781 = vpop.f32.mrb[0].mxu0
        %3782 = vmatprep.mubr.f32.mxu0 0.0
        %3783 = vmatmul.mubr.f32.gmra.mrb[0].mxu0 %v3583
        %v3784 = vpop.f32.mrb[0].mxu0
        %v3785 = vadd.f32 %v3656, %v3784
        %v3786 = vpop.f32.mrb[0].mxu0
        %3787 = vmatprep.mubr.f32.mxu0 0.0
        %3788 = vmatmul.mubr.f32.gmra.mrb[0].mxu0 %v3584
        %v3789 = vpop.f32.mrb[0].mxu0
        %v3790 = vadd.f32 %v3656, %v3789
        %v3791 = vpop.f32.mrb[0].mxu0
        %3792 = vmatprep.mubr.f32.mxu0 0.0
        %3793 = vmatmul.mubr.f32.gmra.mrb[0].mxu0 %v3585
        %v3794 = vpop.f32.mrb[0].mxu0
        %v3795 = vadd.f32 %v3656, %v3794
        %v3796 = vpop.f32.mrb[0].mxu0
        %3797 = vmatprep.mubr.f32.mxu0 0.0
        %3798 = vmatmul.mubr.f32.gmra.mrb[0].mxu0 %v3586
        %v3799 = vpop.f32.mrb[0].mxu0
        %v3800 = vadd.f32 %v3656, %v3799
        %v3801 = vpop.f32.mrb[0].mxu0
        %3802 = vmatprep.mubr.f32.mxu0 0.0
        %3803 = vmatmul.mubr.f32.gmra.mrb[0].mxu0 %v3587
        %v3804 = vpop.f32.mrb[0].mxu0
        %v3805 = vadd.f32 %v3656, %v3804
        %v3806 = vpop.f32.mrb[0].mxu0
        %3807 = vmatprep.mubr.f32.mxu0 0.0
        %3808 = vmatmul.mubr.f32.gmra.mrb[0].mxu0 %v3588
        %v3809 = vpop.f32.mrb[0].mxu0
        %v3810 = vadd.f32 %v3656, %v3809
        %v3811 = vpop.f32.mrb[0].mxu0
        %3812 = vmatprep.mubr.f32.mxu0 0.0
        %3813 = vmatmul.mubr.f32.gmra.mrb[0].mxu0 %v3589
        %v3814 = vpop.f32.mrb[0].mxu0
        %v3815 = vadd.f32 %v3656, %v3814
        %v3816 = vpop.f32.mrb[0].mxu0
        %3817 = vmatprep.mubr.f32.mxu0 0.0
        %3818 = vmatmul.mubr.f32.gmra.mrb[0].mxu0 %v3590
        %v3819 = vpop.f32.mrb[0].mxu0
        %v3820 = vadd.f32 %v3656, %v3819
        %v3821 = vpop.f32.mrb[0].mxu0
        %3822 = vmatprep.mubr.f32.mxu0 0.0
        %3823 = vmatmul.mubr.f32.gmra.mrb[0].mxu0 %v3591
        %v3824 = vpop.f32.mrb[0].mxu0
        %v3825 = vadd.f32 %v3656, %v3824
        %v3826 = vpop.f32.mrb[0].mxu0
        %3827 = vmatprep.mubr.f32.mxu0 0.0
        %3828 = vmatmul.mubr.f32.gmra.mrb[0].mxu0 %v3592
        %v3829 = vpop.f32.mrb[0].mxu0
        %v3830 = vadd.f32 %v3656, %v3829
        %v3831 = vpop.f32.mrb[0].mxu0
        %3832 = vmatprep.mubr.f32.mxu0 0.0
        %3833 = vmatmul.mubr.f32.gmra.mrb[0].mxu0 %v3593
        %v3834 = vpop.f32.mrb[0].mxu0
        %v3835 = vadd.f32 %v3656, %v3834
        %v3836 = vpop.f32.mrb[0].mxu0
        %3837 = vmatprep.mubr.f32.mxu0 0.0
        %3838 = vmatmul.mubr.f32.gmra.mrb[0].mxu0 %v3594
        %v3839 = vpop.f32.mrb[0].mxu0
        %v3840 = vadd.f32 %v3656, %v3839
        %v3841 = vpop.f32.mrb[0].mxu0
        %3842 = vmatprep.mubr.f32.mxu0 0.0
        %3843 = vmatmul.mubr.f32.gmra.mrb[0].mxu0 %v3595
        %v3844 = vpop.f32.mrb[0].mxu0
        %v3845 = vadd.f32 %v3656, %v3844
        %v3846 = vpop.f32.mrb[0].mxu0
        %3847 = vmatprep.mubr.f32.mxu0 0.0
        %3848 = vmatmul.mubr.f32.gmra.mrb[0].mxu0 %v3596
        %v3849 = vpop.f32.mrb[0].mxu0
        %v3850 = vadd.f32 %v3656, %v3849
        %v3851 = vpop.f32.mrb[0].mxu0
        %3852 = vmatprep.mubr.f32.mxu0 0.0
        %3853 = vmatmul.mubr.f32.gmra.mrb[0].mxu0 %v3597
        %v3854 = vpop.f32.mrb[0].mxu0
        %v3855 = vadd.f32 %v3656, %v3854
        %v3856 = vpop.f32.mrb[0].mxu0
        %3857 = vmatprep.mubr.f32.mxu0 0.0
        %3858 = vmatmul.mubr.f32.gmra.mrb[0].mxu0 %v3598
        %v3859 = vpop.f32.mrb[0].mxu0
        %v3860 = vadd.f32 %v3656, %v3859
        %v3861 = vpop.f32.mrb[0].mxu0
        %3862 = vmatprep.mubr.f32.mxu0 0.0
        %3863 = vmatmul.mubr.f32.gmra.mrb[0].mxu0 %v3599
        %v3864 = vpop.f32.mrb[0].mxu0
        %v3865 = vadd.f32 %v3656, %v3864
        %v3866 = vpop.f32.mrb[0].mxu0
        %3867 = vmatprep.mubr.f32.mxu0 0.0
        %3868 = vmatmul.mubr.f32.gmra.mrb[0].mxu0 %v3600
        %v3869 = vpop.f32.mrb[0].mxu0
        %v3870 = vadd.f32 %v3656, %v3869
        %v3871 = vpop.f32.mrb[0].mxu0
        %3872 = vmatprep.mubr.f32.mxu0 0.0
        %3873 = vmatmul.mubr.f32.gmra.mrb[0].mxu0 %v3601
        %v3874 = vpop.f32.mrb[0].mxu0
        %v3875 = vadd.f32 %v3656, %v3874
        %v3876 = vpop.f32.mrb[0].mxu0
        %3877 = vmatprep.mubr.f32.mxu0 0.0
        %3878 = vmatmul.mubr.f32.gmra.mrb[0].mxu0 %v3602
        %v3879 = vpop.f32.mrb[0].mxu0
        %v3880 = vadd.f32 %v3656, %v3879
        %v3881 = vpop.f32.mrb[0].mxu0
        %3882 = vmatprep.mubr.f32.mxu0 0.0
        %3883 = vmatmul.mubr.f32.gmra.mrb[0].mxu0 %v3603
        %v3884 = vpop.f32.mrb[0].mxu0
        %v3885 = vadd.f32 %v3656, %v3884
        %v3886 = vpop.f32.mrb[0].mxu0
        %3887 = vmatprep.mubr.f32.mxu0 0.0
        %3888 = vmatmul.mubr.f32.gmra.mrb[0].mxu0 %v3604
        %v3889 = vpop.f32.mrb[0].mxu0
        %v3890 = vadd.f32 %v3656, %v3889
        %v3891 = vpop.f32.mrb[0].mxu0
        %3892 = vmatprep.mubr.f32.mxu0 0.0
        %3893 = vmatmul.mubr.f32.gmra.mrb[0].mxu0 %v3605
        %v3894 = vpop.f32.mrb[0].mxu0
        %v3895 = vadd.f32 %v3656, %v3894
        %v3896 = vpop.f32.mrb[0].mxu0
        %3897 = vmatprep.mubr.f32.mxu0 0.0
        %3898 = vmatmul.mubr.f32.gmra.mrb[0].mxu0 %v3606
        %v3899 = vpop.f32.mrb[0].mxu0
        %v3900 = vadd.f32 %v3656, %v3899
        %v3901 = vpop.f32.mrb[0].mxu0
        %3902 = vmatprep.mubr.f32.mxu0 0.0
        %3903 = vmatmul.mubr.f32.gmra.mrb[0].mxu0 %v3607
        %v3904 = vpop.f32.mrb[0].mxu0
        %v3905 = vadd.f32 %v3656, %v3904
        %v3906 = vpop.f32.mrb[0].mxu0
        %3907 = vmatprep.mubr.f32.mxu0 0.0
        %3908 = vmatmul.mubr.f32.gmra.mrb[0].mxu0 %v3608
        %v3909 = vpop.f32.mrb[0].mxu0
        %v3910 = vadd.f32 %v3656, %v3909
        %v3911 = vpop.f32.mrb[0].mxu0
        %3912 = vmatprep.mubr.f32.mxu0 0.0
        %3913 = vmatmul.mubr.f32.gmra.mrb[0].mxu0 %v3609
        %v3914 = vpop.f32.mrb[0].mxu0
        %v3915 = vadd.f32 %v3656, %v3914
        %v3916 = vpop.f32.mrb[0].mxu0
        %3917 = vmatprep.mubr.f32.mxu0 0.0
        %3918 = vmatmul.mubr.f32.gmra.mrb[0].mxu0 %v3610
        %v3919 = vpop.f32.mrb[0].mxu0
        %v3920 = vadd.f32 %v3656, %v3919
        %v3921 = vpop.f32.mrb[0].mxu0
        %3922 = vmatprep.mubr.f32.mxu0 0.0
        %3923 = vmatmul.mubr.f32.gmra.mrb[0].mxu0 %v3611
        %v3924 = vpop.f32.mrb[0].mxu0
        %v3925 = vadd.f32 %v3656, %v3924
        %v3926 = vpop.f32.mrb[0].mxu0
        %3927 = vmatprep.mubr.f32.mxu0 0.0
        %3928 = vmatmul.mubr.f32.gmra.mrb[0].mxu0 %v3612
        %v3929 = vpop.f32.mrb[0].mxu0
        %v3930 = vadd.f32 %v3656, %v3929
        %v3931 = vpop.f32.mrb[0].mxu0
        %3932 = vmatprep.mubr.f32.mxu0 0.0
        %3933 = vmatmul.mubr.f32.gmra.mrb[0].mxu0 %v3613
        %v3934 = vpop.f32.mrb[0].mxu0
        %v3935 = vadd.f32 %v3656, %v3934
        %v3936 = vpop.f32.mrb[0].mxu0
        %3937 = vmatprep.mubr.f32.mxu0 0.0
        %3938 = vmatmul.mubr.f32.gmra.mrb[0].mxu0 %v3614
        %v3939 = vpop.f32.mrb[0].mxu0
        %v3940 = vadd.f32 %v3656, %v3939
        %v3941 = vpop.f32.mrb[0].mxu0
        %3942 = vmatprep.mubr.f32.mxu0 0.0
        %3943 = vmatmul.mubr.f32.gmra.mrb[0].mxu0 %v3615
        %v3944 = vpop.f32.mrb[0].mxu0
        %v3945 = vadd.f32 %v3656, %v3944
        %v3946 = vpop.f32.mrb[0].mxu0
        %3947 = vmatprep.mubr.f32.mxu0 0.0
        %3948 = vmatmul.mubr.f32.gmra.mrb[0].mxu0 %v3616
        %v3949 = vpop.f32.mrb[0].mxu0
        %v3950 = vadd.f32 %v3656, %v3949
        %v3951 = vpop.f32.mrb[0].mxu0
        %3952 = vmatprep.mubr.f32.mxu0 0.0
        %3953 = vmatmul.mubr.f32.gmra.mrb[0].mxu0 %v3617
        %v3954 = vpop.f32.mrb[0].mxu0
        %v3955 = vadd.f32 %v3656, %v3954
        %v3956 = vpop.f32.mrb[0].mxu0
        %3957 = vmatprep.mubr.f32.mxu0 0.0
        %3958 = vmatmul.mubr.f32.gmra.mrb[0].mxu0 %v3618
        %v3959 = vpop.f32.mrb[0].mxu0
        %v3960 = vadd.f32 %v3656, %v3959
        %v3961 = vpop.f32.mrb[0].mxu0
        %3962 = vmatprep.mubr.f32.mxu0 0.0
        %3963 = vmatmul.mubr.f32.gmra.mrb[0].mxu0 %v3619
        %v3964 = vpop.f32.mrb[0].mxu0
        %v3965 = vadd.f32 %v3656, %v3964
        %v3966 = vpop.f32.mrb[0].mxu0
        %3967 = vmatprep.mubr.f32.mxu0 0.0
        %3968 = vmatmul.mubr.f32.gmra.mrb[0].mxu0 %v3620
        %v3969 = vpop.f32.mrb[0].mxu0
        %v3970 = vadd.f32 %v3656, %v3969
        %v3971 = vpop.f32.mrb[0].mxu0
        %3972 = vmatprep.mubr.f32.mxu0 0.0
        %3973 = vmatmul.mubr.f32.gmra.mrb[0].mxu0 %v3621
        %v3974 = vpop.f32.mrb[0].mxu0
        %v3975 = vadd.f32 %v3656, %v3974
        %v3976 = vpop.f32.mrb[0].mxu0
        %3977 = vmatprep.mubr.f32.mxu0 0.0
        %3978 = vmatmul.mubr.f32.gmra.mrb[0].mxu0 %v3622
        %v3979 = vpop.f32.mrb[0].mxu0
        %v3980 = vadd.f32 %v3656, %v3979
        %v3981 = vpop.f32.mrb[0].mxu0
        %3982 = vmatprep.mubr.f32.mxu0 0.0
        %3983 = vmatmul.mubr.f32.gmra.mrb[0].mxu0 %v3623
        %v3984 = vpop.f32.mrb[0].mxu0
        %v3985 = vadd.f32 %v3656, %v3984
        %v3986 = vpop.f32.mrb[0].mxu0
        %3987 = vmatprep.mubr.f32.mxu0 0.0
        %3988 = vmatmul.mubr.f32.gmra.mrb[0].mxu0 %v3624
        %v3989 = vpop.f32.mrb[0].mxu0
        %v3990 = vadd.f32 %v3656, %v3989
        %v3991 = vpop.f32.mrb[0].mxu0
        %3992 = vmatprep.mubr.f32.mxu0 0.0
        %3993 = vmatmul.mubr.f32.gmra.mrb[0].mxu0 %v3625
        %v3994 = vpop.f32.mrb[0].mxu0
        %v3995 = vadd.f32 %v3656, %v3994
        %v3996 = vpop.f32.mrb[0].mxu0
        %3997 = vmatprep.mubr.f32.mxu0 0.0
        %3998 = vmatmul.mubr.f32.gmra.mrb[0].mxu0 %v3626
        %v3999 = vpop.f32.mrb[0].mxu0
        %v4000 = vadd.f32 %v3656, %v3999
        %v4001 = vpop.f32.mrb[0].mxu0
        %4002 = vmatprep.mubr.f32.mxu0 0.0
        %4003 = vmatmul.mubr.f32.gmra.mrb[0].mxu0 %v3627
        %v4004 = vpop.f32.mrb[0].mxu0
        %v4005 = vadd.f32 %v3656, %v4004
        %v4006 = vpop.f32.mrb[0].mxu0
        %4007 = vmatprep.mubr.f32.mxu0 0.0
        %4008 = vmatmul.mubr.f32.gmra.mrb[0].mxu0 %v3628
        %v4009 = vpop.f32.mrb[0].mxu0
        %v4010 = vadd.f32 %v3656, %v4009
        %v4011 = vpop.f32.mrb[0].mxu0
        %4012 = vmatprep.mubr.f32.mxu0 0.0
        %4013 = vmatmul.mubr.f32.gmra.mrb[0].mxu0 %v3629
        %v4014 = vpop.f32.mrb[0].mxu0
        %v4015 = vadd.f32 %v3656, %v4014
        %v4016 = vpop.f32.mrb[0].mxu0
        %4017 = vmatprep.mubr.f32.mxu0 0.0
        %4018 = vmatmul.mubr.f32.gmra.mrb[0].mxu0 %v3630
        %v4019 = vpop.f32.mrb[0].mxu0
        %v4020 = vadd.f32 %v3656, %v4019
        %v4021 = vpop.f32.mrb[0].mxu0
        %4022 = vmatprep.mubr.f32.mxu0 0.0
        %4023 = vmatmul.mubr.f32.gmra.mrb[0].mxu0 %v3631
        %v4024 = vpop.f32.mrb[0].mxu0
        %v4025 = vadd.f32 %v3656, %v4024
        %v4026 = vpop.f32.mrb[0].mxu0
        %4027 = vmatprep.mubr.f32.mxu0 0.0
        %4028 = vmatmul.mubr.f32.gmra.mrb[0].mxu0 %v3632
        %v4029 = vpop.f32.mrb[0].mxu0
        %v4030 = vadd.f32 %v3656, %v4029
        %v4031 = vpop.f32.mrb[0].mxu0
        %4032 = vmatprep.mubr.f32.mxu0 0.0
        %4033 = vmatmul.mubr.f32.gmra.mrb[0].mxu0 %v3633
        %v4034 = vpop.f32.mrb[0].mxu0
        %v4035 = vadd.f32 %v3656, %v4034
        %v4036 = vpop.f32.mrb[0].mxu0
        %4037 = vmatprep.mubr.f32.mxu0 0.0
        %4038 = vmatmul.mubr.f32.gmra.mrb[0].mxu0 %v3634
        %v4039 = vpop.f32.mrb[0].mxu0
        %v4040 = vadd.f32 %v3656, %v4039
        %v4041 = vpop.f32.mrb[0].mxu0
        %4042 = vdwg.mxu0
        %4043 = vst [vmem:[%s1257] sm:$0xff] %v3725
        %4044 = vst [vmem:[%s1257 + $0x8] sm:$0xff] %v3730
        %4045 = vst [vmem:[%s1257 + $0x10] sm:$0xff] %v3735
        %4046 = vst [vmem:[%s1257 + $0x18] sm:$0xff] %v3740
        %4047 = vst [vmem:[%s1257 + $0x20] sm:$0xff] %v3745
        %4048 = vst [vmem:[%s1257 + $0x28] sm:$0xff] %v3750
        %4049 = vst [vmem:[%s1257 + $0x30] sm:$0xff] %v3755
        %4050 = vst [vmem:[%s1257 + $0x38] sm:$0xff] %v3760
        %4051 = vst [vmem:[%s1257 + $0x40] sm:$0xff] %v3765
        %4052 = vst [vmem:[%s1257 + $0x48] sm:$0xff] %v3770
        %4053 = vst [vmem:[%s1257 + $0x50] sm:$0xff] %v3775
        %4054 = vst [vmem:[%s1257 + $0x58] sm:$0xff] %v3780
        %4055 = vst [vmem:[%s1257 + $0x60] sm:$0xff] %v3785
        %4056 = vst [vmem:[%s1257 + $0x68] sm:$0xff] %v3790
        %4057 = vst [vmem:[%s1257 + $0x70] sm:$0xff] %v3795
        %4058 = vst [vmem:[%s1257 + $0x78] sm:$0xff] %v3800
        %4059 = vst [vmem:[%s1257 + $0x80] sm:$0xff] %v3805
        %4060 = vst [vmem:[%s1257 + $0x88] sm:$0xff] %v3810
        %4061 = vst [vmem:[%s1257 + $0x90] sm:$0xff] %v3815
        %4062 = vst [vmem:[%s1257 + $0x98] sm:$0xff] %v3820
        %4063 = vst [vmem:[%s1257 + $0xa0] sm:$0xff] %v3825
        %4064 = vst [vmem:[%s1257 + $0xa8] sm:$0xff] %v3830
        %4065 = vst [vmem:[%s1257 + $0xb0] sm:$0xff] %v3835
        %4066 = vst [vmem:[%s1257 + $0xb8] sm:$0xff] %v3840
        %4067 = vst [vmem:[%s1257 + $0xc0] sm:$0xff] %v3845
        %4068 = vst [vmem:[%s1257 + $0xc8] sm:$0xff] %v3850
        %4069 = vst [vmem:[%s1257 + $0xd0] sm:$0xff] %v3855
        %4070 = vst [vmem:[%s1257 + $0xd8] sm:$0xff] %v3860
        %4071 = vst [vmem:[%s1257 + $0xe0] sm:$0xff] %v3865
        %4072 = vst [vmem:[%s1257 + $0xe8] sm:$0xff] %v3870
        %4073 = vst [vmem:[%s1257 + $0xf0] sm:$0xff] %v3875
        %4074 = vst [vmem:[%s1257 + $0xf8] sm:$0xff] %v3880
        %4075 = vst [vmem:[%s1257 + $0x100] sm:$0xff] %v3885
        %4076 = vst [vmem:[%s1257 + $0x108] sm:$0xff] %v3890
        %4077 = vst [vmem:[%s1257 + $0x110] sm:$0xff] %v3895
        %4078 = vst [vmem:[%s1257 + $0x118] sm:$0xff] %v3900
        %4079 = vst [vmem:[%s1257 + $0x120] sm:$0xff] %v3905
        %4080 = vst [vmem:[%s1257 + $0x128] sm:$0xff] %v3910
        %4081 = vst [vmem:[%s1257 + $0x130] sm:$0xff] %v3915
        %4082 = vst [vmem:[%s1257 + $0x138] sm:$0xff] %v3920
        %4083 = vst [vmem:[%s1257 + $0x140] sm:$0xff] %v3925
        %4084 = vst [vmem:[%s1257 + $0x148] sm:$0xff] %v3930
        %4085 = vst [vmem:[%s1257 + $0x150] sm:$0xff] %v3935
        %4086 = vst [vmem:[%s1257 + $0x158] sm:$0xff] %v3940
        %4087 = vst [vmem:[%s1257 + $0x160] sm:$0xff] %v3945
        %4088 = vst [vmem:[%s1257 + $0x168] sm:$0xff] %v3950
        %4089 = vst [vmem:[%s1257 + $0x170] sm:$0xff] %v3955
        %4090 = vst [vmem:[%s1257 + $0x178] sm:$0xff] %v3960
        %4091 = vst [vmem:[%s1257 + $0x180] sm:$0xff] %v3965
        %4092 = vst [vmem:[%s1257 + $0x188] sm:$0xff] %v3970
        %4093 = vst [vmem:[%s1257 + $0x190] sm:$0xff] %v3975
        %4094 = vst [vmem:[%s1257 + $0x198] sm:$0xff] %v3980
        %4095 = vst [vmem:[%s1257 + $0x1a0] sm:$0xff] %v3985
        %4096 = vst [vmem:[%s1257 + $0x1a8] sm:$0xff] %v3990
        %4097 = vst [vmem:[%s1257 + $0x1b0] sm:$0xff] %v3995
        %4098 = vst [vmem:[%s1257 + $0x1b8] sm:$0xff] %v4000
        %4099 = vst [vmem:[%s1257 + $0x1c0] sm:$0xff] %v4005
        %4100 = vst [vmem:[%s1257 + $0x1c8] sm:$0xff] %v4010
        %4101 = vst [vmem:[%s1257 + $0x1d0] sm:$0xff] %v4015
        %4102 = vst [vmem:[%s1257 + $0x1d8] sm:$0xff] %v4020
        %4103 = vst [vmem:[%s1257 + $0x1e0] sm:$0xff] %v4025
        %4104 = vst [vmem:[%s1257 + $0x1e8] sm:$0xff] %v4030
        %4105 = vst [vmem:[%s1257 + $0x1f0] sm:$0xff] %v4035
        %4106 = vst [vmem:[%s1257 + $0x1f8] sm:$0xff] %v4040
        %v4107 = vmul.f32 %v3443, 8.999999e+09
        %v4108 = vmul.f32 %v3444, 8.999999e+09
        %v4109 = vmul.f32 %v3445, 8.999999e+09
        %v4110 = vmul.f32 %v3446, 8.999999e+09
        %v4111 = vmul.f32 %v3447, 8.999999e+09
        %v4112 = vmul.f32 %v3448, 8.999999e+09
        %v4113 = vmul.f32 %v3449, 8.999999e+09
        %v4114 = vmul.f32 %v3450, 8.999999e+09
        %v4115 = vmul.f32 %v3451, 8.999999e+09
        %v4116 = vmul.f32 %v3452, 8.999999e+09
        %v4117 = vmul.f32 %v3453, 8.999999e+09
        %v4118 = vmul.f32 %v3454, 8.999999e+09
        %v4119 = vmul.f32 %v3455, 8.999999e+09
        %v4120 = vmul.f32 %v3456, 8.999999e+09
        %v4121 = vmul.f32 %v3457, 8.999999e+09
        %v4122 = vmul.f32 %v3458, 8.999999e+09
        %v4123 = vmul.f32 %v3459, 8.999999e+09
        %v4124 = vmul.f32 %v3460, 8.999999e+09
        %v4125 = vmul.f32 %v3461, 8.999999e+09
        %v4126 = vmul.f32 %v3462, 8.999999e+09
        %v4127 = vmul.f32 %v3463, 8.999999e+09
        %v4128 = vmul.f32 %v3464, 8.999999e+09
        %v4129 = vmul.f32 %v3465, 8.999999e+09
        %v4130 = vmul.f32 %v3466, 8.999999e+09
        %v4131 = vmul.f32 %v3467, 8.999999e+09
        %v4132 = vmul.f32 %v3468, 8.999999e+09
        %v4133 = vmul.f32 %v3469, 8.999999e+09
        %v4134 = vmul.f32 %v3470, 8.999999e+09
        %v4135 = vmul.f32 %v3471, 8.999999e+09
        %v4136 = vmul.f32 %v3472, 8.999999e+09
        %v4137 = vmul.f32 %v3473, 8.999999e+09
        %v4138 = vmul.f32 %v3474, 8.999999e+09
        %v4139 = vmul.f32 %v3475, 8.999999e+09
        %v4140 = vmul.f32 %v3476, 8.999999e+09
        %v4141 = vmul.f32 %v3477, 8.999999e+09
        %v4142 = vmul.f32 %v3478, 8.999999e+09
        %v4143 = vmul.f32 %v3479, 8.999999e+09
        %v4144 = vmul.f32 %v3480, 8.999999e+09
        %v4145 = vmul.f32 %v3481, 8.999999e+09
        %v4146 = vmul.f32 %v3482, 8.999999e+09
        %v4147 = vmul.f32 %v3483, 8.999999e+09
        %v4148 = vmul.f32 %v3484, 8.999999e+09
        %v4149 = vmul.f32 %v3485, 8.999999e+09
        %v4150 = vmul.f32 %v3486, 8.999999e+09
        %v4151 = vmul.f32 %v3487, 8.999999e+09
        %v4152 = vmul.f32 %v3488, 8.999999e+09
        %v4153 = vmul.f32 %v3489, 8.999999e+09
        %v4154 = vmul.f32 %v3490, 8.999999e+09
        %v4155 = vmul.f32 %v3491, 8.999999e+09
        %v4156 = vmul.f32 %v3492, 8.999999e+09
        %v4157 = vmul.f32 %v3493, 8.999999e+09
        %v4158 = vmul.f32 %v3494, 8.999999e+09
        %v4159 = vmul.f32 %v3495, 8.999999e+09
        %v4160 = vmul.f32 %v3496, 8.999999e+09
        %v4161 = vmul.f32 %v3497, 8.999999e+09
        %v4162 = vmul.f32 %v3498, 8.999999e+09
        %v4163 = vmul.f32 %v3499, 8.999999e+09
        %v4164 = vmul.f32 %v3500, 8.999999e+09
        %v4165 = vmul.f32 %v3501, 8.999999e+09
        %v4166 = vmul.f32 %v3502, 8.999999e+09
        %v4167 = vmul.f32 %v3503, 8.999999e+09
        %v4168 = vmul.f32 %v3504, 8.999999e+09
        %v4169 = vmul.f32 %v3505, 8.999999e+09
        %v4170 = vmul.f32 %v3506, 8.999999e+09
        %v4171 = vadd.f32 %v3379, %v4107
        %v4172 = vadd.f32 %v3380, %v4108
        %v4173 = vadd.f32 %v3381, %v4109
        %v4174 = vadd.f32 %v3382, %v4110
        %v4175 = vadd.f32 %v3383, %v4111
        %v4176 = vadd.f32 %v3384, %v4112
        %v4177 = vadd.f32 %v3385, %v4113
        %v4178 = vadd.f32 %v3386, %v4114
        %v4179 = vadd.f32 %v3387, %v4115
        %v4180 = vadd.f32 %v3388, %v4116
        %v4181 = vadd.f32 %v3389, %v4117
        %v4182 = vadd.f32 %v3390, %v4118
        %v4183 = vadd.f32 %v3391, %v4119
        %v4184 = vadd.f32 %v3392, %v4120
        %v4185 = vadd.f32 %v3393, %v4121
        %v4186 = vadd.f32 %v3394, %v4122
        %v4187 = vadd.f32 %v3395, %v4123
        %v4188 = vadd.f32 %v3396, %v4124
        %v4189 = vadd.f32 %v3397, %v4125
        %v4190 = vadd.f32 %v3398, %v4126
        %v4191 = vadd.f32 %v3399, %v4127
        %v4192 = vadd.f32 %v3400, %v4128
        %v4193 = vadd.f32 %v3401, %v4129
        %v4194 = vadd.f32 %v3402, %v4130
        %v4195 = vadd.f32 %v3403, %v4131
        %v4196 = vadd.f32 %v3404, %v4132
        %v4197 = vadd.f32 %v3405, %v4133
        %v4198 = vadd.f32 %v3406, %v4134
        %v4199 = vadd.f32 %v3407, %v4135
        %v4200 = vadd.f32 %v3408, %v4136
        %v4201 = vadd.f32 %v3409, %v4137
        %v4202 = vadd.f32 %v3410, %v4138
        %v4203 = vadd.f32 %v3411, %v4139
        %v4204 = vadd.f32 %v3412, %v4140
        %v4205 = vadd.f32 %v3413, %v4141
        %v4206 = vadd.f32 %v3414, %v4142
        %v4207 = vadd.f32 %v3415, %v4143
        %v4208 = vadd.f32 %v3416, %v4144
        %v4209 = vadd.f32 %v3417, %v4145
        %v4210 = vadd.f32 %v3418, %v4146
        %v4211 = vadd.f32 %v3419, %v4147
        %v4212 = vadd.f32 %v3420, %v4148
        %v4213 = vadd.f32 %v3421, %v4149
        %v4214 = vadd.f32 %v3422, %v4150
        %v4215 = vadd.f32 %v3423, %v4151
        %v4216 = vadd.f32 %v3424, %v4152
        %v4217 = vadd.f32 %v3425, %v4153
        %v4218 = vadd.f32 %v3426, %v4154
        %v4219 = vadd.f32 %v3427, %v4155
        %v4220 = vadd.f32 %v3428, %v4156
        %v4221 = vadd.f32 %v3429, %v4157
        %v4222 = vadd.f32 %v3430, %v4158
        %v4223 = vadd.f32 %v3431, %v4159
        %v4224 = vadd.f32 %v3432, %v4160
        %v4225 = vadd.f32 %v3433, %v4161
        %v4226 = vadd.f32 %v3434, %v4162
        %v4227 = vadd.f32 %v3435, %v4163
        %v4228 = vadd.f32 %v3436, %v4164
        %v4229 = vadd.f32 %v3437, %v4165
        %v4230 = vadd.f32 %v3438, %v4166
        %v4231 = vadd.f32 %v3439, %v4167
        %v4232 = vadd.f32 %v3440, %v4168
        %v4233 = vadd.f32 %v3441, %v4169
        %v4234 = vadd.f32 %v3442, %v4170
        %v4235 = vld [vmem:[#allocation2] sm:$0xff]
        %v4236 = vld [vmem:[#allocation2 + $0x8] sm:$0xff]
        %v4237 = vld [vmem:[#allocation2 + $0x10] sm:$0xff]
        %v4238 = vld [vmem:[#allocation2 + $0x18] sm:$0xff]
        %v4239 = vmax.f32 %v4171, %v4172
        %v4240 = vrot.slane %v4239, 4
        %v4241 = vmax.f32 %v4239, %v4240
        %v4242 = vrot.slane %v4241, 2
        %v4243 = vmax.f32 %v4241, %v4242
        %v4244 = vrot.slane %v4243, 1
        %v4245 = vmax.f32 %v4243, %v4244
        %v4246 = vmax.f32 %v4173, %v4174
        %v4247 = vrot.slane %v4246, 4
        %v4248 = vmax.f32 %v4246, %v4247
        %v4249 = vrot.slane %v4248, 2
        %v4250 = vmax.f32 %v4248, %v4249
        %v4251 = vrot.slane %v4250, 1
        %v4252 = vmax.f32 %v4250, %v4251
        %v4253 = vmax.f32 %v4175, %v4176
        %v4254 = vrot.slane %v4253, 4
        %v4255 = vmax.f32 %v4253, %v4254
        %v4256 = vrot.slane %v4255, 2
        %v4257 = vmax.f32 %v4255, %v4256
        %v4258 = vrot.slane %v4257, 1
        %v4259 = vmax.f32 %v4257, %v4258
        %v4260 = vmax.f32 %v4177, %v4178
        %v4261 = vrot.slane %v4260, 4
        %v4262 = vmax.f32 %v4260, %v4261
        %v4263 = vrot.slane %v4262, 2
        %v4264 = vmax.f32 %v4262, %v4263
        %v4265 = vrot.slane %v4264, 1
        %v4266 = vmax.f32 %v4264, %v4265
        %v4267 = vmax.f32 %v4179, %v4180
        %v4268 = vrot.slane %v4267, 4
        %v4269 = vmax.f32 %v4267, %v4268
        %v4270 = vrot.slane %v4269, 2
        %v4271 = vmax.f32 %v4269, %v4270
        %v4272 = vrot.slane %v4271, 1
        %v4273 = vmax.f32 %v4271, %v4272
        %v4274 = vmax.f32 %v4181, %v4182
        %v4275 = vrot.slane %v4274, 4
        %v4276 = vmax.f32 %v4274, %v4275
        %v4277 = vrot.slane %v4276, 2
        %v4278 = vmax.f32 %v4276, %v4277
        %v4279 = vrot.slane %v4278, 1
        %v4280 = vmax.f32 %v4278, %v4279
        %v4281 = vmax.f32 %v4183, %v4184
        %v4282 = vrot.slane %v4281, 4
        %v4283 = vmax.f32 %v4281, %v4282
        %v4284 = vrot.slane %v4283, 2
        %v4285 = vmax.f32 %v4283, %v4284
        %v4286 = vrot.slane %v4285, 1
        %v4287 = vmax.f32 %v4285, %v4286
        %v4288 = vmax.f32 %v4185, %v4186
        %v4289 = vrot.slane %v4288, 4
        %v4290 = vmax.f32 %v4288, %v4289
        %v4291 = vrot.slane %v4290, 2
        %v4292 = vmax.f32 %v4290, %v4291
        %v4293 = vrot.slane %v4292, 1
        %v4294 = vmax.f32 %v4292, %v4293
        %v4295 = vmax.f32 %v4187, %v4188
        %v4296 = vrot.slane %v4295, 4
        %v4297 = vmax.f32 %v4295, %v4296
        %v4298 = vrot.slane %v4297, 2
        %v4299 = vmax.f32 %v4297, %v4298
        %v4300 = vrot.slane %v4299, 1
        %v4301 = vmax.f32 %v4299, %v4300
        %v4302 = vmax.f32 %v4189, %v4190
        %v4303 = vrot.slane %v4302, 4
        %v4304 = vmax.f32 %v4302, %v4303
        %v4305 = vrot.slane %v4304, 2
        %v4306 = vmax.f32 %v4304, %v4305
        %v4307 = vrot.slane %v4306, 1
        %v4308 = vmax.f32 %v4306, %v4307
        %v4309 = vmax.f32 %v4191, %v4192
        %v4310 = vrot.slane %v4309, 4
        %v4311 = vmax.f32 %v4309, %v4310
        %v4312 = vrot.slane %v4311, 2
        %v4313 = vmax.f32 %v4311, %v4312
        %v4314 = vrot.slane %v4313, 1
        %v4315 = vmax.f32 %v4313, %v4314
        %v4316 = vmax.f32 %v4193, %v4194
        %v4317 = vrot.slane %v4316, 4
        %v4318 = vmax.f32 %v4316, %v4317
        %v4319 = vrot.slane %v4318, 2
        %v4320 = vmax.f32 %v4318, %v4319
        %v4321 = vrot.slane %v4320, 1
        %v4322 = vmax.f32 %v4320, %v4321
        %v4323 = vmax.f32 %v4195, %v4196
        %v4324 = vrot.slane %v4323, 4
        %v4325 = vmax.f32 %v4323, %v4324
        %v4326 = vrot.slane %v4325, 2
        %v4327 = vmax.f32 %v4325, %v4326
        %v4328 = vrot.slane %v4327, 1
        %v4329 = vmax.f32 %v4327, %v4328
        %v4330 = vmax.f32 %v4197, %v4198
        %v4331 = vrot.slane %v4330, 4
        %v4332 = vmax.f32 %v4330, %v4331
        %v4333 = vrot.slane %v4332, 2
        %v4334 = vmax.f32 %v4332, %v4333
        %v4335 = vrot.slane %v4334, 1
        %v4336 = vmax.f32 %v4334, %v4335
        %v4337 = vmax.f32 %v4199, %v4200
        %v4338 = vrot.slane %v4337, 4
        %v4339 = vmax.f32 %v4337, %v4338
        %v4340 = vrot.slane %v4339, 2
        %v4341 = vmax.f32 %v4339, %v4340
        %v4342 = vrot.slane %v4341, 1
        %v4343 = vmax.f32 %v4341, %v4342
        %v4344 = vmax.f32 %v4201, %v4202
        %v4345 = vrot.slane %v4344, 4
        %v4346 = vmax.f32 %v4344, %v4345
        %v4347 = vrot.slane %v4346, 2
        %v4348 = vmax.f32 %v4346, %v4347
        %v4349 = vrot.slane %v4348, 1
        %v4350 = vmax.f32 %v4348, %v4349
        %v4351 = vmax.f32 %v4203, %v4204
        %v4352 = vrot.slane %v4351, 4
        %v4353 = vmax.f32 %v4351, %v4352
        %v4354 = vrot.slane %v4353, 2
        %v4355 = vmax.f32 %v4353, %v4354
        %v4356 = vrot.slane %v4355, 1
        %v4357 = vmax.f32 %v4355, %v4356
        %v4358 = vmax.f32 %v4205, %v4206
        %v4359 = vrot.slane %v4358, 4
        %v4360 = vmax.f32 %v4358, %v4359
        %v4361 = vrot.slane %v4360, 2
        %v4362 = vmax.f32 %v4360, %v4361
        %v4363 = vrot.slane %v4362, 1
        %v4364 = vmax.f32 %v4362, %v4363
        %v4365 = vmax.f32 %v4207, %v4208
        %v4366 = vrot.slane %v4365, 4
        %v4367 = vmax.f32 %v4365, %v4366
        %v4368 = vrot.slane %v4367, 2
        %v4369 = vmax.f32 %v4367, %v4368
        %v4370 = vrot.slane %v4369, 1
        %v4371 = vmax.f32 %v4369, %v4370
        %v4372 = vmax.f32 %v4209, %v4210
        %v4373 = vrot.slane %v4372, 4
        %v4374 = vmax.f32 %v4372, %v4373
        %v4375 = vrot.slane %v4374, 2
        %v4376 = vmax.f32 %v4374, %v4375
        %v4377 = vrot.slane %v4376, 1
        %v4378 = vmax.f32 %v4376, %v4377
        %v4379 = vmax.f32 %v4211, %v4212
        %v4380 = vrot.slane %v4379, 4
        %v4381 = vmax.f32 %v4379, %v4380
        %v4382 = vrot.slane %v4381, 2
        %v4383 = vmax.f32 %v4381, %v4382
        %v4384 = vrot.slane %v4383, 1
        %v4385 = vmax.f32 %v4383, %v4384
        %v4386 = vmax.f32 %v4213, %v4214
        %v4387 = vrot.slane %v4386, 4
        %v4388 = vmax.f32 %v4386, %v4387
        %v4389 = vrot.slane %v4388, 2
        %v4390 = vmax.f32 %v4388, %v4389
        %v4391 = vrot.slane %v4390, 1
        %v4392 = vmax.f32 %v4390, %v4391
        %v4393 = vmax.f32 %v4215, %v4216
        %v4394 = vrot.slane %v4393, 4
        %v4395 = vmax.f32 %v4393, %v4394
        %v4396 = vrot.slane %v4395, 2
        %v4397 = vmax.f32 %v4395, %v4396
        %v4398 = vrot.slane %v4397, 1
        %v4399 = vmax.f32 %v4397, %v4398
        %v4400 = vmax.f32 %v4217, %v4218
        %v4401 = vrot.slane %v4400, 4
        %v4402 = vmax.f32 %v4400, %v4401
        %v4403 = vrot.slane %v4402, 2
        %v4404 = vmax.f32 %v4402, %v4403
        %v4405 = vrot.slane %v4404, 1
        %v4406 = vmax.f32 %v4404, %v4405
        %v4407 = vmax.f32 %v4219, %v4220
        %v4408 = vrot.slane %v4407, 4
        %v4409 = vmax.f32 %v4407, %v4408
        %v4410 = vrot.slane %v4409, 2
        %v4411 = vmax.f32 %v4409, %v4410
        %v4412 = vrot.slane %v4411, 1
        %v4413 = vmax.f32 %v4411, %v4412
        %v4414 = vmax.f32 %v4221, %v4222
        %v4415 = vrot.slane %v4414, 4
        %v4416 = vmax.f32 %v4414, %v4415
        %v4417 = vrot.slane %v4416, 2
        %v4418 = vmax.f32 %v4416, %v4417
        %v4419 = vrot.slane %v4418, 1
        %v4420 = vmax.f32 %v4418, %v4419
        %v4421 = vmax.f32 %v4223, %v4224
        %v4422 = vrot.slane %v4421, 4
        %v4423 = vmax.f32 %v4421, %v4422
        %v4424 = vrot.slane %v4423, 2
        %v4425 = vmax.f32 %v4423, %v4424
        %v4426 = vrot.slane %v4425, 1
        %v4427 = vmax.f32 %v4425, %v4426
        %v4428 = vmax.f32 %v4225, %v4226
        %v4429 = vrot.slane %v4428, 4
        %v4430 = vmax.f32 %v4428, %v4429
        %v4431 = vrot.slane %v4430, 2
        %v4432 = vmax.f32 %v4430, %v4431
        %v4433 = vrot.slane %v4432, 1
        %v4434 = vmax.f32 %v4432, %v4433
        %v4435 = vmax.f32 %v4227, %v4228
        %v4436 = vrot.slane %v4435, 4
        %v4437 = vmax.f32 %v4435, %v4436
        %v4438 = vrot.slane %v4437, 2
        %v4439 = vmax.f32 %v4437, %v4438
        %v4440 = vrot.slane %v4439, 1
        %v4441 = vmax.f32 %v4439, %v4440
        %v4442 = vmax.f32 %v4229, %v4230
        %v4443 = vrot.slane %v4442, 4
        %v4444 = vmax.f32 %v4442, %v4443
        %v4445 = vrot.slane %v4444, 2
        %v4446 = vmax.f32 %v4444, %v4445
        %v4447 = vrot.slane %v4446, 1
        %v4448 = vmax.f32 %v4446, %v4447
        %v4449 = vmax.f32 %v4231, %v4232
        %v4450 = vrot.slane %v4449, 4
        %v4451 = vmax.f32 %v4449, %v4450
        %v4452 = vrot.slane %v4451, 2
        %v4453 = vmax.f32 %v4451, %v4452
        %v4454 = vrot.slane %v4453, 1
        %v4455 = vmax.f32 %v4453, %v4454
        %v4456 = vmax.f32 %v4233, %v4234
        %v4457 = vrot.slane %v4456, 4
        %v4458 = vmax.f32 %v4456, %v4457
        %v4459 = vrot.slane %v4458, 2
        %v4460 = vmax.f32 %v4458, %v4459
        %v4461 = vrot.slane %v4460, 1
        %v4462 = vmax.f32 %v4460, %v4461
        %vm4495 = vcmask 1041409
        %v4496 = vsel %vm4495, %v4252, %v4245
        %vm4497 = vcmask 1042434
        %v4498 = vsel %vm4497, %v4259, %v4496
        %vm4499 = vcmask 1043459
        %v4500 = vsel %vm4499, %v4266, %v4498
        %vm4501 = vcmask 1044484
        %v4502 = vsel %vm4501, %v4273, %v4500
        %vm4503 = vcmask 1045509
        %v4504 = vsel %vm4503, %v4280, %v4502
        %vm4505 = vcmask 1046534
        %v4506 = vsel %vm4505, %v4287, %v4504
        %vm4507 = vcmask 1047559
        %v4508 = vsel %vm4507, %v4294, %v4506
        %v4509 = vsel %vm4495, %v4308, %v4301
        %v4510 = vsel %vm4497, %v4315, %v4509
        %v4511 = vsel %vm4499, %v4322, %v4510
        %v4512 = vsel %vm4501, %v4329, %v4511
        %v4513 = vsel %vm4503, %v4336, %v4512
        %v4514 = vsel %vm4505, %v4343, %v4513
        %v4515 = vsel %vm4507, %v4350, %v4514
        %v4516 = vsel %vm4495, %v4364, %v4357
        %v4517 = vsel %vm4497, %v4371, %v4516
        %v4518 = vsel %vm4499, %v4378, %v4517
        %v4519 = vsel %vm4501, %v4385, %v4518
        %v4520 = vsel %vm4503, %v4392, %v4519
        %v4521 = vsel %vm4505, %v4399, %v4520
        %v4522 = vsel %vm4507, %v4406, %v4521
        %v4523 = vsel %vm4495, %v4420, %v4413
        %v4524 = vsel %vm4497, %v4427, %v4523
        %v4525 = vsel %vm4499, %v4434, %v4524
        %v4526 = vsel %vm4501, %v4441, %v4525
        %v4527 = vsel %vm4503, %v4448, %v4526
        %v4528 = vsel %vm4505, %v4455, %v4527
        %v4529 = vsel %vm4507, %v4462, %v4528
        %v4534 = vmax.f32 %v4235, %v4508
        %v4535 = vmax.f32 %v4236, %v4515
        %v4536 = vmax.f32 %v4237, %v4522
        %v4537 = vmax.f32 %v4238, %v4529
        %v4538 = vsub.f32 %v4235, %v4534
        %v4539 = vsub.f32 %v4236, %v4535
        %v4540 = vsub.f32 %v4237, %v4536
        %v4541 = vsub.f32 %v4238, %v4537
        %v4542 = vmul.f32 %v4538, 1.442695
        %v4543 = vpow.pop %v4542
        %v4544 = vmul.f32 %v4539, 1.442695
        %v4545 = vpow.pop %v4544
        %v4546 = vmul.f32 %v4540, 1.442695
        %v4547 = vpow.pop %v4546
        %v4548 = vmul.f32 %v4541, 1.442695
        %v4549 = vpow.pop %v4548
        %v4554 = vcombine.high %v4534, %v4534
        %v4556 = vunpack.c.l.s4 1966171168
        %v4557 = vunpack.c.0.s8 %v4556
        %v4558 = vlaneseq
        %v4559 = vshrl.u32 %v4558, 7
        %v4560 = vsub.s32 %v4557, %v4559
        %v4561 = vrot.slane %v4534, %v4560
        %v4563 = vunpack.c.l.s4 1966171168
        %v4564 = vunpack.c.0.s8 %v4563
        %v4565 = vlaneseq
        %v4566 = vshrl.u32 %v4565, 7
        %v4567 = vsub.s32 %v4564, %v4566
        %v4568 = vrot.slane %v4554, %v4567
        %v4569 = vcombine.high %v4561, %v4561
        %v4570 = vcombine.high %v4568, %v4568
        %v4572 = vunpack.c.l.s4 1966171168
        %v4573 = vunpack.c.0.s8 %v4572
        %v4574 = vlaneseq
        %v4575 = vshrl.u32 %v4574, 7
        %v4576 = vsub.s32 %v4573, %v4575
        %v4577 = vrot.slane %v4561, %v4576
        %v4579 = vunpack.c.l.s4 1966171168
        %v4580 = vunpack.c.0.s8 %v4579
        %v4581 = vlaneseq
        %v4582 = vshrl.u32 %v4581, 7
        %v4583 = vsub.s32 %v4580, %v4582
        %v4584 = vrot.slane %v4568, %v4583
        %v4586 = vunpack.c.l.s4 1966171168
        %v4587 = vunpack.c.0.s8 %v4586
        %v4588 = vlaneseq
        %v4589 = vshrl.u32 %v4588, 7
        %v4590 = vsub.s32 %v4587, %v4589
        %v4591 = vrot.slane %v4569, %v4590
        %v4593 = vunpack.c.l.s4 1966171168
        %v4594 = vunpack.c.0.s8 %v4593
        %v4595 = vlaneseq
        %v4596 = vshrl.u32 %v4595, 7
        %v4597 = vsub.s32 %v4594, %v4596
        %v4598 = vrot.slane %v4570, %v4597
        %v4599 = vcombine.high %v4577, %v4577
        %v4600 = vcombine.high %v4584, %v4584
        %v4601 = vcombine.high %v4591, %v4591
        %v4602 = vcombine.high %v4598, %v4598
        %v4603 = vcombine.high %v4535, %v4535
        %v4605 = vunpack.c.l.s4 1966171168
        %v4606 = vunpack.c.0.s8 %v4605
        %v4607 = vlaneseq
        %v4608 = vshrl.u32 %v4607, 7
        %v4609 = vsub.s32 %v4606, %v4608
        %v4610 = vrot.slane %v4535, %v4609
        %v4612 = vunpack.c.l.s4 1966171168
        %v4613 = vunpack.c.0.s8 %v4612
        %v4614 = vlaneseq
        %v4615 = vshrl.u32 %v4614, 7
        %v4616 = vsub.s32 %v4613, %v4615
        %v4617 = vrot.slane %v4603, %v4616
        %v4618 = vcombine.high %v4610, %v4610
        %v4619 = vcombine.high %v4617, %v4617
        %v4621 = vunpack.c.l.s4 1966171168
        %v4622 = vunpack.c.0.s8 %v4621
        %v4623 = vlaneseq
        %v4624 = vshrl.u32 %v4623, 7
        %v4625 = vsub.s32 %v4622, %v4624
        %v4626 = vrot.slane %v4610, %v4625
        %v4628 = vunpack.c.l.s4 1966171168
        %v4629 = vunpack.c.0.s8 %v4628
        %v4630 = vlaneseq
        %v4631 = vshrl.u32 %v4630, 7
        %v4632 = vsub.s32 %v4629, %v4631
        %v4633 = vrot.slane %v4617, %v4632
        %v4635 = vunpack.c.l.s4 1966171168
        %v4636 = vunpack.c.0.s8 %v4635
        %v4637 = vlaneseq
        %v4638 = vshrl.u32 %v4637, 7
        %v4639 = vsub.s32 %v4636, %v4638
        %v4640 = vrot.slane %v4618, %v4639
        %v4642 = vunpack.c.l.s4 1966171168
        %v4643 = vunpack.c.0.s8 %v4642
        %v4644 = vlaneseq
        %v4645 = vshrl.u32 %v4644, 7
        %v4646 = vsub.s32 %v4643, %v4645
        %v4647 = vrot.slane %v4619, %v4646
        %v4648 = vcombine.high %v4626, %v4626
        %v4649 = vcombine.high %v4633, %v4633
        %v4650 = vcombine.high %v4640, %v4640
        %v4651 = vcombine.high %v4647, %v4647
        %v4652 = vcombine.high %v4536, %v4536
        %v4654 = vunpack.c.l.s4 1966171168
        %v4655 = vunpack.c.0.s8 %v4654
        %v4656 = vlaneseq
        %v4657 = vshrl.u32 %v4656, 7
        %v4658 = vsub.s32 %v4655, %v4657
        %v4659 = vrot.slane %v4536, %v4658
        %v4661 = vunpack.c.l.s4 1966171168
        %v4662 = vunpack.c.0.s8 %v4661
        %v4663 = vlaneseq
        %v4664 = vshrl.u32 %v4663, 7
        %v4665 = vsub.s32 %v4662, %v4664
        %v4666 = vrot.slane %v4652, %v4665
        %v4667 = vcombine.high %v4659, %v4659
        %v4668 = vcombine.high %v4666, %v4666
        %v4670 = vunpack.c.l.s4 1966171168
        %v4671 = vunpack.c.0.s8 %v4670
        %v4672 = vlaneseq
        %v4673 = vshrl.u32 %v4672, 7
        %v4674 = vsub.s32 %v4671, %v4673
        %v4675 = vrot.slane %v4659, %v4674
        %v4677 = vunpack.c.l.s4 1966171168
        %v4678 = vunpack.c.0.s8 %v4677
        %v4679 = vlaneseq
        %v4680 = vshrl.u32 %v4679, 7
        %v4681 = vsub.s32 %v4678, %v4680
        %v4682 = vrot.slane %v4666, %v4681
        %v4684 = vunpack.c.l.s4 1966171168
        %v4685 = vunpack.c.0.s8 %v4684
        %v4686 = vlaneseq
        %v4687 = vshrl.u32 %v4686, 7
        %v4688 = vsub.s32 %v4685, %v4687
        %v4689 = vrot.slane %v4667, %v4688
        %v4691 = vunpack.c.l.s4 1966171168
        %v4692 = vunpack.c.0.s8 %v4691
        %v4693 = vlaneseq
        %v4694 = vshrl.u32 %v4693, 7
        %v4695 = vsub.s32 %v4692, %v4694
        %v4696 = vrot.slane %v4668, %v4695
        %v4697 = vcombine.high %v4675, %v4675
        %v4698 = vcombine.high %v4682, %v4682
        %v4699 = vcombine.high %v4689, %v4689
        %v4700 = vcombine.high %v4696, %v4696
        %v4701 = vcombine.high %v4537, %v4537
        %v4703 = vunpack.c.l.s4 1966171168
        %v4704 = vunpack.c.0.s8 %v4703
        %v4705 = vlaneseq
        %v4706 = vshrl.u32 %v4705, 7
        %v4707 = vsub.s32 %v4704, %v4706
        %v4708 = vrot.slane %v4537, %v4707
        %v4710 = vunpack.c.l.s4 1966171168
        %v4711 = vunpack.c.0.s8 %v4710
        %v4712 = vlaneseq
        %v4713 = vshrl.u32 %v4712, 7
        %v4714 = vsub.s32 %v4711, %v4713
        %v4715 = vrot.slane %v4701, %v4714
        %v4716 = vcombine.high %v4708, %v4708
        %v4717 = vcombine.high %v4715, %v4715
        %v4719 = vunpack.c.l.s4 1966171168
        %v4720 = vunpack.c.0.s8 %v4719
        %v4721 = vlaneseq
        %v4722 = vshrl.u32 %v4721, 7
        %v4723 = vsub.s32 %v4720, %v4722
        %v4724 = vrot.slane %v4708, %v4723
        %v4726 = vunpack.c.l.s4 1966171168
        %v4727 = vunpack.c.0.s8 %v4726
        %v4728 = vlaneseq
        %v4729 = vshrl.u32 %v4728, 7
        %v4730 = vsub.s32 %v4727, %v4729
        %v4731 = vrot.slane %v4715, %v4730
        %v4733 = vunpack.c.l.s4 1966171168
        %v4734 = vunpack.c.0.s8 %v4733
        %v4735 = vlaneseq
        %v4736 = vshrl.u32 %v4735, 7
        %v4737 = vsub.s32 %v4734, %v4736
        %v4738 = vrot.slane %v4716, %v4737
        %v4740 = vunpack.c.l.s4 1966171168
        %v4741 = vunpack.c.0.s8 %v4740
        %v4742 = vlaneseq
        %v4743 = vshrl.u32 %v4742, 7
        %v4744 = vsub.s32 %v4741, %v4743
        %v4745 = vrot.slane %v4717, %v4744
        %v4746 = vcombine.high %v4724, %v4724
        %v4747 = vcombine.high %v4731, %v4731
        %v4748 = vcombine.high %v4738, %v4738
        %v4749 = vcombine.high %v4745, %v4745
        %v4750 = vlaneseq
        %v4751 = vshrl.u32 %v4750, 7
        %v4752 = vsub.s32 0, %v4751
        %v4753 = vrot.slane %v4577, %v4752
        %v4754 = vlaneseq
        %v4755 = vshrl.u32 %v4754, 7
        %v4756 = vsub.s32 0, %v4755
        %v4757 = vrot.slane %v4591, %v4756
        %v4758 = vlaneseq
        %v4759 = vshrl.u32 %v4758, 7
        %v4760 = vsub.s32 0, %v4759
        %v4761 = vrot.slane %v4599, %v4760
        %v4762 = vlaneseq
        %v4763 = vshrl.u32 %v4762, 7
        %v4764 = vsub.s32 0, %v4763
        %v4765 = vrot.slane %v4601, %v4764
        %v4766 = vlaneseq
        %v4767 = vshrl.u32 %v4766, 7
        %v4768 = vsub.s32 0, %v4767
        %v4769 = vrot.slane %v4584, %v4768
        %v4770 = vlaneseq
        %v4771 = vshrl.u32 %v4770, 7
        %v4772 = vsub.s32 0, %v4771
        %v4773 = vrot.slane %v4598, %v4772
        %v4774 = vlaneseq
        %v4775 = vshrl.u32 %v4774, 7
        %v4776 = vsub.s32 0, %v4775
        %v4777 = vrot.slane %v4600, %v4776
        %v4778 = vlaneseq
        %v4779 = vshrl.u32 %v4778, 7
        %v4780 = vsub.s32 0, %v4779
        %v4781 = vrot.slane %v4602, %v4780
        %v4782 = vlaneseq
        %v4783 = vshrl.u32 %v4782, 7
        %v4784 = vsub.s32 0, %v4783
        %v4785 = vrot.slane %v4626, %v4784
        %v4786 = vlaneseq
        %v4787 = vshrl.u32 %v4786, 7
        %v4788 = vsub.s32 0, %v4787
        %v4789 = vrot.slane %v4640, %v4788
        %v4790 = vlaneseq
        %v4791 = vshrl.u32 %v4790, 7
        %v4792 = vsub.s32 0, %v4791
        %v4793 = vrot.slane %v4648, %v4792
        %v4794 = vlaneseq
        %v4795 = vshrl.u32 %v4794, 7
        %v4796 = vsub.s32 0, %v4795
        %v4797 = vrot.slane %v4650, %v4796
        %v4798 = vlaneseq
        %v4799 = vshrl.u32 %v4798, 7
        %v4800 = vsub.s32 0, %v4799
        %v4801 = vrot.slane %v4633, %v4800
        %v4802 = vlaneseq
        %v4803 = vshrl.u32 %v4802, 7
        %v4804 = vsub.s32 0, %v4803
        %v4805 = vrot.slane %v4647, %v4804
        %v4806 = vlaneseq
        %v4807 = vshrl.u32 %v4806, 7
        %v4808 = vsub.s32 0, %v4807
        %v4809 = vrot.slane %v4649, %v4808
        %v4810 = vlaneseq
        %v4811 = vshrl.u32 %v4810, 7
        %v4812 = vsub.s32 0, %v4811
        %v4813 = vrot.slane %v4651, %v4812
        %v4814 = vlaneseq
        %v4815 = vshrl.u32 %v4814, 7
        %v4816 = vsub.s32 0, %v4815
        %v4817 = vrot.slane %v4675, %v4816
        %v4818 = vlaneseq
        %v4819 = vshrl.u32 %v4818, 7
        %v4820 = vsub.s32 0, %v4819
        %v4821 = vrot.slane %v4689, %v4820
        %v4822 = vlaneseq
        %v4823 = vshrl.u32 %v4822, 7
        %v4824 = vsub.s32 0, %v4823
        %v4825 = vrot.slane %v4697, %v4824
        %v4826 = vlaneseq
        %v4827 = vshrl.u32 %v4826, 7
        %v4828 = vsub.s32 0, %v4827
        %v4829 = vrot.slane %v4699, %v4828
        %v4830 = vlaneseq
        %v4831 = vshrl.u32 %v4830, 7
        %v4832 = vsub.s32 0, %v4831
        %v4833 = vrot.slane %v4682, %v4832
        %v4834 = vlaneseq
        %v4835 = vshrl.u32 %v4834, 7
        %v4836 = vsub.s32 0, %v4835
        %v4837 = vrot.slane %v4696, %v4836
        %v4838 = vlaneseq
        %v4839 = vshrl.u32 %v4838, 7
        %v4840 = vsub.s32 0, %v4839
        %v4841 = vrot.slane %v4698, %v4840
        %v4842 = vlaneseq
        %v4843 = vshrl.u32 %v4842, 7
        %v4844 = vsub.s32 0, %v4843
        %v4845 = vrot.slane %v4700, %v4844
        %v4846 = vlaneseq
        %v4847 = vshrl.u32 %v4846, 7
        %v4848 = vsub.s32 0, %v4847
        %v4849 = vrot.slane %v4724, %v4848
        %v4850 = vlaneseq
        %v4851 = vshrl.u32 %v4850, 7
        %v4852 = vsub.s32 0, %v4851
        %v4853 = vrot.slane %v4738, %v4852
        %v4854 = vlaneseq
        %v4855 = vshrl.u32 %v4854, 7
        %v4856 = vsub.s32 0, %v4855
        %v4857 = vrot.slane %v4746, %v4856
        %v4858 = vlaneseq
        %v4859 = vshrl.u32 %v4858, 7
        %v4860 = vsub.s32 0, %v4859
        %v4861 = vrot.slane %v4748, %v4860
        %v4862 = vlaneseq
        %v4863 = vshrl.u32 %v4862, 7
        %v4864 = vsub.s32 0, %v4863
        %v4865 = vrot.slane %v4731, %v4864
        %v4866 = vlaneseq
        %v4867 = vshrl.u32 %v4866, 7
        %v4868 = vsub.s32 0, %v4867
        %v4869 = vrot.slane %v4745, %v4868
        %v4870 = vlaneseq
        %v4871 = vshrl.u32 %v4870, 7
        %v4872 = vsub.s32 0, %v4871
        %v4873 = vrot.slane %v4747, %v4872
        %v4874 = vlaneseq
        %v4875 = vshrl.u32 %v4874, 7
        %v4876 = vsub.s32 0, %v4875
        %v4877 = vrot.slane %v4749, %v4876
        %v4910 = vsub.f32 %v4171, %v4753
        %v4911 = vsub.f32 %v4172, %v4753
        %v4912 = vsub.f32 %v4173, %v4757
        %v4913 = vsub.f32 %v4174, %v4757
        %v4914 = vsub.f32 %v4175, %v4761
        %v4915 = vsub.f32 %v4176, %v4761
        %v4916 = vsub.f32 %v4177, %v4765
        %v4917 = vsub.f32 %v4178, %v4765
        %v4918 = vsub.f32 %v4179, %v4769
        %v4919 = vsub.f32 %v4180, %v4769
        %v4920 = vsub.f32 %v4181, %v4773
        %v4921 = vsub.f32 %v4182, %v4773
        %v4922 = vsub.f32 %v4183, %v4777
        %v4923 = vsub.f32 %v4184, %v4777
        %v4924 = vsub.f32 %v4185, %v4781
        %v4925 = vsub.f32 %v4186, %v4781
        %v4926 = vsub.f32 %v4187, %v4785
        %v4927 = vsub.f32 %v4188, %v4785
        %v4928 = vsub.f32 %v4189, %v4789
        %v4929 = vsub.f32 %v4190, %v4789
        %v4930 = vsub.f32 %v4191, %v4793
        %v4931 = vsub.f32 %v4192, %v4793
        %v4932 = vsub.f32 %v4193, %v4797
        %v4933 = vsub.f32 %v4194, %v4797
        %v4934 = vsub.f32 %v4195, %v4801
        %v4935 = vsub.f32 %v4196, %v4801
        %v4936 = vsub.f32 %v4197, %v4805
        %v4937 = vsub.f32 %v4198, %v4805
        %v4938 = vsub.f32 %v4199, %v4809
        %v4939 = vsub.f32 %v4200, %v4809
        %v4940 = vsub.f32 %v4201, %v4813
        %v4941 = vsub.f32 %v4202, %v4813
        %v4942 = vsub.f32 %v4203, %v4817
        %v4943 = vsub.f32 %v4204, %v4817
        %v4944 = vsub.f32 %v4205, %v4821
        %v4945 = vsub.f32 %v4206, %v4821
        %v4946 = vsub.f32 %v4207, %v4825
        %v4947 = vsub.f32 %v4208, %v4825
        %v4948 = vsub.f32 %v4209, %v4829
        %v4949 = vsub.f32 %v4210, %v4829
        %v4950 = vsub.f32 %v4211, %v4833
        %v4951 = vsub.f32 %v4212, %v4833
        %v4952 = vsub.f32 %v4213, %v4837
        %v4953 = vsub.f32 %v4214, %v4837
        %v4954 = vsub.f32 %v4215, %v4841
        %v4955 = vsub.f32 %v4216, %v4841
        %v4956 = vsub.f32 %v4217, %v4845
        %v4957 = vsub.f32 %v4218, %v4845
        %v4958 = vsub.f32 %v4219, %v4849
        %v4959 = vsub.f32 %v4220, %v4849
        %v4960 = vsub.f32 %v4221, %v4853
        %v4961 = vsub.f32 %v4222, %v4853
        %v4962 = vsub.f32 %v4223, %v4857
        %v4963 = vsub.f32 %v4224, %v4857
        %v4964 = vsub.f32 %v4225, %v4861
        %v4965 = vsub.f32 %v4226, %v4861
        %v4966 = vsub.f32 %v4227, %v4865
        %v4967 = vsub.f32 %v4228, %v4865
        %v4968 = vsub.f32 %v4229, %v4869
        %v4969 = vsub.f32 %v4230, %v4869
        %v4970 = vsub.f32 %v4231, %v4873
        %v4971 = vsub.f32 %v4232, %v4873
        %v4972 = vsub.f32 %v4233, %v4877
        %v4973 = vsub.f32 %v4234, %v4877
        %v4974 = vmul.f32 %v4910, 1.442695
        %v4975 = vpow.pop %v4974
        %v4976 = vmul.f32 %v4911, 1.442695
        %v4977 = vpow.pop %v4976
        %v4978 = vmul.f32 %v4912, 1.442695
        %v4979 = vpow.pop %v4978
        %v4980 = vmul.f32 %v4913, 1.442695
        %v4981 = vpow.pop %v4980
        %v4982 = vmul.f32 %v4914, 1.442695
        %v4983 = vpow.pop %v4982
        %v4984 = vmul.f32 %v4915, 1.442695
        %v4985 = vpow.pop %v4984
        %v4986 = vmul.f32 %v4916, 1.442695
        %v4987 = vpow.pop %v4986
        %v4988 = vmul.f32 %v4917, 1.442695
        %v4989 = vpow.pop %v4988
        %v4990 = vmul.f32 %v4918, 1.442695
        %v4991 = vpow.pop %v4990
        %v4992 = vmul.f32 %v4919, 1.442695
        %v4993 = vpow.pop %v4992
        %v4994 = vmul.f32 %v4920, 1.442695
        %v4995 = vpow.pop %v4994
        %v4996 = vmul.f32 %v4921, 1.442695
        %v4997 = vpow.pop %v4996
        %v4998 = vmul.f32 %v4922, 1.442695
        %v4999 = vpow.pop %v4998
        %v5000 = vmul.f32 %v4923, 1.442695
        %v5001 = vpow.pop %v5000
        %v5002 = vmul.f32 %v4924, 1.442695
        %v5003 = vpow.pop %v5002
        %v5004 = vmul.f32 %v4925, 1.442695
        %v5005 = vpow.pop %v5004
        %v5006 = vmul.f32 %v4926, 1.442695
        %v5007 = vpow.pop %v5006
        %v5008 = vmul.f32 %v4927, 1.442695
        %v5009 = vpow.pop %v5008
        %v5010 = vmul.f32 %v4928, 1.442695
        %v5011 = vpow.pop %v5010
        %v5012 = vmul.f32 %v4929, 1.442695
        %v5013 = vpow.pop %v5012
        %v5014 = vmul.f32 %v4930, 1.442695
        %v5015 = vpow.pop %v5014
        %v5016 = vmul.f32 %v4931, 1.442695
        %v5017 = vpow.pop %v5016
        %v5018 = vmul.f32 %v4932, 1.442695
        %v5019 = vpow.pop %v5018
        %v5020 = vmul.f32 %v4933, 1.442695
        %v5021 = vpow.pop %v5020
        %v5022 = vmul.f32 %v4934, 1.442695
        %v5023 = vpow.pop %v5022
        %v5024 = vmul.f32 %v4935, 1.442695
        %v5025 = vpow.pop %v5024
        %v5026 = vmul.f32 %v4936, 1.442695
        %v5027 = vpow.pop %v5026
        %v5028 = vmul.f32 %v4937, 1.442695
        %v5029 = vpow.pop %v5028
        %v5030 = vmul.f32 %v4938, 1.442695
        %v5031 = vpow.pop %v5030
        %v5032 = vmul.f32 %v4939, 1.442695
        %v5033 = vpow.pop %v5032
        %v5034 = vmul.f32 %v4940, 1.442695
        %v5035 = vpow.pop %v5034
        %v5036 = vmul.f32 %v4941, 1.442695
        %v5037 = vpow.pop %v5036
        %v5038 = vmul.f32 %v4942, 1.442695
        %v5039 = vpow.pop %v5038
        %v5040 = vmul.f32 %v4943, 1.442695
        %v5041 = vpow.pop %v5040
        %v5042 = vmul.f32 %v4944, 1.442695
        %v5043 = vpow.pop %v5042
        %v5044 = vmul.f32 %v4945, 1.442695
        %v5045 = vpow.pop %v5044
        %v5046 = vmul.f32 %v4946, 1.442695
        %v5047 = vpow.pop %v5046
        %v5048 = vmul.f32 %v4947, 1.442695
        %v5049 = vpow.pop %v5048
        %v5050 = vmul.f32 %v4948, 1.442695
        %v5051 = vpow.pop %v5050
        %v5052 = vmul.f32 %v4949, 1.442695
        %v5053 = vpow.pop %v5052
        %v5054 = vmul.f32 %v4950, 1.442695
        %v5055 = vpow.pop %v5054
        %v5056 = vmul.f32 %v4951, 1.442695
        %v5057 = vpow.pop %v5056
        %v5058 = vmul.f32 %v4952, 1.442695
        %v5059 = vpow.pop %v5058
        %v5060 = vmul.f32 %v4953, 1.442695
        %v5061 = vpow.pop %v5060
        %v5062 = vmul.f32 %v4954, 1.442695
        %v5063 = vpow.pop %v5062
        %v5064 = vmul.f32 %v4955, 1.442695
        %v5065 = vpow.pop %v5064
        %v5066 = vmul.f32 %v4956, 1.442695
        %v5067 = vpow.pop %v5066
        %v5068 = vmul.f32 %v4957, 1.442695
        %v5069 = vpow.pop %v5068
        %v5070 = vmul.f32 %v4958, 1.442695
        %v5071 = vpow.pop %v5070
        %v5072 = vmul.f32 %v4959, 1.442695
        %v5073 = vpow.pop %v5072
        %v5074 = vmul.f32 %v4960, 1.442695
        %v5075 = vpow.pop %v5074
        %v5076 = vmul.f32 %v4961, 1.442695
        %v5077 = vpow.pop %v5076
        %v5078 = vmul.f32 %v4962, 1.442695
        %v5079 = vpow.pop %v5078
        %v5080 = vmul.f32 %v4963, 1.442695
        %v5081 = vpow.pop %v5080
        %v5082 = vmul.f32 %v4964, 1.442695
        %v5083 = vpow.pop %v5082
        %v5084 = vmul.f32 %v4965, 1.442695
        %v5085 = vpow.pop %v5084
        %v5086 = vmul.f32 %v4966, 1.442695
        %v5087 = vpow.pop %v5086
        %v5088 = vmul.f32 %v4967, 1.442695
        %v5089 = vpow.pop %v5088
        %v5090 = vmul.f32 %v4968, 1.442695
        %v5091 = vpow.pop %v5090
        %v5092 = vmul.f32 %v4969, 1.442695
        %v5093 = vpow.pop %v5092
        %v5094 = vmul.f32 %v4970, 1.442695
        %v5095 = vpow.pop %v5094
        %v5096 = vmul.f32 %v4971, 1.442695
        %v5097 = vpow.pop %v5096
        %v5098 = vmul.f32 %v4972, 1.442695
        %v5099 = vpow.pop %v5098
        %v5100 = vmul.f32 %v4973, 1.442695
        %v5101 = vpow.pop %v5100
        %v5102 = vld [vmem:[#allocation3] sm:$0xff]
        %v5103 = vld [vmem:[#allocation3 + $0x8] sm:$0xff]
        %v5104 = vld [vmem:[#allocation3 + $0x10] sm:$0xff]
        %v5105 = vld [vmem:[#allocation3 + $0x18] sm:$0xff]
        %v5106 = vmul.f32 %v4543, %v5102
        %v5107 = vmul.f32 %v4545, %v5103
        %v5108 = vmul.f32 %v4547, %v5104
        %v5109 = vmul.f32 %v4549, %v5105
        %v5110 = vadd.f32 %v4975, %v4977
        %v5111 = vrot.slane %v5110, 4
        %v5112 = vadd.f32 %v5110, %v5111
        %v5113 = vrot.slane %v5112, 2
        %v5114 = vadd.f32 %v5112, %v5113
        %v5115 = vrot.slane %v5114, 1
        %v5116 = vadd.f32 %v5114, %v5115
        %v5117 = vadd.f32 %v4979, %v4981
        %v5118 = vrot.slane %v5117, 4
        %v5119 = vadd.f32 %v5117, %v5118
        %v5120 = vrot.slane %v5119, 2
        %v5121 = vadd.f32 %v5119, %v5120
        %v5122 = vrot.slane %v5121, 1
        %v5123 = vadd.f32 %v5121, %v5122
        %v5124 = vadd.f32 %v4983, %v4985
        %v5125 = vrot.slane %v5124, 4
        %v5126 = vadd.f32 %v5124, %v5125
        %v5127 = vrot.slane %v5126, 2
        %v5128 = vadd.f32 %v5126, %v5127
        %v5129 = vrot.slane %v5128, 1
        %v5130 = vadd.f32 %v5128, %v5129
        %v5131 = vadd.f32 %v4987, %v4989
        %v5132 = vrot.slane %v5131, 4
        %v5133 = vadd.f32 %v5131, %v5132
        %v5134 = vrot.slane %v5133, 2
        %v5135 = vadd.f32 %v5133, %v5134
        %v5136 = vrot.slane %v5135, 1
        %v5137 = vadd.f32 %v5135, %v5136
        %v5138 = vadd.f32 %v4991, %v4993
        %v5139 = vrot.slane %v5138, 4
        %v5140 = vadd.f32 %v5138, %v5139
        %v5141 = vrot.slane %v5140, 2
        %v5142 = vadd.f32 %v5140, %v5141
        %v5143 = vrot.slane %v5142, 1
        %v5144 = vadd.f32 %v5142, %v5143
        %v5145 = vadd.f32 %v4995, %v4997
        %v5146 = vrot.slane %v5145, 4
        %v5147 = vadd.f32 %v5145, %v5146
        %v5148 = vrot.slane %v5147, 2
        %v5149 = vadd.f32 %v5147, %v5148
        %v5150 = vrot.slane %v5149, 1
        %v5151 = vadd.f32 %v5149, %v5150
        %v5152 = vadd.f32 %v4999, %v5001
        %v5153 = vrot.slane %v5152, 4
        %v5154 = vadd.f32 %v5152, %v5153
        %v5155 = vrot.slane %v5154, 2
        %v5156 = vadd.f32 %v5154, %v5155
        %v5157 = vrot.slane %v5156, 1
        %v5158 = vadd.f32 %v5156, %v5157
        %v5159 = vadd.f32 %v5003, %v5005
        %v5160 = vrot.slane %v5159, 4
        %v5161 = vadd.f32 %v5159, %v5160
        %v5162 = vrot.slane %v5161, 2
        %v5163 = vadd.f32 %v5161, %v5162
        %v5164 = vrot.slane %v5163, 1
        %v5165 = vadd.f32 %v5163, %v5164
        %v5166 = vadd.f32 %v5007, %v5009
        %v5167 = vrot.slane %v5166, 4
        %v5168 = vadd.f32 %v5166, %v5167
        %v5169 = vrot.slane %v5168, 2
        %v5170 = vadd.f32 %v5168, %v5169
        %v5171 = vrot.slane %v5170, 1
        %v5172 = vadd.f32 %v5170, %v5171
        %v5173 = vadd.f32 %v5011, %v5013
        %v5174 = vrot.slane %v5173, 4
        %v5175 = vadd.f32 %v5173, %v5174
        %v5176 = vrot.slane %v5175, 2
        %v5177 = vadd.f32 %v5175, %v5176
        %v5178 = vrot.slane %v5177, 1
        %v5179 = vadd.f32 %v5177, %v5178
        %v5180 = vadd.f32 %v5015, %v5017
        %v5181 = vrot.slane %v5180, 4
        %v5182 = vadd.f32 %v5180, %v5181
        %v5183 = vrot.slane %v5182, 2
        %v5184 = vadd.f32 %v5182, %v5183
        %v5185 = vrot.slane %v5184, 1
        %v5186 = vadd.f32 %v5184, %v5185
        %v5187 = vadd.f32 %v5019, %v5021
        %v5188 = vrot.slane %v5187, 4
        %v5189 = vadd.f32 %v5187, %v5188
        %v5190 = vrot.slane %v5189, 2
        %v5191 = vadd.f32 %v5189, %v5190
        %v5192 = vrot.slane %v5191, 1
        %v5193 = vadd.f32 %v5191, %v5192
        %v5194 = vadd.f32 %v5023, %v5025
        %v5195 = vrot.slane %v5194, 4
        %v5196 = vadd.f32 %v5194, %v5195
        %v5197 = vrot.slane %v5196, 2
        %v5198 = vadd.f32 %v5196, %v5197
        %v5199 = vrot.slane %v5198, 1
        %v5200 = vadd.f32 %v5198, %v5199
        %v5201 = vadd.f32 %v5027, %v5029
        %v5202 = vrot.slane %v5201, 4
        %v5203 = vadd.f32 %v5201, %v5202
        %v5204 = vrot.slane %v5203, 2
        %v5205 = vadd.f32 %v5203, %v5204
        %v5206 = vrot.slane %v5205, 1
        %v5207 = vadd.f32 %v5205, %v5206
        %v5208 = vadd.f32 %v5031, %v5033
        %v5209 = vrot.slane %v5208, 4
        %v5210 = vadd.f32 %v5208, %v5209
        %v5211 = vrot.slane %v5210, 2
        %v5212 = vadd.f32 %v5210, %v5211
        %v5213 = vrot.slane %v5212, 1
        %v5214 = vadd.f32 %v5212, %v5213
        %v5215 = vadd.f32 %v5035, %v5037
        %v5216 = vrot.slane %v5215, 4
        %v5217 = vadd.f32 %v5215, %v5216
        %v5218 = vrot.slane %v5217, 2
        %v5219 = vadd.f32 %v5217, %v5218
        %v5220 = vrot.slane %v5219, 1
        %v5221 = vadd.f32 %v5219, %v5220
        %v5222 = vadd.f32 %v5039, %v5041
        %v5223 = vrot.slane %v5222, 4
        %v5224 = vadd.f32 %v5222, %v5223
        %v5225 = vrot.slane %v5224, 2
        %v5226 = vadd.f32 %v5224, %v5225
        %v5227 = vrot.slane %v5226, 1
        %v5228 = vadd.f32 %v5226, %v5227
        %v5229 = vadd.f32 %v5043, %v5045
        %v5230 = vrot.slane %v5229, 4
        %v5231 = vadd.f32 %v5229, %v5230
        %v5232 = vrot.slane %v5231, 2
        %v5233 = vadd.f32 %v5231, %v5232
        %v5234 = vrot.slane %v5233, 1
        %v5235 = vadd.f32 %v5233, %v5234
        %v5236 = vadd.f32 %v5047, %v5049
        %v5237 = vrot.slane %v5236, 4
        %v5238 = vadd.f32 %v5236, %v5237
        %v5239 = vrot.slane %v5238, 2
        %v5240 = vadd.f32 %v5238, %v5239
        %v5241 = vrot.slane %v5240, 1
        %v5242 = vadd.f32 %v5240, %v5241
        %v5243 = vadd.f32 %v5051, %v5053
        %v5244 = vrot.slane %v5243, 4
        %v5245 = vadd.f32 %v5243, %v5244
        %v5246 = vrot.slane %v5245, 2
        %v5247 = vadd.f32 %v5245, %v5246
        %v5248 = vrot.slane %v5247, 1
        %v5249 = vadd.f32 %v5247, %v5248
        %v5250 = vadd.f32 %v5055, %v5057
        %v5251 = vrot.slane %v5250, 4
        %v5252 = vadd.f32 %v5250, %v5251
        %v5253 = vrot.slane %v5252, 2
        %v5254 = vadd.f32 %v5252, %v5253
        %v5255 = vrot.slane %v5254, 1
        %v5256 = vadd.f32 %v5254, %v5255
        %v5257 = vadd.f32 %v5059, %v5061
        %v5258 = vrot.slane %v5257, 4
        %v5259 = vadd.f32 %v5257, %v5258
        %v5260 = vrot.slane %v5259, 2
        %v5261 = vadd.f32 %v5259, %v5260
        %v5262 = vrot.slane %v5261, 1
        %v5263 = vadd.f32 %v5261, %v5262
        %v5264 = vadd.f32 %v5063, %v5065
        %v5265 = vrot.slane %v5264, 4
        %v5266 = vadd.f32 %v5264, %v5265
        %v5267 = vrot.slane %v5266, 2
        %v5268 = vadd.f32 %v5266, %v5267
        %v5269 = vrot.slane %v5268, 1
        %v5270 = vadd.f32 %v5268, %v5269
        %v5271 = vadd.f32 %v5067, %v5069
        %v5272 = vrot.slane %v5271, 4
        %v5273 = vadd.f32 %v5271, %v5272
        %v5274 = vrot.slane %v5273, 2
        %v5275 = vadd.f32 %v5273, %v5274
        %v5276 = vrot.slane %v5275, 1
        %v5277 = vadd.f32 %v5275, %v5276
        %v5278 = vadd.f32 %v5071, %v5073
        %v5279 = vrot.slane %v5278, 4
        %v5280 = vadd.f32 %v5278, %v5279
        %v5281 = vrot.slane %v5280, 2
        %v5282 = vadd.f32 %v5280, %v5281
        %v5283 = vrot.slane %v5282, 1
        %v5284 = vadd.f32 %v5282, %v5283
        %v5285 = vadd.f32 %v5075, %v5077
        %v5286 = vrot.slane %v5285, 4
        %v5287 = vadd.f32 %v5285, %v5286
        %v5288 = vrot.slane %v5287, 2
        %v5289 = vadd.f32 %v5287, %v5288
        %v5290 = vrot.slane %v5289, 1
        %v5291 = vadd.f32 %v5289, %v5290
        %v5292 = vadd.f32 %v5079, %v5081
        %v5293 = vrot.slane %v5292, 4
        %v5294 = vadd.f32 %v5292, %v5293
        %v5295 = vrot.slane %v5294, 2
        %v5296 = vadd.f32 %v5294, %v5295
        %v5297 = vrot.slane %v5296, 1
        %v5298 = vadd.f32 %v5296, %v5297
        %v5299 = vadd.f32 %v5083, %v5085
        %v5300 = vrot.slane %v5299, 4
        %v5301 = vadd.f32 %v5299, %v5300
        %v5302 = vrot.slane %v5301, 2
        %v5303 = vadd.f32 %v5301, %v5302
        %v5304 = vrot.slane %v5303, 1
        %v5305 = vadd.f32 %v5303, %v5304
        %v5306 = vadd.f32 %v5087, %v5089
        %v5307 = vrot.slane %v5306, 4
        %v5308 = vadd.f32 %v5306, %v5307
        %v5309 = vrot.slane %v5308, 2
        %v5310 = vadd.f32 %v5308, %v5309
        %v5311 = vrot.slane %v5310, 1
        %v5312 = vadd.f32 %v5310, %v5311
        %v5313 = vadd.f32 %v5091, %v5093
        %v5314 = vrot.slane %v5313, 4
        %v5315 = vadd.f32 %v5313, %v5314
        %v5316 = vrot.slane %v5315, 2
        %v5317 = vadd.f32 %v5315, %v5316
        %v5318 = vrot.slane %v5317, 1
        %v5319 = vadd.f32 %v5317, %v5318
        %v5320 = vadd.f32 %v5095, %v5097
        %v5321 = vrot.slane %v5320, 4
        %v5322 = vadd.f32 %v5320, %v5321
        %v5323 = vrot.slane %v5322, 2
        %v5324 = vadd.f32 %v5322, %v5323
        %v5325 = vrot.slane %v5324, 1
        %v5326 = vadd.f32 %v5324, %v5325
        %v5327 = vadd.f32 %v5099, %v5101
        %v5328 = vrot.slane %v5327, 4
        %v5329 = vadd.f32 %v5327, %v5328
        %v5330 = vrot.slane %v5329, 2
        %v5331 = vadd.f32 %v5329, %v5330
        %v5332 = vrot.slane %v5331, 1
        %v5333 = vadd.f32 %v5331, %v5332
        %v5366 = vsel %vm4495, %v5123, %v5116
        %v5367 = vsel %vm4497, %v5130, %v5366
        %v5368 = vsel %vm4499, %v5137, %v5367
        %v5369 = vsel %vm4501, %v5144, %v5368
        %v5370 = vsel %vm4503, %v5151, %v5369
        %v5371 = vsel %vm4505, %v5158, %v5370
        %v5372 = vsel %vm4507, %v5165, %v5371
        %v5373 = vsel %vm4495, %v5179, %v5172
        %v5374 = vsel %vm4497, %v5186, %v5373
        %v5375 = vsel %vm4499, %v5193, %v5374
        %v5376 = vsel %vm4501, %v5200, %v5375
        %v5377 = vsel %vm4503, %v5207, %v5376
        %v5378 = vsel %vm4505, %v5214, %v5377
        %v5379 = vsel %vm4507, %v5221, %v5378
        %v5380 = vsel %vm4495, %v5235, %v5228
        %v5381 = vsel %vm4497, %v5242, %v5380
        %v5382 = vsel %vm4499, %v5249, %v5381
        %v5383 = vsel %vm4501, %v5256, %v5382
        %v5384 = vsel %vm4503, %v5263, %v5383
        %v5385 = vsel %vm4505, %v5270, %v5384
        %v5386 = vsel %vm4507, %v5277, %v5385
        %v5387 = vsel %vm4495, %v5291, %v5284
        %v5388 = vsel %vm4497, %v5298, %v5387
        %v5389 = vsel %vm4499, %v5305, %v5388
        %v5390 = vsel %vm4501, %v5312, %v5389
        %v5391 = vsel %vm4503, %v5319, %v5390
        %v5392 = vsel %vm4505, %v5326, %v5391
        %v5393 = vsel %vm4507, %v5333, %v5392
        %v5398 = vadd.f32 %v5106, %v5372
        %v5399 = vadd.f32 %v5107, %v5379
        %v5400 = vadd.f32 %v5108, %v5386
        %v5401 = vadd.f32 %v5109, %v5393
        %5402 = vst [vmem:[#allocation3] sm:$0xff] %v5398
        %5403 = vst [vmem:[#allocation3 + $0x8] sm:$0xff] %v5399
        %5404 = vst [vmem:[#allocation3 + $0x10] sm:$0xff] %v5400
        %5405 = vst [vmem:[#allocation3 + $0x18] sm:$0xff] %v5401
        %v5406 = vld [vmem:[#allocation4] sm:$0xff]
        %v5407 = vld [vmem:[#allocation4 + $0x8] sm:$0xff]
        %v5408 = vld [vmem:[#allocation4 + $0x10] sm:$0xff]
        %v5409 = vld [vmem:[#allocation4 + $0x18] sm:$0xff]
        %v5410 = vmul.f32 %v4543, %v5406
        %v5411 = vmul.f32 %v4545, %v5407
        %v5412 = vmul.f32 %v4547, %v5408
        %v5413 = vmul.f32 %v4549, %v5409
        %v5414 = vld [vmem:[%s1162] sm:$0xff]
        %v5415 = vld [vmem:[%s1162 + $0x8] sm:$0xff]
        %v5416 = vmul.f32 %v4975, %v5414
        %v5417 = vmul.f32 %v4977, %v5415
        %v5418 = vmul.f32 %v4979, %v5414
        %v5419 = vmul.f32 %v4981, %v5415
        %v5420 = vmul.f32 %v4983, %v5414
        %v5421 = vmul.f32 %v4985, %v5415
        %v5422 = vmul.f32 %v4987, %v5414
        %v5423 = vmul.f32 %v4989, %v5415
        %v5424 = vmul.f32 %v4991, %v5414
        %v5425 = vmul.f32 %v4993, %v5415
        %v5426 = vmul.f32 %v4995, %v5414
        %v5427 = vmul.f32 %v4997, %v5415
        %v5428 = vmul.f32 %v4999, %v5414
        %v5429 = vmul.f32 %v5001, %v5415
        %v5430 = vmul.f32 %v5003, %v5414
        %v5431 = vmul.f32 %v5005, %v5415
        %v5432 = vmul.f32 %v5007, %v5414
        %v5433 = vmul.f32 %v5009, %v5415
        %v5434 = vmul.f32 %v5011, %v5414
        %v5435 = vmul.f32 %v5013, %v5415
        %v5436 = vmul.f32 %v5015, %v5414
        %v5437 = vmul.f32 %v5017, %v5415
        %v5438 = vmul.f32 %v5019, %v5414
        %v5439 = vmul.f32 %v5021, %v5415
        %v5440 = vmul.f32 %v5023, %v5414
        %v5441 = vmul.f32 %v5025, %v5415
        %v5442 = vmul.f32 %v5027, %v5414
        %v5443 = vmul.f32 %v5029, %v5415
        %v5444 = vmul.f32 %v5031, %v5414
        %v5445 = vmul.f32 %v5033, %v5415
        %v5446 = vmul.f32 %v5035, %v5414
        %v5447 = vmul.f32 %v5037, %v5415
        %v5448 = vmul.f32 %v5039, %v5414
        %v5449 = vmul.f32 %v5041, %v5415
        %v5450 = vmul.f32 %v5043, %v5414
        %v5451 = vmul.f32 %v5045, %v5415
        %v5452 = vmul.f32 %v5047, %v5414
        %v5453 = vmul.f32 %v5049, %v5415
        %v5454 = vmul.f32 %v5051, %v5414
        %v5455 = vmul.f32 %v5053, %v5415
        %v5456 = vmul.f32 %v5055, %v5414
        %v5457 = vmul.f32 %v5057, %v5415
        %v5458 = vmul.f32 %v5059, %v5414
        %v5459 = vmul.f32 %v5061, %v5415
        %v5460 = vmul.f32 %v5063, %v5414
        %v5461 = vmul.f32 %v5065, %v5415
        %v5462 = vmul.f32 %v5067, %v5414
        %v5463 = vmul.f32 %v5069, %v5415
        %v5464 = vmul.f32 %v5071, %v5414
        %v5465 = vmul.f32 %v5073, %v5415
        %v5466 = vmul.f32 %v5075, %v5414
        %v5467 = vmul.f32 %v5077, %v5415
        %v5468 = vmul.f32 %v5079, %v5414
        %v5469 = vmul.f32 %v5081, %v5415
        %v5470 = vmul.f32 %v5083, %v5414
        %v5471 = vmul.f32 %v5085, %v5415
        %v5472 = vmul.f32 %v5087, %v5414
        %v5473 = vmul.f32 %v5089, %v5415
        %v5474 = vmul.f32 %v5091, %v5414
        %v5475 = vmul.f32 %v5093, %v5415
        %v5476 = vmul.f32 %v5095, %v5414
        %v5477 = vmul.f32 %v5097, %v5415
        %v5478 = vmul.f32 %v5099, %v5414
        %v5479 = vmul.f32 %v5101, %v5415
        %v5480 = vadd.f32 %v5416, %v5417
        %v5481 = vrot.slane %v5480, 4
        %v5482 = vadd.f32 %v5480, %v5481
        %v5483 = vrot.slane %v5482, 2
        %v5484 = vadd.f32 %v5482, %v5483
        %v5485 = vrot.slane %v5484, 1
        %v5486 = vadd.f32 %v5484, %v5485
        %v5487 = vadd.f32 %v5418, %v5419
        %v5488 = vrot.slane %v5487, 4
        %v5489 = vadd.f32 %v5487, %v5488
        %v5490 = vrot.slane %v5489, 2
        %v5491 = vadd.f32 %v5489, %v5490
        %v5492 = vrot.slane %v5491, 1
        %v5493 = vadd.f32 %v5491, %v5492
        %v5494 = vadd.f32 %v5420, %v5421
        %v5495 = vrot.slane %v5494, 4
        %v5496 = vadd.f32 %v5494, %v5495
        %v5497 = vrot.slane %v5496, 2
        %v5498 = vadd.f32 %v5496, %v5497
        %v5499 = vrot.slane %v5498, 1
        %v5500 = vadd.f32 %v5498, %v5499
        %v5501 = vadd.f32 %v5422, %v5423
        %v5502 = vrot.slane %v5501, 4
        %v5503 = vadd.f32 %v5501, %v5502
        %v5504 = vrot.slane %v5503, 2
        %v5505 = vadd.f32 %v5503, %v5504
        %v5506 = vrot.slane %v5505, 1
        %v5507 = vadd.f32 %v5505, %v5506
        %v5508 = vadd.f32 %v5424, %v5425
        %v5509 = vrot.slane %v5508, 4
        %v5510 = vadd.f32 %v5508, %v5509
        %v5511 = vrot.slane %v5510, 2
        %v5512 = vadd.f32 %v5510, %v5511
        %v5513 = vrot.slane %v5512, 1
        %v5514 = vadd.f32 %v5512, %v5513
        %v5515 = vadd.f32 %v5426, %v5427
        %v5516 = vrot.slane %v5515, 4
        %v5517 = vadd.f32 %v5515, %v5516
        %v5518 = vrot.slane %v5517, 2
        %v5519 = vadd.f32 %v5517, %v5518
        %v5520 = vrot.slane %v5519, 1
        %v5521 = vadd.f32 %v5519, %v5520
        %v5522 = vadd.f32 %v5428, %v5429
        %v5523 = vrot.slane %v5522, 4
        %v5524 = vadd.f32 %v5522, %v5523
        %v5525 = vrot.slane %v5524, 2
        %v5526 = vadd.f32 %v5524, %v5525
        %v5527 = vrot.slane %v5526, 1
        %v5528 = vadd.f32 %v5526, %v5527
        %v5529 = vadd.f32 %v5430, %v5431
        %v5530 = vrot.slane %v5529, 4
        %v5531 = vadd.f32 %v5529, %v5530
        %v5532 = vrot.slane %v5531, 2
        %v5533 = vadd.f32 %v5531, %v5532
        %v5534 = vrot.slane %v5533, 1
        %v5535 = vadd.f32 %v5533, %v5534
        %v5536 = vadd.f32 %v5432, %v5433
        %v5537 = vrot.slane %v5536, 4
        %v5538 = vadd.f32 %v5536, %v5537
        %v5539 = vrot.slane %v5538, 2
        %v5540 = vadd.f32 %v5538, %v5539
        %v5541 = vrot.slane %v5540, 1
        %v5542 = vadd.f32 %v5540, %v5541
        %v5543 = vadd.f32 %v5434, %v5435
        %v5544 = vrot.slane %v5543, 4
        %v5545 = vadd.f32 %v5543, %v5544
        %v5546 = vrot.slane %v5545, 2
        %v5547 = vadd.f32 %v5545, %v5546
        %v5548 = vrot.slane %v5547, 1
        %v5549 = vadd.f32 %v5547, %v5548
        %v5550 = vadd.f32 %v5436, %v5437
        %v5551 = vrot.slane %v5550, 4
        %v5552 = vadd.f32 %v5550, %v5551
        %v5553 = vrot.slane %v5552, 2
        %v5554 = vadd.f32 %v5552, %v5553
        %v5555 = vrot.slane %v5554, 1
        %v5556 = vadd.f32 %v5554, %v5555
        %v5557 = vadd.f32 %v5438, %v5439
        %v5558 = vrot.slane %v5557, 4
        %v5559 = vadd.f32 %v5557, %v5558
        %v5560 = vrot.slane %v5559, 2
        %v5561 = vadd.f32 %v5559, %v5560
        %v5562 = vrot.slane %v5561, 1
        %v5563 = vadd.f32 %v5561, %v5562
        %v5564 = vadd.f32 %v5440, %v5441
        %v5565 = vrot.slane %v5564, 4
        %v5566 = vadd.f32 %v5564, %v5565
        %v5567 = vrot.slane %v5566, 2
        %v5568 = vadd.f32 %v5566, %v5567
        %v5569 = vrot.slane %v5568, 1
        %v5570 = vadd.f32 %v5568, %v5569
        %v5571 = vadd.f32 %v5442, %v5443
        %v5572 = vrot.slane %v5571, 4
        %v5573 = vadd.f32 %v5571, %v5572
        %v5574 = vrot.slane %v5573, 2
        %v5575 = vadd.f32 %v5573, %v5574
        %v5576 = vrot.slane %v5575, 1
        %v5577 = vadd.f32 %v5575, %v5576
        %v5578 = vadd.f32 %v5444, %v5445
        %v5579 = vrot.slane %v5578, 4
        %v5580 = vadd.f32 %v5578, %v5579
        %v5581 = vrot.slane %v5580, 2
        %v5582 = vadd.f32 %v5580, %v5581
        %v5583 = vrot.slane %v5582, 1
        %v5584 = vadd.f32 %v5582, %v5583
        %v5585 = vadd.f32 %v5446, %v5447
        %v5586 = vrot.slane %v5585, 4
        %v5587 = vadd.f32 %v5585, %v5586
        %v5588 = vrot.slane %v5587, 2
        %v5589 = vadd.f32 %v5587, %v5588
        %v5590 = vrot.slane %v5589, 1
        %v5591 = vadd.f32 %v5589, %v5590
        %v5592 = vadd.f32 %v5448, %v5449
        %v5593 = vrot.slane %v5592, 4
        %v5594 = vadd.f32 %v5592, %v5593
        %v5595 = vrot.slane %v5594, 2
        %v5596 = vadd.f32 %v5594, %v5595
        %v5597 = vrot.slane %v5596, 1
        %v5598 = vadd.f32 %v5596, %v5597
        %v5599 = vadd.f32 %v5450, %v5451
        %v5600 = vrot.slane %v5599, 4
        %v5601 = vadd.f32 %v5599, %v5600
        %v5602 = vrot.slane %v5601, 2
        %v5603 = vadd.f32 %v5601, %v5602
        %v5604 = vrot.slane %v5603, 1
        %v5605 = vadd.f32 %v5603, %v5604
        %v5606 = vadd.f32 %v5452, %v5453
        %v5607 = vrot.slane %v5606, 4
        %v5608 = vadd.f32 %v5606, %v5607
        %v5609 = vrot.slane %v5608, 2
        %v5610 = vadd.f32 %v5608, %v5609
        %v5611 = vrot.slane %v5610, 1
        %v5612 = vadd.f32 %v5610, %v5611
        %v5613 = vadd.f32 %v5454, %v5455
        %v5614 = vrot.slane %v5613, 4
        %v5615 = vadd.f32 %v5613, %v5614
        %v5616 = vrot.slane %v5615, 2
        %v5617 = vadd.f32 %v5615, %v5616
        %v5618 = vrot.slane %v5617, 1
        %v5619 = vadd.f32 %v5617, %v5618
        %v5620 = vadd.f32 %v5456, %v5457
        %v5621 = vrot.slane %v5620, 4
        %v5622 = vadd.f32 %v5620, %v5621
        %v5623 = vrot.slane %v5622, 2
        %v5624 = vadd.f32 %v5622, %v5623
        %v5625 = vrot.slane %v5624, 1
        %v5626 = vadd.f32 %v5624, %v5625
        %v5627 = vadd.f32 %v5458, %v5459
        %v5628 = vrot.slane %v5627, 4
        %v5629 = vadd.f32 %v5627, %v5628
        %v5630 = vrot.slane %v5629, 2
        %v5631 = vadd.f32 %v5629, %v5630
        %v5632 = vrot.slane %v5631, 1
        %v5633 = vadd.f32 %v5631, %v5632
        %v5634 = vadd.f32 %v5460, %v5461
        %v5635 = vrot.slane %v5634, 4
        %v5636 = vadd.f32 %v5634, %v5635
        %v5637 = vrot.slane %v5636, 2
        %v5638 = vadd.f32 %v5636, %v5637
        %v5639 = vrot.slane %v5638, 1
        %v5640 = vadd.f32 %v5638, %v5639
        %v5641 = vadd.f32 %v5462, %v5463
        %v5642 = vrot.slane %v5641, 4
        %v5643 = vadd.f32 %v5641, %v5642
        %v5644 = vrot.slane %v5643, 2
        %v5645 = vadd.f32 %v5643, %v5644
        %v5646 = vrot.slane %v5645, 1
        %v5647 = vadd.f32 %v5645, %v5646
        %v5648 = vadd.f32 %v5464, %v5465
        %v5649 = vrot.slane %v5648, 4
        %v5650 = vadd.f32 %v5648, %v5649
        %v5651 = vrot.slane %v5650, 2
        %v5652 = vadd.f32 %v5650, %v5651
        %v5653 = vrot.slane %v5652, 1
        %v5654 = vadd.f32 %v5652, %v5653
        %v5655 = vadd.f32 %v5466, %v5467
        %v5656 = vrot.slane %v5655, 4
        %v5657 = vadd.f32 %v5655, %v5656
        %v5658 = vrot.slane %v5657, 2
        %v5659 = vadd.f32 %v5657, %v5658
        %v5660 = vrot.slane %v5659, 1
        %v5661 = vadd.f32 %v5659, %v5660
        %v5662 = vadd.f32 %v5468, %v5469
        %v5663 = vrot.slane %v5662, 4
        %v5664 = vadd.f32 %v5662, %v5663
        %v5665 = vrot.slane %v5664, 2
        %v5666 = vadd.f32 %v5664, %v5665
        %v5667 = vrot.slane %v5666, 1
        %v5668 = vadd.f32 %v5666, %v5667
        %v5669 = vadd.f32 %v5470, %v5471
        %v5670 = vrot.slane %v5669, 4
        %v5671 = vadd.f32 %v5669, %v5670
        %v5672 = vrot.slane %v5671, 2
        %v5673 = vadd.f32 %v5671, %v5672
        %v5674 = vrot.slane %v5673, 1
        %v5675 = vadd.f32 %v5673, %v5674
        %v5676 = vadd.f32 %v5472, %v5473
        %v5677 = vrot.slane %v5676, 4
        %v5678 = vadd.f32 %v5676, %v5677
        %v5679 = vrot.slane %v5678, 2
        %v5680 = vadd.f32 %v5678, %v5679
        %v5681 = vrot.slane %v5680, 1
        %v5682 = vadd.f32 %v5680, %v5681
        %v5683 = vadd.f32 %v5474, %v5475
        %v5684 = vrot.slane %v5683, 4
        %v5685 = vadd.f32 %v5683, %v5684
        %v5686 = vrot.slane %v5685, 2
        %v5687 = vadd.f32 %v5685, %v5686
        %v5688 = vrot.slane %v5687, 1
        %v5689 = vadd.f32 %v5687, %v5688
        %v5690 = vadd.f32 %v5476, %v5477
        %v5691 = vrot.slane %v5690, 4
        %v5692 = vadd.f32 %v5690, %v5691
        %v5693 = vrot.slane %v5692, 2
        %v5694 = vadd.f32 %v5692, %v5693
        %v5695 = vrot.slane %v5694, 1
        %v5696 = vadd.f32 %v5694, %v5695
        %v5697 = vadd.f32 %v5478, %v5479
        %v5698 = vrot.slane %v5697, 4
        %v5699 = vadd.f32 %v5697, %v5698
        %v5700 = vrot.slane %v5699, 2
        %v5701 = vadd.f32 %v5699, %v5700
        %v5702 = vrot.slane %v5701, 1
        %v5703 = vadd.f32 %v5701, %v5702
        %v5736 = vsel %vm4495, %v5493, %v5486
        %v5737 = vsel %vm4497, %v5500, %v5736
        %v5738 = vsel %vm4499, %v5507, %v5737
        %v5739 = vsel %vm4501, %v5514, %v5738
        %v5740 = vsel %vm4503, %v5521, %v5739
        %v5741 = vsel %vm4505, %v5528, %v5740
        %v5742 = vsel %vm4507, %v5535, %v5741
        %v5743 = vsel %vm4495, %v5549, %v5542
        %v5744 = vsel %vm4497, %v5556, %v5743
        %v5745 = vsel %vm4499, %v5563, %v5744
        %v5746 = vsel %vm4501, %v5570, %v5745
        %v5747 = vsel %vm4503, %v5577, %v5746
        %v5748 = vsel %vm4505, %v5584, %v5747
        %v5749 = vsel %vm4507, %v5591, %v5748
        %v5750 = vsel %vm4495, %v5605, %v5598
        %v5751 = vsel %vm4497, %v5612, %v5750
        %v5752 = vsel %vm4499, %v5619, %v5751
        %v5753 = vsel %vm4501, %v5626, %v5752
        %v5754 = vsel %vm4503, %v5633, %v5753
        %v5755 = vsel %vm4505, %v5640, %v5754
        %v5756 = vsel %vm4507, %v5647, %v5755
        %v5757 = vsel %vm4495, %v5661, %v5654
        %v5758 = vsel %vm4497, %v5668, %v5757
        %v5759 = vsel %vm4499, %v5675, %v5758
        %v5760 = vsel %vm4501, %v5682, %v5759
        %v5761 = vsel %vm4503, %v5689, %v5760
        %v5762 = vsel %vm4505, %v5696, %v5761
        %v5763 = vsel %vm4507, %v5703, %v5762
        %v5768 = vadd.f32 %v5410, %v5742
        %v5769 = vadd.f32 %v5411, %v5749
        %v5770 = vadd.f32 %v5412, %v5756
        %v5771 = vadd.f32 %v5413, %v5763
        %5772 = vst [vmem:[#allocation4] sm:$0xff] %v5768
        %5773 = vst [vmem:[#allocation4 + $0x8] sm:$0xff] %v5769
        %5774 = vst [vmem:[#allocation4 + $0x10] sm:$0xff] %v5770
        %5775 = vst [vmem:[#allocation4 + $0x18] sm:$0xff] %v5771
        %5776 = vst [vmem:[#allocation2] sm:$0xff] %v4534
        %5777 = vst [vmem:[#allocation2 + $0x8] sm:$0xff] %v4535
        %5778 = vst [vmem:[#allocation2 + $0x10] sm:$0xff] %v4536
        %5779 = vst [vmem:[#allocation2 + $0x18] sm:$0xff] %v4537
        %p5780 = scmp.eq.s32.totalorder %s42, 1
        // Predicated region
        $region177: #{tpu_custom_call.1} parent=143 // pred_check
          %p5781 = pneg %p5780
        $region178: #{tpu_custom_call.1} parent=143 // pred_check_branch
          %5783 = sbr.rel (%p5781) target = $region180
        $region179: #{tpu_custom_call.1} parent=143 // pred_region
          %v5784 = vld [vmem:[#allocation2] sm:$0xff]
          %v5785 = vld [vmem:[#allocation2 + $0x8] sm:$0xff]
          %v5786 = vld [vmem:[#allocation2 + $0x10] sm:$0xff]
          %v5787 = vld [vmem:[#allocation2 + $0x18] sm:$0xff]
          %v5788 = vld [vmem:[#allocation3] sm:$0xff]
          %v5789 = vld [vmem:[#allocation3 + $0x8] sm:$0xff]
          %v5790 = vld [vmem:[#allocation3 + $0x10] sm:$0xff]
          %v5791 = vld [vmem:[#allocation3 + $0x18] sm:$0xff]
          %v5792 = vld [vmem:[#allocation4] sm:$0xff]
          %v5793 = vld [vmem:[#allocation4 + $0x8] sm:$0xff]
          %v5794 = vld [vmem:[#allocation4 + $0x10] sm:$0xff]
          %v5795 = vld [vmem:[#allocation4 + $0x18] sm:$0xff]
          %5800 = vrot.lane.b32.xlu0 %v5784, 96
          %v5801 = vpop.permute.xlu0 %5800
          %5802 = vrot.lane.b32.xlu0 %v5785, 96
          %v5803 = vpop.permute.xlu0 %5802
          %5804 = vrot.lane.b32.xlu0 %v5786, 96
          %v5805 = vpop.permute.xlu0 %5804
          %5806 = vrot.lane.b32.xlu0 %v5787, 96
          %v5807 = vpop.permute.xlu0 %5806
          %v5812 = vmax.f32 %v5784, %v5801
          %v5813 = vmax.f32 %v5785, %v5803
          %v5814 = vmax.f32 %v5786, %v5805
          %v5815 = vmax.f32 %v5787, %v5807
          %5816 = vrot.lane.b32.xlu0 %v5784, 64
          %v5817 = vpop.permute.xlu0 %5816
          %5818 = vrot.lane.b32.xlu0 %v5785, 64
          %v5819 = vpop.permute.xlu0 %5818
          %5820 = vrot.lane.b32.xlu0 %v5786, 64
          %v5821 = vpop.permute.xlu0 %5820
          %5822 = vrot.lane.b32.xlu0 %v5787, 64
          %v5823 = vpop.permute.xlu0 %5822
          %v5828 = vmax.f32 %v5812, %v5817
          %v5829 = vmax.f32 %v5813, %v5819
          %v5830 = vmax.f32 %v5814, %v5821
          %v5831 = vmax.f32 %v5815, %v5823
          %5832 = vrot.lane.b32.xlu0 %v5784, 32
          %v5833 = vpop.permute.xlu0 %5832
          %5834 = vrot.lane.b32.xlu0 %v5785, 32
          %v5835 = vpop.permute.xlu0 %5834
          %5836 = vrot.lane.b32.xlu0 %v5786, 32
          %v5837 = vpop.permute.xlu0 %5836
          %5838 = vrot.lane.b32.xlu0 %v5787, 32
          %v5839 = vpop.permute.xlu0 %5838
          %v5844 = vmax.f32 %v5828, %v5833
          %v5845 = vmax.f32 %v5829, %v5835
          %v5846 = vmax.f32 %v5830, %v5837
          %v5847 = vmax.f32 %v5831, %v5839
          %v5848 = vsub.f32 %v5784, %v5844
          %v5849 = vsub.f32 %v5785, %v5845
          %v5850 = vsub.f32 %v5786, %v5846
          %v5851 = vsub.f32 %v5787, %v5847
          %v5852 = vmul.f32 %v5848, 1.442695
          %v5853 = vpow.pop %v5852
          %v5854 = vmul.f32 %v5849, 1.442695
          %v5855 = vpow.pop %v5854
          %v5856 = vmul.f32 %v5850, 1.442695
          %v5857 = vpow.pop %v5856
          %v5858 = vmul.f32 %v5851, 1.442695
          %v5859 = vpow.pop %v5858
          %v5860 = vmul.f32 %v5788, %v5853
          %v5861 = vmul.f32 %v5789, %v5855
          %v5862 = vmul.f32 %v5790, %v5857
          %v5863 = vmul.f32 %v5791, %v5859
          %v5864 = vadd.f32 %v5860, 0.0
          %v5865 = vadd.f32 %v5861, 0.0
          %v5866 = vadd.f32 %v5862, 0.0
          %v5867 = vadd.f32 %v5863, 0.0
          %v5868 = vmul.f32 %v5792, %v5853
          %v5869 = vmul.f32 %v5793, %v5855
          %v5870 = vmul.f32 %v5794, %v5857
          %v5871 = vmul.f32 %v5795, %v5859
          %v5872 = vadd.f32 %v5868, 0.0
          %v5873 = vadd.f32 %v5869, 0.0
          %v5874 = vadd.f32 %v5870, 0.0
          %v5875 = vadd.f32 %v5871, 0.0
          %5880 = vrot.lane.b32.xlu0 %v5844, 32
          %v5881 = vpop.permute.xlu0 %5880
          %5882 = vrot.lane.b32.xlu0 %v5845, 32
          %v5883 = vpop.permute.xlu0 %5882
          %5884 = vrot.lane.b32.xlu0 %v5846, 32
          %v5885 = vpop.permute.xlu0 %5884
          %5886 = vrot.lane.b32.xlu0 %v5847, 32
          %v5887 = vpop.permute.xlu0 %5886
          %v5892 = vsub.f32 %v5784, %v5881
          %v5893 = vsub.f32 %v5785, %v5883
          %v5894 = vsub.f32 %v5786, %v5885
          %v5895 = vsub.f32 %v5787, %v5887
          %v5896 = vmul.f32 %v5892, 1.442695
          %v5897 = vpow.pop %v5896
          %v5898 = vmul.f32 %v5893, 1.442695
          %v5899 = vpow.pop %v5898
          %v5900 = vmul.f32 %v5894, 1.442695
          %v5901 = vpow.pop %v5900
          %v5902 = vmul.f32 %v5895, 1.442695
          %v5903 = vpow.pop %v5902
          %v5904 = vmul.f32 %v5788, %v5897
          %v5905 = vmul.f32 %v5789, %v5899
          %v5906 = vmul.f32 %v5790, %v5901
          %v5907 = vmul.f32 %v5791, %v5903
          %5912 = vrot.lane.b32.xlu0 %v5904, 96
          %v5913 = vpop.permute.xlu0 %5912
          %5914 = vrot.lane.b32.xlu0 %v5905, 96
          %v5915 = vpop.permute.xlu0 %5914
          %5916 = vrot.lane.b32.xlu0 %v5906, 96
          %v5917 = vpop.permute.xlu0 %5916
          %5918 = vrot.lane.b32.xlu0 %v5907, 96
          %v5919 = vpop.permute.xlu0 %5918
          %v5924 = vadd.f32 %v5864, %v5913
          %v5925 = vadd.f32 %v5865, %v5915
          %v5926 = vadd.f32 %v5866, %v5917
          %v5927 = vadd.f32 %v5867, %v5919
          %v5928 = vmul.f32 %v5792, %v5897
          %v5929 = vmul.f32 %v5793, %v5899
          %v5930 = vmul.f32 %v5794, %v5901
          %v5931 = vmul.f32 %v5795, %v5903
          %5936 = vrot.lane.b32.xlu0 %v5928, 96
          %v5937 = vpop.permute.xlu0 %5936
          %5938 = vrot.lane.b32.xlu0 %v5929, 96
          %v5939 = vpop.permute.xlu0 %5938
          %5940 = vrot.lane.b32.xlu0 %v5930, 96
          %v5941 = vpop.permute.xlu0 %5940
          %5942 = vrot.lane.b32.xlu0 %v5931, 96
          %v5943 = vpop.permute.xlu0 %5942
          %v5948 = vadd.f32 %v5872, %v5937
          %v5949 = vadd.f32 %v5873, %v5939
          %v5950 = vadd.f32 %v5874, %v5941
          %v5951 = vadd.f32 %v5875, %v5943
          %5952 = vrot.lane.b32.xlu0 %v5844, 64
          %v5953 = vpop.permute.xlu0 %5952
          %5954 = vrot.lane.b32.xlu0 %v5845, 64
          %v5955 = vpop.permute.xlu0 %5954
          %5956 = vrot.lane.b32.xlu0 %v5846, 64
          %v5957 = vpop.permute.xlu0 %5956
          %5958 = vrot.lane.b32.xlu0 %v5847, 64
          %v5959 = vpop.permute.xlu0 %5958
          %v5964 = vsub.f32 %v5784, %v5953
          %v5965 = vsub.f32 %v5785, %v5955
          %v5966 = vsub.f32 %v5786, %v5957
          %v5967 = vsub.f32 %v5787, %v5959
          %v5968 = vmul.f32 %v5964, 1.442695
          %v5969 = vpow.pop %v5968
          %v5970 = vmul.f32 %v5965, 1.442695
          %v5971 = vpow.pop %v5970
          %v5972 = vmul.f32 %v5966, 1.442695
          %v5973 = vpow.pop %v5972
          %v5974 = vmul.f32 %v5967, 1.442695
          %v5975 = vpow.pop %v5974
          %v5976 = vmul.f32 %v5788, %v5969
          %v5977 = vmul.f32 %v5789, %v5971
          %v5978 = vmul.f32 %v5790, %v5973
          %v5979 = vmul.f32 %v5791, %v5975
          %5984 = vrot.lane.b32.xlu0 %v5976, 64
          %v5985 = vpop.permute.xlu0 %5984
          %5986 = vrot.lane.b32.xlu0 %v5977, 64
          %v5987 = vpop.permute.xlu0 %5986
          %5988 = vrot.lane.b32.xlu0 %v5978, 64
          %v5989 = vpop.permute.xlu0 %5988
          %5990 = vrot.lane.b32.xlu0 %v5979, 64
          %v5991 = vpop.permute.xlu0 %5990
          %v5996 = vadd.f32 %v5924, %v5985
          %v5997 = vadd.f32 %v5925, %v5987
          %v5998 = vadd.f32 %v5926, %v5989
          %v5999 = vadd.f32 %v5927, %v5991
          %v6000 = vmul.f32 %v5792, %v5969
          %v6001 = vmul.f32 %v5793, %v5971
          %v6002 = vmul.f32 %v5794, %v5973
          %v6003 = vmul.f32 %v5795, %v5975
          %6008 = vrot.lane.b32.xlu0 %v6000, 64
          %v6009 = vpop.permute.xlu0 %6008
          %6010 = vrot.lane.b32.xlu0 %v6001, 64
          %v6011 = vpop.permute.xlu0 %6010
          %6012 = vrot.lane.b32.xlu0 %v6002, 64
          %v6013 = vpop.permute.xlu0 %6012
          %6014 = vrot.lane.b32.xlu0 %v6003, 64
          %v6015 = vpop.permute.xlu0 %6014
          %v6020 = vadd.f32 %v5948, %v6009
          %v6021 = vadd.f32 %v5949, %v6011
          %v6022 = vadd.f32 %v5950, %v6013
          %v6023 = vadd.f32 %v5951, %v6015
          %6024 = vrot.lane.b32.xlu0 %v5844, 96
          %v6025 = vpop.permute.xlu0 %6024
          %6026 = vrot.lane.b32.xlu0 %v5845, 96
          %v6027 = vpop.permute.xlu0 %6026
          %6028 = vrot.lane.b32.xlu0 %v5846, 96
          %v6029 = vpop.permute.xlu0 %6028
          %6030 = vrot.lane.b32.xlu0 %v5847, 96
          %v6031 = vpop.permute.xlu0 %6030
          %v6036 = vsub.f32 %v5784, %v6025
          %v6037 = vsub.f32 %v5785, %v6027
          %v6038 = vsub.f32 %v5786, %v6029
          %v6039 = vsub.f32 %v5787, %v6031
          %v6040 = vmul.f32 %v6036, 1.442695
          %v6041 = vpow.pop %v6040
          %v6042 = vmul.f32 %v6037, 1.442695
          %v6043 = vpow.pop %v6042
          %v6044 = vmul.f32 %v6038, 1.442695
          %v6045 = vpow.pop %v6044
          %v6046 = vmul.f32 %v6039, 1.442695
          %v6047 = vpow.pop %v6046
          %v6048 = vmul.f32 %v5788, %v6041
          %v6049 = vmul.f32 %v5789, %v6043
          %v6050 = vmul.f32 %v5790, %v6045
          %v6051 = vmul.f32 %v5791, %v6047
          %6056 = vrot.lane.b32.xlu0 %v6048, 32
          %v6057 = vpop.permute.xlu0 %6056
          %6058 = vrot.lane.b32.xlu0 %v6049, 32
          %v6059 = vpop.permute.xlu0 %6058
          %6060 = vrot.lane.b32.xlu0 %v6050, 32
          %v6061 = vpop.permute.xlu0 %6060
          %6062 = vrot.lane.b32.xlu0 %v6051, 32
          %v6063 = vpop.permute.xlu0 %6062
          %v6068 = vadd.f32 %v5996, %v6057
          %v6069 = vadd.f32 %v5997, %v6059
          %v6070 = vadd.f32 %v5998, %v6061
          %v6071 = vadd.f32 %v5999, %v6063
          %v6072 = vmul.f32 %v5792, %v6041
          %v6073 = vmul.f32 %v5793, %v6043
          %v6074 = vmul.f32 %v5794, %v6045
          %v6075 = vmul.f32 %v5795, %v6047
          %6080 = vrot.lane.b32.xlu0 %v6072, 32
          %v6081 = vpop.permute.xlu0 %6080
          %6082 = vrot.lane.b32.xlu0 %v6073, 32
          %v6083 = vpop.permute.xlu0 %6082
          %6084 = vrot.lane.b32.xlu0 %v6074, 32
          %v6085 = vpop.permute.xlu0 %6084
          %6086 = vrot.lane.b32.xlu0 %v6075, 32
          %v6087 = vpop.permute.xlu0 %6086
          %v6092 = vadd.f32 %v6020, %v6081
          %v6093 = vadd.f32 %v6021, %v6083
          %v6094 = vadd.f32 %v6022, %v6085
          %v6095 = vadd.f32 %v6023, %v6087
          %v6096 = vrcp.pop %v6068
          %v6097 = vmul.f32 1.0, %v6096
          %v6098 = vrcp.pop %v6069
          %v6099 = vmul.f32 1.0, %v6098
          %v6100 = vrcp.pop %v6070
          %v6101 = vmul.f32 1.0, %v6100
          %v6102 = vrcp.pop %v6071
          %v6103 = vmul.f32 1.0, %v6102
          %v6104 = vmul.f32 %v6092, %v6097
          %v6105 = vmul.f32 %v6093, %v6099
          %v6106 = vmul.f32 %v6094, %v6101
          %v6107 = vmul.f32 %v6095, %v6103
          %v6108 = vld [vmem:[%s12] sm:$0xff]
          %v6109 = vld [vmem:[%s12 + $0x8] sm:$0xff]
          %v6110 = vld [vmem:[%s12 + $0x10] sm:$0xff]
          %v6111 = vld [vmem:[%s12 + $0x18] sm:$0xff]
          %v6112 = vld [vmem:[%s13] sm:$0x1]
          %v6114 = vlaneseq
          %v6115 = vshrl.u32 %v6114, 7
          %v6116 = vsub.s32 0, %v6115
          %v6117 = vrot.slane %v6112, %v6116
          %vm6119 = vcmask 261120
          %v6121 = vsel %vm6119, %v6104, 0
          %v6124 = vsel %vm6119, %v6105, 0
          %v6127 = vsel %vm6119, %v6106, 0
          %v6130 = vsel %vm6119, %v6107, 0
          %6132 = vmatprep.subr.mxu0 0.0
          %6133 = vmatpush1.msra.mxu0 %v6108
          %6134 = vmatprep.subr.mxu0 0.0
          %6135 = vmatpush1.msra.mxu0 %v6109
          %6136 = vmatprep.subr.mxu0 0.0
          %6137 = vmatpush1.msra.mxu0 %v6110
          %6138 = vmatprep.subr.mxu0 0.0
          %6139 = vmatpush1.msra.mxu0 %v6111
          %6140 = vmatprep.subr.mxu0 0.0
          %6141 = vmatpush1.msra.mxu0 0.0
          %6142 = vmatprep.subr.mxu0 0.0
          %6143 = vmatpush1.msra.mxu0 0.0
          %6144 = vmatprep.subr.mxu0 0.0
          %6145 = vmatpush1.msra.mxu0 0.0
          %6146 = vmatprep.subr.mxu0 0.0
          %6147 = vmatpush1.msra.mxu0 0.0
          %6148 = vmatprep.subr.mxu0 0.0
          %6149 = vmatpush1.msra.mxu0 0.0
          %6150 = vmatprep.subr.mxu0 0.0
          %6151 = vmatpush1.msra.mxu0 0.0
          %6152 = vmatprep.subr.mxu0 0.0
          %6153 = vmatpush1.msra.mxu0 0.0
          %6154 = vmatprep.subr.mxu0 0.0
          %6155 = vmatpush1.msra.mxu0 0.0
          %6156 = vmatprep.subr.mxu0 0.0
          %6157 = vmatpush1.msra.mxu0 0.0
          %6158 = vmatprep.subr.mxu0 0.0
          %6159 = vmatpush1.msra.mxu0 0.0
          %6160 = vmatprep.subr.mxu0 0.0
          %6161 = vmatpush1.msra.mxu0 0.0
          %6162 = vmatprep.subr.mxu0 0.0
          %6163 = vmatpush1.msra.mxu0 0.0
          %6164 = vmatprep.subr.mxu0 0.0
          %6165 = vmatpush1.msra.mxu0 0.0
          %6166 = vmatprep.subr.mxu0 0.0
          %6167 = vmatpush1.msra.mxu0 0.0
          %6168 = vmatprep.subr.mxu0 0.0
          %6169 = vmatpush1.msra.mxu0 0.0
          %6170 = vmatprep.subr.mxu0 0.0
          %6171 = vmatpush1.msra.mxu0 0.0
          %6172 = vmatprep.subr.mxu0 0.0
          %6173 = vmatpush1.msra.mxu0 0.0
          %6174 = vmatprep.subr.mxu0 0.0
          %6175 = vmatpush1.msra.mxu0 0.0
          %6176 = vmatprep.subr.mxu0 0.0
          %6177 = vmatpush1.msra.mxu0 0.0
          %6178 = vmatprep.subr.mxu0 0.0
          %6179 = vmatpush1.msra.mxu0 0.0
          %6180 = vmatprep.subr.mxu0 0.0
          %6181 = vmatpush1.msra.mxu0 0.0
          %6182 = vmatprep.subr.mxu0 0.0
          %6183 = vmatpush1.msra.mxu0 0.0
          %6184 = vmatprep.subr.mxu0 0.0
          %6185 = vmatpush1.msra.mxu0 0.0
          %6186 = vmatprep.subr.mxu0 0.0
          %6187 = vmatpush1.msra.mxu0 0.0
          %6188 = vmatprep.subr.mxu0 0.0
          %6189 = vmatpush1.msra.mxu0 0.0
          %6190 = vmatprep.subr.mxu0 0.0
          %6191 = vmatpush1.msra.mxu0 0.0
          %6192 = vmatprep.subr.mxu0 0.0
          %6193 = vmatpush1.msra.mxu0 0.0
          %6194 = vmatprep.subr.mxu0 0.0
          %6195 = vmatpush1.msra.mxu0 0.0
          %6196 = vmatprep.mubr.f32.mxu0 0.0
          %6197 = vmatmul.mubr.f32.gmra.mrb[0].mxu0 %v6121
          %v6198 = vpop.f32.mrb[0].mxu0
          %v6199 = vadd.f32 %v6117, %v6198
          %v6200 = vpop.f32.mrb[0].mxu0
          %6201 = vmatprep.mubr.f32.mxu0 0.0
          %6202 = vmatmul.mubr.f32.gmra.mrb[0].mxu0 %v6124
          %v6203 = vpop.f32.mrb[0].mxu0
          %v6204 = vadd.f32 %v6117, %v6203
          %v6205 = vpop.f32.mrb[0].mxu0
          %6206 = vmatprep.mubr.f32.mxu0 0.0
          %6207 = vmatmul.mubr.f32.gmra.mrb[0].mxu0 %v6127
          %v6208 = vpop.f32.mrb[0].mxu0
          %v6209 = vadd.f32 %v6117, %v6208
          %v6210 = vpop.f32.mrb[0].mxu0
          %6211 = vmatprep.mubr.f32.mxu0 0.0
          %6212 = vmatmul.mubr.f32.gmra.mrb[0].mxu0 %v6130
          %v6213 = vpop.f32.mrb[0].mxu0
          %v6214 = vadd.f32 %v6117, %v6213
          %v6215 = vpop.f32.mrb[0].mxu0
          %6216 = vdwg.mxu0
          %6217 = vst.msk [vmem:[%s1274] sm:$0xff] %vm6119, %v6199
          %6218 = vst.msk [vmem:[%s1274 + $0x8] sm:$0xff] %vm6119, %v6204
          %6219 = vst.msk [vmem:[%s1274 + $0x10] sm:$0xff] %vm6119, %v6209
          %6220 = vst.msk [vmem:[%s1274 + $0x18] sm:$0xff] %vm6119, %v6214
        $region180: #{tpu_custom_call.1} parent=143 // pred_fallthru
          _
        %s6221 = smul.u32 4, %s41
        %p6222 = scmp.lt.s32.totalorder %s6221, 15
        %s6223 = scalar_select %p6222, %s6221, 15
        %s6224 = smul.addr %s6223, 8
        %s6225 = scalar_lea.vmem %s14, %s6224
        %s6226 = sand.u32 %s408, 1
        %s6227 = scalar_lea.sflag [#allocation7], %s6226
        %s6228 = sand.u32 %s408, 1
        %s6229 = smul.addr %s6228, 512
        %s6230 = scalar_lea.vmem [#allocation16], %s6229
        // Predicated region
        $region181: #{tpu_custom_call.1} parent=143 // pred_check
          %p6231 = pneg %p390
        $region182: #{tpu_custom_call.1} parent=143 // pred_check_branch
          %6233 = sbr.rel (%p6231) target = $region184
        $region183: #{tpu_custom_call.1} parent=143 // pred_region
          %s6234 = smul.u32 4, %s41
        $region184: #{tpu_custom_call.1} parent=143 // pred_fallthru
          _
        // Predicated region
        $region185: #{tpu_custom_call.1} parent=143 // pred_check
          %p6235 = pneg %p418
        $region186: #{tpu_custom_call.1} parent=143 // pred_check_branch
          %6237 = sbr.rel (%p6235) target = $region188
        $region187: #{tpu_custom_call.1} parent=143 // pred_region
          #allocation18 [shape = 'u32[6]{0}', space=smem, size = 0x18, scoped, tag = 'DMA stride descriptor']
          %s6238 = smul.u32 32, %s41
          %s6239 = smul.u32 2, %s42
          %s6241 = ssub.s32 8192, 8192
          %6242 = vsyncadd %s6227, %s6241
          %s6243 = smul.addr %s6238, 4
          %s6244 = sadd.s32 %s6239, %s6243
          %s6245 = smul.addr %s6244, 128
          %s6246 = scalar_lea.hbm %s15, %s6245
          %s6248 = sshll.u32 1, 14
          %s6249 = sxor.u32 4294967295, %s6248
          %s6252 = sshll.u32 7, 18
          %s6253 = sxor.u32 4294967295, %s6252
          %s6254 = sand.u32 0, %s6253
          %s6256 = sor.u32 %s6254, 0
          %s6258 = sshll.u32 3, 24
          %s6259 = sxor.u32 4294967295, %s6258
          %s6260 = sand.u32 %s6256, %s6259
          %s6262 = sor.u32 %s6260, 0
          %s6263 = sshll.u32 %s6230, 4
          %s6264 = int_to_ptr.vmem [resolvable:$true] %s6263
          %6270 = sst [smem:[#allocation18]] 256
          %s6271 = scalar_lea.smem [#allocation18], 1
          %6272 = sst [smem:[%s6271]] 512
          %s6273 = scalar_lea.smem [#allocation18], 2
          %6274 = sst [smem:[%s6273]] 2
          %s6275 = scalar_lea.smem [#allocation18], 3
          %6276 = sst [smem:[%s6275]] 128
          %s6277 = scalar_lea.smem [#allocation18], 4
          %6278 = sst [smem:[%s6277]] 128
          %s6279 = scalar_lea.smem [#allocation18], 5
          %6280 = sst [smem:[%s6279]] 8
          %6282 = dma.general %s6264, 8192, %s6246, %s6227, [#allocation17], [#allocation18], %s6262, 0
        $region188: #{tpu_custom_call.1} parent=143 // pred_fallthru
          _
      $region144: #{tpu_custom_call.1} parent=5 // pred_fallthru
        _
      %p6283 = scmp.le.s32.totalorder 2, %s32
      // Predicated region
      $region189: #{tpu_custom_call.1} parent=5 // pred_check
        %p6284 = pneg %p6283
      $region190: #{tpu_custom_call.1} parent=5 // pred_check_branch
        %6286 = sbr.rel (%p6284) target = $region192
      $region191: #{tpu_custom_call.1} parent=5 // pred_region
        %s6287 = ssub.s32 %s32, 2
        // Predicated region
        $region193: #{tpu_custom_call.1} parent=191 // pred_check
          %p6288 = pneg %p396
        $region194: #{tpu_custom_call.1} parent=191 // pred_check_branch
          %6290 = sbr.rel (%p6288) target = $region196
        $region195: #{tpu_custom_call.1} parent=191 // pred_region
          %s6291 = smul.u32 4, %s43
          %p6292 = scmp.lt.s32.totalorder %s6291, 15
          %s6293 = scalar_select %p6292, %s6291, 15
          %s6294 = smul.addr %s6293, 8
          %s6295 = scalar_lea.vmem %s14, %s6294
        $region196: #{tpu_custom_call.1} parent=191 // pred_fallthru
          _
        // Predicated region
        $region197: #{tpu_custom_call.1} parent=191 // pred_check
          %p6296 = pneg %p424
        $region198: #{tpu_custom_call.1} parent=191 // pred_check_branch
          %6298 = sbr.rel (%p6296) target = $region200
        $region199: #{tpu_custom_call.1} parent=191 // pred_region
          %s6299 = sand.u32 %s409, 1
          %s6300 = scalar_lea.sflag [#allocation7], %s6299
          %s6301 = sand.u32 %s409, 1
          %s6302 = smul.addr %s6301, 512
          %s6303 = scalar_lea.vmem [#allocation16], %s6302
          %6304 = dma.done %s6300, 8192
        $region200: #{tpu_custom_call.1} parent=191 // pred_fallthru
          _
      $region192: #{tpu_custom_call.1} parent=5 // pred_fallthru
        _
    $region6: #{tpu_custom_call.1} parent=1 // loop_footer
      %s36 = sadd.s32 1, %s32
    $region7: #{tpu_custom_call.1} parent=1 // loop_footer_branch
      %31 = sbr.rel target = $region3
    $region8: #{tpu_custom_call.1} parent=1 // loop_exit
      _
    %6305 = vsyncpa [#allocation6], 1
    %s6306 = scalar_lea.sflag [#allocation6], 1
    %6307 = vsyncpa %s6306, 1
    %6308 = vsyncpa [#allocation9], 1
    %s6309 = scalar_lea.sflag [#allocation9], 1
    %6310 = vsyncpa %s6309, 1
    %6311 = vsyncpa [#allocation14], 1
    %6312 = vsyncpa [#allocation7], 1
    %s6313 = scalar_lea.sflag [#allocation7], 1
    %6314 = vsyncpa %s6313, 1

</llo_original>
